<compile_context>
chip_gen: v6e
topology: v6e:2x2x1
jax: 0.10.0
libtpu: 0.0.40
codegen_flags: <defaults>
</compile_context>

<pallas_src>
import jax
import jax.numpy as jnp
from jax import lax
from jax.experimental import pallas as pl
from jax.experimental.pallas import tpu as pltpu


_H = _W = 15                        # input spatial size
_ROWS_PAD = 232                     # per-image packed-input rows (225 + 7 pad)
_WIN1, _WIN2, _WIN3 = 152, 88, 40   # per-image row windows computed per layer
# Window arithmetic (rows are h*15 + w):
#   conv1 computes rows [0,152): reads xp rows <= 151 + 5*15 = 226 <= 231 (pad).
#   conv2 computes rows [0, 88): reads a1 rows <= 87 + 4*15+4 = 151 <= 151.
#   conv3 computes rows [0, 40): reads a2 rows <= 39 + 3*15+3 = 87  <= 87.
#   valid 3x3 block = a3 rows {0,1,2,15,16,17,30,31,32}.


# --------------------------- conv stage (gridded) ----------------------------

def _conv_kernel(x_ref, w1_ref, b1_ref, w2_ref, b2_ref, w3_ref, b3_ref,
                 out_ref, a1_ref, a2_ref):
    """One image per grid step: conv1+conv2+conv3 (+bias+ReLU); emits the nine
    valid 3x3 output rows channels-last as a lane-dense (1, 9, 128) block."""
    f32, bf16 = jnp.float32, jnp.bfloat16

    # conv1: 6x6, 4 -> 32.  Column taps (j) pre-packed into lanes host-side:
    # 6 bf16 matmuls of K=24 (one per row tap i).
    acc = jnp.zeros((_WIN1, 32), f32)
    for i in range(6):
        acc = acc + jnp.dot(x_ref[0, pl.ds(i * _W, _WIN1), :], w1_ref[i],
                            preferred_element_type=f32)
    a1_ref[...] = jnp.maximum(acc + b1_ref[...], 0.0).astype(bf16)

    # conv2: 5x5, 32 -> 64.  Unpadded K=32 (real channels only), bf16 slabs.
    acc = jnp.zeros((_WIN2, 64), f32)
    for i in range(5):
        for j in range(5):
            acc = acc + jnp.dot(a1_ref[pl.ds(i * _W + j, _WIN2), :],
                                w2_ref[i * 5 + j], preferred_element_type=f32)
    a2_ref[...] = jnp.maximum(acc + b2_ref[...], 0.0).astype(bf16)

    # conv3: 4x4, 64 -> 128.  Unpadded K=64.
    # TODO(synk): pack 2-4 j-taps into K=128/256 (pltpu.roll by 64 lanes) to
    # further cut MXU pushes on the 256-deep v6e/v7x MXU.
    acc = jnp.zeros((_WIN3, 128), f32)
    for i in range(4):
        for j in range(4):
            acc = acc + jnp.dot(a2_ref[pl.ds(i * _W + j, _WIN3), :],
                                w3_ref[i * 4 + j], preferred_element_type=f32)
    a3 = jnp.maximum(acc + b3_ref[...], 0.0).astype(bf16)

    # Valid 3x3 block lives at window rows h*15 + w, h, w in {0,1,2}.
    for h in range(3):
        out_ref[0, 3 * h:3 * h + 3, :] = a3[15 * h:15 * h + 3, :]


# ------------------------------ FC stage -------------------------------------

def _fc_kernel(x_ref, wf1_ref, bf1_ref, wf2_ref, bf2_ref, wf3_ref, bf3_ref,
               out_ref):
    f32, bf16 = jnp.float32, jnp.bfloat16
    h = jnp.dot(x_ref[...], wf1_ref[...], preferred_element_type=f32) + bf1_ref[...]
    h = jnp.maximum(h, 0.0)
    h = jnp.dot(h.astype(bf16), wf2_ref[...], preferred_element_type=f32) + bf2_ref[...]
    h = jnp.maximum(h, 0.0)
    out_ref[...] = (jnp.dot(h.astype(bf16), wf3_ref[...],
                            preferred_element_type=f32) + bf3_ref[...])


def _full_spec(shape):
    idx = (0,) * len(shape)
    return pl.BlockSpec(tuple(shape), lambda: idx)


# ------------------------------ parameters -----------------------------------

def _uniform(key, shape, fan_in):
    bound = 1.0 / jnp.sqrt(jnp.float32(fan_in))
    return jax.random.uniform(key, shape, jnp.float32, -bound, bound)


def init_params(key):
    """Parameters in native PyTorch layouts (Conv2d: (Cout,Cin,kh,kw), Linear: (out,in))."""
    ks = jax.random.split(key, 12)
    p = {}
    p["conv1_w"] = _uniform(ks[0], (32, 4, 6, 6), 4 * 6 * 6)
    p["conv1_b"] = _uniform(ks[1], (32,), 4 * 6 * 6)
    p["conv2_w"] = _uniform(ks[2], (64, 32, 5, 5), 32 * 5 * 5)
    p["conv2_b"] = _uniform(ks[3], (64,), 32 * 5 * 5)
    p["conv3_w"] = _uniform(ks[4], (128, 64, 4, 4), 64 * 4 * 4)
    p["conv3_b"] = _uniform(ks[5], (128,), 64 * 4 * 4)
    p["fc1_w"] = _uniform(ks[6], (512, 1152), 1152)
    p["fc1_b"] = _uniform(ks[7], (512,), 1152)
    p["fc2_w"] = _uniform(ks[8], (128, 512), 512)
    p["fc2_b"] = _uniform(ks[9], (128,), 512)
    p["fc3_w"] = _uniform(ks[10], (1, 128), 128)
    p["fc3_b"] = _uniform(ks[11], (1,), 128)
    return p


def prepare_params(p):
    """One-time host-side repack into kernel layouts: tap-major conv weights with
    their REAL Cin (no zero-pad in K), conv1 column taps folded into K, fc1 rows
    permuted for the (C,H,W) flatten, bf16 MXU operands, f32 biases."""
    f32, bf16 = jnp.float32, jnp.bfloat16

    def conv_w(w):               # (Cout,Cin,kh,kw) -> (kh*kw, Cin, Cout)
        cout, cin, kh, kw = w.shape
        return jnp.transpose(w, (2, 3, 1, 0)).reshape(kh * kw, cin, cout)

    kp = {}
    # conv1: w1[i, j*4 + c, co] = conv1_w[co, c, i, j]   -> (6, 24, 32)
    w1 = jnp.transpose(p["conv1_w"], (2, 3, 1, 0)).reshape(6, 6 * 4, 32)
    kp["w1"] = w1.astype(bf16)
    kp["b1"] = p["conv1_b"].reshape(1, 32).astype(f32)
    kp["w2"] = conv_w(p["conv2_w"]).astype(bf16)              # (25, 32, 64)
    kp["b2"] = p["conv2_b"].reshape(1, 64).astype(f32)
    kp["w3"] = conv_w(p["conv3_w"]).astype(bf16)              # (16, 64, 128)
    kp["b3"] = p["conv3_b"].reshape(1, 128).astype(f32)
    # fc1: torch feature index f = c*9 + h*3 + w  ->  kernel row p*128 + c, p=h*3+w
    wf1 = p["fc1_w"].reshape(512, 128, 3, 3)
    kp["wf1"] = jnp.transpose(wf1, (2, 3, 1, 0)).reshape(1152, 512).astype(bf16)
    kp["bf1"] = p["fc1_b"].reshape(1, 512).astype(f32)
    kp["wf2"] = jnp.transpose(p["fc2_w"]).astype(bf16)        # (512, 128)
    kp["bf2"] = p["fc2_b"].reshape(1, 128).astype(f32)
    wf3 = jnp.pad(jnp.transpose(p["fc3_w"]), ((0, 0), (0, 127)))
    kp["wf3"] = wf3.astype(bf16)                              # (128, 128) lane-dense
    kp["bf3"] = jnp.pad(p["fc3_b"], (0, 127)).reshape(1, 128).astype(f32)
    return kp


# ------------------------------- forward -------------------------------------

def _pack_input(x):
    """x: (N,4,15,15) NCHW -> (N, 232, 24) bf16 with the 6 conv1 column taps
    packed into lanes: xp[n, h*15+w, j*4+c] = x[n, c, h, w+j] (zero past w=14).
    The 7 trailing pad rows keep conv1's over-read (row <= 226) in-bounds."""
    n = x.shape[0]
    xh = jnp.transpose(x, (0, 2, 3, 1))                       # (N, 15, 15, 4)
    xh = jnp.pad(xh, ((0, 0), (0, 0), (0, 5), (0, 0)))        # width 15 -> 20
    xp = jnp.stack([xh[:, :, j:j + _W, :] for j in range(6)], axis=3)
    xp = xp.reshape(n, _H * _W, 6 * 4)
    xp = jnp.pad(xp, ((0, 0), (0, _ROWS_PAD - _H * _W), (0, 0)))
    return xp.astype(jnp.bfloat16)


def net_forward(kp, x):
    # x: (N, 4, 15, 15) float32, NCHW (PyTorch convention)
    n = x.shape[0]
    xp = _pack_input(x)

    feats = pl.pallas_call(
        _conv_kernel,
        out_shape=jax.ShapeDtypeStruct((n, 9, 128), jnp.bfloat16),
        grid=(n,),
        in_specs=[
            pl.BlockSpec((1, _ROWS_PAD, 24), lambda i: (i, 0, 0)),
            pl.BlockSpec((6, 24, 32), lambda i: (0, 0, 0)),
            pl.BlockSpec((1, 32), lambda i: (0, 0)),
            pl.BlockSpec((25, 32, 64), lambda i: (0, 0, 0)),
            pl.BlockSpec((1, 64), lambda i: (0, 0)),
            pl.BlockSpec((16, 64, 128), lambda i: (0, 0, 0)),
            pl.BlockSpec((1, 128), lambda i: (0, 0)),
        ],
        out_specs=pl.BlockSpec((1, 9, 128), lambda i: (i, 0, 0)),
        scratch_shapes=[
            pltpu.VMEM((_WIN1, 32), jnp.bfloat16),   # conv1 activation window
            pltpu.VMEM((_WIN2, 64), jnp.bfloat16),   # conv2 activation window
        ],
        compiler_params=pltpu.CompilerParams(
            dimension_semantics=("parallel",),       # megacore sharding on v7x
            vmem_limit_bytes=32 * 1024 * 1024,
        ),
    )(xp, kp["w1"], kp["b1"], kp["w2"], kp["b2"], kp["w3"], kp["b3"])

    # FC stage: one small batched matmul stack over all images.
    n_pad = max(8, ((n + 7) // 8) * 8)
    flat = jnp.pad(feats.reshape(n, 9 * 128), ((0, n_pad - n), (0, 0)))
    fc_args = (flat, kp["wf1"], kp["bf1"], kp["wf2"], kp["bf2"],
               kp["wf3"], kp["bf3"])

    out = pl.pallas_call(
        _fc_kernel,
        out_shape=jax.ShapeDtypeStruct((n_pad, 128), jnp.float32),
        in_specs=[_full_spec(a.shape) for a in fc_args],
        out_specs=_full_spec((n_pad, 128)),
        compiler_params=pltpu.CompilerParams(vmem_limit_bytes=32 * 1024 * 1024),
    )(*fc_args)
    return out[:n, :1]


# ------------------------------ reference ------------------------------------

def reference_forward(p, x):
    """Pure-JAX f32 reference matching the PyTorch module."""
    hi = lax.Precision.HIGHEST

    def conv(h, w, b):
        y = lax.conv_general_dilated(
            h, w, window_strides=(1, 1), padding="VALID",
            dimension_numbers=("NCHW", "OIHW", "NCHW"), precision=hi)
        return jax.nn.relu(y + b.reshape(1, -1, 1, 1))

    h = conv(x, p["conv1_w"], p["conv1_b"])
    h = conv(h, p["conv2_w"], p["conv2_b"])
    h = conv(h, p["conv3_w"], p["conv3_b"])
    h = h.reshape(h.shape[0], -1)                       # torch (C,H,W) flatten
    h = jax.nn.relu(jnp.dot(h, p["fc1_w"].T, precision=hi) + p["fc1_b"])
    h = jax.nn.relu(jnp.dot(h, p["fc2_w"].T, precision=hi) + p["fc2_b"])
    return jnp.dot(h, p["fc3_w"].T, precision=hi) + p["fc3_b"]


if __name__ == "__main__":
    key = jax.random.PRNGKey(0)
    pkey, xkey = jax.random.split(key)
    params = init_params(pkey)
    kparams = prepare_params(params)
    x = jax.random.normal(xkey, (2, 4, _H, _W), dtype=jnp.float32)

    out = jax.jit(net_forward)(kparams, x)
    out = jax.block_until_ready(out)
    assert out.shape == (2, 1), out.shape
    assert jnp.all(jnp.isfinite(out))

    ref = reference_forward(params, x)
    err = float(jnp.max(jnp.abs(out - ref)))
    scale = max(1.0, float(jnp.max(jnp.abs(ref))))
    assert err <= 5e-2 * scale, (err, scale)   # bf16 MXU tolerance vs f32 ref
    print("KERNEL_OK")
</pallas_src>

<mosaic_0001>
module attributes {stable_mosaic.version = 11 : i64} {
  func.func @_fc_kernel(%arg0: memref<8x1152xbf16, #tpu.memory_space<vmem>>, %arg1: memref<1152x512xbf16, #tpu.memory_space<vmem>>, %arg2: memref<1x512xf32, #tpu.memory_space<vmem>>, %arg3: memref<512x128xbf16, #tpu.memory_space<vmem>>, %arg4: memref<1x128xf32, #tpu.memory_space<vmem>>, %arg5: memref<128x128xbf16, #tpu.memory_space<vmem>>, %arg6: memref<1x128xf32, #tpu.memory_space<vmem>>, %arg7: memref<8x128xf32, #tpu.memory_space<vmem>>) attributes {dimension_semantics = [], scalar_prefetch = 0 : i64, scratch_operands = 0 : i64, tpu.core_type = #tpu.core_type<tc>} {
    %c0 = arith.constant 0 : index
    %c0_0 = arith.constant 0 : index
    %0 = vector.load %arg0[%c0, %c0_0] : memref<8x1152xbf16, #tpu.memory_space<vmem>>, vector<8x1152xbf16>
    %c0_1 = arith.constant 0 : index
    %c0_2 = arith.constant 0 : index
    %1 = vector.load %arg1[%c0_1, %c0_2] : memref<1152x512xbf16, #tpu.memory_space<vmem>>, vector<1152x512xbf16>
    %cst = arith.constant dense<0.000000e+00> : vector<8x512xf32>
    %2 = tpu.matmul %0, %1, %cst {dimension_numbers = #tpu.dot_dimension_numbers<[1], [0], [0], [1], [0, 0, 1, 1], [], []>} : vector<8x1152xbf16>, vector<1152x512xbf16>, vector<8x512xf32> -> vector<8x512xf32>
    %c0_3 = arith.constant 0 : index
    %c0_4 = arith.constant 0 : index
    %3 = vector.load %arg2[%c0_3, %c0_4] : memref<1x512xf32, #tpu.memory_space<vmem>>, vector<1x512xf32>
    %4 = vector.broadcast %3 : vector<1x512xf32> to vector<8x512xf32>
    %5 = arith.addf %2, %4 : vector<8x512xf32>
    %cst_5 = arith.constant 0.000000e+00 : f32
    %6 = vector.broadcast %cst_5 : f32 to vector<8x512xf32>
    %7 = arith.maximumf %5, %6 : vector<8x512xf32>
    %8 = arith.truncf %7 : vector<8x512xf32> to vector<8x512xbf16>
    %c0_6 = arith.constant 0 : index
    %c0_7 = arith.constant 0 : index
    %9 = vector.load %arg3[%c0_6, %c0_7] : memref<512x128xbf16, #tpu.memory_space<vmem>>, vector<512x128xbf16>
    %cst_8 = arith.constant dense<0.000000e+00> : vector<8x128xf32>
    %10 = tpu.matmul %8, %9, %cst_8 {dimension_numbers = #tpu.dot_dimension_numbers<[1], [0], [0], [1], [0, 0, 1, 1], [], []>} : vector<8x512xbf16>, vector<512x128xbf16>, vector<8x128xf32> -> vector<8x128xf32>
    %c0_9 = arith.constant 0 : index
    %c0_10 = arith.constant 0 : index
    %11 = vector.load %arg4[%c0_9, %c0_10] : memref<1x128xf32, #tpu.memory_space<vmem>>, vector<1x128xf32>
    %12 = vector.broadcast %11 : vector<1x128xf32> to vector<8x128xf32>
    %13 = arith.addf %10, %12 : vector<8x128xf32>
    %cst_11 = arith.constant 0.000000e+00 : f32
    %14 = vector.broadcast %cst_11 : f32 to vector<8x128xf32>
    %15 = arith.maximumf %13, %14 : vector<8x128xf32>
    %16 = arith.truncf %15 : vector<8x128xf32> to vector<8x128xbf16>
    %c0_12 = arith.constant 0 : index
    %c0_13 = arith.constant 0 : index
    %17 = vector.load %arg5[%c0_12, %c0_13] : memref<128x128xbf16, #tpu.memory_space<vmem>>, vector<128x128xbf16>
    %cst_14 = arith.constant dense<0.000000e+00> : vector<8x128xf32>
    %18 = tpu.matmul %16, %17, %cst_14 {dimension_numbers = #tpu.dot_dimension_numbers<[1], [0], [0], [1], [0, 0, 1, 1], [], []>} : vector<8x128xbf16>, vector<128x128xbf16>, vector<8x128xf32> -> vector<8x128xf32>
    %c0_15 = arith.constant 0 : index
    %c0_16 = arith.constant 0 : index
    %19 = vector.load %arg6[%c0_15, %c0_16] : memref<1x128xf32, #tpu.memory_space<vmem>>, vector<1x128xf32>
    %20 = vector.broadcast %19 : vector<1x128xf32> to vector<8x128xf32>
    %21 = arith.addf %18, %20 : vector<8x128xf32>
    %c0_17 = arith.constant 0 : index
    %c0_18 = arith.constant 0 : index
    %22 = vector.load %arg7[%c0_17, %c0_18] : memref<8x128xf32, #tpu.memory_space<vmem>>, vector<8x128xf32>
    tpu.vector_store %arg7[%c0_17, %c0_18], %21 {strides = array<i32>} : memref<8x128xf32, #tpu.memory_space<vmem>>, vector<8x128xf32>,
    return
  }
}

module attributes {stable_mosaic.version = 11 : i64} {
  func.func @_conv_kernel(%arg0: i32, %arg1: memref<1x232x24xbf16, #tpu.memory_space<vmem>>, %arg2: memref<6x24x32xbf16, #tpu.memory_space<vmem>>, %arg3: memref<1x32xf32, #tpu.memory_space<vmem>>, %arg4: memref<25x32x64xbf16, #tpu.memory_space<vmem>>, %arg5: memref<1x64xf32, #tpu.memory_space<vmem>>, %arg6: memref<16x64x128xbf16, #tpu.memory_space<vmem>>, %arg7: memref<1x128xf32, #tpu.memory_space<vmem>>, %arg8: memref<1x9x128xbf16, #tpu.memory_space<vmem>>, %arg9: memref<152x32xbf16, #tpu.memory_space<vmem>>, %arg10: memref<88x64xbf16, #tpu.memory_space<vmem>>) attributes {dimension_semantics = [#tpu.dimension_semantics<parallel>], iteration_bounds = array<i64: 2>, scalar_prefetch = 0 : i64, scratch_operands = 2 : i64, tpu.core_type = #tpu.core_type<tc>, window_params = [{transform_indices = @transform_0, window_bounds = array<i64: 1, 232, 24>}, {pipeline_mode = #tpu.pipeline_mode<synchronous>, transform_indices = @transform_1, window_bounds = array<i64: 6, 24, 32>}, {pipeline_mode = #tpu.pipeline_mode<synchronous>, transform_indices = @transform_2, window_bounds = array<i64: 1, 32>}, {pipeline_mode = #tpu.pipeline_mode<synchronous>, transform_indices = @transform_3, window_bounds = array<i64: 25, 32, 64>}, {pipeline_mode = #tpu.pipeline_mode<synchronous>, transform_indices = @transform_4, window_bounds = array<i64: 1, 64>}, {pipeline_mode = #tpu.pipeline_mode<synchronous>, transform_indices = @transform_5, window_bounds = array<i64: 16, 64, 128>}, {pipeline_mode = #tpu.pipeline_mode<synchronous>, transform_indices = @transform_6, window_bounds = array<i64: 1, 128>}, {transform_indices = @transform_7, window_bounds = array<i64: 1, 9, 128>}]} {
    %cst = arith.constant 0.000000e+00 : f32
    %0 = vector.broadcast %cst : f32 to vector<152x32xf32>
    %c0 = arith.constant 0 : index
    %c0_0 = arith.constant 0 : index
    %c0_1 = arith.constant 0 : index
    %1 = vector.load %arg1[%c0, %c0_0, %c0_1] : memref<1x232x24xbf16, #tpu.memory_space<vmem>>, vector<1x152x24xbf16>
    %2 = vector.shape_cast %1 : vector<1x152x24xbf16> to vector<152x24xbf16>
    %c0_2 = arith.constant 0 : index
    %c0_3 = arith.constant 0 : index
    %c0_4 = arith.constant 0 : index
    %3 = vector.load %arg2[%c0_2, %c0_3, %c0_4] : memref<6x24x32xbf16, #tpu.memory_space<vmem>>, vector<1x24x32xbf16>
    %4 = vector.shape_cast %3 : vector<1x24x32xbf16> to vector<24x32xbf16>
    %cst_5 = arith.constant dense<0.000000e+00> : vector<152x32xf32>
    %5 = tpu.matmul %2, %4, %cst_5 {dimension_numbers = #tpu.dot_dimension_numbers<[1], [0], [0], [1], [0, 0, 1, 1], [], []>} : vector<152x24xbf16>, vector<24x32xbf16>, vector<152x32xf32> -> vector<152x32xf32>
    %6 = arith.addf %0, %5 : vector<152x32xf32>
    %c0_6 = arith.constant 0 : index
    %c15 = arith.constant 15 : index
    %c0_7 = arith.constant 0 : index
    %7 = vector.load %arg1[%c0_6, %c15, %c0_7] : memref<1x232x24xbf16, #tpu.memory_space<vmem>>, vector<1x152x24xbf16>
    %8 = vector.shape_cast %7 : vector<1x152x24xbf16> to vector<152x24xbf16>
    %c1 = arith.constant 1 : index
    %c0_8 = arith.constant 0 : index
    %c0_9 = arith.constant 0 : index
    %9 = vector.load %arg2[%c1, %c0_8, %c0_9] : memref<6x24x32xbf16, #tpu.memory_space<vmem>>, vector<1x24x32xbf16>
    %10 = vector.shape_cast %9 : vector<1x24x32xbf16> to vector<24x32xbf16>
    %cst_10 = arith.constant dense<0.000000e+00> : vector<152x32xf32>
    %11 = tpu.matmul %8, %10, %cst_10 {dimension_numbers = #tpu.dot_dimension_numbers<[1], [0], [0], [1], [0, 0, 1, 1], [], []>} : vector<152x24xbf16>, vector<24x32xbf16>, vector<152x32xf32> -> vector<152x32xf32>
    %12 = arith.addf %6, %11 : vector<152x32xf32>
    %c0_11 = arith.constant 0 : index
    %c30 = arith.constant 30 : index
    %c0_12 = arith.constant 0 : index
    %13 = vector.load %arg1[%c0_11, %c30, %c0_12] : memref<1x232x24xbf16, #tpu.memory_space<vmem>>, vector<1x152x24xbf16>
    %14 = vector.shape_cast %13 : vector<1x152x24xbf16> to vector<152x24xbf16>
    %c2 = arith.constant 2 : index
    %c0_13 = arith.constant 0 : index
    %c0_14 = arith.constant 0 : index
    %15 = vector.load %arg2[%c2, %c0_13, %c0_14] : memref<6x24x32xbf16, #tpu.memory_space<vmem>>, vector<1x24x32xbf16>
    %16 = vector.shape_cast %15 : vector<1x24x32xbf16> to vector<24x32xbf16>
    %cst_15 = arith.constant dense<0.000000e+00> : vector<152x32xf32>
    %17 = tpu.matmul %14, %16, %cst_15 {dimension_numbers = #tpu.dot_dimension_numbers<[1], [0], [0], [1], [0, 0, 1, 1], [], []>} : vector<152x24xbf16>, vector<24x32xbf16>, vector<152x32xf32> -> vector<152x32xf32>
    %18 = arith.addf %12, %17 : vector<152x32xf32>
    %c0_16 = arith.constant 0 : index
    %c45 = arith.constant 45 : index
    %c0_17 = arith.constant 0 : index
    %19 = vector.load %arg1[%c0_16, %c45, %c0_17] : memref<1x232x24xbf16, #tpu.memory_space<vmem>>, vector<1x152x24xbf16>
    %20 = vector.shape_cast %19 : vector<1x152x24xbf16> to vector<152x24xbf16>
    %c3 = arith.constant 3 : index
    %c0_18 = arith.constant 0 : index
    %c0_19 = arith.constant 0 : index
    %21 = vector.load %arg2[%c3, %c0_18, %c0_19] : memref<6x24x32xbf16, #tpu.memory_space<vmem>>, vector<1x24x32xbf16>
    %22 = vector.shape_cast %21 : vector<1x24x32xbf16> to vector<24x32xbf16>
    %cst_20 = arith.constant dense<0.000000e+00> : vector<152x32xf32>
    %23 = tpu.matmul %20, %22, %cst_20 {dimension_numbers = #tpu.dot_dimension_numbers<[1], [0], [0], [1], [0, 0, 1, 1], [], []>} : vector<152x24xbf16>, vector<24x32xbf16>, vector<152x32xf32> -> vector<152x32xf32>
    %24 = arith.addf %18, %23 : vector<152x32xf32>
    %c0_21 = arith.constant 0 : index
    %c60 = arith.constant 60 : index
    %c0_22 = arith.constant 0 : index
    %25 = vector.load %arg1[%c0_21, %c60, %c0_22] : memref<1x232x24xbf16, #tpu.memory_space<vmem>>, vector<1x152x24xbf16>
    %26 = vector.shape_cast %25 : vector<1x152x24xbf16> to vector<152x24xbf16>
    %c4 = arith.constant 4 : index
    %c0_23 = arith.constant 0 : index
    %c0_24 = arith.constant 0 : index
    %27 = vector.load %arg2[%c4, %c0_23, %c0_24] : memref<6x24x32xbf16, #tpu.memory_space<vmem>>, vector<1x24x32xbf16>
    %28 = vector.shape_cast %27 : vector<1x24x32xbf16> to vector<24x32xbf16>
    %cst_25 = arith.constant dense<0.000000e+00> : vector<152x32xf32>
    %29 = tpu.matmul %26, %28, %cst_25 {dimension_numbers = #tpu.dot_dimension_numbers<[1], [0], [0], [1], [0, 0, 1, 1], [], []>} : vector<152x24xbf16>, vector<24x32xbf16>, vector<152x32xf32> -> vector<152x32xf32>
    %30 = arith.addf %24, %29 : vector<152x32xf32>
    %c0_26 = arith.constant 0 : index
    %c75 = arith.constant 75 : index
    %c0_27 = arith.constant 0 : index
    %31 = vector.load %arg1[%c0_26, %c75, %c0_27] : memref<1x232x24xbf16, #tpu.memory_space<vmem>>, vector<1x152x24xbf16>
    %32 = vector.shape_cast %31 : vector<1x152x24xbf16> to vector<152x24xbf16>
    %c5 = arith.constant 5 : index
    %c0_28 = arith.constant 0 : index
    %c0_29 = arith.constant 0 : index
    %33 = vector.load %arg2[%c5, %c0_28, %c0_29] : memref<6x24x32xbf16, #tpu.memory_space<vmem>>, vector<1x24x32xbf16>
    %34 = vector.shape_cast %33 : vector<1x24x32xbf16> to vector<24x32xbf16>
    %cst_30 = arith.constant dense<0.000000e+00> : vector<152x32xf32>
    %35 = tpu.matmul %32, %34, %cst_30 {dimension_numbers = #tpu.dot_dimension_numbers<[1], [0], [0], [1], [0, 0, 1, 1], [], []>} : vector<152x24xbf16>, vector<24x32xbf16>, vector<152x32xf32> -> vector<152x32xf32>
    %36 = arith.addf %30, %35 : vector<152x32xf32>
    %c0_31 = arith.constant 0 : index
    %c0_32 = arith.constant 0 : index
    %37 = vector.load %arg3[%c0_31, %c0_32] : memref<1x32xf32, #tpu.memory_space<vmem>>, vector<1x32xf32>
    %38 = vector.broadcast %37 : vector<1x32xf32> to vector<152x32xf32>
    %39 = arith.addf %36, %38 : vector<152x32xf32>
    %cst_33 = arith.constant 0.000000e+00 : f32
    %40 = vector.broadcast %cst_33 : f32 to vector<152x32xf32>
    %41 = arith.maximumf %39, %40 : vector<152x32xf32>
    %42 = arith.truncf %41 : vector<152x32xf32> to vector<152x32xbf16>
    %c0_34 = arith.constant 0 : index
    %c0_35 = arith.constant 0 : index
    %43 = vector.load %arg9[%c0_34, %c0_35] : memref<152x32xbf16, #tpu.memory_space<vmem>>, vector<152x32xbf16>
    tpu.vector_store %arg9[%c0_34, %c0_35], %42 {strides = array<i32>} : memref<152x32xbf16, #tpu.memory_space<vmem>>, vector<152x32xbf16>,
    %cst_36 = arith.constant 0.000000e+00 : f32
    %44 = vector.broadcast %cst_36 : f32 to vector<88x64xf32>
    %c0_37 = arith.constant 0 : index
    %c0_38 = arith.constant 0 : index
    %45 = vector.load %arg9[%c0_37, %c0_38] : memref<152x32xbf16, #tpu.memory_space<vmem>>, vector<88x32xbf16>
    %c0_39 = arith.constant 0 : index
    %c0_40 = arith.constant 0 : index
    %c0_41 = arith.constant 0 : index
    %46 = vector.load %arg4[%c0_39, %c0_40, %c0_41] : memref<25x32x64xbf16, #tpu.memory_space<vmem>>, vector<1x32x64xbf16>
    %47 = vector.shape_cast %46 : vector<1x32x64xbf16> to vector<32x64xbf16>
    %cst_42 = arith.constant dense<0.000000e+00> : vector<88x64xf32>
    %48 = tpu.matmul %45, %47, %cst_42 {dimension_numbers = #tpu.dot_dimension_numbers<[1], [0], [0], [1], [0, 0, 1, 1], [], []>} : vector<88x32xbf16>, vector<32x64xbf16>, vector<88x64xf32> -> vector<88x64xf32>
    %49 = arith.addf %44, %48 : vector<88x64xf32>
    %c1_43 = arith.constant 1 : index
    %c0_44 = arith.constant 0 : index
    %50 = vector.load %arg9[%c1_43, %c0_44] : memref<152x32xbf16, #tpu.memory_space<vmem>>, vector<88x32xbf16>
    %c1_45 = arith.constant 1 : index
    %c0_46 = arith.constant 0 : index
    %c0_47 = arith.constant 0 : index
    %51 = vector.load %arg4[%c1_45, %c0_46, %c0_47] : memref<25x32x64xbf16, #tpu.memory_space<vmem>>, vector<1x32x64xbf16>
    %52 = vector.shape_cast %51 : vector<1x32x64xbf16> to vector<32x64xbf16>
    %cst_48 = arith.constant dense<0.000000e+00> : vector<88x64xf32>
    %53 = tpu.matmul %50, %52, %cst_48 {dimension_numbers = #tpu.dot_dimension_numbers<[1], [0], [0], [1], [0, 0, 1, 1], [], []>} : vector<88x32xbf16>, vector<32x64xbf16>, vector<88x64xf32> -> vector<88x64xf32>
    %54 = arith.addf %49, %53 : vector<88x64xf32>
    %c2_49 = arith.constant 2 : index
    %c0_50 = arith.constant 0 : index
    %55 = vector.load %arg9[%c2_49, %c0_50] : memref<152x32xbf16, #tpu.memory_space<vmem>>, vector<88x32xbf16>
    %c2_51 = arith.constant 2 : index
    %c0_52 = arith.constant 0 : index
    %c0_53 = arith.constant 0 : index
    %56 = vector.load %arg4[%c2_51, %c0_52, %c0_53] : memref<25x32x64xbf16, #tpu.memory_space<vmem>>, vector<1x32x64xbf16>
    %57 = vector.shape_cast %56 : vector<1x32x64xbf16> to vector<32x64xbf16>
    %cst_54 = arith.constant dense<0.000000e+00> : vector<88x64xf32>
    %58 = tpu.matmul %55, %57, %cst_54 {dimension_numbers = #tpu.dot_dimension_numbers<[1], [0], [0], [1], [0, 0, 1, 1], [], []>} : vector<88x32xbf16>, vector<32x64xbf16>, vector<88x64xf32> -> vector<88x64xf32>
    %59 = arith.addf %54, %58 : vector<88x64xf32>
    %c3_55 = arith.constant 3 : index
    %c0_56 = arith.constant 0 : index
    %60 = vector.load %arg9[%c3_55, %c0_56] : memref<152x32xbf16, #tpu.memory_space<vmem>>, vector<88x32xbf16>
    %c3_57 = arith.constant 3 : index
    %c0_58 = arith.constant 0 : index
    %c0_59 = arith.constant 0 : index
    %61 = vector.load %arg4[%c3_57, %c0_58, %c0_59] : memref<25x32x64xbf16, #tpu.memory_space<vmem>>, vector<1x32x64xbf16>
    %62 = vector.shape_cast %61 : vector<1x32x64xbf16> to vector<32x64xbf16>
    %cst_60 = arith.constant dense<0.000000e+00> : vector<88x64xf32>
    %63 = tpu.matmul %60, %62, %cst_60 {dimension_numbers = #tpu.dot_dimension_numbers<[1], [0], [0], [1], [0, 0, 1, 1], [], []>} : vector<88x32xbf16>, vector<32x64xbf16>, vector<88x64xf32> -> vector<88x64xf32>
    %64 = arith.addf %59, %63 : vector<88x64xf32>
    %c4_61 = arith.constant 4 : index
    %c0_62 = arith.constant 0 : index
    %65 = vector.load %arg9[%c4_61, %c0_62] : memref<152x32xbf16, #tpu.memory_space<vmem>>, vector<88x32xbf16>
    %c4_63 = arith.constant 4 : index
    %c0_64 = arith.constant 0 : index
    %c0_65 = arith.constant 0 : index
    %66 = vector.load %arg4[%c4_63, %c0_64, %c0_65] : memref<25x32x64xbf16, #tpu.memory_space<vmem>>, vector<1x32x64xbf16>
    %67 = vector.shape_cast %66 : vector<1x32x64xbf16> to vector<32x64xbf16>
    %cst_66 = arith.constant dense<0.000000e+00> : vector<88x64xf32>
    %68 = tpu.matmul %65, %67, %cst_66 {dimension_numbers = #tpu.dot_dimension_numbers<[1], [0], [0], [1], [0, 0, 1, 1], [], []>} : vector<88x32xbf16>, vector<32x64xbf16>, vector<88x64xf32> -> vector<88x64xf32>
    %69 = arith.addf %64, %68 : vector<88x64xf32>
    %c15_67 = arith.constant 15 : index
    %c0_68 = arith.constant 0 : index
    %70 = vector.load %arg9[%c15_67, %c0_68] : memref<152x32xbf16, #tpu.memory_space<vmem>>, vector<88x32xbf16>
    %c5_69 = arith.constant 5 : index
    %c0_70 = arith.constant 0 : index
    %c0_71 = arith.constant 0 : index
    %71 = vector.load %arg4[%c5_69, %c0_70, %c0_71] : memref<25x32x64xbf16, #tpu.memory_space<vmem>>, vector<1x32x64xbf16>
    %72 = vector.shape_cast %71 : vector<1x32x64xbf16> to vector<32x64xbf16>
    %cst_72 = arith.constant dense<0.000000e+00> : vector<88x64xf32>
    %73 = tpu.matmul %70, %72, %cst_72 {dimension_numbers = #tpu.dot_dimension_numbers<[1], [0], [0], [1], [0, 0, 1, 1], [], []>} : vector<88x32xbf16>, vector<32x64xbf16>, vector<88x64xf32> -> vector<88x64xf32>
    %74 = arith.addf %69, %73 : vector<88x64xf32>
    %c16 = arith.constant 16 : index
    %c0_73 = arith.constant 0 : index
    %75 = vector.load %arg9[%c16, %c0_73] : memref<152x32xbf16, #tpu.memory_space<vmem>>, vector<88x32xbf16>
    %c6 = arith.constant 6 : index
    %c0_74 = arith.constant 0 : index
    %c0_75 = arith.constant 0 : index
    %76 = vector.load %arg4[%c6, %c0_74, %c0_75] : memref<25x32x64xbf16, #tpu.memory_space<vmem>>, vector<1x32x64xbf16>
    %77 = vector.shape_cast %76 : vector<1x32x64xbf16> to vector<32x64xbf16>
    %cst_76 = arith.constant dense<0.000000e+00> : vector<88x64xf32>
    %78 = tpu.matmul %75, %77, %cst_76 {dimension_numbers = #tpu.dot_dimension_numbers<[1], [0], [0], [1], [0, 0, 1, 1], [], []>} : vector<88x32xbf16>, vector<32x64xbf16>, vector<88x64xf32> -> vector<88x64xf32>
    %79 = arith.addf %74, %78 : vector<88x64xf32>
    %c17 = arith.constant 17 : index
    %c0_77 = arith.constant 0 : index
    %80 = vector.load %arg9[%c17, %c0_77] : memref<152x32xbf16, #tpu.memory_space<vmem>>, vector<88x32xbf16>
    %c7 = arith.constant 7 : index
    %c0_78 = arith.constant 0 : index
    %c0_79 = arith.constant 0 : index
    %81 = vector.load %arg4[%c7, %c0_78, %c0_79] : memref<25x32x64xbf16, #tpu.memory_space<vmem>>, vector<1x32x64xbf16>
    %82 = vector.shape_cast %81 : vector<1x32x64xbf16> to vector<32x64xbf16>
    %cst_80 = arith.constant dense<0.000000e+00> : vector<88x64xf32>
    %83 = tpu.matmul %80, %82, %cst_80 {dimension_numbers = #tpu.dot_dimension_numbers<[1], [0], [0], [1], [0, 0, 1, 1], [], []>} : vector<88x32xbf16>, vector<32x64xbf16>, vector<88x64xf32> -> vector<88x64xf32>
    %84 = arith.addf %79, %83 : vector<88x64xf32>
    %c18 = arith.constant 18 : index
    %c0_81 = arith.constant 0 : index
    %85 = vector.load %arg9[%c18, %c0_81] : memref<152x32xbf16, #tpu.memory_space<vmem>>, vector<88x32xbf16>
    %c8 = arith.constant 8 : index
    %c0_82 = arith.constant 0 : index
    %c0_83 = arith.constant 0 : index
    %86 = vector.load %arg4[%c8, %c0_82, %c0_83] : memref<25x32x64xbf16, #tpu.memory_space<vmem>>, vector<1x32x64xbf16>
    %87 = vector.shape_cast %86 : vector<1x32x64xbf16> to vector<32x64xbf16>
    %cst_84 = arith.constant dense<0.000000e+00> : vector<88x64xf32>
    %88 = tpu.matmul %85, %87, %cst_84 {dimension_numbers = #tpu.dot_dimension_numbers<[1], [0], [0], [1], [0, 0, 1, 1], [], []>} : vector<88x32xbf16>, vector<32x64xbf16>, vector<88x64xf32> -> vector<88x64xf32>
    %89 = arith.addf %84, %88 : vector<88x64xf32>
    %c19 = arith.constant 19 : index
    %c0_85 = arith.constant 0 : index
    %90 = vector.load %arg9[%c19, %c0_85] : memref<152x32xbf16, #tpu.memory_space<vmem>>, vector<88x32xbf16>
    %c9 = arith.constant 9 : index
    %c0_86 = arith.constant 0 : index
    %c0_87 = arith.constant 0 : index
    %91 = vector.load %arg4[%c9, %c0_86, %c0_87] : memref<25x32x64xbf16, #tpu.memory_space<vmem>>, vector<1x32x64xbf16>
    %92 = vector.shape_cast %91 : vector<1x32x64xbf16> to vector<32x64xbf16>
    %cst_88 = arith.constant dense<0.000000e+00> : vector<88x64xf32>
    %93 = tpu.matmul %90, %92, %cst_88 {dimension_numbers = #tpu.dot_dimension_numbers<[1], [0], [0], [1], [0, 0, 1, 1], [], []>} : vector<88x32xbf16>, vector<32x64xbf16>, vector<88x64xf32> -> vector<88x64xf32>
    %94 = arith.addf %89, %93 : vector<88x64xf32>
    %c30_89 = arith.constant 30 : index
    %c0_90 = arith.constant 0 : index
    %95 = vector.load %arg9[%c30_89, %c0_90] : memref<152x32xbf16, #tpu.memory_space<vmem>>, vector<88x32xbf16>
    %c10 = arith.constant 10 : index
    %c0_91 = arith.constant 0 : index
    %c0_92 = arith.constant 0 : index
    %96 = vector.load %arg4[%c10, %c0_91, %c0_92] : memref<25x32x64xbf16, #tpu.memory_space<vmem>>, vector<1x32x64xbf16>
    %97 = vector.shape_cast %96 : vector<1x32x64xbf16> to vector<32x64xbf16>
    %cst_93 = arith.constant dense<0.000000e+00> : vector<88x64xf32>
    %98 = tpu.matmul %95, %97, %cst_93 {dimension_numbers = #tpu.dot_dimension_numbers<[1], [0], [0], [1], [0, 0, 1, 1], [], []>} : vector<88x32xbf16>, vector<32x64xbf16>, vector<88x64xf32> -> vector<88x64xf32>
    %99 = arith.addf %94, %98 : vector<88x64xf32>
    %c31 = arith.constant 31 : index
    %c0_94 = arith.constant 0 : index
    %100 = vector.load %arg9[%c31, %c0_94] : memref<152x32xbf16, #tpu.memory_space<vmem>>, vector<88x32xbf16>
    %c11 = arith.constant 11 : index
    %c0_95 = arith.constant 0 : index
    %c0_96 = arith.constant 0 : index
    %101 = vector.load %arg4[%c11, %c0_95, %c0_96] : memref<25x32x64xbf16, #tpu.memory_space<vmem>>, vector<1x32x64xbf16>
    %102 = vector.shape_cast %101 : vector<1x32x64xbf16> to vector<32x64xbf16>
    %cst_97 = arith.constant dense<0.000000e+00> : vector<88x64xf32>
    %103 = tpu.matmul %100, %102, %cst_97 {dimension_numbers = #tpu.dot_dimension_numbers<[1], [0], [0], [1], [0, 0, 1, 1], [], []>} : vector<88x32xbf16>, vector<32x64xbf16>, vector<88x64xf32> -> vector<88x64xf32>
    %104 = arith.addf %99, %103 : vector<88x64xf32>
    %c32 = arith.constant 32 : index
    %c0_98 = arith.constant 0 : index
    %105 = vector.load %arg9[%c32, %c0_98] : memref<152x32xbf16, #tpu.memory_space<vmem>>, vector<88x32xbf16>
    %c12 = arith.constant 12 : index
    %c0_99 = arith.constant 0 : index
    %c0_100 = arith.constant 0 : index
    %106 = vector.load %arg4[%c12, %c0_99, %c0_100] : memref<25x32x64xbf16, #tpu.memory_space<vmem>>, vector<1x32x64xbf16>
    %107 = vector.shape_cast %106 : vector<1x32x64xbf16> to vector<32x64xbf16>
    %cst_101 = arith.constant dense<0.000000e+00> : vector<88x64xf32>
    %108 = tpu.matmul %105, %107, %cst_101 {dimension_numbers = #tpu.dot_dimension_numbers<[1], [0], [0], [1], [0, 0, 1, 1], [], []>} : vector<88x32xbf16>, vector<32x64xbf16>, vector<88x64xf32> -> vector<88x64xf32>
    %109 = arith.addf %104, %108 : vector<88x64xf32>
    %c33 = arith.constant 33 : index
    %c0_102 = arith.constant 0 : index
    %110 = vector.load %arg9[%c33, %c0_102] : memref<152x32xbf16, #tpu.memory_space<vmem>>, vector<88x32xbf16>
    %c13 = arith.constant 13 : index
    %c0_103 = arith.constant 0 : index
    %c0_104 = arith.constant 0 : index
    %111 = vector.load %arg4[%c13, %c0_103, %c0_104] : memref<25x32x64xbf16, #tpu.memory_space<vmem>>, vector<1x32x64xbf16>
    %112 = vector.shape_cast %111 : vector<1x32x64xbf16> to vector<32x64xbf16>
    %cst_105 = arith.constant dense<0.000000e+00> : vector<88x64xf32>
    %113 = tpu.matmul %110, %112, %cst_105 {dimension_numbers = #tpu.dot_dimension_numbers<[1], [0], [0], [1], [0, 0, 1, 1], [], []>} : vector<88x32xbf16>, vector<32x64xbf16>, vector<88x64xf32> -> vector<88x64xf32>
    %114 = arith.addf %109, %113 : vector<88x64xf32>
    %c34 = arith.constant 34 : index
    %c0_106 = arith.constant 0 : index
    %115 = vector.load %arg9[%c34, %c0_106] : memref<152x32xbf16, #tpu.memory_space<vmem>>, vector<88x32xbf16>
    %c14 = arith.constant 14 : index
    %c0_107 = arith.constant 0 : index
    %c0_108 = arith.constant 0 : index
    %116 = vector.load %arg4[%c14, %c0_107, %c0_108] : memref<25x32x64xbf16, #tpu.memory_space<vmem>>, vector<1x32x64xbf16>
    %117 = vector.shape_cast %116 : vector<1x32x64xbf16> to vector<32x64xbf16>
    %cst_109 = arith.constant dense<0.000000e+00> : vector<88x64xf32>
    %118 = tpu.matmul %115, %117, %cst_109 {dimension_numbers = #tpu.dot_dimension_numbers<[1], [0], [0], [1], [0, 0, 1, 1], [], []>} : vector<88x32xbf16>, vector<32x64xbf16>, vector<88x64xf32> -> vector<88x64xf32>
    %119 = arith.addf %114, %118 : vector<88x64xf32>
    %c45_110 = arith.constant 45 : index
    %c0_111 = arith.constant 0 : index
    %120 = vector.load %arg9[%c45_110, %c0_111] : memref<152x32xbf16, #tpu.memory_space<vmem>>, vector<88x32xbf16>
    %c15_112 = arith.constant 15 : index
    %c0_113 = arith.constant 0 : index
    %c0_114 = arith.constant 0 : index
    %121 = vector.load %arg4[%c15_112, %c0_113, %c0_114] : memref<25x32x64xbf16, #tpu.memory_space<vmem>>, vector<1x32x64xbf16>
    %122 = vector.shape_cast %121 : vector<1x32x64xbf16> to vector<32x64xbf16>
    %cst_115 = arith.constant dense<0.000000e+00> : vector<88x64xf32>
    %123 = tpu.matmul %120, %122, %cst_115 {dimension_numbers = #tpu.dot_dimension_numbers<[1], [0], [0], [1], [0, 0, 1, 1], [], []>} : vector<88x32xbf16>, vector<32x64xbf16>, vector<88x64xf32> -> vector<88x64xf32>
    %124 = arith.addf %119, %123 : vector<88x64xf32>
    %c46 = arith.constant 46 : index
    %c0_116 = arith.constant 0 : index
    %125 = vector.load %arg9[%c46, %c0_116] : memref<152x32xbf16, #tpu.memory_space<vmem>>, vector<88x32xbf16>
    %c16_117 = arith.constant 16 : index
    %c0_118 = arith.constant 0 : index
    %c0_119 = arith.constant 0 : index
    %126 = vector.load %arg4[%c16_117, %c0_118, %c0_119] : memref<25x32x64xbf16, #tpu.memory_space<vmem>>, vector<1x32x64xbf16>
    %127 = vector.shape_cast %126 : vector<1x32x64xbf16> to vector<32x64xbf16>
    %cst_120 = arith.constant dense<0.000000e+00> : vector<88x64xf32>
    %128 = tpu.matmul %125, %127, %cst_120 {dimension_numbers = #tpu.dot_dimension_numbers<[1], [0], [0], [1], [0, 0, 1, 1], [], []>} : vector<88x32xbf16>, vector<32x64xbf16>, vector<88x64xf32> -> vector<88x64xf32>
    %129 = arith.addf %124, %128 : vector<88x64xf32>
    %c47 = arith.constant 47 : index
    %c0_121 = arith.constant 0 : index
    %130 = vector.load %arg9[%c47, %c0_121] : memref<152x32xbf16, #tpu.memory_space<vmem>>, vector<88x32xbf16>
    %c17_122 = arith.constant 17 : index
    %c0_123 = arith.constant 0 : index
    %c0_124 = arith.constant 0 : index
    %131 = vector.load %arg4[%c17_122, %c0_123, %c0_124] : memref<25x32x64xbf16, #tpu.memory_space<vmem>>, vector<1x32x64xbf16>
    %132 = vector.shape_cast %131 : vector<1x32x64xbf16> to vector<32x64xbf16>
    %cst_125 = arith.constant dense<0.000000e+00> : vector<88x64xf32>
    %133 = tpu.matmul %130, %132, %cst_125 {dimension_numbers = #tpu.dot_dimension_numbers<[1], [0], [0], [1], [0, 0, 1, 1], [], []>} : vector<88x32xbf16>, vector<32x64xbf16>, vector<88x64xf32> -> vector<88x64xf32>
    %134 = arith.addf %129, %133 : vector<88x64xf32>
    %c48 = arith.constant 48 : index
    %c0_126 = arith.constant 0 : index
    %135 = vector.load %arg9[%c48, %c0_126] : memref<152x32xbf16, #tpu.memory_space<vmem>>, vector<88x32xbf16>
    %c18_127 = arith.constant 18 : index
    %c0_128 = arith.constant 0 : index
    %c0_129 = arith.constant 0 : index
    %136 = vector.load %arg4[%c18_127, %c0_128, %c0_129] : memref<25x32x64xbf16, #tpu.memory_space<vmem>>, vector<1x32x64xbf16>
    %137 = vector.shape_cast %136 : vector<1x32x64xbf16> to vector<32x64xbf16>
    %cst_130 = arith.constant dense<0.000000e+00> : vector<88x64xf32>
    %138 = tpu.matmul %135, %137, %cst_130 {dimension_numbers = #tpu.dot_dimension_numbers<[1], [0], [0], [1], [0, 0, 1, 1], [], []>} : vector<88x32xbf16>, vector<32x64xbf16>, vector<88x64xf32> -> vector<88x64xf32>
    %139 = arith.addf %134, %138 : vector<88x64xf32>
    %c49 = arith.constant 49 : index
    %c0_131 = arith.constant 0 : index
    %140 = vector.load %arg9[%c49, %c0_131] : memref<152x32xbf16, #tpu.memory_space<vmem>>, vector<88x32xbf16>
    %c19_132 = arith.constant 19 : index
    %c0_133 = arith.constant 0 : index
    %c0_134 = arith.constant 0 : index
    %141 = vector.load %arg4[%c19_132, %c0_133, %c0_134] : memref<25x32x64xbf16, #tpu.memory_space<vmem>>, vector<1x32x64xbf16>
    %142 = vector.shape_cast %141 : vector<1x32x64xbf16> to vector<32x64xbf16>
    %cst_135 = arith.constant dense<0.000000e+00> : vector<88x64xf32>
    %143 = tpu.matmul %140, %142, %cst_135 {dimension_numbers = #tpu.dot_dimension_numbers<[1], [0], [0], [1], [0, 0, 1, 1], [], []>} : vector<88x32xbf16>, vector<32x64xbf16>, vector<88x64xf32> -> vector<88x64xf32>
    %144 = arith.addf %139, %143 : vector<88x64xf32>
    %c60_136 = arith.constant 60 : index
    %c0_137 = arith.constant 0 : index
    %145 = vector.load %arg9[%c60_136, %c0_137] : memref<152x32xbf16, #tpu.memory_space<vmem>>, vector<88x32xbf16>
    %c20 = arith.constant 20 : index
    %c0_138 = arith.constant 0 : index
    %c0_139 = arith.constant 0 : index
    %146 = vector.load %arg4[%c20, %c0_138, %c0_139] : memref<25x32x64xbf16, #tpu.memory_space<vmem>>, vector<1x32x64xbf16>
    %147 = vector.shape_cast %146 : vector<1x32x64xbf16> to vector<32x64xbf16>
    %cst_140 = arith.constant dense<0.000000e+00> : vector<88x64xf32>
    %148 = tpu.matmul %145, %147, %cst_140 {dimension_numbers = #tpu.dot_dimension_numbers<[1], [0], [0], [1], [0, 0, 1, 1], [], []>} : vector<88x32xbf16>, vector<32x64xbf16>, vector<88x64xf32> -> vector<88x64xf32>
    %149 = arith.addf %144, %148 : vector<88x64xf32>
    %c61 = arith.constant 61 : index
    %c0_141 = arith.constant 0 : index
    %150 = vector.load %arg9[%c61, %c0_141] : memref<152x32xbf16, #tpu.memory_space<vmem>>, vector<88x32xbf16>
    %c21 = arith.constant 21 : index
    %c0_142 = arith.constant 0 : index
    %c0_143 = arith.constant 0 : index
    %151 = vector.load %arg4[%c21, %c0_142, %c0_143] : memref<25x32x64xbf16, #tpu.memory_space<vmem>>, vector<1x32x64xbf16>
    %152 = vector.shape_cast %151 : vector<1x32x64xbf16> to vector<32x64xbf16>
    %cst_144 = arith.constant dense<0.000000e+00> : vector<88x64xf32>
    %153 = tpu.matmul %150, %152, %cst_144 {dimension_numbers = #tpu.dot_dimension_numbers<[1], [0], [0], [1], [0, 0, 1, 1], [], []>} : vector<88x32xbf16>, vector<32x64xbf16>, vector<88x64xf32> -> vector<88x64xf32>
    %154 = arith.addf %149, %153 : vector<88x64xf32>
    %c62 = arith.constant 62 : index
    %c0_145 = arith.constant 0 : index
    %155 = vector.load %arg9[%c62, %c0_145] : memref<152x32xbf16, #tpu.memory_space<vmem>>, vector<88x32xbf16>
    %c22 = arith.constant 22 : index
    %c0_146 = arith.constant 0 : index
    %c0_147 = arith.constant 0 : index
    %156 = vector.load %arg4[%c22, %c0_146, %c0_147] : memref<25x32x64xbf16, #tpu.memory_space<vmem>>, vector<1x32x64xbf16>
    %157 = vector.shape_cast %156 : vector<1x32x64xbf16> to vector<32x64xbf16>
    %cst_148 = arith.constant dense<0.000000e+00> : vector<88x64xf32>
    %158 = tpu.matmul %155, %157, %cst_148 {dimension_numbers = #tpu.dot_dimension_numbers<[1], [0], [0], [1], [0, 0, 1, 1], [], []>} : vector<88x32xbf16>, vector<32x64xbf16>, vector<88x64xf32> -> vector<88x64xf32>
    %159 = arith.addf %154, %158 : vector<88x64xf32>
    %c63 = arith.constant 63 : index
    %c0_149 = arith.constant 0 : index
    %160 = vector.load %arg9[%c63, %c0_149] : memref<152x32xbf16, #tpu.memory_space<vmem>>, vector<88x32xbf16>
    %c23 = arith.constant 23 : index
    %c0_150 = arith.constant 0 : index
    %c0_151 = arith.constant 0 : index
    %161 = vector.load %arg4[%c23, %c0_150, %c0_151] : memref<25x32x64xbf16, #tpu.memory_space<vmem>>, vector<1x32x64xbf16>
    %162 = vector.shape_cast %161 : vector<1x32x64xbf16> to vector<32x64xbf16>
    %cst_152 = arith.constant dense<0.000000e+00> : vector<88x64xf32>
    %163 = tpu.matmul %160, %162, %cst_152 {dimension_numbers = #tpu.dot_dimension_numbers<[1], [0], [0], [1], [0, 0, 1, 1], [], []>} : vector<88x32xbf16>, vector<32x64xbf16>, vector<88x64xf32> -> vector<88x64xf32>
    %164 = arith.addf %159, %163 : vector<88x64xf32>
    %c64 = arith.constant 64 : index
    %c0_153 = arith.constant 0 : index
    %165 = vector.load %arg9[%c64, %c0_153] : memref<152x32xbf16, #tpu.memory_space<vmem>>, vector<88x32xbf16>
    %c24 = arith.constant 24 : index
    %c0_154 = arith.constant 0 : index
    %c0_155 = arith.constant 0 : index
    %166 = vector.load %arg4[%c24, %c0_154, %c0_155] : memref<25x32x64xbf16, #tpu.memory_space<vmem>>, vector<1x32x64xbf16>
    %167 = vector.shape_cast %166 : vector<1x32x64xbf16> to vector<32x64xbf16>
    %cst_156 = arith.constant dense<0.000000e+00> : vector<88x64xf32>
    %168 = tpu.matmul %165, %167, %cst_156 {dimension_numbers = #tpu.dot_dimension_numbers<[1], [0], [0], [1], [0, 0, 1, 1], [], []>} : vector<88x32xbf16>, vector<32x64xbf16>, vector<88x64xf32> -> vector<88x64xf32>
    %169 = arith.addf %164, %168 : vector<88x64xf32>
    %c0_157 = arith.constant 0 : index
    %c0_158 = arith.constant 0 : index
    %170 = vector.load %arg5[%c0_157, %c0_158] : memref<1x64xf32, #tpu.memory_space<vmem>>, vector<1x64xf32>
    %171 = vector.broadcast %170 : vector<1x64xf32> to vector<88x64xf32>
    %172 = arith.addf %169, %171 : vector<88x64xf32>
    %cst_159 = arith.constant 0.000000e+00 : f32
    %173 = vector.broadcast %cst_159 : f32 to vector<88x64xf32>
    %174 = arith.maximumf %172, %173 : vector<88x64xf32>
    %175 = arith.truncf %174 : vector<88x64xf32> to vector<88x64xbf16>
    %c0_160 = arith.constant 0 : index
    %c0_161 = arith.constant 0 : index
    %176 = vector.load %arg10[%c0_160, %c0_161] : memref<88x64xbf16, #tpu.memory_space<vmem>>, vector<88x64xbf16>
    tpu.vector_store %arg10[%c0_160, %c0_161], %175 {strides = array<i32>} : memref<88x64xbf16, #tpu.memory_space<vmem>>, vector<88x64xbf16>,
    %cst_162 = arith.constant 0.000000e+00 : f32
    %177 = vector.broadcast %cst_162 : f32 to vector<40x128xf32>
    %c0_163 = arith.constant 0 : index
    %c0_164 = arith.constant 0 : index
    %178 = vector.load %arg10[%c0_163, %c0_164] : memref<88x64xbf16, #tpu.memory_space<vmem>>, vector<40x64xbf16>
    %c0_165 = arith.constant 0 : index
    %c0_166 = arith.constant 0 : index
    %c0_167 = arith.constant 0 : index
    %179 = vector.load %arg6[%c0_165, %c0_166, %c0_167] : memref<16x64x128xbf16, #tpu.memory_space<vmem>>, vector<1x64x128xbf16>
    %180 = vector.shape_cast %179 : vector<1x64x128xbf16> to vector<64x128xbf16>
    %cst_168 = arith.constant dense<0.000000e+00> : vector<40x128xf32>
    %181 = tpu.matmul %178, %180, %cst_168 {dimension_numbers = #tpu.dot_dimension_numbers<[1], [0], [0], [1], [0, 0, 1, 1], [], []>} : vector<40x64xbf16>, vector<64x128xbf16>, vector<40x128xf32> -> vector<40x128xf32>
    %182 = arith.addf %177, %181 : vector<40x128xf32>
    %c1_169 = arith.constant 1 : index
    %c0_170 = arith.constant 0 : index
    %183 = vector.load %arg10[%c1_169, %c0_170] : memref<88x64xbf16, #tpu.memory_space<vmem>>, vector<40x64xbf16>
    %c1_171 = arith.constant 1 : index
    %c0_172 = arith.constant 0 : index
    %c0_173 = arith.constant 0 : index
    %184 = vector.load %arg6[%c1_171, %c0_172, %c0_173] : memref<16x64x128xbf16, #tpu.memory_space<vmem>>, vector<1x64x128xbf16>
    %185 = vector.shape_cast %184 : vector<1x64x128xbf16> to vector<64x128xbf16>
    %cst_174 = arith.constant dense<0.000000e+00> : vector<40x128xf32>
    %186 = tpu.matmul %183, %185, %cst_174 {dimension_numbers = #tpu.dot_dimension_numbers<[1], [0], [0], [1], [0, 0, 1, 1], [], []>} : vector<40x64xbf16>, vector<64x128xbf16>, vector<40x128xf32> -> vector<40x128xf32>
    %187 = arith.addf %182, %186 : vector<40x128xf32>
    %c2_175 = arith.constant 2 : index
    %c0_176 = arith.constant 0 : index
    %188 = vector.load %arg10[%c2_175, %c0_176] : memref<88x64xbf16, #tpu.memory_space<vmem>>, vector<40x64xbf16>
    %c2_177 = arith.constant 2 : index
    %c0_178 = arith.constant 0 : index
    %c0_179 = arith.constant 0 : index
    %189 = vector.load %arg6[%c2_177, %c0_178, %c0_179] : memref<16x64x128xbf16, #tpu.memory_space<vmem>>, vector<1x64x128xbf16>
    %190 = vector.shape_cast %189 : vector<1x64x128xbf16> to vector<64x128xbf16>
    %cst_180 = arith.constant dense<0.000000e+00> : vector<40x128xf32>
    %191 = tpu.matmul %188, %190, %cst_180 {dimension_numbers = #tpu.dot_dimension_numbers<[1], [0], [0], [1], [0, 0, 1, 1], [], []>} : vector<40x64xbf16>, vector<64x128xbf16>, vector<40x128xf32> -> vector<40x128xf32>
    %192 = arith.addf %187, %191 : vector<40x128xf32>
    %c3_181 = arith.constant 3 : index
    %c0_182 = arith.constant 0 : index
    %193 = vector.load %arg10[%c3_181, %c0_182] : memref<88x64xbf16, #tpu.memory_space<vmem>>, vector<40x64xbf16>
    %c3_183 = arith.constant 3 : index
    %c0_184 = arith.constant 0 : index
    %c0_185 = arith.constant 0 : index
    %194 = vector.load %arg6[%c3_183, %c0_184, %c0_185] : memref<16x64x128xbf16, #tpu.memory_space<vmem>>, vector<1x64x128xbf16>
    %195 = vector.shape_cast %194 : vector<1x64x128xbf16> to vector<64x128xbf16>
    %cst_186 = arith.constant dense<0.000000e+00> : vector<40x128xf32>
    %196 = tpu.matmul %193, %195, %cst_186 {dimension_numbers = #tpu.dot_dimension_numbers<[1], [0], [0], [1], [0, 0, 1, 1], [], []>} : vector<40x64xbf16>, vector<64x128xbf16>, vector<40x128xf32> -> vector<40x128xf32>
    %197 = arith.addf %192, %196 : vector<40x128xf32>
    %c15_187 = arith.constant 15 : index
    %c0_188 = arith.constant 0 : index
    %198 = vector.load %arg10[%c15_187, %c0_188] : memref<88x64xbf16, #tpu.memory_space<vmem>>, vector<40x64xbf16>
    %c4_189 = arith.constant 4 : index
    %c0_190 = arith.constant 0 : index
    %c0_191 = arith.constant 0 : index
    %199 = vector.load %arg6[%c4_189, %c0_190, %c0_191] : memref<16x64x128xbf16, #tpu.memory_space<vmem>>, vector<1x64x128xbf16>
    %200 = vector.shape_cast %199 : vector<1x64x128xbf16> to vector<64x128xbf16>
    %cst_192 = arith.constant dense<0.000000e+00> : vector<40x128xf32>
    %201 = tpu.matmul %198, %200, %cst_192 {dimension_numbers = #tpu.dot_dimension_numbers<[1], [0], [0], [1], [0, 0, 1, 1], [], []>} : vector<40x64xbf16>, vector<64x128xbf16>, vector<40x128xf32> -> vector<40x128xf32>
    %202 = arith.addf %197, %201 : vector<40x128xf32>
    %c16_193 = arith.constant 16 : index
    %c0_194 = arith.constant 0 : index
    %203 = vector.load %arg10[%c16_193, %c0_194] : memref<88x64xbf16, #tpu.memory_space<vmem>>, vector<40x64xbf16>
    %c5_195 = arith.constant 5 : index
    %c0_196 = arith.constant 0 : index
    %c0_197 = arith.constant 0 : index
    %204 = vector.load %arg6[%c5_195, %c0_196, %c0_197] : memref<16x64x128xbf16, #tpu.memory_space<vmem>>, vector<1x64x128xbf16>
    %205 = vector.shape_cast %204 : vector<1x64x128xbf16> to vector<64x128xbf16>
    %cst_198 = arith.constant dense<0.000000e+00> : vector<40x128xf32>
    %206 = tpu.matmul %203, %205, %cst_198 {dimension_numbers = #tpu.dot_dimension_numbers<[1], [0], [0], [1], [0, 0, 1, 1], [], []>} : vector<40x64xbf16>, vector<64x128xbf16>, vector<40x128xf32> -> vector<40x128xf32>
    %207 = arith.addf %202, %206 : vector<40x128xf32>
    %c17_199 = arith.constant 17 : index
    %c0_200 = arith.constant 0 : index
    %208 = vector.load %arg10[%c17_199, %c0_200] : memref<88x64xbf16, #tpu.memory_space<vmem>>, vector<40x64xbf16>
    %c6_201 = arith.constant 6 : index
    %c0_202 = arith.constant 0 : index
    %c0_203 = arith.constant 0 : index
    %209 = vector.load %arg6[%c6_201, %c0_202, %c0_203] : memref<16x64x128xbf16, #tpu.memory_space<vmem>>, vector<1x64x128xbf16>
    %210 = vector.shape_cast %209 : vector<1x64x128xbf16> to vector<64x128xbf16>
    %cst_204 = arith.constant dense<0.000000e+00> : vector<40x128xf32>
    %211 = tpu.matmul %208, %210, %cst_204 {dimension_numbers = #tpu.dot_dimension_numbers<[1], [0], [0], [1], [0, 0, 1, 1], [], []>} : vector<40x64xbf16>, vector<64x128xbf16>, vector<40x128xf32> -> vector<40x128xf32>
    %212 = arith.addf %207, %211 : vector<40x128xf32>
    %c18_205 = arith.constant 18 : index
    %c0_206 = arith.constant 0 : index
    %213 = vector.load %arg10[%c18_205, %c0_206] : memref<88x64xbf16, #tpu.memory_space<vmem>>, vector<40x64xbf16>
    %c7_207 = arith.constant 7 : index
    %c0_208 = arith.constant 0 : index
    %c0_209 = arith.constant 0 : index
    %214 = vector.load %arg6[%c7_207, %c0_208, %c0_209] : memref<16x64x128xbf16, #tpu.memory_space<vmem>>, vector<1x64x128xbf16>
    %215 = vector.shape_cast %214 : vector<1x64x128xbf16> to vector<64x128xbf16>
    %cst_210 = arith.constant dense<0.000000e+00> : vector<40x128xf32>
    %216 = tpu.matmul %213, %215, %cst_210 {dimension_numbers = #tpu.dot_dimension_numbers<[1], [0], [0], [1], [0, 0, 1, 1], [], []>} : vector<40x64xbf16>, vector<64x128xbf16>, vector<40x128xf32> -> vector<40x128xf32>
    %217 = arith.addf %212, %216 : vector<40x128xf32>
    %c30_211 = arith.constant 30 : index
    %c0_212 = arith.constant 0 : index
    %218 = vector.load %arg10[%c30_211, %c0_212] : memref<88x64xbf16, #tpu.memory_space<vmem>>, vector<40x64xbf16>
    %c8_213 = arith.constant 8 : index
    %c0_214 = arith.constant 0 : index
    %c0_215 = arith.constant 0 : index
    %219 = vector.load %arg6[%c8_213, %c0_214, %c0_215] : memref<16x64x128xbf16, #tpu.memory_space<vmem>>, vector<1x64x128xbf16>
    %220 = vector.shape_cast %219 : vector<1x64x128xbf16> to vector<64x128xbf16>
    %cst_216 = arith.constant dense<0.000000e+00> : vector<40x128xf32>
    %221 = tpu.matmul %218, %220, %cst_216 {dimension_numbers = #tpu.dot_dimension_numbers<[1], [0], [0], [1], [0, 0, 1, 1], [], []>} : vector<40x64xbf16>, vector<64x128xbf16>, vector<40x128xf32> -> vector<40x128xf32>
    %222 = arith.addf %217, %221 : vector<40x128xf32>
    %c31_217 = arith.constant 31 : index
    %c0_218 = arith.constant 0 : index
    %223 = vector.load %arg10[%c31_217, %c0_218] : memref<88x64xbf16, #tpu.memory_space<vmem>>, vector<40x64xbf16>
    %c9_219 = arith.constant 9 : index
    %c0_220 = arith.constant 0 : index
    %c0_221 = arith.constant 0 : index
    %224 = vector.load %arg6[%c9_219, %c0_220, %c0_221] : memref<16x64x128xbf16, #tpu.memory_space<vmem>>, vector<1x64x128xbf16>
    %225 = vector.shape_cast %224 : vector<1x64x128xbf16> to vector<64x128xbf16>
    %cst_222 = arith.constant dense<0.000000e+00> : vector<40x128xf32>
    %226 = tpu.matmul %223, %225, %cst_222 {dimension_numbers = #tpu.dot_dimension_numbers<[1], [0], [0], [1], [0, 0, 1, 1], [], []>} : vector<40x64xbf16>, vector<64x128xbf16>, vector<40x128xf32> -> vector<40x128xf32>
    %227 = arith.addf %222, %226 : vector<40x128xf32>
    %c32_223 = arith.constant 32 : index
    %c0_224 = arith.constant 0 : index
    %228 = vector.load %arg10[%c32_223, %c0_224] : memref<88x64xbf16, #tpu.memory_space<vmem>>, vector<40x64xbf16>
    %c10_225 = arith.constant 10 : index
    %c0_226 = arith.constant 0 : index
    %c0_227 = arith.constant 0 : index
    %229 = vector.load %arg6[%c10_225, %c0_226, %c0_227] : memref<16x64x128xbf16, #tpu.memory_space<vmem>>, vector<1x64x128xbf16>
    %230 = vector.shape_cast %229 : vector<1x64x128xbf16> to vector<64x128xbf16>
    %cst_228 = arith.constant dense<0.000000e+00> : vector<40x128xf32>
    %231 = tpu.matmul %228, %230, %cst_228 {dimension_numbers = #tpu.dot_dimension_numbers<[1], [0], [0], [1], [0, 0, 1, 1], [], []>} : vector<40x64xbf16>, vector<64x128xbf16>, vector<40x128xf32> -> vector<40x128xf32>
    %232 = arith.addf %227, %231 : vector<40x128xf32>
    %c33_229 = arith.constant 33 : index
    %c0_230 = arith.constant 0 : index
    %233 = vector.load %arg10[%c33_229, %c0_230] : memref<88x64xbf16, #tpu.memory_space<vmem>>, vector<40x64xbf16>
    %c11_231 = arith.constant 11 : index
    %c0_232 = arith.constant 0 : index
    %c0_233 = arith.constant 0 : index
    %234 = vector.load %arg6[%c11_231, %c0_232, %c0_233] : memref<16x64x128xbf16, #tpu.memory_space<vmem>>, vector<1x64x128xbf16>
    %235 = vector.shape_cast %234 : vector<1x64x128xbf16> to vector<64x128xbf16>
    %cst_234 = arith.constant dense<0.000000e+00> : vector<40x128xf32>
    %236 = tpu.matmul %233, %235, %cst_234 {dimension_numbers = #tpu.dot_dimension_numbers<[1], [0], [0], [1], [0, 0, 1, 1], [], []>} : vector<40x64xbf16>, vector<64x128xbf16>, vector<40x128xf32> -> vector<40x128xf32>
    %237 = arith.addf %232, %236 : vector<40x128xf32>
    %c45_235 = arith.constant 45 : index
    %c0_236 = arith.constant 0 : index
    %238 = vector.load %arg10[%c45_235, %c0_236] : memref<88x64xbf16, #tpu.memory_space<vmem>>, vector<40x64xbf16>
    %c12_237 = arith.constant 12 : index
    %c0_238 = arith.constant 0 : index
    %c0_239 = arith.constant 0 : index
    %239 = vector.load %arg6[%c12_237, %c0_238, %c0_239] : memref<16x64x128xbf16, #tpu.memory_space<vmem>>, vector<1x64x128xbf16>
    %240 = vector.shape_cast %239 : vector<1x64x128xbf16> to vector<64x128xbf16>
    %cst_240 = arith.constant dense<0.000000e+00> : vector<40x128xf32>
    %241 = tpu.matmul %238, %240, %cst_240 {dimension_numbers = #tpu.dot_dimension_numbers<[1], [0], [0], [1], [0, 0, 1, 1], [], []>} : vector<40x64xbf16>, vector<64x128xbf16>, vector<40x128xf32> -> vector<40x128xf32>
    %242 = arith.addf %237, %241 : vector<40x128xf32>
    %c46_241 = arith.constant 46 : index
    %c0_242 = arith.constant 0 : index
    %243 = vector.load %arg10[%c46_241, %c0_242] : memref<88x64xbf16, #tpu.memory_space<vmem>>, vector<40x64xbf16>
    %c13_243 = arith.constant 13 : index
    %c0_244 = arith.constant 0 : index
    %c0_245 = arith.constant 0 : index
    %244 = vector.load %arg6[%c13_243, %c0_244, %c0_245] : memref<16x64x128xbf16, #tpu.memory_space<vmem>>, vector<1x64x128xbf16>
    %245 = vector.shape_cast %244 : vector<1x64x128xbf16> to vector<64x128xbf16>
    %cst_246 = arith.constant dense<0.000000e+00> : vector<40x128xf32>
    %246 = tpu.matmul %243, %245, %cst_246 {dimension_numbers = #tpu.dot_dimension_numbers<[1], [0], [0], [1], [0, 0, 1, 1], [], []>} : vector<40x64xbf16>, vector<64x128xbf16>, vector<40x128xf32> -> vector<40x128xf32>
    %247 = arith.addf %242, %246 : vector<40x128xf32>
    %c47_247 = arith.constant 47 : index
    %c0_248 = arith.constant 0 : index
    %248 = vector.load %arg10[%c47_247, %c0_248] : memref<88x64xbf16, #tpu.memory_space<vmem>>, vector<40x64xbf16>
    %c14_249 = arith.constant 14 : index
    %c0_250 = arith.constant 0 : index
    %c0_251 = arith.constant 0 : index
    %249 = vector.load %arg6[%c14_249, %c0_250, %c0_251] : memref<16x64x128xbf16, #tpu.memory_space<vmem>>, vector<1x64x128xbf16>
    %250 = vector.shape_cast %249 : vector<1x64x128xbf16> to vector<64x128xbf16>
    %cst_252 = arith.constant dense<0.000000e+00> : vector<40x128xf32>
    %251 = tpu.matmul %248, %250, %cst_252 {dimension_numbers = #tpu.dot_dimension_numbers<[1], [0], [0], [1], [0, 0, 1, 1], [], []>} : vector<40x64xbf16>, vector<64x128xbf16>, vector<40x128xf32> -> vector<40x128xf32>
    %252 = arith.addf %247, %251 : vector<40x128xf32>
    %c48_253 = arith.constant 48 : index
    %c0_254 = arith.constant 0 : index
    %253 = vector.load %arg10[%c48_253, %c0_254] : memref<88x64xbf16, #tpu.memory_space<vmem>>, vector<40x64xbf16>
    %c15_255 = arith.constant 15 : index
    %c0_256 = arith.constant 0 : index
    %c0_257 = arith.constant 0 : index
    %254 = vector.load %arg6[%c15_255, %c0_256, %c0_257] : memref<16x64x128xbf16, #tpu.memory_space<vmem>>, vector<1x64x128xbf16>
    %255 = vector.shape_cast %254 : vector<1x64x128xbf16> to vector<64x128xbf16>
    %cst_258 = arith.constant dense<0.000000e+00> : vector<40x128xf32>
    %256 = tpu.matmul %253, %255, %cst_258 {dimension_numbers = #tpu.dot_dimension_numbers<[1], [0], [0], [1], [0, 0, 1, 1], [], []>} : vector<40x64xbf16>, vector<64x128xbf16>, vector<40x128xf32> -> vector<40x128xf32>
    %257 = arith.addf %252, %256 : vector<40x128xf32>
    %c0_259 = arith.constant 0 : index
    %c0_260 = arith.constant 0 : index
    %258 = vector.load %arg7[%c0_259, %c0_260] : memref<1x128xf32, #tpu.memory_space<vmem>>, vector<1x128xf32>
    %259 = vector.broadcast %258 : vector<1x128xf32> to vector<40x128xf32>
    %260 = arith.addf %257, %259 : vector<40x128xf32>
    %cst_261 = arith.constant 0.000000e+00 : f32
    %261 = vector.broadcast %cst_261 : f32 to vector<40x128xf32>
    %262 = arith.maximumf %260, %261 : vector<40x128xf32>
    %263 = arith.truncf %262 : vector<40x128xf32> to vector<40x128xbf16>
    %264 = vector.extract_strided_slice %263 {offsets = [0, 0], sizes = [3, 128], strides = [1, 1]} : vector<40x128xbf16> to vector<3x128xbf16>
    %c0_262 = arith.constant 0 : index
    %c0_263 = arith.constant 0 : index
    %c0_264 = arith.constant 0 : index
    %265 = vector.load %arg8[%c0_262, %c0_263, %c0_264] : memref<1x9x128xbf16, #tpu.memory_space<vmem>>, vector<1x3x128xbf16>
    %266 = vector.shape_cast %265 : vector<1x3x128xbf16> to vector<3x128xbf16>
    %267 = vector.shape_cast %264 : vector<3x128xbf16> to vector<1x3x128xbf16>
    tpu.vector_store %arg8[%c0_262, %c0_263, %c0_264], %267 {strides = array<i32>} : memref<1x9x128xbf16, #tpu.memory_space<vmem>>, vector<1x3x128xbf16>,
    %268 = vector.extract_strided_slice %263 {offsets = [15, 0], sizes = [3, 128], strides = [1, 1]} : vector<40x128xbf16> to vector<3x128xbf16>
    %c0_265 = arith.constant 0 : index
    %c3_266 = arith.constant 3 : index
    %c0_267 = arith.constant 0 : index
    %269 = vector.load %arg8[%c0_265, %c3_266, %c0_267] : memref<1x9x128xbf16, #tpu.memory_space<vmem>>, vector<1x3x128xbf16>
    %270 = vector.shape_cast %269 : vector<1x3x128xbf16> to vector<3x128xbf16>
    %271 = vector.shape_cast %268 : vector<3x128xbf16> to vector<1x3x128xbf16>
    tpu.vector_store %arg8[%c0_265, %c3_266, %c0_267], %271 {strides = array<i32>} : memref<1x9x128xbf16, #tpu.memory_space<vmem>>, vector<1x3x128xbf16>,
    %272 = vector.extract_strided_slice %263 {offsets = [30, 0], sizes = [3, 128], strides = [1, 1]} : vector<40x128xbf16> to vector<3x128xbf16>
    %c0_268 = arith.constant 0 : index
    %c6_269 = arith.constant 6 : index
    %c0_270 = arith.constant 0 : index
    %273 = vector.load %arg8[%c0_268, %c6_269, %c0_270] : memref<1x9x128xbf16, #tpu.memory_space<vmem>>, vector<1x3x128xbf16>
    %274 = vector.shape_cast %273 : vector<1x3x128xbf16> to vector<3x128xbf16>
    %275 = vector.shape_cast %272 : vector<3x128xbf16> to vector<1x3x128xbf16>
    tpu.vector_store %arg8[%c0_268, %c6_269, %c0_270], %275 {strides = array<i32>} : memref<1x9x128xbf16, #tpu.memory_space<vmem>>, vector<1x3x128xbf16>,
    return
  }
  func.func @transform_0(%arg0: i32) -> (i32, i32, i32) {
    %c0_i32 = arith.constant 0 : i32
    %c0_i32_0 = arith.constant 0 : i32
    %c0_i32_1 = arith.constant 0 : i32
    return %arg0, %c0_i32, %c0_i32_0 : i32, i32, i32
  }
  func.func @transform_1(%arg0: i32) -> (i32, i32, i32) {
    %c0_i32 = arith.constant 0 : i32
    %c0_i32_0 = arith.constant 0 : i32
    %c0_i32_1 = arith.constant 0 : i32
    %c0_i32_2 = arith.constant 0 : i32
    return %c0_i32, %c0_i32_0, %c0_i32_1 : i32, i32, i32
  }
  func.func @transform_2(%arg0: i32) -> (i32, i32) {
    %c0_i32 = arith.constant 0 : i32
    %c0_i32_0 = arith.constant 0 : i32
    %c0_i32_1 = arith.constant 0 : i32
    return %c0_i32, %c0_i32_0 : i32, i32
  }
  func.func @transform_3(%arg0: i32) -> (i32, i32, i32) {
    %c0_i32 = arith.constant 0 : i32
    %c0_i32_0 = arith.constant 0 : i32
    %c0_i32_1 = arith.constant 0 : i32
    %c0_i32_2 = arith.constant 0 : i32
    return %c0_i32, %c0_i32_0, %c0_i32_1 : i32, i32, i32
  }
  func.func @transform_4(%arg0: i32) -> (i32, i32) {
    %c0_i32 = arith.constant 0 : i32
    %c0_i32_0 = arith.constant 0 : i32
    %c0_i32_1 = arith.constant 0 : i32
    return %c0_i32, %c0_i32_0 : i32, i32
  }
  func.func @transform_5(%arg0: i32) -> (i32, i32, i32) {
    %c0_i32 = arith.constant 0 : i32
    %c0_i32_0 = arith.constant 0 : i32
    %c0_i32_1 = arith.constant 0 : i32
    %c0_i32_2 = arith.constant 0 : i32
    return %c0_i32, %c0_i32_0, %c0_i32_1 : i32, i32, i32
  }
  func.func @transform_6(%arg0: i32) -> (i32, i32) {
    %c0_i32 = arith.constant 0 : i32
    %c0_i32_0 = arith.constant 0 : i32
    %c0_i32_1 = arith.constant 0 : i32
    return %c0_i32, %c0_i32_0 : i32, i32
  }
  func.func @transform_7(%arg0: i32) -> (i32, i32, i32) {
    %c0_i32 = arith.constant 0 : i32
    %c0_i32_0 = arith.constant 0 : i32
    %c0_i32_1 = arith.constant 0 : i32
    return %arg0, %c0_i32, %c0_i32_0 : i32, i32, i32
  }
}

</mosaic_0001>

<llo_original>
// kernel: net_forward.3
$region0: #{net_forward.3}
  #allocation0 [shape = 'u32[]', space=smem, size = 0x4, offset = 0x4, fixed_abs, tag = 'smem constant byte address 0x4 - core index']
  #allocation1 [shape = 'u32[144,128]{1,0:T(1,128)}', space=vmem, size = 0x12000, scoped, tag = 'internal scratch']
  %s0 = inlined_call_operand.vmem [shape: bf16[8,1152], index: 0, kind: input, shape index: {}]
  %s1 = inlined_call_operand.vmem [shape: bf16[1152,512], index: 1, kind: input, shape index: {}]
  %s2 = inlined_call_operand.vmem [shape: f32[1,512], index: 2, kind: input, shape index: {}]
  %s3 = inlined_call_operand.vmem [shape: bf16[512,128], index: 3, kind: input, shape index: {}]
  %s4 = inlined_call_operand.vmem [shape: f32[1,128], index: 4, kind: input, shape index: {}]
  %s5 = inlined_call_operand.vmem [shape: bf16[128,128], index: 5, kind: input, shape index: {}]
  %s6 = inlined_call_operand.vmem [shape: f32[1,128], index: 6, kind: input, shape index: {}]
  %s7 = inlined_call_operand.vmem [shape: f32[8,128], index: 7, kind: output, shape index: {}]
  %s8 = sld [smem:[#allocation0]]
  $region38: #{net_forward.3} parent=0
    _
  %s10 = ssub.s32 1, %s8
  %s11 = scalar_select 0, %s10, %s8
  // Predicated region
  $region2: #{net_forward.3} parent=0 // pred_check
    _
  $region3: #{net_forward.3} parent=0 // pred_check_branch
    %13 = sbr.rel (0) target = $region5
  $region4: #{net_forward.3} parent=0 // pred_region
    _
  $region5: #{net_forward.3} parent=0 // pred_fallthru
    _
  // Predicated region
  $region6: #{net_forward.3} parent=0 // pred_check
    _
  $region7: #{net_forward.3} parent=0 // pred_check_branch
    %15 = sbr.rel (0) target = $region9
  $region8: #{net_forward.3} parent=0 // pred_region
    _
  $region9: #{net_forward.3} parent=0 // pred_fallthru
    _
  // Predicated region
  $region10: #{net_forward.3} parent=0 // pred_check
    _
  $region11: #{net_forward.3} parent=0 // pred_check_branch
    %17 = sbr.rel (0) target = $region13
  $region12: #{net_forward.3} parent=0 // pred_region
    _
  $region13: #{net_forward.3} parent=0 // pred_fallthru
    _
  // Predicated region
  $region14: #{net_forward.3} parent=0 // pred_check
    _
  $region15: #{net_forward.3} parent=0 // pred_check_branch
    %19 = sbr.rel (0) target = $region17
  $region16: #{net_forward.3} parent=0 // pred_region
    _
  $region17: #{net_forward.3} parent=0 // pred_fallthru
    _
  // Predicated region
  $region18: #{net_forward.3} parent=0 // pred_check
    _
  $region19: #{net_forward.3} parent=0 // pred_check_branch
    %21 = sbr.rel (0) target = $region21
  $region20: #{net_forward.3} parent=0 // pred_region
    _
  $region21: #{net_forward.3} parent=0 // pred_fallthru
    _
  // Predicated region
  $region22: #{net_forward.3} parent=0 // pred_check
    _
  $region23: #{net_forward.3} parent=0 // pred_check_branch
    %23 = sbr.rel (0) target = $region25
  $region24: #{net_forward.3} parent=0 // pred_region
    _
  $region25: #{net_forward.3} parent=0 // pred_fallthru
    _
  // Predicated region
  $region26: #{net_forward.3} parent=0 // pred_check
    _
  $region27: #{net_forward.3} parent=0 // pred_check_branch
    %25 = sbr.rel (0) target = $region29
  $region28: #{net_forward.3} parent=0 // pred_region
    _
  $region29: #{net_forward.3} parent=0 // pred_fallthru
    _
  %v27 = vld [vmem:[%s0] sm:$0xff]
  %v28 = vld [vmem:[%s0 + $0x8] sm:$0xff]
  %v29 = vld [vmem:[%s0 + $0x10] sm:$0xff]
  %v30 = vld [vmem:[%s0 + $0x18] sm:$0xff]
  %v31 = vld [vmem:[%s0 + $0x20] sm:$0xf]
  %v32 = vld [vmem:[%s1] sm:$0xff]
  %v33 = vld [vmem:[%s1 + $0x8] sm:$0xff]
  %v34 = vld [vmem:[%s1 + $0x10] sm:$0xff]
  %v35 = vld [vmem:[%s1 + $0x18] sm:$0xff]
  %v36 = vld [vmem:[%s1 + $0x20] sm:$0xff]
  %v37 = vld [vmem:[%s1 + $0x28] sm:$0xff]
  %v38 = vld [vmem:[%s1 + $0x30] sm:$0xff]
  %v39 = vld [vmem:[%s1 + $0x38] sm:$0xff]
  %v40 = vld [vmem:[%s1 + $0x40] sm:$0xff]
  %v41 = vld [vmem:[%s1 + $0x48] sm:$0xff]
  %v42 = vld [vmem:[%s1 + $0x50] sm:$0xff]
  %v43 = vld [vmem:[%s1 + $0x58] sm:$0xff]
  %v44 = vld [vmem:[%s1 + $0x60] sm:$0xff]
  %v45 = vld [vmem:[%s1 + $0x68] sm:$0xff]
  %v46 = vld [vmem:[%s1 + $0x70] sm:$0xff]
  %v47 = vld [vmem:[%s1 + $0x78] sm:$0xff]
  %v48 = vld [vmem:[%s1 + $0x80] sm:$0xff]
  %v49 = vld [vmem:[%s1 + $0x88] sm:$0xff]
  %v50 = vld [vmem:[%s1 + $0x90] sm:$0xff]
  %v51 = vld [vmem:[%s1 + $0x98] sm:$0xff]
  %v52 = vld [vmem:[%s1 + $0xa0] sm:$0xff]
  %v53 = vld [vmem:[%s1 + $0xa8] sm:$0xff]
  %v54 = vld [vmem:[%s1 + $0xb0] sm:$0xff]
  %v55 = vld [vmem:[%s1 + $0xb8] sm:$0xff]
  %v56 = vld [vmem:[%s1 + $0xc0] sm:$0xff]
  %v57 = vld [vmem:[%s1 + $0xc8] sm:$0xff]
  %v58 = vld [vmem:[%s1 + $0xd0] sm:$0xff]
  %v59 = vld [vmem:[%s1 + $0xd8] sm:$0xff]
  %v60 = vld [vmem:[%s1 + $0xe0] sm:$0xff]
  %v61 = vld [vmem:[%s1 + $0xe8] sm:$0xff]
  %v62 = vld [vmem:[%s1 + $0xf0] sm:$0xff]
  %v63 = vld [vmem:[%s1 + $0xf8] sm:$0xff]
  %v64 = vld [vmem:[%s1 + $0x100] sm:$0xff]
  %v65 = vld [vmem:[%s1 + $0x108] sm:$0xff]
  %v66 = vld [vmem:[%s1 + $0x110] sm:$0xff]
  %v67 = vld [vmem:[%s1 + $0x118] sm:$0xff]
  %v68 = vld [vmem:[%s1 + $0x120] sm:$0xff]
  %v69 = vld [vmem:[%s1 + $0x128] sm:$0xff]
  %v70 = vld [vmem:[%s1 + $0x130] sm:$0xff]
  %v71 = vld [vmem:[%s1 + $0x138] sm:$0xff]
  %v72 = vld [vmem:[%s1 + $0x140] sm:$0xff]
  %v73 = vld [vmem:[%s1 + $0x148] sm:$0xff]
  %v74 = vld [vmem:[%s1 + $0x150] sm:$0xff]
  %v75 = vld [vmem:[%s1 + $0x158] sm:$0xff]
  %v76 = vld [vmem:[%s1 + $0x160] sm:$0xff]
  %v77 = vld [vmem:[%s1 + $0x168] sm:$0xff]
  %v78 = vld [vmem:[%s1 + $0x170] sm:$0xff]
  %v79 = vld [vmem:[%s1 + $0x178] sm:$0xff]
  %v80 = vld [vmem:[%s1 + $0x180] sm:$0xff]
  %v81 = vld [vmem:[%s1 + $0x188] sm:$0xff]
  %v82 = vld [vmem:[%s1 + $0x190] sm:$0xff]
  %v83 = vld [vmem:[%s1 + $0x198] sm:$0xff]
  %v84 = vld [vmem:[%s1 + $0x1a0] sm:$0xff]
  %v85 = vld [vmem:[%s1 + $0x1a8] sm:$0xff]
  %v86 = vld [vmem:[%s1 + $0x1b0] sm:$0xff]
  %v87 = vld [vmem:[%s1 + $0x1b8] sm:$0xff]
  %v88 = vld [vmem:[%s1 + $0x1c0] sm:$0xff]
  %v89 = vld [vmem:[%s1 + $0x1c8] sm:$0xff]
  %v90 = vld [vmem:[%s1 + $0x1d0] sm:$0xff]
  %v91 = vld [vmem:[%s1 + $0x1d8] sm:$0xff]
  %v92 = vld [vmem:[%s1 + $0x1e0] sm:$0xff]
  %v93 = vld [vmem:[%s1 + $0x1e8] sm:$0xff]
  %v94 = vld [vmem:[%s1 + $0x1f0] sm:$0xff]
  %v95 = vld [vmem:[%s1 + $0x1f8] sm:$0xff]
  %v96 = vld [vmem:[%s1 + $0x200] sm:$0xff]
  %v97 = vld [vmem:[%s1 + $0x208] sm:$0xff]
  %v98 = vld [vmem:[%s1 + $0x210] sm:$0xff]
  %v99 = vld [vmem:[%s1 + $0x218] sm:$0xff]
  %v100 = vld [vmem:[%s1 + $0x220] sm:$0xff]
  %v101 = vld [vmem:[%s1 + $0x228] sm:$0xff]
  %v102 = vld [vmem:[%s1 + $0x230] sm:$0xff]
  %v103 = vld [vmem:[%s1 + $0x238] sm:$0xff]
  %v104 = vld [vmem:[%s1 + $0x240] sm:$0xff]
  %v105 = vld [vmem:[%s1 + $0x248] sm:$0xff]
  %v106 = vld [vmem:[%s1 + $0x250] sm:$0xff]
  %v107 = vld [vmem:[%s1 + $0x258] sm:$0xff]
  %v108 = vld [vmem:[%s1 + $0x260] sm:$0xff]
  %v109 = vld [vmem:[%s1 + $0x268] sm:$0xff]
  %v110 = vld [vmem:[%s1 + $0x270] sm:$0xff]
  %v111 = vld [vmem:[%s1 + $0x278] sm:$0xff]
  %v112 = vld [vmem:[%s1 + $0x280] sm:$0xff]
  %v113 = vld [vmem:[%s1 + $0x288] sm:$0xff]
  %v114 = vld [vmem:[%s1 + $0x290] sm:$0xff]
  %v115 = vld [vmem:[%s1 + $0x298] sm:$0xff]
  %v116 = vld [vmem:[%s1 + $0x2a0] sm:$0xff]
  %v117 = vld [vmem:[%s1 + $0x2a8] sm:$0xff]
  %v118 = vld [vmem:[%s1 + $0x2b0] sm:$0xff]
  %v119 = vld [vmem:[%s1 + $0x2b8] sm:$0xff]
  %v120 = vld [vmem:[%s1 + $0x2c0] sm:$0xff]
  %v121 = vld [vmem:[%s1 + $0x2c8] sm:$0xff]
  %v122 = vld [vmem:[%s1 + $0x2d0] sm:$0xff]
  %v123 = vld [vmem:[%s1 + $0x2d8] sm:$0xff]
  %v124 = vld [vmem:[%s1 + $0x2e0] sm:$0xff]
  %v125 = vld [vmem:[%s1 + $0x2e8] sm:$0xff]
  %v126 = vld [vmem:[%s1 + $0x2f0] sm:$0xff]
  %v127 = vld [vmem:[%s1 + $0x2f8] sm:$0xff]
  %v128 = vld [vmem:[%s1 + $0x300] sm:$0xff]
  %v129 = vld [vmem:[%s1 + $0x308] sm:$0xff]
  %v130 = vld [vmem:[%s1 + $0x310] sm:$0xff]
  %v131 = vld [vmem:[%s1 + $0x318] sm:$0xff]
  %v132 = vld [vmem:[%s1 + $0x320] sm:$0xff]
  %v133 = vld [vmem:[%s1 + $0x328] sm:$0xff]
  %v134 = vld [vmem:[%s1 + $0x330] sm:$0xff]
  %v135 = vld [vmem:[%s1 + $0x338] sm:$0xff]
  %v136 = vld [vmem:[%s1 + $0x340] sm:$0xff]
  %v137 = vld [vmem:[%s1 + $0x348] sm:$0xff]
  %v138 = vld [vmem:[%s1 + $0x350] sm:$0xff]
  %v139 = vld [vmem:[%s1 + $0x358] sm:$0xff]
  %v140 = vld [vmem:[%s1 + $0x360] sm:$0xff]
  %v141 = vld [vmem:[%s1 + $0x368] sm:$0xff]
  %v142 = vld [vmem:[%s1 + $0x370] sm:$0xff]
  %v143 = vld [vmem:[%s1 + $0x378] sm:$0xff]
  %v144 = vld [vmem:[%s1 + $0x380] sm:$0xff]
  %v145 = vld [vmem:[%s1 + $0x388] sm:$0xff]
  %v146 = vld [vmem:[%s1 + $0x390] sm:$0xff]
  %v147 = vld [vmem:[%s1 + $0x398] sm:$0xff]
  %v148 = vld [vmem:[%s1 + $0x3a0] sm:$0xff]
  %v149 = vld [vmem:[%s1 + $0x3a8] sm:$0xff]
  %v150 = vld [vmem:[%s1 + $0x3b0] sm:$0xff]
  %v151 = vld [vmem:[%s1 + $0x3b8] sm:$0xff]
  %v152 = vld [vmem:[%s1 + $0x3c0] sm:$0xff]
  %v153 = vld [vmem:[%s1 + $0x3c8] sm:$0xff]
  %v154 = vld [vmem:[%s1 + $0x3d0] sm:$0xff]
  %v155 = vld [vmem:[%s1 + $0x3d8] sm:$0xff]
  %v156 = vld [vmem:[%s1 + $0x3e0] sm:$0xff]
  %v157 = vld [vmem:[%s1 + $0x3e8] sm:$0xff]
  %v158 = vld [vmem:[%s1 + $0x3f0] sm:$0xff]
  %v159 = vld [vmem:[%s1 + $0x3f8] sm:$0xff]
  %v160 = vld [vmem:[%s1 + $0x400] sm:$0xff]
  %v161 = vld [vmem:[%s1 + $0x408] sm:$0xff]
  %v162 = vld [vmem:[%s1 + $0x410] sm:$0xff]
  %v163 = vld [vmem:[%s1 + $0x418] sm:$0xff]
  %v164 = vld [vmem:[%s1 + $0x420] sm:$0xff]
  %v165 = vld [vmem:[%s1 + $0x428] sm:$0xff]
  %v166 = vld [vmem:[%s1 + $0x430] sm:$0xff]
  %v167 = vld [vmem:[%s1 + $0x438] sm:$0xff]
  %v168 = vld [vmem:[%s1 + $0x440] sm:$0xff]
  %v169 = vld [vmem:[%s1 + $0x448] sm:$0xff]
  %v170 = vld [vmem:[%s1 + $0x450] sm:$0xff]
  %v171 = vld [vmem:[%s1 + $0x458] sm:$0xff]
  %v172 = vld [vmem:[%s1 + $0x460] sm:$0xff]
  %v173 = vld [vmem:[%s1 + $0x468] sm:$0xff]
  %v174 = vld [vmem:[%s1 + $0x470] sm:$0xff]
  %v175 = vld [vmem:[%s1 + $0x478] sm:$0xff]
  %v176 = vld [vmem:[%s1 + $0x480] sm:$0xff]
  %v177 = vld [vmem:[%s1 + $0x488] sm:$0xff]
  %v178 = vld [vmem:[%s1 + $0x490] sm:$0xff]
  %v179 = vld [vmem:[%s1 + $0x498] sm:$0xff]
  %v180 = vld [vmem:[%s1 + $0x4a0] sm:$0xff]
  %v181 = vld [vmem:[%s1 + $0x4a8] sm:$0xff]
  %v182 = vld [vmem:[%s1 + $0x4b0] sm:$0xff]
  %v183 = vld [vmem:[%s1 + $0x4b8] sm:$0xff]
  %v184 = vld [vmem:[%s1 + $0x4c0] sm:$0xff]
  %v185 = vld [vmem:[%s1 + $0x4c8] sm:$0xff]
  %v186 = vld [vmem:[%s1 + $0x4d0] sm:$0xff]
  %v187 = vld [vmem:[%s1 + $0x4d8] sm:$0xff]
  %v188 = vld [vmem:[%s1 + $0x4e0] sm:$0xff]
  %v189 = vld [vmem:[%s1 + $0x4e8] sm:$0xff]
  %v190 = vld [vmem:[%s1 + $0x4f0] sm:$0xff]
  %v191 = vld [vmem:[%s1 + $0x4f8] sm:$0xff]
  %v192 = vld [vmem:[%s1 + $0x500] sm:$0xff]
  %v193 = vld [vmem:[%s1 + $0x508] sm:$0xff]
  %v194 = vld [vmem:[%s1 + $0x510] sm:$0xff]
  %v195 = vld [vmem:[%s1 + $0x518] sm:$0xff]
  %v196 = vld [vmem:[%s1 + $0x520] sm:$0xff]
  %v197 = vld [vmem:[%s1 + $0x528] sm:$0xff]
  %v198 = vld [vmem:[%s1 + $0x530] sm:$0xff]
  %v199 = vld [vmem:[%s1 + $0x538] sm:$0xff]
  %v200 = vld [vmem:[%s1 + $0x540] sm:$0xff]
  %v201 = vld [vmem:[%s1 + $0x548] sm:$0xff]
  %v202 = vld [vmem:[%s1 + $0x550] sm:$0xff]
  %v203 = vld [vmem:[%s1 + $0x558] sm:$0xff]
  %v204 = vld [vmem:[%s1 + $0x560] sm:$0xff]
  %v205 = vld [vmem:[%s1 + $0x568] sm:$0xff]
  %v206 = vld [vmem:[%s1 + $0x570] sm:$0xff]
  %v207 = vld [vmem:[%s1 + $0x578] sm:$0xff]
  %v208 = vld [vmem:[%s1 + $0x580] sm:$0xff]
  %v209 = vld [vmem:[%s1 + $0x588] sm:$0xff]
  %v210 = vld [vmem:[%s1 + $0x590] sm:$0xff]
  %v211 = vld [vmem:[%s1 + $0x598] sm:$0xff]
  %v212 = vld [vmem:[%s1 + $0x5a0] sm:$0xff]
  %v213 = vld [vmem:[%s1 + $0x5a8] sm:$0xff]
  %v214 = vld [vmem:[%s1 + $0x5b0] sm:$0xff]
  %v215 = vld [vmem:[%s1 + $0x5b8] sm:$0xff]
  %v216 = vld [vmem:[%s1 + $0x5c0] sm:$0xff]
  %v217 = vld [vmem:[%s1 + $0x5c8] sm:$0xff]
  %v218 = vld [vmem:[%s1 + $0x5d0] sm:$0xff]
  %v219 = vld [vmem:[%s1 + $0x5d8] sm:$0xff]
  %v220 = vld [vmem:[%s1 + $0x5e0] sm:$0xff]
  %v221 = vld [vmem:[%s1 + $0x5e8] sm:$0xff]
  %v222 = vld [vmem:[%s1 + $0x5f0] sm:$0xff]
  %v223 = vld [vmem:[%s1 + $0x5f8] sm:$0xff]
  %v224 = vld [vmem:[%s1 + $0x600] sm:$0xff]
  %v225 = vld [vmem:[%s1 + $0x608] sm:$0xff]
  %v226 = vld [vmem:[%s1 + $0x610] sm:$0xff]
  %v227 = vld [vmem:[%s1 + $0x618] sm:$0xff]
  %v228 = vld [vmem:[%s1 + $0x620] sm:$0xff]
  %v229 = vld [vmem:[%s1 + $0x628] sm:$0xff]
  %v230 = vld [vmem:[%s1 + $0x630] sm:$0xff]
  %v231 = vld [vmem:[%s1 + $0x638] sm:$0xff]
  %v232 = vld [vmem:[%s1 + $0x640] sm:$0xff]
  %v233 = vld [vmem:[%s1 + $0x648] sm:$0xff]
  %v234 = vld [vmem:[%s1 + $0x650] sm:$0xff]
  %v235 = vld [vmem:[%s1 + $0x658] sm:$0xff]
  %v236 = vld [vmem:[%s1 + $0x660] sm:$0xff]
  %v237 = vld [vmem:[%s1 + $0x668] sm:$0xff]
  %v238 = vld [vmem:[%s1 + $0x670] sm:$0xff]
  %v239 = vld [vmem:[%s1 + $0x678] sm:$0xff]
  %v240 = vld [vmem:[%s1 + $0x680] sm:$0xff]
  %v241 = vld [vmem:[%s1 + $0x688] sm:$0xff]
  %v242 = vld [vmem:[%s1 + $0x690] sm:$0xff]
  %v243 = vld [vmem:[%s1 + $0x698] sm:$0xff]
  %v244 = vld [vmem:[%s1 + $0x6a0] sm:$0xff]
  %v245 = vld [vmem:[%s1 + $0x6a8] sm:$0xff]
  %v246 = vld [vmem:[%s1 + $0x6b0] sm:$0xff]
  %v247 = vld [vmem:[%s1 + $0x6b8] sm:$0xff]
  %v248 = vld [vmem:[%s1 + $0x6c0] sm:$0xff]
  %v249 = vld [vmem:[%s1 + $0x6c8] sm:$0xff]
  %v250 = vld [vmem:[%s1 + $0x6d0] sm:$0xff]
  %v251 = vld [vmem:[%s1 + $0x6d8] sm:$0xff]
  %v252 = vld [vmem:[%s1 + $0x6e0] sm:$0xff]
  %v253 = vld [vmem:[%s1 + $0x6e8] sm:$0xff]
  %v254 = vld [vmem:[%s1 + $0x6f0] sm:$0xff]
  %v255 = vld [vmem:[%s1 + $0x6f8] sm:$0xff]
  %v256 = vld [vmem:[%s1 + $0x700] sm:$0xff]
  %v257 = vld [vmem:[%s1 + $0x708] sm:$0xff]
  %v258 = vld [vmem:[%s1 + $0x710] sm:$0xff]
  %v259 = vld [vmem:[%s1 + $0x718] sm:$0xff]
  %v260 = vld [vmem:[%s1 + $0x720] sm:$0xff]
  %v261 = vld [vmem:[%s1 + $0x728] sm:$0xff]
  %v262 = vld [vmem:[%s1 + $0x730] sm:$0xff]
  %v263 = vld [vmem:[%s1 + $0x738] sm:$0xff]
  %v264 = vld [vmem:[%s1 + $0x740] sm:$0xff]
  %v265 = vld [vmem:[%s1 + $0x748] sm:$0xff]
  %v266 = vld [vmem:[%s1 + $0x750] sm:$0xff]
  %v267 = vld [vmem:[%s1 + $0x758] sm:$0xff]
  %v268 = vld [vmem:[%s1 + $0x760] sm:$0xff]
  %v269 = vld [vmem:[%s1 + $0x768] sm:$0xff]
  %v270 = vld [vmem:[%s1 + $0x770] sm:$0xff]
  %v271 = vld [vmem:[%s1 + $0x778] sm:$0xff]
  %v272 = vld [vmem:[%s1 + $0x780] sm:$0xff]
  %v273 = vld [vmem:[%s1 + $0x788] sm:$0xff]
  %v274 = vld [vmem:[%s1 + $0x790] sm:$0xff]
  %v275 = vld [vmem:[%s1 + $0x798] sm:$0xff]
  %v276 = vld [vmem:[%s1 + $0x7a0] sm:$0xff]
  %v277 = vld [vmem:[%s1 + $0x7a8] sm:$0xff]
  %v278 = vld [vmem:[%s1 + $0x7b0] sm:$0xff]
  %v279 = vld [vmem:[%s1 + $0x7b8] sm:$0xff]
  %v280 = vld [vmem:[%s1 + $0x7c0] sm:$0xff]
  %v281 = vld [vmem:[%s1 + $0x7c8] sm:$0xff]
  %v282 = vld [vmem:[%s1 + $0x7d0] sm:$0xff]
  %v283 = vld [vmem:[%s1 + $0x7d8] sm:$0xff]
  %v284 = vld [vmem:[%s1 + $0x7e0] sm:$0xff]
  %v285 = vld [vmem:[%s1 + $0x7e8] sm:$0xff]
  %v286 = vld [vmem:[%s1 + $0x7f0] sm:$0xff]
  %v287 = vld [vmem:[%s1 + $0x7f8] sm:$0xff]
  %v288 = vld [vmem:[%s1 + $0x800] sm:$0xff]
  %v289 = vld [vmem:[%s1 + $0x808] sm:$0xff]
  %v290 = vld [vmem:[%s1 + $0x810] sm:$0xff]
  %v291 = vld [vmem:[%s1 + $0x818] sm:$0xff]
  %v292 = vld [vmem:[%s1 + $0x820] sm:$0xff]
  %v293 = vld [vmem:[%s1 + $0x828] sm:$0xff]
  %v294 = vld [vmem:[%s1 + $0x830] sm:$0xff]
  %v295 = vld [vmem:[%s1 + $0x838] sm:$0xff]
  %v296 = vld [vmem:[%s1 + $0x840] sm:$0xff]
  %v297 = vld [vmem:[%s1 + $0x848] sm:$0xff]
  %v298 = vld [vmem:[%s1 + $0x850] sm:$0xff]
  %v299 = vld [vmem:[%s1 + $0x858] sm:$0xff]
  %v300 = vld [vmem:[%s1 + $0x860] sm:$0xff]
  %v301 = vld [vmem:[%s1 + $0x868] sm:$0xff]
  %v302 = vld [vmem:[%s1 + $0x870] sm:$0xff]
  %v303 = vld [vmem:[%s1 + $0x878] sm:$0xff]
  %v304 = vld [vmem:[%s1 + $0x880] sm:$0xff]
  %v305 = vld [vmem:[%s1 + $0x888] sm:$0xff]
  %v306 = vld [vmem:[%s1 + $0x890] sm:$0xff]
  %v307 = vld [vmem:[%s1 + $0x898] sm:$0xff]
  %v308 = vld [vmem:[%s1 + $0x8a0] sm:$0xff]
  %v309 = vld [vmem:[%s1 + $0x8a8] sm:$0xff]
  %v310 = vld [vmem:[%s1 + $0x8b0] sm:$0xff]
  %v311 = vld [vmem:[%s1 + $0x8b8] sm:$0xff]
  %v312 = vld [vmem:[%s1 + $0x8c0] sm:$0xff]
  %v313 = vld [vmem:[%s1 + $0x8c8] sm:$0xff]
  %v314 = vld [vmem:[%s1 + $0x8d0] sm:$0xff]
  %v315 = vld [vmem:[%s1 + $0x8d8] sm:$0xff]
  %v316 = vld [vmem:[%s1 + $0x8e0] sm:$0xff]
  %v317 = vld [vmem:[%s1 + $0x8e8] sm:$0xff]
  %v318 = vld [vmem:[%s1 + $0x8f0] sm:$0xff]
  %v319 = vld [vmem:[%s1 + $0x8f8] sm:$0xff]
  %v320 = vld [vmem:[%s2] sm:$0xf]
  %v322 = vlaneseq
  %v323 = vshrl.u32 %v322, 7
  %v324 = vsub.s32 0, %v323
  %v325 = vrot.slane %v320, %v324
  %v326 = vlaneseq
  %v327 = vshrl.u32 %v326, 7
  %v328 = vsub.s32 1, %v327
  %v329 = vrot.slane %v320, %v328
  %v330 = vlaneseq
  %v331 = vshrl.u32 %v330, 7
  %v332 = vsub.s32 2, %v331
  %v333 = vrot.slane %v320, %v332
  %v334 = vlaneseq
  %v335 = vshrl.u32 %v334, 7
  %v336 = vsub.s32 3, %v335
  %v337 = vrot.slane %v320, %v336
  %v347 = vunpack.c.l.b16 %v27
  %v348 = vunpack.c.h.b16 %v27
  %v349 = vunpack.c.l.b16 %v28
  %v350 = vunpack.c.h.b16 %v28
  %v351 = vunpack.c.l.b16 %v29
  %v352 = vunpack.c.h.b16 %v29
  %v353 = vunpack.c.l.b16 %v30
  %v354 = vunpack.c.h.b16 %v30
  %v355 = vunpack.c.l.b16 %v31
  %v356 = vpack.c.b16 %v347, %v347
  %v357 = vpack.c.b16 %v348, %v348
  %v358 = vpack.c.b16 %v349, %v349
  %v359 = vpack.c.b16 %v350, %v350
  %v360 = vpack.c.b16 %v351, %v351
  %v361 = vpack.c.b16 %v352, %v352
  %v362 = vpack.c.b16 %v353, %v353
  %v363 = vpack.c.b16 %v354, %v354
  %v364 = vpack.c.b16 %v355, %v355
  %v662 = vunpack.c.l.b16 %v32
  %v663 = vunpack.c.h.b16 %v32
  %v664 = vunpack.c.l.b16 %v33
  %v665 = vunpack.c.h.b16 %v33
  %v666 = vunpack.c.l.b16 %v34
  %v667 = vunpack.c.h.b16 %v34
  %v668 = vunpack.c.l.b16 %v35
  %v669 = vunpack.c.h.b16 %v35
  %v670 = vunpack.c.l.b16 %v36
  %v671 = vunpack.c.h.b16 %v36
  %v672 = vunpack.c.l.b16 %v37
  %v673 = vunpack.c.h.b16 %v37
  %v674 = vunpack.c.l.b16 %v38
  %v675 = vunpack.c.h.b16 %v38
  %v676 = vunpack.c.l.b16 %v39
  %v677 = vunpack.c.h.b16 %v39
  %v678 = vunpack.c.l.b16 %v40
  %v679 = vunpack.c.h.b16 %v40
  %v680 = vunpack.c.l.b16 %v41
  %v681 = vunpack.c.h.b16 %v41
  %v682 = vunpack.c.l.b16 %v42
  %v683 = vunpack.c.h.b16 %v42
  %v684 = vunpack.c.l.b16 %v43
  %v685 = vunpack.c.h.b16 %v43
  %v686 = vunpack.c.l.b16 %v44
  %v687 = vunpack.c.h.b16 %v44
  %v688 = vunpack.c.l.b16 %v45
  %v689 = vunpack.c.h.b16 %v45
  %v690 = vunpack.c.l.b16 %v46
  %v691 = vunpack.c.h.b16 %v46
  %v692 = vunpack.c.l.b16 %v47
  %v693 = vunpack.c.h.b16 %v47
  %v694 = vunpack.c.l.b16 %v48
  %v695 = vunpack.c.h.b16 %v48
  %v696 = vunpack.c.l.b16 %v49
  %v697 = vunpack.c.h.b16 %v49
  %v698 = vunpack.c.l.b16 %v50
  %v699 = vunpack.c.h.b16 %v50
  %v700 = vunpack.c.l.b16 %v51
  %v701 = vunpack.c.h.b16 %v51
  %v702 = vunpack.c.l.b16 %v52
  %v703 = vunpack.c.h.b16 %v52
  %v704 = vunpack.c.l.b16 %v53
  %v705 = vunpack.c.h.b16 %v53
  %v706 = vunpack.c.l.b16 %v54
  %v707 = vunpack.c.h.b16 %v54
  %v708 = vunpack.c.l.b16 %v55
  %v709 = vunpack.c.h.b16 %v55
  %v710 = vunpack.c.l.b16 %v56
  %v711 = vunpack.c.h.b16 %v56
  %v712 = vunpack.c.l.b16 %v57
  %v713 = vunpack.c.h.b16 %v57
  %v714 = vunpack.c.l.b16 %v58
  %v715 = vunpack.c.h.b16 %v58
  %v716 = vunpack.c.l.b16 %v59
  %v717 = vunpack.c.h.b16 %v59
  %v718 = vunpack.c.l.b16 %v60
  %v719 = vunpack.c.h.b16 %v60
  %v720 = vunpack.c.l.b16 %v61
  %v721 = vunpack.c.h.b16 %v61
  %v722 = vunpack.c.l.b16 %v62
  %v723 = vunpack.c.h.b16 %v62
  %v724 = vunpack.c.l.b16 %v63
  %v725 = vunpack.c.h.b16 %v63
  %v726 = vunpack.c.l.b16 %v64
  %v727 = vunpack.c.h.b16 %v64
  %v728 = vunpack.c.l.b16 %v65
  %v729 = vunpack.c.h.b16 %v65
  %v730 = vunpack.c.l.b16 %v66
  %v731 = vunpack.c.h.b16 %v66
  %v732 = vunpack.c.l.b16 %v67
  %v733 = vunpack.c.h.b16 %v67
  %v734 = vunpack.c.l.b16 %v68
  %v735 = vunpack.c.h.b16 %v68
  %v736 = vunpack.c.l.b16 %v69
  %v737 = vunpack.c.h.b16 %v69
  %v738 = vunpack.c.l.b16 %v70
  %v739 = vunpack.c.h.b16 %v70
  %v740 = vunpack.c.l.b16 %v71
  %v741 = vunpack.c.h.b16 %v71
  %v742 = vunpack.c.l.b16 %v72
  %v743 = vunpack.c.h.b16 %v72
  %v744 = vunpack.c.l.b16 %v73
  %v745 = vunpack.c.h.b16 %v73
  %v746 = vunpack.c.l.b16 %v74
  %v747 = vunpack.c.h.b16 %v74
  %v748 = vunpack.c.l.b16 %v75
  %v749 = vunpack.c.h.b16 %v75
  %v750 = vunpack.c.l.b16 %v76
  %v751 = vunpack.c.h.b16 %v76
  %v752 = vunpack.c.l.b16 %v77
  %v753 = vunpack.c.h.b16 %v77
  %v754 = vunpack.c.l.b16 %v78
  %v755 = vunpack.c.h.b16 %v78
  %v756 = vunpack.c.l.b16 %v79
  %v757 = vunpack.c.h.b16 %v79
  %v758 = vunpack.c.l.b16 %v80
  %v759 = vunpack.c.h.b16 %v80
  %v760 = vunpack.c.l.b16 %v81
  %v761 = vunpack.c.h.b16 %v81
  %v762 = vunpack.c.l.b16 %v82
  %v763 = vunpack.c.h.b16 %v82
  %v764 = vunpack.c.l.b16 %v83
  %v765 = vunpack.c.h.b16 %v83
  %v766 = vunpack.c.l.b16 %v84
  %v767 = vunpack.c.h.b16 %v84
  %v768 = vunpack.c.l.b16 %v85
  %v769 = vunpack.c.h.b16 %v85
  %v770 = vunpack.c.l.b16 %v86
  %v771 = vunpack.c.h.b16 %v86
  %v772 = vunpack.c.l.b16 %v87
  %v773 = vunpack.c.h.b16 %v87
  %v774 = vunpack.c.l.b16 %v88
  %v775 = vunpack.c.h.b16 %v88
  %v776 = vunpack.c.l.b16 %v89
  %v777 = vunpack.c.h.b16 %v89
  %v778 = vunpack.c.l.b16 %v90
  %v779 = vunpack.c.h.b16 %v90
  %v780 = vunpack.c.l.b16 %v91
  %v781 = vunpack.c.h.b16 %v91
  %v782 = vunpack.c.l.b16 %v92
  %v783 = vunpack.c.h.b16 %v92
  %v784 = vunpack.c.l.b16 %v93
  %v785 = vunpack.c.h.b16 %v93
  %v786 = vunpack.c.l.b16 %v94
  %v787 = vunpack.c.h.b16 %v94
  %v788 = vunpack.c.l.b16 %v95
  %v789 = vunpack.c.h.b16 %v95
  %v790 = vunpack.c.l.b16 %v96
  %v791 = vunpack.c.h.b16 %v96
  %v792 = vunpack.c.l.b16 %v97
  %v793 = vunpack.c.h.b16 %v97
  %v794 = vunpack.c.l.b16 %v98
  %v795 = vunpack.c.h.b16 %v98
  %v796 = vunpack.c.l.b16 %v99
  %v797 = vunpack.c.h.b16 %v99
  %v798 = vunpack.c.l.b16 %v100
  %v799 = vunpack.c.h.b16 %v100
  %v800 = vunpack.c.l.b16 %v101
  %v801 = vunpack.c.h.b16 %v101
  %v802 = vunpack.c.l.b16 %v102
  %v803 = vunpack.c.h.b16 %v102
  %v804 = vunpack.c.l.b16 %v103
  %v805 = vunpack.c.h.b16 %v103
  %v806 = vunpack.c.l.b16 %v104
  %v807 = vunpack.c.h.b16 %v104
  %v808 = vunpack.c.l.b16 %v105
  %v809 = vunpack.c.h.b16 %v105
  %v810 = vunpack.c.l.b16 %v106
  %v811 = vunpack.c.h.b16 %v106
  %v812 = vunpack.c.l.b16 %v107
  %v813 = vunpack.c.h.b16 %v107
  %v814 = vunpack.c.l.b16 %v108
  %v815 = vunpack.c.h.b16 %v108
  %v816 = vunpack.c.l.b16 %v109
  %v817 = vunpack.c.h.b16 %v109
  %v818 = vunpack.c.l.b16 %v110
  %v819 = vunpack.c.h.b16 %v110
  %v820 = vunpack.c.l.b16 %v111
  %v821 = vunpack.c.h.b16 %v111
  %v822 = vunpack.c.l.b16 %v112
  %v823 = vunpack.c.h.b16 %v112
  %v824 = vunpack.c.l.b16 %v113
  %v825 = vunpack.c.h.b16 %v113
  %v826 = vunpack.c.l.b16 %v114
  %v827 = vunpack.c.h.b16 %v114
  %v828 = vunpack.c.l.b16 %v115
  %v829 = vunpack.c.h.b16 %v115
  %v830 = vunpack.c.l.b16 %v116
  %v831 = vunpack.c.h.b16 %v116
  %v832 = vunpack.c.l.b16 %v117
  %v833 = vunpack.c.h.b16 %v117
  %v834 = vunpack.c.l.b16 %v118
  %v835 = vunpack.c.h.b16 %v118
  %v836 = vunpack.c.l.b16 %v119
  %v837 = vunpack.c.h.b16 %v119
  %v838 = vunpack.c.l.b16 %v120
  %v839 = vunpack.c.h.b16 %v120
  %v840 = vunpack.c.l.b16 %v121
  %v841 = vunpack.c.h.b16 %v121
  %v842 = vunpack.c.l.b16 %v122
  %v843 = vunpack.c.h.b16 %v122
  %v844 = vunpack.c.l.b16 %v123
  %v845 = vunpack.c.h.b16 %v123
  %v846 = vunpack.c.l.b16 %v124
  %v847 = vunpack.c.h.b16 %v124
  %v848 = vunpack.c.l.b16 %v125
  %v849 = vunpack.c.h.b16 %v125
  %v850 = vunpack.c.l.b16 %v126
  %v851 = vunpack.c.h.b16 %v126
  %v852 = vunpack.c.l.b16 %v127
  %v853 = vunpack.c.h.b16 %v127
  %v854 = vunpack.c.l.b16 %v128
  %v855 = vunpack.c.h.b16 %v128
  %v856 = vunpack.c.l.b16 %v129
  %v857 = vunpack.c.h.b16 %v129
  %v858 = vunpack.c.l.b16 %v130
  %v859 = vunpack.c.h.b16 %v130
  %v860 = vunpack.c.l.b16 %v131
  %v861 = vunpack.c.h.b16 %v131
  %v862 = vunpack.c.l.b16 %v132
  %v863 = vunpack.c.h.b16 %v132
  %v864 = vunpack.c.l.b16 %v133
  %v865 = vunpack.c.h.b16 %v133
  %v866 = vunpack.c.l.b16 %v134
  %v867 = vunpack.c.h.b16 %v134
  %v868 = vunpack.c.l.b16 %v135
  %v869 = vunpack.c.h.b16 %v135
  %v870 = vunpack.c.l.b16 %v136
  %v871 = vunpack.c.h.b16 %v136
  %v872 = vunpack.c.l.b16 %v137
  %v873 = vunpack.c.h.b16 %v137
  %v874 = vunpack.c.l.b16 %v138
  %v875 = vunpack.c.h.b16 %v138
  %v876 = vunpack.c.l.b16 %v139
  %v877 = vunpack.c.h.b16 %v139
  %v878 = vunpack.c.l.b16 %v140
  %v879 = vunpack.c.h.b16 %v140
  %v880 = vunpack.c.l.b16 %v141
  %v881 = vunpack.c.h.b16 %v141
  %v882 = vunpack.c.l.b16 %v142
  %v883 = vunpack.c.h.b16 %v142
  %v884 = vunpack.c.l.b16 %v143
  %v885 = vunpack.c.h.b16 %v143
  %v886 = vunpack.c.l.b16 %v144
  %v887 = vunpack.c.h.b16 %v144
  %v888 = vunpack.c.l.b16 %v145
  %v889 = vunpack.c.h.b16 %v145
  %v890 = vunpack.c.l.b16 %v146
  %v891 = vunpack.c.h.b16 %v146
  %v892 = vunpack.c.l.b16 %v147
  %v893 = vunpack.c.h.b16 %v147
  %v894 = vunpack.c.l.b16 %v148
  %v895 = vunpack.c.h.b16 %v148
  %v896 = vunpack.c.l.b16 %v149
  %v897 = vunpack.c.h.b16 %v149
  %v898 = vunpack.c.l.b16 %v150
  %v899 = vunpack.c.h.b16 %v150
  %v900 = vunpack.c.l.b16 %v151
  %v901 = vunpack.c.h.b16 %v151
  %v902 = vunpack.c.l.b16 %v152
  %v903 = vunpack.c.h.b16 %v152
  %v904 = vunpack.c.l.b16 %v153
  %v905 = vunpack.c.h.b16 %v153
  %v906 = vunpack.c.l.b16 %v154
  %v907 = vunpack.c.h.b16 %v154
  %v908 = vunpack.c.l.b16 %v155
  %v909 = vunpack.c.h.b16 %v155
  %v910 = vunpack.c.l.b16 %v156
  %v911 = vunpack.c.h.b16 %v156
  %v912 = vunpack.c.l.b16 %v157
  %v913 = vunpack.c.h.b16 %v157
  %v914 = vunpack.c.l.b16 %v158
  %v915 = vunpack.c.h.b16 %v158
  %v916 = vunpack.c.l.b16 %v159
  %v917 = vunpack.c.h.b16 %v159
  %v918 = vunpack.c.l.b16 %v160
  %v919 = vunpack.c.h.b16 %v160
  %v920 = vunpack.c.l.b16 %v161
  %v921 = vunpack.c.h.b16 %v161
  %v922 = vunpack.c.l.b16 %v162
  %v923 = vunpack.c.h.b16 %v162
  %v924 = vunpack.c.l.b16 %v163
  %v925 = vunpack.c.h.b16 %v163
  %v926 = vunpack.c.l.b16 %v164
  %v927 = vunpack.c.h.b16 %v164
  %v928 = vunpack.c.l.b16 %v165
  %v929 = vunpack.c.h.b16 %v165
  %v930 = vunpack.c.l.b16 %v166
  %v931 = vunpack.c.h.b16 %v166
  %v932 = vunpack.c.l.b16 %v167
  %v933 = vunpack.c.h.b16 %v167
  %v934 = vunpack.c.l.b16 %v168
  %v935 = vunpack.c.h.b16 %v168
  %v936 = vunpack.c.l.b16 %v169
  %v937 = vunpack.c.h.b16 %v169
  %v938 = vunpack.c.l.b16 %v170
  %v939 = vunpack.c.h.b16 %v170
  %v940 = vunpack.c.l.b16 %v171
  %v941 = vunpack.c.h.b16 %v171
  %v942 = vunpack.c.l.b16 %v172
  %v943 = vunpack.c.h.b16 %v172
  %v944 = vunpack.c.l.b16 %v173
  %v945 = vunpack.c.h.b16 %v173
  %v946 = vunpack.c.l.b16 %v174
  %v947 = vunpack.c.h.b16 %v174
  %v948 = vunpack.c.l.b16 %v175
  %v949 = vunpack.c.h.b16 %v175
  %v950 = vunpack.c.l.b16 %v176
  %v951 = vunpack.c.h.b16 %v176
  %v952 = vunpack.c.l.b16 %v177
  %v953 = vunpack.c.h.b16 %v177
  %v954 = vunpack.c.l.b16 %v178
  %v955 = vunpack.c.h.b16 %v178
  %v956 = vunpack.c.l.b16 %v179
  %v957 = vunpack.c.h.b16 %v179
  %v958 = vunpack.c.l.b16 %v180
  %v959 = vunpack.c.h.b16 %v180
  %v960 = vunpack.c.l.b16 %v181
  %v961 = vunpack.c.h.b16 %v181
  %v962 = vunpack.c.l.b16 %v182
  %v963 = vunpack.c.h.b16 %v182
  %v964 = vunpack.c.l.b16 %v183
  %v965 = vunpack.c.h.b16 %v183
  %v966 = vunpack.c.l.b16 %v184
  %v967 = vunpack.c.h.b16 %v184
  %v968 = vunpack.c.l.b16 %v185
  %v969 = vunpack.c.h.b16 %v185
  %v970 = vunpack.c.l.b16 %v186
  %v971 = vunpack.c.h.b16 %v186
  %v972 = vunpack.c.l.b16 %v187
  %v973 = vunpack.c.h.b16 %v187
  %v974 = vunpack.c.l.b16 %v188
  %v975 = vunpack.c.h.b16 %v188
  %v976 = vunpack.c.l.b16 %v189
  %v977 = vunpack.c.h.b16 %v189
  %v978 = vunpack.c.l.b16 %v190
  %v979 = vunpack.c.h.b16 %v190
  %v980 = vunpack.c.l.b16 %v191
  %v981 = vunpack.c.h.b16 %v191
  %v982 = vunpack.c.l.b16 %v192
  %v983 = vunpack.c.h.b16 %v192
  %v984 = vunpack.c.l.b16 %v193
  %v985 = vunpack.c.h.b16 %v193
  %v986 = vunpack.c.l.b16 %v194
  %v987 = vunpack.c.h.b16 %v194
  %v988 = vunpack.c.l.b16 %v195
  %v989 = vunpack.c.h.b16 %v195
  %v990 = vunpack.c.l.b16 %v196
  %v991 = vunpack.c.h.b16 %v196
  %v992 = vunpack.c.l.b16 %v197
  %v993 = vunpack.c.h.b16 %v197
  %v994 = vunpack.c.l.b16 %v198
  %v995 = vunpack.c.h.b16 %v198
  %v996 = vunpack.c.l.b16 %v199
  %v997 = vunpack.c.h.b16 %v199
  %v998 = vunpack.c.l.b16 %v200
  %v999 = vunpack.c.h.b16 %v200
  %v1000 = vunpack.c.l.b16 %v201
  %v1001 = vunpack.c.h.b16 %v201
  %v1002 = vunpack.c.l.b16 %v202
  %v1003 = vunpack.c.h.b16 %v202
  %v1004 = vunpack.c.l.b16 %v203
  %v1005 = vunpack.c.h.b16 %v203
  %v1006 = vunpack.c.l.b16 %v204
  %v1007 = vunpack.c.h.b16 %v204
  %v1008 = vunpack.c.l.b16 %v205
  %v1009 = vunpack.c.h.b16 %v205
  %v1010 = vunpack.c.l.b16 %v206
  %v1011 = vunpack.c.h.b16 %v206
  %v1012 = vunpack.c.l.b16 %v207
  %v1013 = vunpack.c.h.b16 %v207
  %v1014 = vunpack.c.l.b16 %v208
  %v1015 = vunpack.c.h.b16 %v208
  %v1016 = vunpack.c.l.b16 %v209
  %v1017 = vunpack.c.h.b16 %v209
  %v1018 = vunpack.c.l.b16 %v210
  %v1019 = vunpack.c.h.b16 %v210
  %v1020 = vunpack.c.l.b16 %v211
  %v1021 = vunpack.c.h.b16 %v211
  %v1022 = vunpack.c.l.b16 %v212
  %v1023 = vunpack.c.h.b16 %v212
  %v1024 = vunpack.c.l.b16 %v213
  %v1025 = vunpack.c.h.b16 %v213
  %v1026 = vunpack.c.l.b16 %v214
  %v1027 = vunpack.c.h.b16 %v214
  %v1028 = vunpack.c.l.b16 %v215
  %v1029 = vunpack.c.h.b16 %v215
  %v1030 = vunpack.c.l.b16 %v216
  %v1031 = vunpack.c.h.b16 %v216
  %v1032 = vunpack.c.l.b16 %v217
  %v1033 = vunpack.c.h.b16 %v217
  %v1034 = vunpack.c.l.b16 %v218
  %v1035 = vunpack.c.h.b16 %v218
  %v1036 = vunpack.c.l.b16 %v219
  %v1037 = vunpack.c.h.b16 %v219
  %v1038 = vunpack.c.l.b16 %v220
  %v1039 = vunpack.c.h.b16 %v220
  %v1040 = vunpack.c.l.b16 %v221
  %v1041 = vunpack.c.h.b16 %v221
  %v1042 = vunpack.c.l.b16 %v222
  %v1043 = vunpack.c.h.b16 %v222
  %v1044 = vunpack.c.l.b16 %v223
  %v1045 = vunpack.c.h.b16 %v223
  %v1046 = vunpack.c.l.b16 %v224
  %v1047 = vunpack.c.h.b16 %v224
  %v1048 = vunpack.c.l.b16 %v225
  %v1049 = vunpack.c.h.b16 %v225
  %v1050 = vunpack.c.l.b16 %v226
  %v1051 = vunpack.c.h.b16 %v226
  %v1052 = vunpack.c.l.b16 %v227
  %v1053 = vunpack.c.h.b16 %v227
  %v1054 = vunpack.c.l.b16 %v228
  %v1055 = vunpack.c.h.b16 %v228
  %v1056 = vunpack.c.l.b16 %v229
  %v1057 = vunpack.c.h.b16 %v229
  %v1058 = vunpack.c.l.b16 %v230
  %v1059 = vunpack.c.h.b16 %v230
  %v1060 = vunpack.c.l.b16 %v231
  %v1061 = vunpack.c.h.b16 %v231
  %v1062 = vunpack.c.l.b16 %v232
  %v1063 = vunpack.c.h.b16 %v232
  %v1064 = vunpack.c.l.b16 %v233
  %v1065 = vunpack.c.h.b16 %v233
  %v1066 = vunpack.c.l.b16 %v234
  %v1067 = vunpack.c.h.b16 %v234
  %v1068 = vunpack.c.l.b16 %v235
  %v1069 = vunpack.c.h.b16 %v235
  %v1070 = vunpack.c.l.b16 %v236
  %v1071 = vunpack.c.h.b16 %v236
  %v1072 = vunpack.c.l.b16 %v237
  %v1073 = vunpack.c.h.b16 %v237
  %v1074 = vunpack.c.l.b16 %v238
  %v1075 = vunpack.c.h.b16 %v238
  %v1076 = vunpack.c.l.b16 %v239
  %v1077 = vunpack.c.h.b16 %v239
  %v1078 = vunpack.c.l.b16 %v240
  %v1079 = vunpack.c.h.b16 %v240
  %v1080 = vunpack.c.l.b16 %v241
  %v1081 = vunpack.c.h.b16 %v241
  %v1082 = vunpack.c.l.b16 %v242
  %v1083 = vunpack.c.h.b16 %v242
  %v1084 = vunpack.c.l.b16 %v243
  %v1085 = vunpack.c.h.b16 %v243
  %v1086 = vunpack.c.l.b16 %v244
  %v1087 = vunpack.c.h.b16 %v244
  %v1088 = vunpack.c.l.b16 %v245
  %v1089 = vunpack.c.h.b16 %v245
  %v1090 = vunpack.c.l.b16 %v246
  %v1091 = vunpack.c.h.b16 %v246
  %v1092 = vunpack.c.l.b16 %v247
  %v1093 = vunpack.c.h.b16 %v247
  %v1094 = vunpack.c.l.b16 %v248
  %v1095 = vunpack.c.h.b16 %v248
  %v1096 = vunpack.c.l.b16 %v249
  %v1097 = vunpack.c.h.b16 %v249
  %v1098 = vunpack.c.l.b16 %v250
  %v1099 = vunpack.c.h.b16 %v250
  %v1100 = vunpack.c.l.b16 %v251
  %v1101 = vunpack.c.h.b16 %v251
  %v1102 = vunpack.c.l.b16 %v252
  %v1103 = vunpack.c.h.b16 %v252
  %v1104 = vunpack.c.l.b16 %v253
  %v1105 = vunpack.c.h.b16 %v253
  %v1106 = vunpack.c.l.b16 %v254
  %v1107 = vunpack.c.h.b16 %v254
  %v1108 = vunpack.c.l.b16 %v255
  %v1109 = vunpack.c.h.b16 %v255
  %v1110 = vunpack.c.l.b16 %v256
  %v1111 = vunpack.c.h.b16 %v256
  %v1112 = vunpack.c.l.b16 %v257
  %v1113 = vunpack.c.h.b16 %v257
  %v1114 = vunpack.c.l.b16 %v258
  %v1115 = vunpack.c.h.b16 %v258
  %v1116 = vunpack.c.l.b16 %v259
  %v1117 = vunpack.c.h.b16 %v259
  %v1118 = vunpack.c.l.b16 %v260
  %v1119 = vunpack.c.h.b16 %v260
  %v1120 = vunpack.c.l.b16 %v261
  %v1121 = vunpack.c.h.b16 %v261
  %v1122 = vunpack.c.l.b16 %v262
  %v1123 = vunpack.c.h.b16 %v262
  %v1124 = vunpack.c.l.b16 %v263
  %v1125 = vunpack.c.h.b16 %v263
  %v1126 = vunpack.c.l.b16 %v264
  %v1127 = vunpack.c.h.b16 %v264
  %v1128 = vunpack.c.l.b16 %v265
  %v1129 = vunpack.c.h.b16 %v265
  %v1130 = vunpack.c.l.b16 %v266
  %v1131 = vunpack.c.h.b16 %v266
  %v1132 = vunpack.c.l.b16 %v267
  %v1133 = vunpack.c.h.b16 %v267
  %v1134 = vunpack.c.l.b16 %v268
  %v1135 = vunpack.c.h.b16 %v268
  %v1136 = vunpack.c.l.b16 %v269
  %v1137 = vunpack.c.h.b16 %v269
  %v1138 = vunpack.c.l.b16 %v270
  %v1139 = vunpack.c.h.b16 %v270
  %v1140 = vunpack.c.l.b16 %v271
  %v1141 = vunpack.c.h.b16 %v271
  %v1142 = vunpack.c.l.b16 %v272
  %v1143 = vunpack.c.h.b16 %v272
  %v1144 = vunpack.c.l.b16 %v273
  %v1145 = vunpack.c.h.b16 %v273
  %v1146 = vunpack.c.l.b16 %v274
  %v1147 = vunpack.c.h.b16 %v274
  %v1148 = vunpack.c.l.b16 %v275
  %v1149 = vunpack.c.h.b16 %v275
  %v1150 = vunpack.c.l.b16 %v276
  %v1151 = vunpack.c.h.b16 %v276
  %v1152 = vunpack.c.l.b16 %v277
  %v1153 = vunpack.c.h.b16 %v277
  %v1154 = vunpack.c.l.b16 %v278
  %v1155 = vunpack.c.h.b16 %v278
  %v1156 = vunpack.c.l.b16 %v279
  %v1157 = vunpack.c.h.b16 %v279
  %v1158 = vunpack.c.l.b16 %v280
  %v1159 = vunpack.c.h.b16 %v280
  %v1160 = vunpack.c.l.b16 %v281
  %v1161 = vunpack.c.h.b16 %v281
  %v1162 = vunpack.c.l.b16 %v282
  %v1163 = vunpack.c.h.b16 %v282
  %v1164 = vunpack.c.l.b16 %v283
  %v1165 = vunpack.c.h.b16 %v283
  %v1166 = vunpack.c.l.b16 %v284
  %v1167 = vunpack.c.h.b16 %v284
  %v1168 = vunpack.c.l.b16 %v285
  %v1169 = vunpack.c.h.b16 %v285
  %v1170 = vunpack.c.l.b16 %v286
  %v1171 = vunpack.c.h.b16 %v286
  %v1172 = vunpack.c.l.b16 %v287
  %v1173 = vunpack.c.h.b16 %v287
  %v1174 = vunpack.c.l.b16 %v288
  %v1175 = vunpack.c.h.b16 %v288
  %v1176 = vunpack.c.l.b16 %v289
  %v1177 = vunpack.c.h.b16 %v289
  %v1178 = vunpack.c.l.b16 %v290
  %v1179 = vunpack.c.h.b16 %v290
  %v1180 = vunpack.c.l.b16 %v291
  %v1181 = vunpack.c.h.b16 %v291
  %v1182 = vunpack.c.l.b16 %v292
  %v1183 = vunpack.c.h.b16 %v292
  %v1184 = vunpack.c.l.b16 %v293
  %v1185 = vunpack.c.h.b16 %v293
  %v1186 = vunpack.c.l.b16 %v294
  %v1187 = vunpack.c.h.b16 %v294
  %v1188 = vunpack.c.l.b16 %v295
  %v1189 = vunpack.c.h.b16 %v295
  %v1190 = vunpack.c.l.b16 %v296
  %v1191 = vunpack.c.h.b16 %v296
  %v1192 = vunpack.c.l.b16 %v297
  %v1193 = vunpack.c.h.b16 %v297
  %v1194 = vunpack.c.l.b16 %v298
  %v1195 = vunpack.c.h.b16 %v298
  %v1196 = vunpack.c.l.b16 %v299
  %v1197 = vunpack.c.h.b16 %v299
  %v1198 = vunpack.c.l.b16 %v300
  %v1199 = vunpack.c.h.b16 %v300
  %v1200 = vunpack.c.l.b16 %v301
  %v1201 = vunpack.c.h.b16 %v301
  %v1202 = vunpack.c.l.b16 %v302
  %v1203 = vunpack.c.h.b16 %v302
  %v1204 = vunpack.c.l.b16 %v303
  %v1205 = vunpack.c.h.b16 %v303
  %v1206 = vunpack.c.l.b16 %v304
  %v1207 = vunpack.c.h.b16 %v304
  %v1208 = vunpack.c.l.b16 %v305
  %v1209 = vunpack.c.h.b16 %v305
  %v1210 = vunpack.c.l.b16 %v306
  %v1211 = vunpack.c.h.b16 %v306
  %v1212 = vunpack.c.l.b16 %v307
  %v1213 = vunpack.c.h.b16 %v307
  %v1214 = vunpack.c.l.b16 %v308
  %v1215 = vunpack.c.h.b16 %v308
  %v1216 = vunpack.c.l.b16 %v309
  %v1217 = vunpack.c.h.b16 %v309
  %v1218 = vunpack.c.l.b16 %v310
  %v1219 = vunpack.c.h.b16 %v310
  %v1220 = vunpack.c.l.b16 %v311
  %v1221 = vunpack.c.h.b16 %v311
  %v1222 = vunpack.c.l.b16 %v312
  %v1223 = vunpack.c.h.b16 %v312
  %v1224 = vunpack.c.l.b16 %v313
  %v1225 = vunpack.c.h.b16 %v313
  %v1226 = vunpack.c.l.b16 %v314
  %v1227 = vunpack.c.h.b16 %v314
  %v1228 = vunpack.c.l.b16 %v315
  %v1229 = vunpack.c.h.b16 %v315
  %v1230 = vunpack.c.l.b16 %v316
  %v1231 = vunpack.c.h.b16 %v316
  %v1232 = vunpack.c.l.b16 %v317
  %v1233 = vunpack.c.h.b16 %v317
  %v1234 = vunpack.c.l.b16 %v318
  %v1235 = vunpack.c.h.b16 %v318
  %v1236 = vunpack.c.l.b16 %v319
  %v1237 = vunpack.c.h.b16 %v319
  %v1238 = vpack.c.b16 %v666, %v662
  %v1239 = vpack.c.b16 %v667, %v663
  %v1240 = vpack.c.b16 %v668, %v664
  %v1241 = vpack.c.b16 %v669, %v665
  %v1242 = vpack.c.b16 %v674, %v670
  %v1243 = vpack.c.b16 %v675, %v671
  %v1244 = vpack.c.b16 %v676, %v672
  %v1245 = vpack.c.b16 %v677, %v673
  %v1246 = vpack.c.b16 %v682, %v678
  %v1247 = vpack.c.b16 %v683, %v679
  %v1248 = vpack.c.b16 %v684, %v680
  %v1249 = vpack.c.b16 %v685, %v681
  %v1250 = vpack.c.b16 %v690, %v686
  %v1251 = vpack.c.b16 %v691, %v687
  %v1252 = vpack.c.b16 %v692, %v688
  %v1253 = vpack.c.b16 %v693, %v689
  %v1254 = vpack.c.b16 %v698, %v694
  %v1255 = vpack.c.b16 %v699, %v695
  %v1256 = vpack.c.b16 %v700, %v696
  %v1257 = vpack.c.b16 %v701, %v697
  %v1258 = vpack.c.b16 %v706, %v702
  %v1259 = vpack.c.b16 %v707, %v703
  %v1260 = vpack.c.b16 %v708, %v704
  %v1261 = vpack.c.b16 %v709, %v705
  %v1262 = vpack.c.b16 %v714, %v710
  %v1263 = vpack.c.b16 %v715, %v711
  %v1264 = vpack.c.b16 %v716, %v712
  %v1265 = vpack.c.b16 %v717, %v713
  %v1266 = vpack.c.b16 %v722, %v718
  %v1267 = vpack.c.b16 %v723, %v719
  %v1268 = vpack.c.b16 %v724, %v720
  %v1269 = vpack.c.b16 %v725, %v721
  %v1270 = vpack.c.b16 %v730, %v726
  %v1271 = vpack.c.b16 %v731, %v727
  %v1272 = vpack.c.b16 %v732, %v728
  %v1273 = vpack.c.b16 %v733, %v729
  %v1274 = vpack.c.b16 %v738, %v734
  %v1275 = vpack.c.b16 %v739, %v735
  %v1276 = vpack.c.b16 %v740, %v736
  %v1277 = vpack.c.b16 %v741, %v737
  %v1278 = vpack.c.b16 %v746, %v742
  %v1279 = vpack.c.b16 %v747, %v743
  %v1280 = vpack.c.b16 %v748, %v744
  %v1281 = vpack.c.b16 %v749, %v745
  %v1282 = vpack.c.b16 %v754, %v750
  %v1283 = vpack.c.b16 %v755, %v751
  %v1284 = vpack.c.b16 %v756, %v752
  %v1285 = vpack.c.b16 %v757, %v753
  %v1286 = vpack.c.b16 %v762, %v758
  %v1287 = vpack.c.b16 %v763, %v759
  %v1288 = vpack.c.b16 %v764, %v760
  %v1289 = vpack.c.b16 %v765, %v761
  %v1290 = vpack.c.b16 %v770, %v766
  %v1291 = vpack.c.b16 %v771, %v767
  %v1292 = vpack.c.b16 %v772, %v768
  %v1293 = vpack.c.b16 %v773, %v769
  %v1294 = vpack.c.b16 %v778, %v774
  %v1295 = vpack.c.b16 %v779, %v775
  %v1296 = vpack.c.b16 %v780, %v776
  %v1297 = vpack.c.b16 %v781, %v777
  %v1298 = vpack.c.b16 %v786, %v782
  %v1299 = vpack.c.b16 %v787, %v783
  %v1300 = vpack.c.b16 %v788, %v784
  %v1301 = vpack.c.b16 %v789, %v785
  %v1302 = vpack.c.b16 %v794, %v790
  %v1303 = vpack.c.b16 %v795, %v791
  %v1304 = vpack.c.b16 %v796, %v792
  %v1305 = vpack.c.b16 %v797, %v793
  %v1306 = vpack.c.b16 %v802, %v798
  %v1307 = vpack.c.b16 %v803, %v799
  %v1308 = vpack.c.b16 %v804, %v800
  %v1309 = vpack.c.b16 %v805, %v801
  %v1310 = vpack.c.b16 %v810, %v806
  %v1311 = vpack.c.b16 %v811, %v807
  %v1312 = vpack.c.b16 %v812, %v808
  %v1313 = vpack.c.b16 %v813, %v809
  %v1314 = vpack.c.b16 %v818, %v814
  %v1315 = vpack.c.b16 %v819, %v815
  %v1316 = vpack.c.b16 %v820, %v816
  %v1317 = vpack.c.b16 %v821, %v817
  %v1318 = vpack.c.b16 %v826, %v822
  %v1319 = vpack.c.b16 %v827, %v823
  %v1320 = vpack.c.b16 %v828, %v824
  %v1321 = vpack.c.b16 %v829, %v825
  %v1322 = vpack.c.b16 %v834, %v830
  %v1323 = vpack.c.b16 %v835, %v831
  %v1324 = vpack.c.b16 %v836, %v832
  %v1325 = vpack.c.b16 %v837, %v833
  %v1326 = vpack.c.b16 %v842, %v838
  %v1327 = vpack.c.b16 %v843, %v839
  %v1328 = vpack.c.b16 %v844, %v840
  %v1329 = vpack.c.b16 %v845, %v841
  %v1330 = vpack.c.b16 %v850, %v846
  %v1331 = vpack.c.b16 %v851, %v847
  %v1332 = vpack.c.b16 %v852, %v848
  %v1333 = vpack.c.b16 %v853, %v849
  %v1334 = vpack.c.b16 %v858, %v854
  %v1335 = vpack.c.b16 %v859, %v855
  %v1336 = vpack.c.b16 %v860, %v856
  %v1337 = vpack.c.b16 %v861, %v857
  %v1338 = vpack.c.b16 %v866, %v862
  %v1339 = vpack.c.b16 %v867, %v863
  %v1340 = vpack.c.b16 %v868, %v864
  %v1341 = vpack.c.b16 %v869, %v865
  %v1342 = vpack.c.b16 %v874, %v870
  %v1343 = vpack.c.b16 %v875, %v871
  %v1344 = vpack.c.b16 %v876, %v872
  %v1345 = vpack.c.b16 %v877, %v873
  %v1346 = vpack.c.b16 %v882, %v878
  %v1347 = vpack.c.b16 %v883, %v879
  %v1348 = vpack.c.b16 %v884, %v880
  %v1349 = vpack.c.b16 %v885, %v881
  %v1350 = vpack.c.b16 %v890, %v886
  %v1351 = vpack.c.b16 %v891, %v887
  %v1352 = vpack.c.b16 %v892, %v888
  %v1353 = vpack.c.b16 %v893, %v889
  %v1354 = vpack.c.b16 %v898, %v894
  %v1355 = vpack.c.b16 %v899, %v895
  %v1356 = vpack.c.b16 %v900, %v896
  %v1357 = vpack.c.b16 %v901, %v897
  %v1358 = vpack.c.b16 %v906, %v902
  %v1359 = vpack.c.b16 %v907, %v903
  %v1360 = vpack.c.b16 %v908, %v904
  %v1361 = vpack.c.b16 %v909, %v905
  %v1362 = vpack.c.b16 %v914, %v910
  %v1363 = vpack.c.b16 %v915, %v911
  %v1364 = vpack.c.b16 %v916, %v912
  %v1365 = vpack.c.b16 %v917, %v913
  %v1366 = vpack.c.b16 %v922, %v918
  %v1367 = vpack.c.b16 %v923, %v919
  %v1368 = vpack.c.b16 %v924, %v920
  %v1369 = vpack.c.b16 %v925, %v921
  %v1370 = vpack.c.b16 %v930, %v926
  %v1371 = vpack.c.b16 %v931, %v927
  %v1372 = vpack.c.b16 %v932, %v928
  %v1373 = vpack.c.b16 %v933, %v929
  %v1374 = vpack.c.b16 %v938, %v934
  %v1375 = vpack.c.b16 %v939, %v935
  %v1376 = vpack.c.b16 %v940, %v936
  %v1377 = vpack.c.b16 %v941, %v937
  %v1378 = vpack.c.b16 %v946, %v942
  %v1379 = vpack.c.b16 %v947, %v943
  %v1380 = vpack.c.b16 %v948, %v944
  %v1381 = vpack.c.b16 %v949, %v945
  %v1382 = vpack.c.b16 %v954, %v950
  %v1383 = vpack.c.b16 %v955, %v951
  %v1384 = vpack.c.b16 %v956, %v952
  %v1385 = vpack.c.b16 %v957, %v953
  %v1386 = vpack.c.b16 %v962, %v958
  %v1387 = vpack.c.b16 %v963, %v959
  %v1388 = vpack.c.b16 %v964, %v960
  %v1389 = vpack.c.b16 %v965, %v961
  %v1390 = vpack.c.b16 %v970, %v966
  %v1391 = vpack.c.b16 %v971, %v967
  %v1392 = vpack.c.b16 %v972, %v968
  %v1393 = vpack.c.b16 %v973, %v969
  %v1394 = vpack.c.b16 %v978, %v974
  %v1395 = vpack.c.b16 %v979, %v975
  %v1396 = vpack.c.b16 %v980, %v976
  %v1397 = vpack.c.b16 %v981, %v977
  %v1398 = vpack.c.b16 %v986, %v982
  %v1399 = vpack.c.b16 %v987, %v983
  %v1400 = vpack.c.b16 %v988, %v984
  %v1401 = vpack.c.b16 %v989, %v985
  %v1402 = vpack.c.b16 %v994, %v990
  %v1403 = vpack.c.b16 %v995, %v991
  %v1404 = vpack.c.b16 %v996, %v992
  %v1405 = vpack.c.b16 %v997, %v993
  %v1406 = vpack.c.b16 %v1002, %v998
  %v1407 = vpack.c.b16 %v1003, %v999
  %v1408 = vpack.c.b16 %v1004, %v1000
  %v1409 = vpack.c.b16 %v1005, %v1001
  %v1410 = vpack.c.b16 %v1010, %v1006
  %v1411 = vpack.c.b16 %v1011, %v1007
  %v1412 = vpack.c.b16 %v1012, %v1008
  %v1413 = vpack.c.b16 %v1013, %v1009
  %v1414 = vpack.c.b16 %v1018, %v1014
  %v1415 = vpack.c.b16 %v1019, %v1015
  %v1416 = vpack.c.b16 %v1020, %v1016
  %v1417 = vpack.c.b16 %v1021, %v1017
  %v1418 = vpack.c.b16 %v1026, %v1022
  %v1419 = vpack.c.b16 %v1027, %v1023
  %v1420 = vpack.c.b16 %v1028, %v1024
  %v1421 = vpack.c.b16 %v1029, %v1025
  %v1422 = vpack.c.b16 %v1034, %v1030
  %v1423 = vpack.c.b16 %v1035, %v1031
  %v1424 = vpack.c.b16 %v1036, %v1032
  %v1425 = vpack.c.b16 %v1037, %v1033
  %v1426 = vpack.c.b16 %v1042, %v1038
  %v1427 = vpack.c.b16 %v1043, %v1039
  %v1428 = vpack.c.b16 %v1044, %v1040
  %v1429 = vpack.c.b16 %v1045, %v1041
  %v1430 = vpack.c.b16 %v1050, %v1046
  %v1431 = vpack.c.b16 %v1051, %v1047
  %v1432 = vpack.c.b16 %v1052, %v1048
  %v1433 = vpack.c.b16 %v1053, %v1049
  %v1434 = vpack.c.b16 %v1058, %v1054
  %v1435 = vpack.c.b16 %v1059, %v1055
  %v1436 = vpack.c.b16 %v1060, %v1056
  %v1437 = vpack.c.b16 %v1061, %v1057
  %v1438 = vpack.c.b16 %v1066, %v1062
  %v1439 = vpack.c.b16 %v1067, %v1063
  %v1440 = vpack.c.b16 %v1068, %v1064
  %v1441 = vpack.c.b16 %v1069, %v1065
  %v1442 = vpack.c.b16 %v1074, %v1070
  %v1443 = vpack.c.b16 %v1075, %v1071
  %v1444 = vpack.c.b16 %v1076, %v1072
  %v1445 = vpack.c.b16 %v1077, %v1073
  %v1446 = vpack.c.b16 %v1082, %v1078
  %v1447 = vpack.c.b16 %v1083, %v1079
  %v1448 = vpack.c.b16 %v1084, %v1080
  %v1449 = vpack.c.b16 %v1085, %v1081
  %v1450 = vpack.c.b16 %v1090, %v1086
  %v1451 = vpack.c.b16 %v1091, %v1087
  %v1452 = vpack.c.b16 %v1092, %v1088
  %v1453 = vpack.c.b16 %v1093, %v1089
  %v1454 = vpack.c.b16 %v1098, %v1094
  %v1455 = vpack.c.b16 %v1099, %v1095
  %v1456 = vpack.c.b16 %v1100, %v1096
  %v1457 = vpack.c.b16 %v1101, %v1097
  %v1458 = vpack.c.b16 %v1106, %v1102
  %v1459 = vpack.c.b16 %v1107, %v1103
  %v1460 = vpack.c.b16 %v1108, %v1104
  %v1461 = vpack.c.b16 %v1109, %v1105
  %v1462 = vpack.c.b16 %v1114, %v1110
  %v1463 = vpack.c.b16 %v1115, %v1111
  %v1464 = vpack.c.b16 %v1116, %v1112
  %v1465 = vpack.c.b16 %v1117, %v1113
  %v1466 = vpack.c.b16 %v1122, %v1118
  %v1467 = vpack.c.b16 %v1123, %v1119
  %v1468 = vpack.c.b16 %v1124, %v1120
  %v1469 = vpack.c.b16 %v1125, %v1121
  %v1470 = vpack.c.b16 %v1130, %v1126
  %v1471 = vpack.c.b16 %v1131, %v1127
  %v1472 = vpack.c.b16 %v1132, %v1128
  %v1473 = vpack.c.b16 %v1133, %v1129
  %v1474 = vpack.c.b16 %v1138, %v1134
  %v1475 = vpack.c.b16 %v1139, %v1135
  %v1476 = vpack.c.b16 %v1140, %v1136
  %v1477 = vpack.c.b16 %v1141, %v1137
  %v1478 = vpack.c.b16 %v1146, %v1142
  %v1479 = vpack.c.b16 %v1147, %v1143
  %v1480 = vpack.c.b16 %v1148, %v1144
  %v1481 = vpack.c.b16 %v1149, %v1145
  %v1482 = vpack.c.b16 %v1154, %v1150
  %v1483 = vpack.c.b16 %v1155, %v1151
  %v1484 = vpack.c.b16 %v1156, %v1152
  %v1485 = vpack.c.b16 %v1157, %v1153
  %v1486 = vpack.c.b16 %v1162, %v1158
  %v1487 = vpack.c.b16 %v1163, %v1159
  %v1488 = vpack.c.b16 %v1164, %v1160
  %v1489 = vpack.c.b16 %v1165, %v1161
  %v1490 = vpack.c.b16 %v1170, %v1166
  %v1491 = vpack.c.b16 %v1171, %v1167
  %v1492 = vpack.c.b16 %v1172, %v1168
  %v1493 = vpack.c.b16 %v1173, %v1169
  %v1494 = vpack.c.b16 %v1178, %v1174
  %v1495 = vpack.c.b16 %v1179, %v1175
  %v1496 = vpack.c.b16 %v1180, %v1176
  %v1497 = vpack.c.b16 %v1181, %v1177
  %v1498 = vpack.c.b16 %v1186, %v1182
  %v1499 = vpack.c.b16 %v1187, %v1183
  %v1500 = vpack.c.b16 %v1188, %v1184
  %v1501 = vpack.c.b16 %v1189, %v1185
  %v1502 = vpack.c.b16 %v1194, %v1190
  %v1503 = vpack.c.b16 %v1195, %v1191
  %v1504 = vpack.c.b16 %v1196, %v1192
  %v1505 = vpack.c.b16 %v1197, %v1193
  %v1506 = vpack.c.b16 %v1202, %v1198
  %v1507 = vpack.c.b16 %v1203, %v1199
  %v1508 = vpack.c.b16 %v1204, %v1200
  %v1509 = vpack.c.b16 %v1205, %v1201
  %v1510 = vpack.c.b16 %v1210, %v1206
  %v1511 = vpack.c.b16 %v1211, %v1207
  %v1512 = vpack.c.b16 %v1212, %v1208
  %v1513 = vpack.c.b16 %v1213, %v1209
  %v1514 = vpack.c.b16 %v1218, %v1214
  %v1515 = vpack.c.b16 %v1219, %v1215
  %v1516 = vpack.c.b16 %v1220, %v1216
  %v1517 = vpack.c.b16 %v1221, %v1217
  %v1518 = vpack.c.b16 %v1226, %v1222
  %v1519 = vpack.c.b16 %v1227, %v1223
  %v1520 = vpack.c.b16 %v1228, %v1224
  %v1521 = vpack.c.b16 %v1229, %v1225
  %v1522 = vpack.c.b16 %v1234, %v1230
  %v1523 = vpack.c.b16 %v1235, %v1231
  %v1524 = vpack.c.b16 %v1236, %v1232
  %v1525 = vpack.c.b16 %v1237, %v1233
  %1814 = vmatprep.subr.bf16.mxu0 %v1267
  %1815 = vmatpush1.bf16.msra.mxu0 %v1266
  %1816 = vmatprep.subr.bf16.mxu0 %v1263
  %1817 = vmatpush1.bf16.msra.mxu0 %v1262
  %1818 = vmatprep.subr.bf16.mxu0 %v1259
  %1819 = vmatpush1.bf16.msra.mxu0 %v1258
  %1820 = vmatprep.subr.bf16.mxu0 %v1255
  %1821 = vmatpush1.bf16.msra.mxu0 %v1254
  %1822 = vmatprep.subr.bf16.mxu0 %v1251
  %1823 = vmatpush1.bf16.msra.mxu0 %v1250
  %1824 = vmatprep.subr.bf16.mxu0 %v1247
  %1825 = vmatpush1.bf16.msra.mxu0 %v1246
  %1826 = vmatprep.subr.bf16.mxu0 %v1243
  %1827 = vmatpush1.bf16.msra.mxu0 %v1242
  %1828 = vmatprep.subr.bf16.mxu0 %v1239
  %1829 = vmatpush1.bf16.msra.mxu0 %v1238
  %1830 = vmatprep.subr.bf16.mxu0 %v1299
  %1831 = vmatpush2.bf16.msra.mxu0 %v1298
  %1832 = vmatprep.subr.bf16.mxu0 %v1295
  %1833 = vmatpush2.bf16.msra.mxu0 %v1294
  %1834 = vmatprep.subr.bf16.mxu0 %v1291
  %1835 = vmatpush2.bf16.msra.mxu0 %v1290
  %1836 = vmatprep.subr.bf16.mxu0 %v1287
  %1837 = vmatpush2.bf16.msra.mxu0 %v1286
  %1838 = vmatprep.subr.bf16.mxu0 %v1283
  %1839 = vmatpush2.bf16.msra.mxu0 %v1282
  %1840 = vmatprep.subr.bf16.mxu0 %v1279
  %1841 = vmatpush2.bf16.msra.mxu0 %v1278
  %1842 = vmatprep.subr.bf16.mxu0 %v1275
  %1843 = vmatpush2.bf16.msra.mxu0 %v1274
  %1844 = vmatprep.subr.bf16.mxu0 %v1271
  %1845 = vmatpush2.bf16.msra.mxu0 %v1270
  %1846 = vmatprep.mubr.bf16.mxu0 %v357
  %1847 = vmatmul.mubr.bf16.gmra.mxu0 %v356
  %v1848 = vpop.f32.mrf.mxu0
  %v1849 = vadd.f32 %v325, %v1848
  %v1850 = vpop.f32.mrf.mxu0
  %v1851 = vadd.f32 %v329, %v1850
  %v1852 = vpop.f32.mrf.mxu0
  %v1853 = vpop.f32.mrf.mxu0
  %1854 = vdwg.mxu0
  %1855 = vmatprep.subr.bf16.mxu0 %v1331
  %1856 = vmatpush1.bf16.msra.mxu0 %v1330
  %1857 = vmatprep.subr.bf16.mxu0 %v1327
  %1858 = vmatpush1.bf16.msra.mxu0 %v1326
  %1859 = vmatprep.subr.bf16.mxu0 %v1323
  %1860 = vmatpush1.bf16.msra.mxu0 %v1322
  %1861 = vmatprep.subr.bf16.mxu0 %v1319
  %1862 = vmatpush1.bf16.msra.mxu0 %v1318
  %1863 = vmatprep.subr.bf16.mxu0 %v1315
  %1864 = vmatpush1.bf16.msra.mxu0 %v1314
  %1865 = vmatprep.subr.bf16.mxu0 %v1311
  %1866 = vmatpush1.bf16.msra.mxu0 %v1310
  %1867 = vmatprep.subr.bf16.mxu0 %v1307
  %1868 = vmatpush1.bf16.msra.mxu0 %v1306
  %1869 = vmatprep.subr.bf16.mxu0 %v1303
  %1870 = vmatpush1.bf16.msra.mxu0 %v1302
  %1871 = vmatprep.subr.bf16.mxu0 %v1363
  %1872 = vmatpush2.bf16.msra.mxu0 %v1362
  %1873 = vmatprep.subr.bf16.mxu0 %v1359
  %1874 = vmatpush2.bf16.msra.mxu0 %v1358
  %1875 = vmatprep.subr.bf16.mxu0 %v1355
  %1876 = vmatpush2.bf16.msra.mxu0 %v1354
  %1877 = vmatprep.subr.bf16.mxu0 %v1351
  %1878 = vmatpush2.bf16.msra.mxu0 %v1350
  %1879 = vmatprep.subr.bf16.mxu0 %v1347
  %1880 = vmatpush2.bf16.msra.mxu0 %v1346
  %1881 = vmatprep.subr.bf16.mxu0 %v1343
  %1882 = vmatpush2.bf16.msra.mxu0 %v1342
  %1883 = vmatprep.subr.bf16.mxu0 %v1339
  %1884 = vmatpush2.bf16.msra.mxu0 %v1338
  %1885 = vmatprep.subr.bf16.mxu0 %v1335
  %1886 = vmatpush2.bf16.msra.mxu0 %v1334
  %1887 = vmatprep.mubr.bf16.mxu0 %v359
  %1888 = vmatmul.mubr.bf16.gmra.mxu0 %v358
  %v1889 = vpop.f32.mrf.mxu0
  %v1890 = vadd.f32 %v1849, %v1889
  %v1891 = vpop.f32.mrf.mxu0
  %v1892 = vadd.f32 %v1851, %v1891
  %v1893 = vpop.f32.mrf.mxu0
  %v1894 = vpop.f32.mrf.mxu0
  %1895 = vdwg.mxu0
  %1896 = vmatprep.subr.bf16.mxu0 %v1395
  %1897 = vmatpush1.bf16.msra.mxu0 %v1394
  %1898 = vmatprep.subr.bf16.mxu0 %v1391
  %1899 = vmatpush1.bf16.msra.mxu0 %v1390
  %1900 = vmatprep.subr.bf16.mxu0 %v1387
  %1901 = vmatpush1.bf16.msra.mxu0 %v1386
  %1902 = vmatprep.subr.bf16.mxu0 %v1383
  %1903 = vmatpush1.bf16.msra.mxu0 %v1382
  %1904 = vmatprep.subr.bf16.mxu0 %v1379
  %1905 = vmatpush1.bf16.msra.mxu0 %v1378
  %1906 = vmatprep.subr.bf16.mxu0 %v1375
  %1907 = vmatpush1.bf16.msra.mxu0 %v1374
  %1908 = vmatprep.subr.bf16.mxu0 %v1371
  %1909 = vmatpush1.bf16.msra.mxu0 %v1370
  %1910 = vmatprep.subr.bf16.mxu0 %v1367
  %1911 = vmatpush1.bf16.msra.mxu0 %v1366
  %1912 = vmatprep.subr.bf16.mxu0 %v1427
  %1913 = vmatpush2.bf16.msra.mxu0 %v1426
  %1914 = vmatprep.subr.bf16.mxu0 %v1423
  %1915 = vmatpush2.bf16.msra.mxu0 %v1422
  %1916 = vmatprep.subr.bf16.mxu0 %v1419
  %1917 = vmatpush2.bf16.msra.mxu0 %v1418
  %1918 = vmatprep.subr.bf16.mxu0 %v1415
  %1919 = vmatpush2.bf16.msra.mxu0 %v1414
  %1920 = vmatprep.subr.bf16.mxu0 %v1411
  %1921 = vmatpush2.bf16.msra.mxu0 %v1410
  %1922 = vmatprep.subr.bf16.mxu0 %v1407
  %1923 = vmatpush2.bf16.msra.mxu0 %v1406
  %1924 = vmatprep.subr.bf16.mxu0 %v1403
  %1925 = vmatpush2.bf16.msra.mxu0 %v1402
  %1926 = vmatprep.subr.bf16.mxu0 %v1399
  %1927 = vmatpush2.bf16.msra.mxu0 %v1398
  %1928 = vmatprep.mubr.bf16.mxu0 %v361
  %1929 = vmatmul.mubr.bf16.gmra.mxu0 %v360
  %v1930 = vpop.f32.mrf.mxu0
  %v1931 = vadd.f32 %v1890, %v1930
  %v1932 = vpop.f32.mrf.mxu0
  %v1933 = vadd.f32 %v1892, %v1932
  %v1934 = vpop.f32.mrf.mxu0
  %v1935 = vpop.f32.mrf.mxu0
  %1936 = vdwg.mxu0
  %1937 = vmatprep.subr.bf16.mxu0 %v1459
  %1938 = vmatpush1.bf16.msra.mxu0 %v1458
  %1939 = vmatprep.subr.bf16.mxu0 %v1455
  %1940 = vmatpush1.bf16.msra.mxu0 %v1454
  %1941 = vmatprep.subr.bf16.mxu0 %v1451
  %1942 = vmatpush1.bf16.msra.mxu0 %v1450
  %1943 = vmatprep.subr.bf16.mxu0 %v1447
  %1944 = vmatpush1.bf16.msra.mxu0 %v1446
  %1945 = vmatprep.subr.bf16.mxu0 %v1443
  %1946 = vmatpush1.bf16.msra.mxu0 %v1442
  %1947 = vmatprep.subr.bf16.mxu0 %v1439
  %1948 = vmatpush1.bf16.msra.mxu0 %v1438
  %1949 = vmatprep.subr.bf16.mxu0 %v1435
  %1950 = vmatpush1.bf16.msra.mxu0 %v1434
  %1951 = vmatprep.subr.bf16.mxu0 %v1431
  %1952 = vmatpush1.bf16.msra.mxu0 %v1430
  %1953 = vmatprep.subr.bf16.mxu0 %v1491
  %1954 = vmatpush2.bf16.msra.mxu0 %v1490
  %1955 = vmatprep.subr.bf16.mxu0 %v1487
  %1956 = vmatpush2.bf16.msra.mxu0 %v1486
  %1957 = vmatprep.subr.bf16.mxu0 %v1483
  %1958 = vmatpush2.bf16.msra.mxu0 %v1482
  %1959 = vmatprep.subr.bf16.mxu0 %v1479
  %1960 = vmatpush2.bf16.msra.mxu0 %v1478
  %1961 = vmatprep.subr.bf16.mxu0 %v1475
  %1962 = vmatpush2.bf16.msra.mxu0 %v1474
  %1963 = vmatprep.subr.bf16.mxu0 %v1471
  %1964 = vmatpush2.bf16.msra.mxu0 %v1470
  %1965 = vmatprep.subr.bf16.mxu0 %v1467
  %1966 = vmatpush2.bf16.msra.mxu0 %v1466
  %1967 = vmatprep.subr.bf16.mxu0 %v1463
  %1968 = vmatpush2.bf16.msra.mxu0 %v1462
  %1969 = vmatprep.mubr.bf16.mxu0 %v363
  %1970 = vmatmul.mubr.bf16.gmra.mxu0 %v362
  %v1971 = vpop.f32.mrf.mxu0
  %v1972 = vadd.f32 %v1931, %v1971
  %v1973 = vpop.f32.mrf.mxu0
  %v1974 = vadd.f32 %v1933, %v1973
  %v1975 = vpop.f32.mrf.mxu0
  %v1976 = vpop.f32.mrf.mxu0
  %1977 = vdwg.mxu0
  %1978 = vmatprep.subr.bf16.mxu0 %v1523
  %1979 = vmatpush1.bf16.msra.mxu0 %v1522
  %1980 = vmatprep.subr.bf16.mxu0 %v1519
  %1981 = vmatpush1.bf16.msra.mxu0 %v1518
  %1982 = vmatprep.subr.bf16.mxu0 %v1515
  %1983 = vmatpush1.bf16.msra.mxu0 %v1514
  %1984 = vmatprep.subr.bf16.mxu0 %v1511
  %1985 = vmatpush1.bf16.msra.mxu0 %v1510
  %1986 = vmatprep.subr.bf16.mxu0 %v1507
  %1987 = vmatpush1.bf16.msra.mxu0 %v1506
  %1988 = vmatprep.subr.bf16.mxu0 %v1503
  %1989 = vmatpush1.bf16.msra.mxu0 %v1502
  %1990 = vmatprep.subr.bf16.mxu0 %v1499
  %1991 = vmatpush1.bf16.msra.mxu0 %v1498
  %1992 = vmatprep.subr.bf16.mxu0 %v1495
  %1993 = vmatpush1.bf16.msra.mxu0 %v1494
  %1994 = vmatprep.subr.bf16.mxu0 0
  %1995 = vmatpush2.bf16.msra.mxu0 0
  %1996 = vmatprep.subr.bf16.mxu0 0
  %1997 = vmatpush2.bf16.msra.mxu0 0
  %1998 = vmatprep.subr.bf16.mxu0 0
  %1999 = vmatpush2.bf16.msra.mxu0 0
  %2000 = vmatprep.subr.bf16.mxu0 0
  %2001 = vmatpush2.bf16.msra.mxu0 0
  %2002 = vmatprep.subr.bf16.mxu0 0
  %2003 = vmatpush2.bf16.msra.mxu0 0
  %2004 = vmatprep.subr.bf16.mxu0 0
  %2005 = vmatpush2.bf16.msra.mxu0 0
  %2006 = vmatprep.subr.bf16.mxu0 0
  %2007 = vmatpush2.bf16.msra.mxu0 0
  %2008 = vmatprep.subr.bf16.mxu0 0
  %2009 = vmatpush2.bf16.msra.mxu0 0
  %2010 = vmatprep.mubr.bf16.mxu0 0
  %2011 = vmatmul.mubr.bf16.gmra.mxu0 %v364
  %v2012 = vpop.f32.mrf.mxu0
  %v2013 = vadd.f32 %v1972, %v2012
  %v2014 = vpop.f32.mrf.mxu0
  %v2015 = vadd.f32 %v1974, %v2014
  %v2016 = vpop.f32.mrf.mxu0
  %v2017 = vpop.f32.mrf.mxu0
  %2018 = vdwg.mxu0
  %2019 = vmatprep.subr.bf16.mxu0 %v1269
  %2020 = vmatpush1.bf16.msra.mxu0 %v1268
  %2021 = vmatprep.subr.bf16.mxu0 %v1265
  %2022 = vmatpush1.bf16.msra.mxu0 %v1264
  %2023 = vmatprep.subr.bf16.mxu0 %v1261
  %2024 = vmatpush1.bf16.msra.mxu0 %v1260
  %2025 = vmatprep.subr.bf16.mxu0 %v1257
  %2026 = vmatpush1.bf16.msra.mxu0 %v1256
  %2027 = vmatprep.subr.bf16.mxu0 %v1253
  %2028 = vmatpush1.bf16.msra.mxu0 %v1252
  %2029 = vmatprep.subr.bf16.mxu0 %v1249
  %2030 = vmatpush1.bf16.msra.mxu0 %v1248
  %2031 = vmatprep.subr.bf16.mxu0 %v1245
  %2032 = vmatpush1.bf16.msra.mxu0 %v1244
  %2033 = vmatprep.subr.bf16.mxu0 %v1241
  %2034 = vmatpush1.bf16.msra.mxu0 %v1240
  %2035 = vmatprep.subr.bf16.mxu0 %v1301
  %2036 = vmatpush2.bf16.msra.mxu0 %v1300
  %2037 = vmatprep.subr.bf16.mxu0 %v1297
  %2038 = vmatpush2.bf16.msra.mxu0 %v1296
  %2039 = vmatprep.subr.bf16.mxu0 %v1293
  %2040 = vmatpush2.bf16.msra.mxu0 %v1292
  %2041 = vmatprep.subr.bf16.mxu0 %v1289
  %2042 = vmatpush2.bf16.msra.mxu0 %v1288
  %2043 = vmatprep.subr.bf16.mxu0 %v1285
  %2044 = vmatpush2.bf16.msra.mxu0 %v1284
  %2045 = vmatprep.subr.bf16.mxu0 %v1281
  %2046 = vmatpush2.bf16.msra.mxu0 %v1280
  %2047 = vmatprep.subr.bf16.mxu0 %v1277
  %2048 = vmatpush2.bf16.msra.mxu0 %v1276
  %2049 = vmatprep.subr.bf16.mxu0 %v1273
  %2050 = vmatpush2.bf16.msra.mxu0 %v1272
  %2051 = vmatprep.mubr.bf16.mxu0 %v357
  %2052 = vmatmul.mubr.bf16.gmra.mxu0 %v356
  %v2053 = vpop.f32.mrf.mxu0
  %v2054 = vadd.f32 %v333, %v2053
  %v2055 = vpop.f32.mrf.mxu0
  %v2056 = vadd.f32 %v337, %v2055
  %v2057 = vpop.f32.mrf.mxu0
  %v2058 = vpop.f32.mrf.mxu0
  %2059 = vdwg.mxu0
  %2060 = vmatprep.subr.bf16.mxu0 %v1333
  %2061 = vmatpush1.bf16.msra.mxu0 %v1332
  %2062 = vmatprep.subr.bf16.mxu0 %v1329
  %2063 = vmatpush1.bf16.msra.mxu0 %v1328
  %2064 = vmatprep.subr.bf16.mxu0 %v1325
  %2065 = vmatpush1.bf16.msra.mxu0 %v1324
  %2066 = vmatprep.subr.bf16.mxu0 %v1321
  %2067 = vmatpush1.bf16.msra.mxu0 %v1320
  %2068 = vmatprep.subr.bf16.mxu0 %v1317
  %2069 = vmatpush1.bf16.msra.mxu0 %v1316
  %2070 = vmatprep.subr.bf16.mxu0 %v1313
  %2071 = vmatpush1.bf16.msra.mxu0 %v1312
  %2072 = vmatprep.subr.bf16.mxu0 %v1309
  %2073 = vmatpush1.bf16.msra.mxu0 %v1308
  %2074 = vmatprep.subr.bf16.mxu0 %v1305
  %2075 = vmatpush1.bf16.msra.mxu0 %v1304
  %2076 = vmatprep.subr.bf16.mxu0 %v1365
  %2077 = vmatpush2.bf16.msra.mxu0 %v1364
  %2078 = vmatprep.subr.bf16.mxu0 %v1361
  %2079 = vmatpush2.bf16.msra.mxu0 %v1360
  %2080 = vmatprep.subr.bf16.mxu0 %v1357
  %2081 = vmatpush2.bf16.msra.mxu0 %v1356
  %2082 = vmatprep.subr.bf16.mxu0 %v1353
  %2083 = vmatpush2.bf16.msra.mxu0 %v1352
  %2084 = vmatprep.subr.bf16.mxu0 %v1349
  %2085 = vmatpush2.bf16.msra.mxu0 %v1348
  %2086 = vmatprep.subr.bf16.mxu0 %v1345
  %2087 = vmatpush2.bf16.msra.mxu0 %v1344
  %2088 = vmatprep.subr.bf16.mxu0 %v1341
  %2089 = vmatpush2.bf16.msra.mxu0 %v1340
  %2090 = vmatprep.subr.bf16.mxu0 %v1337
  %2091 = vmatpush2.bf16.msra.mxu0 %v1336
  %2092 = vmatprep.mubr.bf16.mxu0 %v359
  %2093 = vmatmul.mubr.bf16.gmra.mxu0 %v358
  %v2094 = vpop.f32.mrf.mxu0
  %v2095 = vadd.f32 %v2054, %v2094
  %v2096 = vpop.f32.mrf.mxu0
  %v2097 = vadd.f32 %v2056, %v2096
  %v2098 = vpop.f32.mrf.mxu0
  %v2099 = vpop.f32.mrf.mxu0
  %2100 = vdwg.mxu0
  %2101 = vmatprep.subr.bf16.mxu0 %v1397
  %2102 = vmatpush1.bf16.msra.mxu0 %v1396
  %2103 = vmatprep.subr.bf16.mxu0 %v1393
  %2104 = vmatpush1.bf16.msra.mxu0 %v1392
  %2105 = vmatprep.subr.bf16.mxu0 %v1389
  %2106 = vmatpush1.bf16.msra.mxu0 %v1388
  %2107 = vmatprep.subr.bf16.mxu0 %v1385
  %2108 = vmatpush1.bf16.msra.mxu0 %v1384
  %2109 = vmatprep.subr.bf16.mxu0 %v1381
  %2110 = vmatpush1.bf16.msra.mxu0 %v1380
  %2111 = vmatprep.subr.bf16.mxu0 %v1377
  %2112 = vmatpush1.bf16.msra.mxu0 %v1376
  %2113 = vmatprep.subr.bf16.mxu0 %v1373
  %2114 = vmatpush1.bf16.msra.mxu0 %v1372
  %2115 = vmatprep.subr.bf16.mxu0 %v1369
  %2116 = vmatpush1.bf16.msra.mxu0 %v1368
  %2117 = vmatprep.subr.bf16.mxu0 %v1429
  %2118 = vmatpush2.bf16.msra.mxu0 %v1428
  %2119 = vmatprep.subr.bf16.mxu0 %v1425
  %2120 = vmatpush2.bf16.msra.mxu0 %v1424
  %2121 = vmatprep.subr.bf16.mxu0 %v1421
  %2122 = vmatpush2.bf16.msra.mxu0 %v1420
  %2123 = vmatprep.subr.bf16.mxu0 %v1417
  %2124 = vmatpush2.bf16.msra.mxu0 %v1416
  %2125 = vmatprep.subr.bf16.mxu0 %v1413
  %2126 = vmatpush2.bf16.msra.mxu0 %v1412
  %2127 = vmatprep.subr.bf16.mxu0 %v1409
  %2128 = vmatpush2.bf16.msra.mxu0 %v1408
  %2129 = vmatprep.subr.bf16.mxu0 %v1405
  %2130 = vmatpush2.bf16.msra.mxu0 %v1404
  %2131 = vmatprep.subr.bf16.mxu0 %v1401
  %2132 = vmatpush2.bf16.msra.mxu0 %v1400
  %2133 = vmatprep.mubr.bf16.mxu0 %v361
  %2134 = vmatmul.mubr.bf16.gmra.mxu0 %v360
  %v2135 = vpop.f32.mrf.mxu0
  %v2136 = vadd.f32 %v2095, %v2135
  %v2137 = vpop.f32.mrf.mxu0
  %v2138 = vadd.f32 %v2097, %v2137
  %v2139 = vpop.f32.mrf.mxu0
  %v2140 = vpop.f32.mrf.mxu0
  %2141 = vdwg.mxu0
  %2142 = vmatprep.subr.bf16.mxu0 %v1461
  %2143 = vmatpush1.bf16.msra.mxu0 %v1460
  %2144 = vmatprep.subr.bf16.mxu0 %v1457
  %2145 = vmatpush1.bf16.msra.mxu0 %v1456
  %2146 = vmatprep.subr.bf16.mxu0 %v1453
  %2147 = vmatpush1.bf16.msra.mxu0 %v1452
  %2148 = vmatprep.subr.bf16.mxu0 %v1449
  %2149 = vmatpush1.bf16.msra.mxu0 %v1448
  %2150 = vmatprep.subr.bf16.mxu0 %v1445
  %2151 = vmatpush1.bf16.msra.mxu0 %v1444
  %2152 = vmatprep.subr.bf16.mxu0 %v1441
  %2153 = vmatpush1.bf16.msra.mxu0 %v1440
  %2154 = vmatprep.subr.bf16.mxu0 %v1437
  %2155 = vmatpush1.bf16.msra.mxu0 %v1436
  %2156 = vmatprep.subr.bf16.mxu0 %v1433
  %2157 = vmatpush1.bf16.msra.mxu0 %v1432
  %2158 = vmatprep.subr.bf16.mxu0 %v1493
  %2159 = vmatpush2.bf16.msra.mxu0 %v1492
  %2160 = vmatprep.subr.bf16.mxu0 %v1489
  %2161 = vmatpush2.bf16.msra.mxu0 %v1488
  %2162 = vmatprep.subr.bf16.mxu0 %v1485
  %2163 = vmatpush2.bf16.msra.mxu0 %v1484
  %2164 = vmatprep.subr.bf16.mxu0 %v1481
  %2165 = vmatpush2.bf16.msra.mxu0 %v1480
  %2166 = vmatprep.subr.bf16.mxu0 %v1477
  %2167 = vmatpush2.bf16.msra.mxu0 %v1476
  %2168 = vmatprep.subr.bf16.mxu0 %v1473
  %2169 = vmatpush2.bf16.msra.mxu0 %v1472
  %2170 = vmatprep.subr.bf16.mxu0 %v1469
  %2171 = vmatpush2.bf16.msra.mxu0 %v1468
  %2172 = vmatprep.subr.bf16.mxu0 %v1465
  %2173 = vmatpush2.bf16.msra.mxu0 %v1464
  %2174 = vmatprep.mubr.bf16.mxu0 %v363
  %2175 = vmatmul.mubr.bf16.gmra.mxu0 %v362
  %v2176 = vpop.f32.mrf.mxu0
  %v2177 = vadd.f32 %v2136, %v2176
  %v2178 = vpop.f32.mrf.mxu0
  %v2179 = vadd.f32 %v2138, %v2178
  %v2180 = vpop.f32.mrf.mxu0
  %v2181 = vpop.f32.mrf.mxu0
  %2182 = vdwg.mxu0
  %2183 = vmatprep.subr.bf16.mxu0 %v1525
  %2184 = vmatpush1.bf16.msra.mxu0 %v1524
  %2185 = vmatprep.subr.bf16.mxu0 %v1521
  %2186 = vmatpush1.bf16.msra.mxu0 %v1520
  %2187 = vmatprep.subr.bf16.mxu0 %v1517
  %2188 = vmatpush1.bf16.msra.mxu0 %v1516
  %2189 = vmatprep.subr.bf16.mxu0 %v1513
  %2190 = vmatpush1.bf16.msra.mxu0 %v1512
  %2191 = vmatprep.subr.bf16.mxu0 %v1509
  %2192 = vmatpush1.bf16.msra.mxu0 %v1508
  %2193 = vmatprep.subr.bf16.mxu0 %v1505
  %2194 = vmatpush1.bf16.msra.mxu0 %v1504
  %2195 = vmatprep.subr.bf16.mxu0 %v1501
  %2196 = vmatpush1.bf16.msra.mxu0 %v1500
  %2197 = vmatprep.subr.bf16.mxu0 %v1497
  %2198 = vmatpush1.bf16.msra.mxu0 %v1496
  %2199 = vmatprep.subr.bf16.mxu0 0
  %2200 = vmatpush2.bf16.msra.mxu0 0
  %2201 = vmatprep.subr.bf16.mxu0 0
  %2202 = vmatpush2.bf16.msra.mxu0 0
  %2203 = vmatprep.subr.bf16.mxu0 0
  %2204 = vmatpush2.bf16.msra.mxu0 0
  %2205 = vmatprep.subr.bf16.mxu0 0
  %2206 = vmatpush2.bf16.msra.mxu0 0
  %2207 = vmatprep.subr.bf16.mxu0 0
  %2208 = vmatpush2.bf16.msra.mxu0 0
  %2209 = vmatprep.subr.bf16.mxu0 0
  %2210 = vmatpush2.bf16.msra.mxu0 0
  %2211 = vmatprep.subr.bf16.mxu0 0
  %2212 = vmatpush2.bf16.msra.mxu0 0
  %2213 = vmatprep.subr.bf16.mxu0 0
  %2214 = vmatpush2.bf16.msra.mxu0 0
  %2215 = vmatprep.mubr.bf16.mxu0 0
  %2216 = vmatmul.mubr.bf16.gmra.mxu0 %v364
  %v2217 = vpop.f32.mrf.mxu0
  %v2218 = vadd.f32 %v2177, %v2217
  %v2219 = vpop.f32.mrf.mxu0
  %v2220 = vadd.f32 %v2179, %v2219
  %v2221 = vpop.f32.mrf.mxu0
  %v2222 = vpop.f32.mrf.mxu0
  %2223 = vdwg.mxu0
  %v2224 = vmax.f32 %v2013, 0.0
  %v2225 = vmax.f32 %v2015, 0.0
  %v2226 = vmax.f32 %v2218, 0.0
  %v2227 = vmax.f32 %v2220, 0.0
  %v2228 = vpack.c.bf16 %v2224, %v2224
  %v2229 = vpack.c.bf16 %v2225, %v2225
  %v2230 = vpack.c.bf16 %v2226, %v2226
  %v2231 = vpack.c.bf16 %v2227, %v2227
  %v2232 = vld [vmem:[%s3] sm:$0xf]
  %v2233 = vld [vmem:[%s3 + $0x4] sm:$0xf]
  %v2234 = vld [vmem:[%s3 + $0x8] sm:$0xf]
  %v2235 = vld [vmem:[%s3 + $0xc] sm:$0xf]
  %v2236 = vld [vmem:[%s3 + $0x10] sm:$0xf]
  %v2237 = vld [vmem:[%s3 + $0x14] sm:$0xf]
  %v2238 = vld [vmem:[%s3 + $0x18] sm:$0xf]
  %v2239 = vld [vmem:[%s3 + $0x1c] sm:$0xf]
  %v2240 = vld [vmem:[%s3 + $0x20] sm:$0xf]
  %v2241 = vld [vmem:[%s3 + $0x24] sm:$0xf]
  %v2242 = vld [vmem:[%s3 + $0x28] sm:$0xf]
  %v2243 = vld [vmem:[%s3 + $0x2c] sm:$0xf]
  %v2244 = vld [vmem:[%s3 + $0x30] sm:$0xf]
  %v2245 = vld [vmem:[%s3 + $0x34] sm:$0xf]
  %v2246 = vld [vmem:[%s3 + $0x38] sm:$0xf]
  %v2247 = vld [vmem:[%s3 + $0x3c] sm:$0xf]
  %v2248 = vld [vmem:[%s3 + $0x40] sm:$0xf]
  %v2249 = vld [vmem:[%s3 + $0x44] sm:$0xf]
  %v2250 = vld [vmem:[%s3 + $0x48] sm:$0xf]
  %v2251 = vld [vmem:[%s3 + $0x4c] sm:$0xf]
  %v2252 = vld [vmem:[%s3 + $0x50] sm:$0xf]
  %v2253 = vld [vmem:[%s3 + $0x54] sm:$0xf]
  %v2254 = vld [vmem:[%s3 + $0x58] sm:$0xf]
  %v2255 = vld [vmem:[%s3 + $0x5c] sm:$0xf]
  %v2256 = vld [vmem:[%s3 + $0x60] sm:$0xf]
  %v2257 = vld [vmem:[%s3 + $0x64] sm:$0xf]
  %v2258 = vld [vmem:[%s3 + $0x68] sm:$0xf]
  %v2259 = vld [vmem:[%s3 + $0x6c] sm:$0xf]
  %v2260 = vld [vmem:[%s3 + $0x70] sm:$0xf]
  %v2261 = vld [vmem:[%s3 + $0x74] sm:$0xf]
  %v2262 = vld [vmem:[%s3 + $0x78] sm:$0xf]
  %v2263 = vld [vmem:[%s3 + $0x7c] sm:$0xf]
  %v2264 = vld [vmem:[%s3 + $0x80] sm:$0xf]
  %v2265 = vld [vmem:[%s3 + $0x84] sm:$0xf]
  %v2266 = vld [vmem:[%s3 + $0x88] sm:$0xf]
  %v2267 = vld [vmem:[%s3 + $0x8c] sm:$0xf]
  %v2268 = vld [vmem:[%s3 + $0x90] sm:$0xf]
  %v2269 = vld [vmem:[%s3 + $0x94] sm:$0xf]
  %v2270 = vld [vmem:[%s3 + $0x98] sm:$0xf]
  %v2271 = vld [vmem:[%s3 + $0x9c] sm:$0xf]
  %v2272 = vld [vmem:[%s3 + $0xa0] sm:$0xf]
  %v2273 = vld [vmem:[%s3 + $0xa4] sm:$0xf]
  %v2274 = vld [vmem:[%s3 + $0xa8] sm:$0xf]
  %v2275 = vld [vmem:[%s3 + $0xac] sm:$0xf]
  %v2276 = vld [vmem:[%s3 + $0xb0] sm:$0xf]
  %v2277 = vld [vmem:[%s3 + $0xb4] sm:$0xf]
  %v2278 = vld [vmem:[%s3 + $0xb8] sm:$0xf]
  %v2279 = vld [vmem:[%s3 + $0xbc] sm:$0xf]
  %v2280 = vld [vmem:[%s3 + $0xc0] sm:$0xf]
  %v2281 = vld [vmem:[%s3 + $0xc4] sm:$0xf]
  %v2282 = vld [vmem:[%s3 + $0xc8] sm:$0xf]
  %v2283 = vld [vmem:[%s3 + $0xcc] sm:$0xf]
  %v2284 = vld [vmem:[%s3 + $0xd0] sm:$0xf]
  %v2285 = vld [vmem:[%s3 + $0xd4] sm:$0xf]
  %v2286 = vld [vmem:[%s3 + $0xd8] sm:$0xf]
  %v2287 = vld [vmem:[%s3 + $0xdc] sm:$0xf]
  %v2288 = vld [vmem:[%s3 + $0xe0] sm:$0xf]
  %v2289 = vld [vmem:[%s3 + $0xe4] sm:$0xf]
  %v2290 = vld [vmem:[%s3 + $0xe8] sm:$0xf]
  %v2291 = vld [vmem:[%s3 + $0xec] sm:$0xf]
  %v2292 = vld [vmem:[%s3 + $0xf0] sm:$0xf]
  %v2293 = vld [vmem:[%s3 + $0xf4] sm:$0xf]
  %v2294 = vld [vmem:[%s3 + $0xf8] sm:$0xf]
  %v2295 = vld [vmem:[%s3 + $0xfc] sm:$0xf]
  %v2296 = vld [vmem:[%s4] sm:$0x1]
  %v2298 = vlaneseq
  %v2299 = vshrl.u32 %v2298, 7
  %v2300 = vsub.s32 0, %v2299
  %v2301 = vrot.slane %v2296, %v2300
  %v2367 = vunpack.c.l.b16 %v2232
  %v2368 = vunpack.c.l.b16 %v2233
  %v2369 = vunpack.c.l.b16 %v2234
  %v2370 = vunpack.c.l.b16 %v2235
  %v2371 = vunpack.c.l.b16 %v2236
  %v2372 = vunpack.c.l.b16 %v2237
  %v2373 = vunpack.c.l.b16 %v2238
  %v2374 = vunpack.c.l.b16 %v2239
  %v2375 = vunpack.c.l.b16 %v2240
  %v2376 = vunpack.c.l.b16 %v2241
  %v2377 = vunpack.c.l.b16 %v2242
  %v2378 = vunpack.c.l.b16 %v2243
  %v2379 = vunpack.c.l.b16 %v2244
  %v2380 = vunpack.c.l.b16 %v2245
  %v2381 = vunpack.c.l.b16 %v2246
  %v2382 = vunpack.c.l.b16 %v2247
  %v2383 = vunpack.c.l.b16 %v2248
  %v2384 = vunpack.c.l.b16 %v2249
  %v2385 = vunpack.c.l.b16 %v2250
  %v2386 = vunpack.c.l.b16 %v2251
  %v2387 = vunpack.c.l.b16 %v2252
  %v2388 = vunpack.c.l.b16 %v2253
  %v2389 = vunpack.c.l.b16 %v2254
  %v2390 = vunpack.c.l.b16 %v2255
  %v2391 = vunpack.c.l.b16 %v2256
  %v2392 = vunpack.c.l.b16 %v2257
  %v2393 = vunpack.c.l.b16 %v2258
  %v2394 = vunpack.c.l.b16 %v2259
  %v2395 = vunpack.c.l.b16 %v2260
  %v2396 = vunpack.c.l.b16 %v2261
  %v2397 = vunpack.c.l.b16 %v2262
  %v2398 = vunpack.c.l.b16 %v2263
  %v2399 = vunpack.c.l.b16 %v2264
  %v2400 = vunpack.c.l.b16 %v2265
  %v2401 = vunpack.c.l.b16 %v2266
  %v2402 = vunpack.c.l.b16 %v2267
  %v2403 = vunpack.c.l.b16 %v2268
  %v2404 = vunpack.c.l.b16 %v2269
  %v2405 = vunpack.c.l.b16 %v2270
  %v2406 = vunpack.c.l.b16 %v2271
  %v2407 = vunpack.c.l.b16 %v2272
  %v2408 = vunpack.c.l.b16 %v2273
  %v2409 = vunpack.c.l.b16 %v2274
  %v2410 = vunpack.c.l.b16 %v2275
  %v2411 = vunpack.c.l.b16 %v2276
  %v2412 = vunpack.c.l.b16 %v2277
  %v2413 = vunpack.c.l.b16 %v2278
  %v2414 = vunpack.c.l.b16 %v2279
  %v2415 = vunpack.c.l.b16 %v2280
  %v2416 = vunpack.c.l.b16 %v2281
  %v2417 = vunpack.c.l.b16 %v2282
  %v2418 = vunpack.c.l.b16 %v2283
  %v2419 = vunpack.c.l.b16 %v2284
  %v2420 = vunpack.c.l.b16 %v2285
  %v2421 = vunpack.c.l.b16 %v2286
  %v2422 = vunpack.c.l.b16 %v2287
  %v2423 = vunpack.c.l.b16 %v2288
  %v2424 = vunpack.c.l.b16 %v2289
  %v2425 = vunpack.c.l.b16 %v2290
  %v2426 = vunpack.c.l.b16 %v2291
  %v2427 = vunpack.c.l.b16 %v2292
  %v2428 = vunpack.c.l.b16 %v2293
  %v2429 = vunpack.c.l.b16 %v2294
  %v2430 = vunpack.c.l.b16 %v2295
  %v2431 = vpack.c.b16 %v2368, %v2367
  %v2432 = vpack.c.b16 %v2370, %v2369
  %v2433 = vpack.c.b16 %v2372, %v2371
  %v2434 = vpack.c.b16 %v2374, %v2373
  %v2435 = vpack.c.b16 %v2376, %v2375
  %v2436 = vpack.c.b16 %v2378, %v2377
  %v2437 = vpack.c.b16 %v2380, %v2379
  %v2438 = vpack.c.b16 %v2382, %v2381
  %v2439 = vpack.c.b16 %v2384, %v2383
  %v2440 = vpack.c.b16 %v2386, %v2385
  %v2441 = vpack.c.b16 %v2388, %v2387
  %v2442 = vpack.c.b16 %v2390, %v2389
  %v2443 = vpack.c.b16 %v2392, %v2391
  %v2444 = vpack.c.b16 %v2394, %v2393
  %v2445 = vpack.c.b16 %v2396, %v2395
  %v2446 = vpack.c.b16 %v2398, %v2397
  %v2447 = vpack.c.b16 %v2400, %v2399
  %v2448 = vpack.c.b16 %v2402, %v2401
  %v2449 = vpack.c.b16 %v2404, %v2403
  %v2450 = vpack.c.b16 %v2406, %v2405
  %v2451 = vpack.c.b16 %v2408, %v2407
  %v2452 = vpack.c.b16 %v2410, %v2409
  %v2453 = vpack.c.b16 %v2412, %v2411
  %v2454 = vpack.c.b16 %v2414, %v2413
  %v2455 = vpack.c.b16 %v2416, %v2415
  %v2456 = vpack.c.b16 %v2418, %v2417
  %v2457 = vpack.c.b16 %v2420, %v2419
  %v2458 = vpack.c.b16 %v2422, %v2421
  %v2459 = vpack.c.b16 %v2424, %v2423
  %v2460 = vpack.c.b16 %v2426, %v2425
  %v2461 = vpack.c.b16 %v2428, %v2427
  %v2462 = vpack.c.b16 %v2430, %v2429
  %2495 = vmatprep.subr.bf16.mxu0 0
  %2496 = vmatpush1.bf16.msra.mxu0 %v2438
  %2497 = vmatprep.subr.bf16.mxu0 0
  %2498 = vmatpush1.bf16.msra.mxu0 %v2437
  %2499 = vmatprep.subr.bf16.mxu0 0
  %2500 = vmatpush1.bf16.msra.mxu0 %v2436
  %2501 = vmatprep.subr.bf16.mxu0 0
  %2502 = vmatpush1.bf16.msra.mxu0 %v2435
  %2503 = vmatprep.subr.bf16.mxu0 0
  %2504 = vmatpush1.bf16.msra.mxu0 %v2434
  %2505 = vmatprep.subr.bf16.mxu0 0
  %2506 = vmatpush1.bf16.msra.mxu0 %v2433
  %2507 = vmatprep.subr.bf16.mxu0 0
  %2508 = vmatpush1.bf16.msra.mxu0 %v2432
  %2509 = vmatprep.subr.bf16.mxu0 0
  %2510 = vmatpush1.bf16.msra.mxu0 %v2431
  %2511 = vmatprep.subr.bf16.mxu0 0
  %2512 = vmatpush2.bf16.msra.mxu0 %v2446
  %2513 = vmatprep.subr.bf16.mxu0 0
  %2514 = vmatpush2.bf16.msra.mxu0 %v2445
  %2515 = vmatprep.subr.bf16.mxu0 0
  %2516 = vmatpush2.bf16.msra.mxu0 %v2444
  %2517 = vmatprep.subr.bf16.mxu0 0
  %2518 = vmatpush2.bf16.msra.mxu0 %v2443
  %2519 = vmatprep.subr.bf16.mxu0 0
  %2520 = vmatpush2.bf16.msra.mxu0 %v2442
  %2521 = vmatprep.subr.bf16.mxu0 0
  %2522 = vmatpush2.bf16.msra.mxu0 %v2441
  %2523 = vmatprep.subr.bf16.mxu0 0
  %2524 = vmatpush2.bf16.msra.mxu0 %v2440
  %2525 = vmatprep.subr.bf16.mxu0 0
  %2526 = vmatpush2.bf16.msra.mxu0 %v2439
  %2527 = vmatprep.mubr.bf16.mxu0 %v2229
  %2528 = vmatmul.mubr.bf16.gmra.mxu0 %v2228
  %v2529 = vpop.f32.mrf.mxu0
  %v2530 = vadd.f32 %v2301, %v2529
  %v2531 = vpop.f32.mrf.mxu0
  %v2532 = vpop.f32.mrf.mxu0
  %v2533 = vpop.f32.mrf.mxu0
  %2534 = vdwg.mxu0
  %2535 = vmatprep.subr.bf16.mxu0 0
  %2536 = vmatpush1.bf16.msra.mxu0 %v2454
  %2537 = vmatprep.subr.bf16.mxu0 0
  %2538 = vmatpush1.bf16.msra.mxu0 %v2453
  %2539 = vmatprep.subr.bf16.mxu0 0
  %2540 = vmatpush1.bf16.msra.mxu0 %v2452
  %2541 = vmatprep.subr.bf16.mxu0 0
  %2542 = vmatpush1.bf16.msra.mxu0 %v2451
  %2543 = vmatprep.subr.bf16.mxu0 0
  %2544 = vmatpush1.bf16.msra.mxu0 %v2450
  %2545 = vmatprep.subr.bf16.mxu0 0
  %2546 = vmatpush1.bf16.msra.mxu0 %v2449
  %2547 = vmatprep.subr.bf16.mxu0 0
  %2548 = vmatpush1.bf16.msra.mxu0 %v2448
  %2549 = vmatprep.subr.bf16.mxu0 0
  %2550 = vmatpush1.bf16.msra.mxu0 %v2447
  %2551 = vmatprep.subr.bf16.mxu0 0
  %2552 = vmatpush2.bf16.msra.mxu0 %v2462
  %2553 = vmatprep.subr.bf16.mxu0 0
  %2554 = vmatpush2.bf16.msra.mxu0 %v2461
  %2555 = vmatprep.subr.bf16.mxu0 0
  %2556 = vmatpush2.bf16.msra.mxu0 %v2460
  %2557 = vmatprep.subr.bf16.mxu0 0
  %2558 = vmatpush2.bf16.msra.mxu0 %v2459
  %2559 = vmatprep.subr.bf16.mxu0 0
  %2560 = vmatpush2.bf16.msra.mxu0 %v2458
  %2561 = vmatprep.subr.bf16.mxu0 0
  %2562 = vmatpush2.bf16.msra.mxu0 %v2457
  %2563 = vmatprep.subr.bf16.mxu0 0
  %2564 = vmatpush2.bf16.msra.mxu0 %v2456
  %2565 = vmatprep.subr.bf16.mxu0 0
  %2566 = vmatpush2.bf16.msra.mxu0 %v2455
  %2567 = vmatprep.mubr.bf16.mxu0 %v2231
  %2568 = vmatmul.mubr.bf16.gmra.mxu0 %v2230
  %v2569 = vpop.f32.mrf.mxu0
  %v2570 = vadd.f32 %v2530, %v2569
  %v2571 = vpop.f32.mrf.mxu0
  %v2572 = vpop.f32.mrf.mxu0
  %v2573 = vpop.f32.mrf.mxu0
  %2574 = vdwg.mxu0
  %v2575 = vmax.f32 %v2570, 0.0
  %v2576 = vpack.c.bf16 %v2575, %v2575
  %v2577 = vld [vmem:[%s5] sm:$0xf]
  %v2578 = vld [vmem:[%s5 + $0x4] sm:$0xf]
  %v2579 = vld [vmem:[%s5 + $0x8] sm:$0xf]
  %v2580 = vld [vmem:[%s5 + $0xc] sm:$0xf]
  %v2581 = vld [vmem:[%s5 + $0x10] sm:$0xf]
  %v2582 = vld [vmem:[%s5 + $0x14] sm:$0xf]
  %v2583 = vld [vmem:[%s5 + $0x18] sm:$0xf]
  %v2584 = vld [vmem:[%s5 + $0x1c] sm:$0xf]
  %v2585 = vld [vmem:[%s5 + $0x20] sm:$0xf]
  %v2586 = vld [vmem:[%s5 + $0x24] sm:$0xf]
  %v2587 = vld [vmem:[%s5 + $0x28] sm:$0xf]
  %v2588 = vld [vmem:[%s5 + $0x2c] sm:$0xf]
  %v2589 = vld [vmem:[%s5 + $0x30] sm:$0xf]
  %v2590 = vld [vmem:[%s5 + $0x34] sm:$0xf]
  %v2591 = vld [vmem:[%s5 + $0x38] sm:$0xf]
  %v2592 = vld [vmem:[%s5 + $0x3c] sm:$0xf]
  %v2593 = vld [vmem:[%s6] sm:$0x1]
  %v2595 = vlaneseq
  %v2596 = vshrl.u32 %v2595, 7
  %v2597 = vsub.s32 0, %v2596
  %v2598 = vrot.slane %v2593, %v2597
  %v2616 = vunpack.c.l.b16 %v2577
  %v2617 = vunpack.c.l.b16 %v2578
  %v2618 = vunpack.c.l.b16 %v2579
  %v2619 = vunpack.c.l.b16 %v2580
  %v2620 = vunpack.c.l.b16 %v2581
  %v2621 = vunpack.c.l.b16 %v2582
  %v2622 = vunpack.c.l.b16 %v2583
  %v2623 = vunpack.c.l.b16 %v2584
  %v2624 = vunpack.c.l.b16 %v2585
  %v2625 = vunpack.c.l.b16 %v2586
  %v2626 = vunpack.c.l.b16 %v2587
  %v2627 = vunpack.c.l.b16 %v2588
  %v2628 = vunpack.c.l.b16 %v2589
  %v2629 = vunpack.c.l.b16 %v2590
  %v2630 = vunpack.c.l.b16 %v2591
  %v2631 = vunpack.c.l.b16 %v2592
  %v2632 = vpack.c.b16 %v2617, %v2616
  %v2633 = vpack.c.b16 %v2619, %v2618
  %v2634 = vpack.c.b16 %v2621, %v2620
  %v2635 = vpack.c.b16 %v2623, %v2622
  %v2636 = vpack.c.b16 %v2625, %v2624
  %v2637 = vpack.c.b16 %v2627, %v2626
  %v2638 = vpack.c.b16 %v2629, %v2628
  %v2639 = vpack.c.b16 %v2631, %v2630
  %2648 = vmatprep.subr.bf16.mxu0 0
  %2649 = vmatpush1.bf16.msra.mxu0 %v2639
  %2650 = vmatprep.subr.bf16.mxu0 0
  %2651 = vmatpush1.bf16.msra.mxu0 %v2638
  %2652 = vmatprep.subr.bf16.mxu0 0
  %2653 = vmatpush1.bf16.msra.mxu0 %v2637
  %2654 = vmatprep.subr.bf16.mxu0 0
  %2655 = vmatpush1.bf16.msra.mxu0 %v2636
  %2656 = vmatprep.subr.bf16.mxu0 0
  %2657 = vmatpush1.bf16.msra.mxu0 %v2635
  %2658 = vmatprep.subr.bf16.mxu0 0
  %2659 = vmatpush1.bf16.msra.mxu0 %v2634
  %2660 = vmatprep.subr.bf16.mxu0 0
  %2661 = vmatpush1.bf16.msra.mxu0 %v2633
  %2662 = vmatprep.subr.bf16.mxu0 0
  %2663 = vmatpush1.bf16.msra.mxu0 %v2632
  %2664 = vmatprep.subr.bf16.mxu0 0
  %2665 = vmatpush2.bf16.msra.mxu0 0
  %2666 = vmatprep.subr.bf16.mxu0 0
  %2667 = vmatpush2.bf16.msra.mxu0 0
  %2668 = vmatprep.subr.bf16.mxu0 0
  %2669 = vmatpush2.bf16.msra.mxu0 0
  %2670 = vmatprep.subr.bf16.mxu0 0
  %2671 = vmatpush2.bf16.msra.mxu0 0
  %2672 = vmatprep.subr.bf16.mxu0 0
  %2673 = vmatpush2.bf16.msra.mxu0 0
  %2674 = vmatprep.subr.bf16.mxu0 0
  %2675 = vmatpush2.bf16.msra.mxu0 0
  %2676 = vmatprep.subr.bf16.mxu0 0
  %2677 = vmatpush2.bf16.msra.mxu0 0
  %2678 = vmatprep.subr.bf16.mxu0 0
  %2679 = vmatpush2.bf16.msra.mxu0 0
  %2680 = vmatprep.mubr.bf16.mxu0 0
  %2681 = vmatmul.mubr.bf16.gmra.mxu0 %v2576
  %v2682 = vpop.f32.mrf.mxu0
  %v2683 = vadd.f32 %v2598, %v2682
  %v2684 = vpop.f32.mrf.mxu0
  %v2685 = vpop.f32.mrf.mxu0
  %v2686 = vpop.f32.mrf.mxu0
  %2687 = vdwg.mxu0
  %2688 = vst [vmem:[%s7] sm:$0xff] %v2683
  // Predicated region
  $region30: #{net_forward.3} parent=0 // pred_check
    _
  $region31: #{net_forward.3} parent=0 // pred_check_branch
    %2690 = sbr.rel (0) target = $region33
  $region32: #{net_forward.3} parent=0 // pred_region
    _
  $region33: #{net_forward.3} parent=0 // pred_fallthru
    _
  // Predicated region
  $region34: #{net_forward.3} parent=0 // pred_check
    _
  $region35: #{net_forward.3} parent=0 // pred_check_branch
    %2692 = sbr.rel (0) target = $region37
  $region36: #{net_forward.3} parent=0 // pred_region
    _
  $region37: #{net_forward.3} parent=0 // pred_fallthru
    _

// kernel: net_forward.2
$region0: #{net_forward.2}
  #allocation0 [shape = 'u32[]', space=smem, size = 0x4, offset = 0x4, fixed_abs, tag = 'smem constant byte address 0x4 - core index']
  #allocation1 [shape = 'u32[144,128]{1,0:T(1,128)}', space=vmem, size = 0x12000, scoped, tag = 'internal scratch']
  #allocation2 [shape = 'bf16[152,32]{1,0:T(8,128)(2,1)}', space=vmem, size = 0x9800, scoped, tag = 'scratch operand']
  #allocation3 [shape = 'bf16[88,64]{1,0:T(8,128)(2,1)}', space=vmem, size = 0x5800, scoped, tag = 'scratch operand']
  %s0 = inlined_call_operand.vmem [shape: bf16[2,232,24], index: 0, kind: input, shape index: {}]
  %s1 = inlined_call_operand.hbm [shape: bf16[6,24,32], index: 1, kind: input, shape index: {}]
  %s2 = inlined_call_operand.hbm [shape: f32[1,32], index: 2, kind: input, shape index: {}]
  %s3 = inlined_call_operand.hbm [shape: bf16[25,32,64], index: 3, kind: input, shape index: {}]
  %s4 = inlined_call_operand.hbm [shape: f32[1,64], index: 4, kind: input, shape index: {}]
  %s5 = inlined_call_operand.vmem [shape: bf16[16,64,128], index: 5, kind: input, shape index: {}]
  %s6 = inlined_call_operand.hbm [shape: f32[1,128], index: 6, kind: input, shape index: {}]
  %s7 = inlined_call_operand.vmem [shape: bf16[2,9,128], index: 7, kind: output, shape index: {}]
  %s8 = sld [smem:[#allocation0]]
  $region81: #{net_forward.2} parent=0
    _
  %s10 = ssub.s32 1, %s8
  %s11 = scalar_select 0, %s10, %s8
  $region1: #{net_forward.2} parent=0
    #allocation4 [shape = 'u8[36864]{0}', space=vmem, size = 0x9000, scoped, tag = 'input window, operand 1, single buffered']
    #allocation5 [shape = 's32[2]{0}', space=sflag, size = 0x8, scoped, tag = 'scoped memory for net_forward.2']
    #allocation6 [shape = 'u8[512]{0}', space=vmem, size = 0x400, scoped, tag = 'input window, operand 2, single buffered']
    #allocation7 [shape = 's32[1]{0}', space=sflag, size = 0x4, scoped, tag = 'scoped memory for net_forward.2']
    #allocation8 [shape = 'u8[204800]{0}', space=vmem, size = 0x32000, scoped, tag = 'input window, operand 3, single buffered']
    #allocation9 [shape = 'u8[512]{0}', space=vmem, size = 0x400, scoped, tag = 'input window, operand 4, single buffered']
    #allocation10 [shape = 's32[1]{0}', space=sflag, size = 0x4, scoped, tag = 'scoped memory for net_forward.2']
    #allocation11 [shape = 'u8[512]{0}', space=vmem, size = 0x400, scoped, tag = 'input window, operand 6, single buffered']
    %12 = vsyncpa [#allocation5], 0
    %13 = vsyncpa [#allocation7], 0
    %14 = vsyncpa [#allocation10], 0
    loop: start=0, step=1, limit=4
    $region2: #{net_forward.2} parent=1 // loop_pre_header
      _
    $region3: #{net_forward.2} parent=1 // loop_header
      %s16 = sphi 0, %s20
      %p17 = scmp.ge.s32.totalorder %s16, 4
      %s26 = sphi 0, %s28
      %s29 = sphi 0, %s26
      %s30 = sphi 0, %s29
      %s46 = sphi 0, %s30
      %s50 = sphi 0, %s50
      %s52 = sphi 0, %s50
      %s53 = sphi 0, %s52
      %s67 = sphi 0, %s53
      %s71 = sphi 0, %s71
      %s73 = sphi 0, %s71
      %s74 = sphi 0, %s73
      %s88 = sphi 0, %s74
      %s92 = sphi 0, %s92
      %s94 = sphi 0, %s92
      %s95 = sphi 0, %s94
      %s109 = sphi 0, %s95
      %s113 = sphi 0, %s113
      %s115 = sphi 0, %s113
      %s116 = sphi 0, %s115
      %s130 = sphi 0, %s116
      %s134 = sphi 0, %s134
      %s136 = sphi 0, %s134
      %s137 = sphi 0, %s136
      %s151 = sphi 0, %s137
      %s155 = sphi 0, %s155
      %s157 = sphi 0, %s155
      %s158 = sphi 0, %s157
      %s172 = sphi 0, %s158
      %s178 = sphi 0, %s180
      %s181 = sphi 0, %s178
      %s182 = sphi 0, %s181
      %s198 = sphi 0, %s182
    $region4: #{net_forward.2} parent=1 // loop_header_branch
      %19 = sbr.rel (%p17) target = $region8
    $region5: #{net_forward.2} parent=1 // loop_body
      %s21 = ssub.s32 %s16, 1
      %s22 = ssub.s32 %s16, 2
      %s23 = sadd.s32 %s16, 1
      %s24 = ssub.s32 %s16, %s23
      %p25 = scmp.eq.s32.totalorder %s24, 0
      %s27 = sadd.s32 %s26, 1
      %s28 = scalar_select %p25, %s26, %s27
      %p31 = pneg %p25
      %p32 = scmp.eq.s32.totalorder %s16, 1
      %p33 = por %p31, %p32
      %p34 = scmp.ne.s32.totalorder %s26, %s29
      %p35 = scmp.eq.s32.totalorder %s16, 0
      %p36 = por %p34, %p35
      %p37 = scmp.ne.s32.totalorder %s26, %s29
      %p38 = scmp.eq.s32.totalorder %s21, 1
      %p39 = por %p37, %p38
      %p40 = scmp.ne.s32.totalorder %s29, %s30
      %p41 = scmp.eq.s32.totalorder %s21, 0
      %p42 = por %p40, %p41
      %p43 = scmp.ne.s32.totalorder %s29, %s30
      %p44 = scmp.eq.s32.totalorder %s22, 1
      %p45 = por %p43, %p44
      %p47 = scmp.ne.s32.totalorder %s30, %s46
      %p48 = scmp.eq.s32.totalorder %s22, 0
      %p49 = por %p47, %p48
      %s51 = sadd.s32 %s50, 1
      %p54 = scmp.eq.s32.totalorder %s16, 1
      %p55 = scmp.ne.s32.totalorder %s50, %s52
      %p56 = scmp.eq.s32.totalorder %s16, 0
      %p57 = por %p55, %p56
      %p58 = scmp.ne.s32.totalorder %s50, %s52
      %p59 = scmp.eq.s32.totalorder %s21, 1
      %p60 = por %p58, %p59
      %p61 = scmp.ne.s32.totalorder %s52, %s53
      %p62 = scmp.eq.s32.totalorder %s21, 0
      %p63 = por %p61, %p62
      %p64 = scmp.ne.s32.totalorder %s52, %s53
      %p65 = scmp.eq.s32.totalorder %s22, 1
      %p66 = por %p64, %p65
      %p68 = scmp.ne.s32.totalorder %s53, %s67
      %p69 = scmp.eq.s32.totalorder %s22, 0
      %p70 = por %p68, %p69
      %s72 = sadd.s32 %s71, 1
      %p75 = scmp.eq.s32.totalorder %s16, 1
      %p76 = scmp.ne.s32.totalorder %s71, %s73
      %p77 = scmp.eq.s32.totalorder %s16, 0
      %p78 = por %p76, %p77
      %p79 = scmp.ne.s32.totalorder %s71, %s73
      %p80 = scmp.eq.s32.totalorder %s21, 1
      %p81 = por %p79, %p80
      %p82 = scmp.ne.s32.totalorder %s73, %s74
      %p83 = scmp.eq.s32.totalorder %s21, 0
      %p84 = por %p82, %p83
      %p85 = scmp.ne.s32.totalorder %s73, %s74
      %p86 = scmp.eq.s32.totalorder %s22, 1
      %p87 = por %p85, %p86
      %p89 = scmp.ne.s32.totalorder %s74, %s88
      %p90 = scmp.eq.s32.totalorder %s22, 0
      %p91 = por %p89, %p90
      %s93 = sadd.s32 %s92, 1
      %p96 = scmp.eq.s32.totalorder %s16, 1
      %p97 = scmp.ne.s32.totalorder %s92, %s94
      %p98 = scmp.eq.s32.totalorder %s16, 0
      %p99 = por %p97, %p98
      %p100 = scmp.ne.s32.totalorder %s92, %s94
      %p101 = scmp.eq.s32.totalorder %s21, 1
      %p102 = por %p100, %p101
      %p103 = scmp.ne.s32.totalorder %s94, %s95
      %p104 = scmp.eq.s32.totalorder %s21, 0
      %p105 = por %p103, %p104
      %p106 = scmp.ne.s32.totalorder %s94, %s95
      %p107 = scmp.eq.s32.totalorder %s22, 1
      %p108 = por %p106, %p107
      %p110 = scmp.ne.s32.totalorder %s95, %s109
      %p111 = scmp.eq.s32.totalorder %s22, 0
      %p112 = por %p110, %p111
      %s114 = sadd.s32 %s113, 1
      %p117 = scmp.eq.s32.totalorder %s16, 1
      %p118 = scmp.ne.s32.totalorder %s113, %s115
      %p119 = scmp.eq.s32.totalorder %s16, 0
      %p120 = por %p118, %p119
      %p121 = scmp.ne.s32.totalorder %s113, %s115
      %p122 = scmp.eq.s32.totalorder %s21, 1
      %p123 = por %p121, %p122
      %p124 = scmp.ne.s32.totalorder %s115, %s116
      %p125 = scmp.eq.s32.totalorder %s21, 0
      %p126 = por %p124, %p125
      %p127 = scmp.ne.s32.totalorder %s115, %s116
      %p128 = scmp.eq.s32.totalorder %s22, 1
      %p129 = por %p127, %p128
      %p131 = scmp.ne.s32.totalorder %s116, %s130
      %p132 = scmp.eq.s32.totalorder %s22, 0
      %p133 = por %p131, %p132
      %s135 = sadd.s32 %s134, 1
      %p138 = scmp.eq.s32.totalorder %s16, 1
      %p139 = scmp.ne.s32.totalorder %s134, %s136
      %p140 = scmp.eq.s32.totalorder %s16, 0
      %p141 = por %p139, %p140
      %p142 = scmp.ne.s32.totalorder %s134, %s136
      %p143 = scmp.eq.s32.totalorder %s21, 1
      %p144 = por %p142, %p143
      %p145 = scmp.ne.s32.totalorder %s136, %s137
      %p146 = scmp.eq.s32.totalorder %s21, 0
      %p147 = por %p145, %p146
      %p148 = scmp.ne.s32.totalorder %s136, %s137
      %p149 = scmp.eq.s32.totalorder %s22, 1
      %p150 = por %p148, %p149
      %p152 = scmp.ne.s32.totalorder %s137, %s151
      %p153 = scmp.eq.s32.totalorder %s22, 0
      %p154 = por %p152, %p153
      %s156 = sadd.s32 %s155, 1
      %p159 = scmp.eq.s32.totalorder %s16, 1
      %p160 = scmp.ne.s32.totalorder %s155, %s157
      %p161 = scmp.eq.s32.totalorder %s16, 0
      %p162 = por %p160, %p161
      %p163 = scmp.ne.s32.totalorder %s155, %s157
      %p164 = scmp.eq.s32.totalorder %s21, 1
      %p165 = por %p163, %p164
      %p166 = scmp.ne.s32.totalorder %s157, %s158
      %p167 = scmp.eq.s32.totalorder %s21, 0
      %p168 = por %p166, %p167
      %p169 = scmp.ne.s32.totalorder %s157, %s158
      %p170 = scmp.eq.s32.totalorder %s22, 1
      %p171 = por %p169, %p170
      %p173 = scmp.ne.s32.totalorder %s158, %s172
      %p174 = scmp.eq.s32.totalorder %s22, 0
      %p175 = por %p173, %p174
      %s176 = ssub.s32 %s16, %s23
      %p177 = scmp.eq.s32.totalorder %s176, 0
      %s179 = sadd.s32 %s178, 1
      %s180 = scalar_select %p177, %s178, %s179
      %p183 = pneg %p177
      %p184 = scmp.eq.s32.totalorder %s16, 1
      %p185 = por %p183, %p184
      %p186 = scmp.ne.s32.totalorder %s178, %s181
      %p187 = scmp.eq.s32.totalorder %s16, 0
      %p188 = por %p186, %p187
      %p189 = scmp.ne.s32.totalorder %s178, %s181
      %p190 = scmp.eq.s32.totalorder %s21, 1
      %p191 = por %p189, %p190
      %p192 = scmp.ne.s32.totalorder %s181, %s182
      %p193 = scmp.eq.s32.totalorder %s21, 0
      %p194 = por %p192, %p193
      %p195 = scmp.ne.s32.totalorder %s181, %s182
      %p196 = scmp.eq.s32.totalorder %s22, 1
      %p197 = por %p195, %p196
      %p199 = scmp.ne.s32.totalorder %s182, %s198
      %p200 = scmp.eq.s32.totalorder %s22, 0
      %p201 = por %p199, %p200
      %p202 = scmp.le.s32.totalorder 1, %s16
      %p203 = scmp.lt.s32.totalorder %s16, 3
      %p204 = pnand %p202, %p203
      %p205 = pneg %p204
      // Predicated region
      $region9: #{net_forward.2} parent=5 // pred_check
        _
      $region10: #{net_forward.2} parent=5 // pred_check_branch
        %207 = sbr.rel (%p204) target = $region12
      $region11: #{net_forward.2} parent=5 // pred_region
        %s208 = ssub.s32 %s16, 1
        // Predicated region
        $region13: #{net_forward.2} parent=11 // pred_check
          %p209 = pneg %p63
        $region14: #{net_forward.2} parent=11 // pred_check_branch
          %211 = sbr.rel (%p209) target = $region16
        $region15: #{net_forward.2} parent=11 // pred_region
          %s213 = ssub.s32 1152, 1152
          %214 = vsyncadd [#allocation5], %s213
          %s215 = sshll.u32 [#allocation4], 4
          %s216 = int_to_ptr.vmem [resolvable:$true] %s215
          %221 = dma.hbm_to_vmem [thread:$0]  %s1, 1152, %s216, [#allocation5], 64, 64, 4
        $region16: #{net_forward.2} parent=11 // pred_fallthru
          _
        // Predicated region
        $region17: #{net_forward.2} parent=11 // pred_check
          %p222 = pneg %p84
        $region18: #{net_forward.2} parent=11 // pred_check_branch
          %224 = sbr.rel (%p222) target = $region20
        $region19: #{net_forward.2} parent=11 // pred_region
          %s226 = ssub.s32 16, 16
          %227 = vsyncadd [#allocation7], %s226
          %s229 = sshll.u32 [#allocation6], 4
          %s230 = int_to_ptr.vmem [resolvable:$true] %s229
          %232 = dma.hbm_to_vmem [thread:$0]  %s2, 16, %s230, [#allocation7]
        $region20: #{net_forward.2} parent=11 // pred_fallthru
          _
        // Predicated region
        $region21: #{net_forward.2} parent=11 // pred_check
          %p233 = pneg %p105
        $region22: #{net_forward.2} parent=11 // pred_check_branch
          %235 = sbr.rel (%p233) target = $region24
        $region23: #{net_forward.2} parent=11 // pred_region
          %s237 = ssub.s32 6400, 6400
          %238 = vsyncadd [#allocation7], %s237
          %s239 = sshll.u32 [#allocation8], 4
          %s240 = int_to_ptr.vmem [resolvable:$true] %s239
          %245 = dma.hbm_to_vmem [thread:$0]  %s3, 6400, %s240, [#allocation7], 64, 64, 4
        $region24: #{net_forward.2} parent=11 // pred_fallthru
          _
        // Predicated region
        $region25: #{net_forward.2} parent=11 // pred_check
          %p246 = pneg %p126
        $region26: #{net_forward.2} parent=11 // pred_check_branch
          %248 = sbr.rel (%p246) target = $region28
        $region27: #{net_forward.2} parent=11 // pred_region
          %s250 = ssub.s32 16, 16
          %251 = vsyncadd [#allocation10], %s250
          %s253 = sshll.u32 [#allocation9], 4
          %s254 = int_to_ptr.vmem [resolvable:$true] %s253
          %256 = dma.hbm_to_vmem [thread:$0]  %s4, 16, %s254, [#allocation10]
        $region28: #{net_forward.2} parent=11 // pred_fallthru
          _
        // Predicated region
        $region29: #{net_forward.2} parent=11 // pred_check
          %p257 = pneg %p147
        $region30: #{net_forward.2} parent=11 // pred_check_branch
          %259 = sbr.rel (%p257) target = $region32
        $region31: #{net_forward.2} parent=11 // pred_region
          _
        $region32: #{net_forward.2} parent=11 // pred_fallthru
          _
        // Predicated region
        $region33: #{net_forward.2} parent=11 // pred_check
          %p260 = pneg %p168
        $region34: #{net_forward.2} parent=11 // pred_check_branch
          %262 = sbr.rel (%p260) target = $region36
        $region35: #{net_forward.2} parent=11 // pred_region
          %s264 = ssub.s32 16, 16
          %265 = vsyncadd [#allocation10], %s264
          %s267 = sshll.u32 [#allocation11], 4
          %s268 = int_to_ptr.vmem [resolvable:$true] %s267
          %270 = dma.hbm_to_vmem [thread:$0]  %s6, 16, %s268, [#allocation10]
        $region36: #{net_forward.2} parent=11 // pred_fallthru
          _
      $region12: #{net_forward.2} parent=5 // pred_fallthru
        _
      %p271 = scmp.lt.s32.totalorder %s16, 2
      // Predicated region
      $region37: #{net_forward.2} parent=5 // pred_check
        %p272 = pneg %p271
      $region38: #{net_forward.2} parent=5 // pred_check_branch
        %274 = sbr.rel (%p272) target = $region40
      $region39: #{net_forward.2} parent=5 // pred_region
        // Predicated region
        $region41: #{net_forward.2} parent=39 // pred_check
          %p275 = pneg %p36
        $region42: #{net_forward.2} parent=39 // pred_check_branch
          %277 = sbr.rel (%p275) target = $region44
        $region43: #{net_forward.2} parent=39 // pred_region
          %p278 = scmp.lt.s32.totalorder %s16, 1
          %s279 = scalar_select %p278, %s16, 1
          %s280 = smul.addr %s279, 29
          %s281 = smul.addr %s280, 4
          %s282 = scalar_lea.vmem %s0, %s281
        $region44: #{net_forward.2} parent=39 // pred_fallthru
          _
      $region40: #{net_forward.2} parent=5 // pred_fallthru
        _
      %p283 = scmp.le.s32.totalorder 1, %s16
      %p284 = scmp.lt.s32.totalorder %s16, 3
      %p285 = pnand %p283, %p284
      %p286 = pneg %p285
      // Predicated region
      $region45: #{net_forward.2} parent=5 // pred_check
        _
      $region46: #{net_forward.2} parent=5 // pred_check_branch
        %288 = sbr.rel (%p285) target = $region48
      $region47: #{net_forward.2} parent=5 // pred_region
        %s289 = ssub.s32 %s16, 1
        // Predicated region
        $region49: #{net_forward.2} parent=47 // pred_check
          %p290 = pneg %p63
        $region50: #{net_forward.2} parent=47 // pred_check_branch
          %292 = sbr.rel (%p290) target = $region52
        $region51: #{net_forward.2} parent=47 // pred_region
          %293 = dma.done [#allocation5], 1152
        $region52: #{net_forward.2} parent=47 // pred_fallthru
          _
        // Predicated region
        $region53: #{net_forward.2} parent=47 // pred_check
          %p294 = pneg %p84
        $region54: #{net_forward.2} parent=47 // pred_check_branch
          %296 = sbr.rel (%p294) target = $region56
        $region55: #{net_forward.2} parent=47 // pred_region
          %297 = dma.done [#allocation7], 16
        $region56: #{net_forward.2} parent=47 // pred_fallthru
          _
        // Predicated region
        $region57: #{net_forward.2} parent=47 // pred_check
          %p298 = pneg %p105
        $region58: #{net_forward.2} parent=47 // pred_check_branch
          %300 = sbr.rel (%p298) target = $region60
        $region59: #{net_forward.2} parent=47 // pred_region
          %301 = dma.done [#allocation7], 6400
        $region60: #{net_forward.2} parent=47 // pred_fallthru
          _
        // Predicated region
        $region61: #{net_forward.2} parent=47 // pred_check
          %p302 = pneg %p126
        $region62: #{net_forward.2} parent=47 // pred_check_branch
          %304 = sbr.rel (%p302) target = $region64
        $region63: #{net_forward.2} parent=47 // pred_region
          %305 = dma.done [#allocation10], 16
        $region64: #{net_forward.2} parent=47 // pred_fallthru
          _
        // Predicated region
        $region65: #{net_forward.2} parent=47 // pred_check
          %p306 = pneg %p168
        $region66: #{net_forward.2} parent=47 // pred_check_branch
          %308 = sbr.rel (%p306) target = $region68
        $region67: #{net_forward.2} parent=47 // pred_region
          %309 = dma.done [#allocation10], 16
        $region68: #{net_forward.2} parent=47 // pred_fallthru
          _
        %p310 = scmp.lt.s32.totalorder %s21, 1
        %s311 = scalar_select %p310, %s21, 1
        %s312 = smul.addr %s311, 29
        %s313 = smul.addr %s312, 4
        %s314 = scalar_lea.vmem %s0, %s313
        %p315 = pneg %p42
        %p316 = pneg %p39
        %p317 = pneg %p63
        %p318 = pneg %p60
        %p319 = pneg %p84
        %p320 = pneg %p81
        %p321 = pneg %p105
        %p322 = pneg %p102
        %p323 = pneg %p126
        %p324 = pneg %p123
        %p325 = pneg %p147
        %p326 = pneg %p144
        %p327 = pneg %p168
        %p328 = pneg %p165
        %p329 = pneg %p194
        %p330 = pneg %p191
        %p331 = scmp.lt.s32.totalorder %s21, 1
        %s332 = scalar_select %p331, %s21, 1
        %s333 = smul.addr %s332, 2
        %s334 = smul.addr %s333, 4
        %s335 = scalar_lea.vmem %s7, %s334
        %p336 = scmp.lt.s32.totalorder %s21, 1
        %s337 = scalar_select %p336, %s21, 1
        %s338 = smul.addr %s337, 29
        %s339 = smul.addr %s338, 4
        %s340 = scalar_lea.vmem %s0, %s339
        %p341 = scmp.lt.s32.totalorder %s21, 1
        %s342 = scalar_select %p341, %s21, 1
        %s343 = smul.addr %s342, 2
        %s344 = smul.addr %s343, 4
        %s345 = scalar_lea.vmem %s7, %s344
        %v347 = vld [vmem:[%s340] sm:$0xf]
        %v348 = vld [vmem:[%s340 + $0x4] sm:$0xf]
        %v349 = vld [vmem:[%s340 + $0x8] sm:$0xf]
        %v350 = vld [vmem:[%s340 + $0xc] sm:$0xf]
        %v351 = vld [vmem:[%s340 + $0x10] sm:$0xf]
        %v352 = vld [vmem:[%s340 + $0x14] sm:$0xf]
        %v353 = vld [vmem:[%s340 + $0x18] sm:$0xf]
        %v354 = vld [vmem:[%s340 + $0x1c] sm:$0xf]
        %v355 = vld [vmem:[%s340 + $0x20] sm:$0xf]
        %v356 = vld [vmem:[%s340 + $0x24] sm:$0xf]
        %v357 = vld [vmem:[%s340 + $0x28] sm:$0xf]
        %v358 = vld [vmem:[%s340 + $0x2c] sm:$0xf]
        %v359 = vld [vmem:[%s340 + $0x30] sm:$0xf]
        %v360 = vld [vmem:[%s340 + $0x34] sm:$0xf]
        %v361 = vld [vmem:[%s340 + $0x38] sm:$0xf]
        %v362 = vld [vmem:[%s340 + $0x3c] sm:$0xf]
        %v363 = vld [vmem:[%s340 + $0x40] sm:$0xf]
        %v364 = vld [vmem:[%s340 + $0x44] sm:$0xf]
        %v365 = vld [vmem:[%s340 + $0x48] sm:$0xf]
        %v366 = vld [vmem:[#allocation4] sm:$0xf]
        %v367 = vld [vmem:[#allocation4 + $0x4] sm:$0xf]
        %v368 = vld [vmem:[#allocation4 + $0x8] sm:$0xf]
        %v369 = vld [vmem:[%s340 + $0x4] sm:$0x8]
        %v370 = vld [vmem:[%s340 + $0x4c] sm:$0xf]
        %v371 = vld [vmem:[%s340 + $0x50] sm:$0xf]
        %s372 = scalar_lea.vmem [#allocation4], 12
        %v373 = vld [vmem:[%s372] sm:$0xf]
        %v374 = vld [vmem:[%s372 + $0x4] sm:$0xf]
        %v375 = vld [vmem:[%s372 + $0x8] sm:$0xf]
        %v396 = vunpack.c.l.b16 %v369
        %v397 = vunpack.c.l.b16 %v349
        %v398 = vunpack.c.l.b16 %v350
        %v399 = vunpack.c.l.b16 %v351
        %v400 = vunpack.c.l.b16 %v352
        %v401 = vunpack.c.l.b16 %v353
        %v402 = vunpack.c.l.b16 %v354
        %v403 = vunpack.c.l.b16 %v355
        %v404 = vunpack.c.l.b16 %v356
        %v405 = vunpack.c.l.b16 %v357
        %v406 = vunpack.c.l.b16 %v358
        %v407 = vunpack.c.l.b16 %v359
        %v408 = vunpack.c.l.b16 %v360
        %v409 = vunpack.c.l.b16 %v361
        %v410 = vunpack.c.l.b16 %v362
        %v411 = vunpack.c.l.b16 %v363
        %v412 = vunpack.c.l.b16 %v364
        %v413 = vunpack.c.l.b16 %v365
        %v414 = vunpack.c.l.b16 %v370
        %v415 = vunpack.c.l.b16 %v371
        %v416 = vpack.c.b16 %v397, %v396
        %v417 = vpack.c.b16 %v399, %v398
        %v418 = vpack.c.b16 %v401, %v400
        %v419 = vpack.c.b16 %v403, %v402
        %v420 = vpack.c.b16 %v405, %v404
        %v421 = vpack.c.b16 %v407, %v406
        %v422 = vpack.c.b16 %v409, %v408
        %v423 = vpack.c.b16 %v411, %v410
        %v424 = vpack.c.b16 %v413, %v412
        %v425 = vpack.c.b16 %v415, %v414
        %vm426 = vsmask.f32 4352
        %v428 = vshrl.u32 %v416, 16
        %v430 = vrot.slane %v428, 3
        %v431 = vshll.u32 %v416, 16
        %v433 = vrot.slane %v431, 4
        %v434 = vor.u32 %v430, %v433
        %v436 = vshrl.u32 %v417, 16
        %v438 = vrot.slane %v436, 3
        %v439 = vshll.u32 %v417, 16
        %v441 = vrot.slane %v439, 4
        %v442 = vor.u32 %v438, %v441
        %v443 = vsel %vm426, %v434, %v442
        %v445 = vshrl.u32 %v418, 16
        %v447 = vrot.slane %v445, 3
        %v448 = vshll.u32 %v418, 16
        %v450 = vrot.slane %v448, 4
        %v451 = vor.u32 %v447, %v450
        %v452 = vsel %vm426, %v442, %v451
        %v454 = vshrl.u32 %v419, 16
        %v456 = vrot.slane %v454, 3
        %v457 = vshll.u32 %v419, 16
        %v459 = vrot.slane %v457, 4
        %v460 = vor.u32 %v456, %v459
        %v461 = vsel %vm426, %v451, %v460
        %v463 = vshrl.u32 %v420, 16
        %v465 = vrot.slane %v463, 3
        %v466 = vshll.u32 %v420, 16
        %v468 = vrot.slane %v466, 4
        %v469 = vor.u32 %v465, %v468
        %v470 = vsel %vm426, %v460, %v469
        %v472 = vshrl.u32 %v421, 16
        %v474 = vrot.slane %v472, 3
        %v475 = vshll.u32 %v421, 16
        %v477 = vrot.slane %v475, 4
        %v478 = vor.u32 %v474, %v477
        %v479 = vsel %vm426, %v469, %v478
        %v481 = vshrl.u32 %v422, 16
        %v483 = vrot.slane %v481, 3
        %v484 = vshll.u32 %v422, 16
        %v486 = vrot.slane %v484, 4
        %v487 = vor.u32 %v483, %v486
        %v488 = vsel %vm426, %v478, %v487
        %v490 = vshrl.u32 %v423, 16
        %v492 = vrot.slane %v490, 3
        %v493 = vshll.u32 %v423, 16
        %v495 = vrot.slane %v493, 4
        %v496 = vor.u32 %v492, %v495
        %v497 = vsel %vm426, %v487, %v496
        %v499 = vshrl.u32 %v424, 16
        %v501 = vrot.slane %v499, 3
        %v502 = vshll.u32 %v424, 16
        %v504 = vrot.slane %v502, 4
        %v505 = vor.u32 %v501, %v504
        %v506 = vsel %vm426, %v496, %v505
        %v508 = vshrl.u32 %v425, 16
        %v510 = vrot.slane %v508, 3
        %v511 = vshll.u32 %v425, 16
        %v513 = vrot.slane %v511, 4
        %v514 = vor.u32 %v510, %v513
        %v515 = vsel %vm426, %v505, %v514
        %v519 = vunpack.c.l.b16 %v373
        %v520 = vunpack.c.l.b16 %v374
        %v521 = vunpack.c.l.b16 %v375
        %v522 = vpack.c.b16 %v520, %v519
        %v523 = vpack.c.b16 %v521, %v521
        %vm525 = vcmask 195584
        %v527 = vsel %vm525, %v443, 0
        %v530 = vsel %vm525, %v452, 0
        %v533 = vsel %vm525, %v461, 0
        %v536 = vsel %vm525, %v470, 0
        %v539 = vsel %vm525, %v479, 0
        %v542 = vsel %vm525, %v488, 0
        %v545 = vsel %vm525, %v497, 0
        %v548 = vsel %vm525, %v506, 0
        %v551 = vsel %vm525, %v515, 0
        %v554 = vsel %vm525, %v514, 0
        %vm556 = vcmask 1043456
        %v558 = vsel %vm556, %v523, 0
        %560 = vmatprep.subr.bf16.mxu0 0
        %561 = vmatpush1.bf16.msra.mxu0 0
        %562 = vmatprep.subr.bf16.mxu0 0
        %563 = vmatpush1.bf16.msra.mxu0 0
        %564 = vmatprep.subr.bf16.mxu0 0
        %565 = vmatpush1.bf16.msra.mxu0 0
        %566 = vmatprep.subr.bf16.mxu0 0
        %567 = vmatpush1.bf16.msra.mxu0 0
        %568 = vmatprep.subr.bf16.mxu0 0
        %569 = vmatpush1.bf16.msra.mxu0 0
        %570 = vmatprep.subr.bf16.mxu0 0
        %571 = vmatpush1.bf16.msra.mxu0 0
        %572 = vmatprep.subr.bf16.mxu0 0
        %573 = vmatpush1.bf16.msra.mxu0 %v558
        %574 = vmatprep.subr.bf16.mxu0 0
        %575 = vmatpush1.bf16.msra.mxu0 %v522
        %576 = vmatprep.subr.bf16.mxu0 0
        %577 = vmatpush2.bf16.msra.mxu0 0
        %578 = vmatprep.subr.bf16.mxu0 0
        %579 = vmatpush2.bf16.msra.mxu0 0
        %580 = vmatprep.subr.bf16.mxu0 0
        %581 = vmatpush2.bf16.msra.mxu0 0
        %582 = vmatprep.subr.bf16.mxu0 0
        %583 = vmatpush2.bf16.msra.mxu0 0
        %584 = vmatprep.subr.bf16.mxu0 0
        %585 = vmatpush2.bf16.msra.mxu0 0
        %586 = vmatprep.subr.bf16.mxu0 0
        %587 = vmatpush2.bf16.msra.mxu0 0
        %588 = vmatprep.subr.bf16.mxu0 0
        %589 = vmatpush2.bf16.msra.mxu0 0
        %590 = vmatprep.subr.bf16.mxu0 0
        %591 = vmatpush2.bf16.msra.mxu0 0
        %592 = vmatprep.mubr.bf16.mxu0 0
        %593 = vmatmul.mubr.bf16.gmra.mxu0 %v527
        %v594 = vpop.f32.mrf.mxu0
        %v595 = vadd.f32 0.0, %v594
        %v596 = vpop.f32.mrf.mxu0
        %v597 = vpop.f32.mrf.mxu0
        %v598 = vadd.f32 0.0, %v597
        %v599 = vpop.f32.mrf.mxu0
        %600 = vmatprep.mubr.bf16.mxu0 0
        %601 = vmatmul.mubr.bf16.gmra.mxu0 %v530
        %v602 = vpop.f32.mrf.mxu0
        %v603 = vadd.f32 0.0, %v602
        %v604 = vpop.f32.mrf.mxu0
        %v605 = vpop.f32.mrf.mxu0
        %v606 = vadd.f32 0.0, %v605
        %v607 = vpop.f32.mrf.mxu0
        %608 = vmatprep.mubr.bf16.mxu0 0
        %609 = vmatmul.mubr.bf16.gmra.mxu0 %v533
        %v610 = vpop.f32.mrf.mxu0
        %v611 = vadd.f32 0.0, %v610
        %v612 = vpop.f32.mrf.mxu0
        %v613 = vpop.f32.mrf.mxu0
        %v614 = vadd.f32 0.0, %v613
        %v615 = vpop.f32.mrf.mxu0
        %616 = vmatprep.mubr.bf16.mxu0 0
        %617 = vmatmul.mubr.bf16.gmra.mxu0 %v536
        %v618 = vpop.f32.mrf.mxu0
        %v619 = vadd.f32 0.0, %v618
        %v620 = vpop.f32.mrf.mxu0
        %v621 = vpop.f32.mrf.mxu0
        %v622 = vadd.f32 0.0, %v621
        %v623 = vpop.f32.mrf.mxu0
        %624 = vmatprep.mubr.bf16.mxu0 0
        %625 = vmatmul.mubr.bf16.gmra.mxu0 %v539
        %v626 = vpop.f32.mrf.mxu0
        %v627 = vadd.f32 0.0, %v626
        %v628 = vpop.f32.mrf.mxu0
        %v629 = vpop.f32.mrf.mxu0
        %v630 = vadd.f32 0.0, %v629
        %v631 = vpop.f32.mrf.mxu0
        %632 = vmatprep.mubr.bf16.mxu0 0
        %633 = vmatmul.mubr.bf16.gmra.mxu0 %v542
        %v634 = vpop.f32.mrf.mxu0
        %v635 = vadd.f32 0.0, %v634
        %v636 = vpop.f32.mrf.mxu0
        %v637 = vpop.f32.mrf.mxu0
        %v638 = vadd.f32 0.0, %v637
        %v639 = vpop.f32.mrf.mxu0
        %640 = vmatprep.mubr.bf16.mxu0 0
        %641 = vmatmul.mubr.bf16.gmra.mxu0 %v545
        %v642 = vpop.f32.mrf.mxu0
        %v643 = vadd.f32 0.0, %v642
        %v644 = vpop.f32.mrf.mxu0
        %v645 = vpop.f32.mrf.mxu0
        %v646 = vadd.f32 0.0, %v645
        %v647 = vpop.f32.mrf.mxu0
        %648 = vmatprep.mubr.bf16.mxu0 0
        %649 = vmatmul.mubr.bf16.gmra.mxu0 %v548
        %v650 = vpop.f32.mrf.mxu0
        %v651 = vadd.f32 0.0, %v650
        %v652 = vpop.f32.mrf.mxu0
        %v653 = vpop.f32.mrf.mxu0
        %v654 = vadd.f32 0.0, %v653
        %v655 = vpop.f32.mrf.mxu0
        %656 = vmatprep.mubr.bf16.mxu0 0
        %657 = vmatmul.mubr.bf16.gmra.mxu0 %v551
        %v658 = vpop.f32.mrf.mxu0
        %v659 = vadd.f32 0.0, %v658
        %v660 = vpop.f32.mrf.mxu0
        %v661 = vpop.f32.mrf.mxu0
        %v662 = vadd.f32 0.0, %v661
        %v663 = vpop.f32.mrf.mxu0
        %664 = vmatprep.mubr.bf16.mxu0 0
        %665 = vmatmul.mubr.bf16.gmra.mxu0 %v554
        %v666 = vpop.f32.mrf.mxu0
        %v667 = vadd.f32 0.0, %v666
        %v668 = vpop.f32.mrf.mxu0
        %v669 = vpop.f32.mrf.mxu0
        %v670 = vpop.f32.mrf.mxu0
        %671 = vdwg.mxu0
        %v674 = vunpack.c.l.b16 %v347
        %v675 = vunpack.c.l.b16 %v348
        %v676 = vpack.c.b16 %v675, %v674
        %v677 = vpack.c.b16 %v398, %v397
        %v678 = vpack.c.b16 %v400, %v399
        %v679 = vpack.c.b16 %v402, %v401
        %v680 = vpack.c.b16 %v404, %v403
        %v681 = vpack.c.b16 %v406, %v405
        %v682 = vpack.c.b16 %v408, %v407
        %v683 = vpack.c.b16 %v410, %v409
        %v684 = vpack.c.b16 %v412, %v411
        %v685 = vpack.c.b16 %v413, %v413
        %v689 = vunpack.c.l.b16 %v366
        %v690 = vunpack.c.l.b16 %v367
        %v691 = vunpack.c.l.b16 %v368
        %v692 = vpack.c.b16 %v690, %v689
        %v693 = vpack.c.b16 %v691, %v691
        %v696 = vsel %vm525, %v676, 0
        %v699 = vsel %vm525, %v677, 0
        %v702 = vsel %vm525, %v678, 0
        %v705 = vsel %vm525, %v679, 0
        %v708 = vsel %vm525, %v680, 0
        %v711 = vsel %vm525, %v681, 0
        %v714 = vsel %vm525, %v682, 0
        %v717 = vsel %vm525, %v683, 0
        %v720 = vsel %vm525, %v684, 0
        %v723 = vsel %vm525, %v685, 0
        %v726 = vsel %vm556, %v693, 0
        %728 = vmatprep.subr.bf16.mxu0 0
        %729 = vmatpush1.bf16.msra.mxu0 0
        %730 = vmatprep.subr.bf16.mxu0 0
        %731 = vmatpush1.bf16.msra.mxu0 0
        %732 = vmatprep.subr.bf16.mxu0 0
        %733 = vmatpush1.bf16.msra.mxu0 0
        %734 = vmatprep.subr.bf16.mxu0 0
        %735 = vmatpush1.bf16.msra.mxu0 0
        %736 = vmatprep.subr.bf16.mxu0 0
        %737 = vmatpush1.bf16.msra.mxu0 0
        %738 = vmatprep.subr.bf16.mxu0 0
        %739 = vmatpush1.bf16.msra.mxu0 0
        %740 = vmatprep.subr.bf16.mxu0 0
        %741 = vmatpush1.bf16.msra.mxu0 %v726
        %742 = vmatprep.subr.bf16.mxu0 0
        %743 = vmatpush1.bf16.msra.mxu0 %v692
        %744 = vmatprep.subr.bf16.mxu0 0
        %745 = vmatpush2.bf16.msra.mxu0 0
        %746 = vmatprep.subr.bf16.mxu0 0
        %747 = vmatpush2.bf16.msra.mxu0 0
        %748 = vmatprep.subr.bf16.mxu0 0
        %749 = vmatpush2.bf16.msra.mxu0 0
        %750 = vmatprep.subr.bf16.mxu0 0
        %751 = vmatpush2.bf16.msra.mxu0 0
        %752 = vmatprep.subr.bf16.mxu0 0
        %753 = vmatpush2.bf16.msra.mxu0 0
        %754 = vmatprep.subr.bf16.mxu0 0
        %755 = vmatpush2.bf16.msra.mxu0 0
        %756 = vmatprep.subr.bf16.mxu0 0
        %757 = vmatpush2.bf16.msra.mxu0 0
        %758 = vmatprep.subr.bf16.mxu0 0
        %759 = vmatpush2.bf16.msra.mxu0 0
        %760 = vmatprep.mubr.bf16.mxu0 0
        %761 = vmatmul.mubr.bf16.gmra.mxu0 %v696
        %v762 = vpop.f32.mrf.mxu0
        %v763 = vadd.f32 %v595, %v762
        %v764 = vpop.f32.mrf.mxu0
        %v765 = vpop.f32.mrf.mxu0
        %v766 = vadd.f32 %v598, %v765
        %v767 = vpop.f32.mrf.mxu0
        %768 = vmatprep.mubr.bf16.mxu0 0
        %769 = vmatmul.mubr.bf16.gmra.mxu0 %v699
        %v770 = vpop.f32.mrf.mxu0
        %v771 = vadd.f32 %v603, %v770
        %v772 = vpop.f32.mrf.mxu0
        %v773 = vpop.f32.mrf.mxu0
        %v774 = vadd.f32 %v606, %v773
        %v775 = vpop.f32.mrf.mxu0
        %776 = vmatprep.mubr.bf16.mxu0 0
        %777 = vmatmul.mubr.bf16.gmra.mxu0 %v702
        %v778 = vpop.f32.mrf.mxu0
        %v779 = vadd.f32 %v611, %v778
        %v780 = vpop.f32.mrf.mxu0
        %v781 = vpop.f32.mrf.mxu0
        %v782 = vadd.f32 %v614, %v781
        %v783 = vpop.f32.mrf.mxu0
        %784 = vmatprep.mubr.bf16.mxu0 0
        %785 = vmatmul.mubr.bf16.gmra.mxu0 %v705
        %v786 = vpop.f32.mrf.mxu0
        %v787 = vadd.f32 %v619, %v786
        %v788 = vpop.f32.mrf.mxu0
        %v789 = vpop.f32.mrf.mxu0
        %v790 = vadd.f32 %v622, %v789
        %v791 = vpop.f32.mrf.mxu0
        %792 = vmatprep.mubr.bf16.mxu0 0
        %793 = vmatmul.mubr.bf16.gmra.mxu0 %v708
        %v794 = vpop.f32.mrf.mxu0
        %v795 = vadd.f32 %v627, %v794
        %v796 = vpop.f32.mrf.mxu0
        %v797 = vpop.f32.mrf.mxu0
        %v798 = vadd.f32 %v630, %v797
        %v799 = vpop.f32.mrf.mxu0
        %800 = vmatprep.mubr.bf16.mxu0 0
        %801 = vmatmul.mubr.bf16.gmra.mxu0 %v711
        %v802 = vpop.f32.mrf.mxu0
        %v803 = vadd.f32 %v635, %v802
        %v804 = vpop.f32.mrf.mxu0
        %v805 = vpop.f32.mrf.mxu0
        %v806 = vadd.f32 %v638, %v805
        %v807 = vpop.f32.mrf.mxu0
        %808 = vmatprep.mubr.bf16.mxu0 0
        %809 = vmatmul.mubr.bf16.gmra.mxu0 %v714
        %v810 = vpop.f32.mrf.mxu0
        %v811 = vadd.f32 %v643, %v810
        %v812 = vpop.f32.mrf.mxu0
        %v813 = vpop.f32.mrf.mxu0
        %v814 = vadd.f32 %v646, %v813
        %v815 = vpop.f32.mrf.mxu0
        %816 = vmatprep.mubr.bf16.mxu0 0
        %817 = vmatmul.mubr.bf16.gmra.mxu0 %v717
        %v818 = vpop.f32.mrf.mxu0
        %v819 = vadd.f32 %v651, %v818
        %v820 = vpop.f32.mrf.mxu0
        %v821 = vpop.f32.mrf.mxu0
        %v822 = vadd.f32 %v654, %v821
        %v823 = vpop.f32.mrf.mxu0
        %824 = vmatprep.mubr.bf16.mxu0 0
        %825 = vmatmul.mubr.bf16.gmra.mxu0 %v720
        %v826 = vpop.f32.mrf.mxu0
        %v827 = vadd.f32 %v659, %v826
        %v828 = vpop.f32.mrf.mxu0
        %v829 = vpop.f32.mrf.mxu0
        %v830 = vadd.f32 %v662, %v829
        %v831 = vpop.f32.mrf.mxu0
        %832 = vmatprep.mubr.bf16.mxu0 0
        %833 = vmatmul.mubr.bf16.gmra.mxu0 %v723
        %v834 = vpop.f32.mrf.mxu0
        %v835 = vadd.f32 %v667, %v834
        %v836 = vpop.f32.mrf.mxu0
        %v837 = vpop.f32.mrf.mxu0
        %v838 = vpop.f32.mrf.mxu0
        %839 = vdwg.mxu0
        %v840 = vld [vmem:[%s340 + $0xc] sm:$0x8]
        %v841 = vld [vmem:[%s340 + $0x10] sm:$0xf]
        %v842 = vld [vmem:[%s340 + $0x14] sm:$0xf]
        %v843 = vld [vmem:[%s340 + $0x18] sm:$0xf]
        %v844 = vld [vmem:[%s340 + $0x1c] sm:$0xf]
        %v845 = vld [vmem:[%s340 + $0x20] sm:$0xf]
        %v846 = vld [vmem:[%s340 + $0x24] sm:$0xf]
        %v847 = vld [vmem:[%s340 + $0x28] sm:$0xf]
        %v848 = vld [vmem:[%s340 + $0x2c] sm:$0xf]
        %v849 = vld [vmem:[%s340 + $0x30] sm:$0xf]
        %v850 = vld [vmem:[%s340 + $0x34] sm:$0xf]
        %v851 = vld [vmem:[%s340 + $0x38] sm:$0xf]
        %v852 = vld [vmem:[%s340 + $0x3c] sm:$0xf]
        %v853 = vld [vmem:[%s340 + $0x40] sm:$0xf]
        %v854 = vld [vmem:[%s340 + $0x44] sm:$0xf]
        %v855 = vld [vmem:[%s340 + $0x48] sm:$0xf]
        %v856 = vld [vmem:[%s340 + $0x4c] sm:$0xf]
        %v857 = vld [vmem:[%s340 + $0x50] sm:$0xf]
        %v858 = vld [vmem:[%s340 + $0x54] sm:$0xf]
        %v859 = vld [vmem:[%s340 + $0x58] sm:$0x7]
        %s860 = scalar_lea.vmem [#allocation4], 24
        %v861 = vld [vmem:[%s860] sm:$0xf]
        %v862 = vld [vmem:[%s860 + $0x4] sm:$0xf]
        %v863 = vld [vmem:[%s860 + $0x8] sm:$0xf]
        %v884 = vunpack.c.l.b16 %v840
        %v885 = vunpack.c.l.b16 %v841
        %v886 = vunpack.c.l.b16 %v842
        %v887 = vunpack.c.l.b16 %v843
        %v888 = vunpack.c.l.b16 %v844
        %v889 = vunpack.c.l.b16 %v845
        %v890 = vunpack.c.l.b16 %v846
        %v891 = vunpack.c.l.b16 %v847
        %v892 = vunpack.c.l.b16 %v848
        %v893 = vunpack.c.l.b16 %v849
        %v894 = vunpack.c.l.b16 %v850
        %v895 = vunpack.c.l.b16 %v851
        %v896 = vunpack.c.l.b16 %v852
        %v897 = vunpack.c.l.b16 %v853
        %v898 = vunpack.c.l.b16 %v854
        %v899 = vunpack.c.l.b16 %v855
        %v900 = vunpack.c.l.b16 %v856
        %v901 = vunpack.c.l.b16 %v857
        %v902 = vunpack.c.l.b16 %v858
        %v903 = vunpack.c.l.b16 %v859
        %v904 = vpack.c.b16 %v885, %v884
        %v905 = vpack.c.b16 %v887, %v886
        %v906 = vpack.c.b16 %v889, %v888
        %v907 = vpack.c.b16 %v891, %v890
        %v908 = vpack.c.b16 %v893, %v892
        %v909 = vpack.c.b16 %v895, %v894
        %v910 = vpack.c.b16 %v897, %v896
        %v911 = vpack.c.b16 %v899, %v898
        %v912 = vpack.c.b16 %v901, %v900
        %v913 = vpack.c.b16 %v903, %v902
        %vm914 = vcmask 1044480
        %v915 = vrot.slane %v904, 3
        %v916 = vrot.slane %v905, 3
        %v917 = vsel %vm914, %v915, %v916
        %v918 = vrot.slane %v906, 3
        %v919 = vsel %vm914, %v916, %v918
        %v920 = vrot.slane %v907, 3
        %v921 = vsel %vm914, %v918, %v920
        %v922 = vrot.slane %v908, 3
        %v923 = vsel %vm914, %v920, %v922
        %v924 = vrot.slane %v909, 3
        %v925 = vsel %vm914, %v922, %v924
        %v926 = vrot.slane %v910, 3
        %v927 = vsel %vm914, %v924, %v926
        %v928 = vrot.slane %v911, 3
        %v929 = vsel %vm914, %v926, %v928
        %v930 = vrot.slane %v912, 3
        %v931 = vsel %vm914, %v928, %v930
        %v932 = vrot.slane %v913, 3
        %v933 = vsel %vm914, %v930, %v932
        %v937 = vunpack.c.l.b16 %v861
        %v938 = vunpack.c.l.b16 %v862
        %v939 = vunpack.c.l.b16 %v863
        %v940 = vpack.c.b16 %v938, %v937
        %v941 = vpack.c.b16 %v939, %v939
        %v944 = vsel %vm525, %v917, 0
        %v947 = vsel %vm525, %v919, 0
        %v950 = vsel %vm525, %v921, 0
        %v953 = vsel %vm525, %v923, 0
        %v956 = vsel %vm525, %v925, 0
        %v959 = vsel %vm525, %v927, 0
        %v962 = vsel %vm525, %v929, 0
        %v965 = vsel %vm525, %v931, 0
        %v968 = vsel %vm525, %v933, 0
        %v971 = vsel %vm525, %v932, 0
        %v974 = vsel %vm556, %v941, 0
        %976 = vmatprep.subr.bf16.mxu0 0
        %977 = vmatpush1.bf16.msra.mxu0 0
        %978 = vmatprep.subr.bf16.mxu0 0
        %979 = vmatpush1.bf16.msra.mxu0 0
        %980 = vmatprep.subr.bf16.mxu0 0
        %981 = vmatpush1.bf16.msra.mxu0 0
        %982 = vmatprep.subr.bf16.mxu0 0
        %983 = vmatpush1.bf16.msra.mxu0 0
        %984 = vmatprep.subr.bf16.mxu0 0
        %985 = vmatpush1.bf16.msra.mxu0 0
        %986 = vmatprep.subr.bf16.mxu0 0
        %987 = vmatpush1.bf16.msra.mxu0 0
        %988 = vmatprep.subr.bf16.mxu0 0
        %989 = vmatpush1.bf16.msra.mxu0 %v974
        %990 = vmatprep.subr.bf16.mxu0 0
        %991 = vmatpush1.bf16.msra.mxu0 %v940
        %992 = vmatprep.subr.bf16.mxu0 0
        %993 = vmatpush2.bf16.msra.mxu0 0
        %994 = vmatprep.subr.bf16.mxu0 0
        %995 = vmatpush2.bf16.msra.mxu0 0
        %996 = vmatprep.subr.bf16.mxu0 0
        %997 = vmatpush2.bf16.msra.mxu0 0
        %998 = vmatprep.subr.bf16.mxu0 0
        %999 = vmatpush2.bf16.msra.mxu0 0
        %1000 = vmatprep.subr.bf16.mxu0 0
        %1001 = vmatpush2.bf16.msra.mxu0 0
        %1002 = vmatprep.subr.bf16.mxu0 0
        %1003 = vmatpush2.bf16.msra.mxu0 0
        %1004 = vmatprep.subr.bf16.mxu0 0
        %1005 = vmatpush2.bf16.msra.mxu0 0
        %1006 = vmatprep.subr.bf16.mxu0 0
        %1007 = vmatpush2.bf16.msra.mxu0 0
        %1008 = vmatprep.mubr.bf16.mxu0 0
        %1009 = vmatmul.mubr.bf16.gmra.mxu0 %v944
        %v1010 = vpop.f32.mrf.mxu0
        %v1011 = vadd.f32 0.0, %v1010
        %v1012 = vpop.f32.mrf.mxu0
        %v1013 = vpop.f32.mrf.mxu0
        %v1014 = vadd.f32 0.0, %v1013
        %v1015 = vpop.f32.mrf.mxu0
        %1016 = vmatprep.mubr.bf16.mxu0 0
        %1017 = vmatmul.mubr.bf16.gmra.mxu0 %v947
        %v1018 = vpop.f32.mrf.mxu0
        %v1019 = vadd.f32 0.0, %v1018
        %v1020 = vpop.f32.mrf.mxu0
        %v1021 = vpop.f32.mrf.mxu0
        %v1022 = vadd.f32 0.0, %v1021
        %v1023 = vpop.f32.mrf.mxu0
        %1024 = vmatprep.mubr.bf16.mxu0 0
        %1025 = vmatmul.mubr.bf16.gmra.mxu0 %v950
        %v1026 = vpop.f32.mrf.mxu0
        %v1027 = vadd.f32 0.0, %v1026
        %v1028 = vpop.f32.mrf.mxu0
        %v1029 = vpop.f32.mrf.mxu0
        %v1030 = vadd.f32 0.0, %v1029
        %v1031 = vpop.f32.mrf.mxu0
        %1032 = vmatprep.mubr.bf16.mxu0 0
        %1033 = vmatmul.mubr.bf16.gmra.mxu0 %v953
        %v1034 = vpop.f32.mrf.mxu0
        %v1035 = vadd.f32 0.0, %v1034
        %v1036 = vpop.f32.mrf.mxu0
        %v1037 = vpop.f32.mrf.mxu0
        %v1038 = vadd.f32 0.0, %v1037
        %v1039 = vpop.f32.mrf.mxu0
        %1040 = vmatprep.mubr.bf16.mxu0 0
        %1041 = vmatmul.mubr.bf16.gmra.mxu0 %v956
        %v1042 = vpop.f32.mrf.mxu0
        %v1043 = vadd.f32 0.0, %v1042
        %v1044 = vpop.f32.mrf.mxu0
        %v1045 = vpop.f32.mrf.mxu0
        %v1046 = vadd.f32 0.0, %v1045
        %v1047 = vpop.f32.mrf.mxu0
        %1048 = vmatprep.mubr.bf16.mxu0 0
        %1049 = vmatmul.mubr.bf16.gmra.mxu0 %v959
        %v1050 = vpop.f32.mrf.mxu0
        %v1051 = vadd.f32 0.0, %v1050
        %v1052 = vpop.f32.mrf.mxu0
        %v1053 = vpop.f32.mrf.mxu0
        %v1054 = vadd.f32 0.0, %v1053
        %v1055 = vpop.f32.mrf.mxu0
        %1056 = vmatprep.mubr.bf16.mxu0 0
        %1057 = vmatmul.mubr.bf16.gmra.mxu0 %v962
        %v1058 = vpop.f32.mrf.mxu0
        %v1059 = vadd.f32 0.0, %v1058
        %v1060 = vpop.f32.mrf.mxu0
        %v1061 = vpop.f32.mrf.mxu0
        %v1062 = vadd.f32 0.0, %v1061
        %v1063 = vpop.f32.mrf.mxu0
        %1064 = vmatprep.mubr.bf16.mxu0 0
        %1065 = vmatmul.mubr.bf16.gmra.mxu0 %v965
        %v1066 = vpop.f32.mrf.mxu0
        %v1067 = vadd.f32 0.0, %v1066
        %v1068 = vpop.f32.mrf.mxu0
        %v1069 = vpop.f32.mrf.mxu0
        %v1070 = vadd.f32 0.0, %v1069
        %v1071 = vpop.f32.mrf.mxu0
        %1072 = vmatprep.mubr.bf16.mxu0 0
        %1073 = vmatmul.mubr.bf16.gmra.mxu0 %v968
        %v1074 = vpop.f32.mrf.mxu0
        %v1075 = vadd.f32 0.0, %v1074
        %v1076 = vpop.f32.mrf.mxu0
        %v1077 = vpop.f32.mrf.mxu0
        %v1078 = vadd.f32 0.0, %v1077
        %v1079 = vpop.f32.mrf.mxu0
        %1080 = vmatprep.mubr.bf16.mxu0 0
        %1081 = vmatmul.mubr.bf16.gmra.mxu0 %v971
        %v1082 = vpop.f32.mrf.mxu0
        %v1083 = vadd.f32 0.0, %v1082
        %v1084 = vpop.f32.mrf.mxu0
        %v1085 = vpop.f32.mrf.mxu0
        %v1086 = vpop.f32.mrf.mxu0
        %1087 = vdwg.mxu0
        %v1088 = vadd.f32 %v763, %v1011
        %v1089 = vadd.f32 %v766, %v1014
        %v1090 = vadd.f32 %v771, %v1019
        %v1091 = vadd.f32 %v774, %v1022
        %v1092 = vadd.f32 %v779, %v1027
        %v1093 = vadd.f32 %v782, %v1030
        %v1094 = vadd.f32 %v787, %v1035
        %v1095 = vadd.f32 %v790, %v1038
        %v1096 = vadd.f32 %v795, %v1043
        %v1097 = vadd.f32 %v798, %v1046
        %v1098 = vadd.f32 %v803, %v1051
        %v1099 = vadd.f32 %v806, %v1054
        %v1100 = vadd.f32 %v811, %v1059
        %v1101 = vadd.f32 %v814, %v1062
        %v1102 = vadd.f32 %v819, %v1067
        %v1103 = vadd.f32 %v822, %v1070
        %v1104 = vadd.f32 %v827, %v1075
        %v1105 = vadd.f32 %v830, %v1078
        %v1106 = vadd.f32 %v835, %v1083
        %v1107 = vld [vmem:[%s340 + $0x14] sm:$0xc]
        %v1108 = vld [vmem:[%s340 + $0x18] sm:$0xf]
        %v1109 = vld [vmem:[%s340 + $0x1c] sm:$0xf]
        %v1110 = vld [vmem:[%s340 + $0x20] sm:$0xf]
        %v1111 = vld [vmem:[%s340 + $0x24] sm:$0xf]
        %v1112 = vld [vmem:[%s340 + $0x28] sm:$0xf]
        %v1113 = vld [vmem:[%s340 + $0x2c] sm:$0xf]
        %v1114 = vld [vmem:[%s340 + $0x30] sm:$0xf]
        %v1115 = vld [vmem:[%s340 + $0x34] sm:$0xf]
        %v1116 = vld [vmem:[%s340 + $0x38] sm:$0xf]
        %v1117 = vld [vmem:[%s340 + $0x3c] sm:$0xf]
        %v1118 = vld [vmem:[%s340 + $0x40] sm:$0xf]
        %v1119 = vld [vmem:[%s340 + $0x44] sm:$0xf]
        %v1120 = vld [vmem:[%s340 + $0x48] sm:$0xf]
        %v1121 = vld [vmem:[%s340 + $0x4c] sm:$0xf]
        %v1122 = vld [vmem:[%s340 + $0x50] sm:$0xf]
        %v1123 = vld [vmem:[%s340 + $0x54] sm:$0xf]
        %v1124 = vld [vmem:[%s340 + $0x58] sm:$0xf]
        %v1125 = vld [vmem:[%s340 + $0x5c] sm:$0xf]
        %v1126 = vld [vmem:[%s340 + $0x60] sm:$0x7]
        %s1127 = scalar_lea.vmem [#allocation4], 36
        %v1128 = vld [vmem:[%s1127] sm:$0xf]
        %v1129 = vld [vmem:[%s1127 + $0x4] sm:$0xf]
        %v1130 = vld [vmem:[%s1127 + $0x8] sm:$0xf]
        %v1151 = vunpack.c.l.b16 %v1107
        %v1152 = vunpack.c.l.b16 %v1108
        %v1153 = vunpack.c.l.b16 %v1109
        %v1154 = vunpack.c.l.b16 %v1110
        %v1155 = vunpack.c.l.b16 %v1111
        %v1156 = vunpack.c.l.b16 %v1112
        %v1157 = vunpack.c.l.b16 %v1113
        %v1158 = vunpack.c.l.b16 %v1114
        %v1159 = vunpack.c.l.b16 %v1115
        %v1160 = vunpack.c.l.b16 %v1116
        %v1161 = vunpack.c.l.b16 %v1117
        %v1162 = vunpack.c.l.b16 %v1118
        %v1163 = vunpack.c.l.b16 %v1119
        %v1164 = vunpack.c.l.b16 %v1120
        %v1165 = vunpack.c.l.b16 %v1121
        %v1166 = vunpack.c.l.b16 %v1122
        %v1167 = vunpack.c.l.b16 %v1123
        %v1168 = vunpack.c.l.b16 %v1124
        %v1169 = vunpack.c.l.b16 %v1125
        %v1170 = vunpack.c.l.b16 %v1126
        %v1171 = vpack.c.b16 %v1152, %v1151
        %v1172 = vpack.c.b16 %v1154, %v1153
        %v1173 = vpack.c.b16 %v1156, %v1155
        %v1174 = vpack.c.b16 %v1158, %v1157
        %v1175 = vpack.c.b16 %v1160, %v1159
        %v1176 = vpack.c.b16 %v1162, %v1161
        %v1177 = vpack.c.b16 %v1164, %v1163
        %v1178 = vpack.c.b16 %v1166, %v1165
        %v1179 = vpack.c.b16 %v1168, %v1167
        %v1180 = vpack.c.b16 %v1170, %v1169
        %vm1181 = vsmask.f32 5376
        %v1183 = vshrl.u32 %v1171, 16
        %v1185 = vrot.slane %v1183, 2
        %v1186 = vshll.u32 %v1171, 16
        %v1188 = vrot.slane %v1186, 3
        %v1189 = vor.u32 %v1185, %v1188
        %v1191 = vshrl.u32 %v1172, 16
        %v1193 = vrot.slane %v1191, 2
        %v1194 = vshll.u32 %v1172, 16
        %v1196 = vrot.slane %v1194, 3
        %v1197 = vor.u32 %v1193, %v1196
        %v1198 = vsel %vm1181, %v1189, %v1197
        %v1200 = vshrl.u32 %v1173, 16
        %v1202 = vrot.slane %v1200, 2
        %v1203 = vshll.u32 %v1173, 16
        %v1205 = vrot.slane %v1203, 3
        %v1206 = vor.u32 %v1202, %v1205
        %v1207 = vsel %vm1181, %v1197, %v1206
        %v1209 = vshrl.u32 %v1174, 16
        %v1211 = vrot.slane %v1209, 2
        %v1212 = vshll.u32 %v1174, 16
        %v1214 = vrot.slane %v1212, 3
        %v1215 = vor.u32 %v1211, %v1214
        %v1216 = vsel %vm1181, %v1206, %v1215
        %v1218 = vshrl.u32 %v1175, 16
        %v1220 = vrot.slane %v1218, 2
        %v1221 = vshll.u32 %v1175, 16
        %v1223 = vrot.slane %v1221, 3
        %v1224 = vor.u32 %v1220, %v1223
        %v1225 = vsel %vm1181, %v1215, %v1224
        %v1227 = vshrl.u32 %v1176, 16
        %v1229 = vrot.slane %v1227, 2
        %v1230 = vshll.u32 %v1176, 16
        %v1232 = vrot.slane %v1230, 3
        %v1233 = vor.u32 %v1229, %v1232
        %v1234 = vsel %vm1181, %v1224, %v1233
        %v1236 = vshrl.u32 %v1177, 16
        %v1238 = vrot.slane %v1236, 2
        %v1239 = vshll.u32 %v1177, 16
        %v1241 = vrot.slane %v1239, 3
        %v1242 = vor.u32 %v1238, %v1241
        %v1243 = vsel %vm1181, %v1233, %v1242
        %v1245 = vshrl.u32 %v1178, 16
        %v1247 = vrot.slane %v1245, 2
        %v1248 = vshll.u32 %v1178, 16
        %v1250 = vrot.slane %v1248, 3
        %v1251 = vor.u32 %v1247, %v1250
        %v1252 = vsel %vm1181, %v1242, %v1251
        %v1254 = vshrl.u32 %v1179, 16
        %v1256 = vrot.slane %v1254, 2
        %v1257 = vshll.u32 %v1179, 16
        %v1259 = vrot.slane %v1257, 3
        %v1260 = vor.u32 %v1256, %v1259
        %v1261 = vsel %vm1181, %v1251, %v1260
        %v1263 = vshrl.u32 %v1180, 16
        %v1265 = vrot.slane %v1263, 2
        %v1266 = vshll.u32 %v1180, 16
        %v1268 = vrot.slane %v1266, 3
        %v1269 = vor.u32 %v1265, %v1268
        %v1270 = vsel %vm1181, %v1260, %v1269
        %v1274 = vunpack.c.l.b16 %v1128
        %v1275 = vunpack.c.l.b16 %v1129
        %v1276 = vunpack.c.l.b16 %v1130
        %v1277 = vpack.c.b16 %v1275, %v1274
        %v1278 = vpack.c.b16 %v1276, %v1276
        %v1281 = vsel %vm525, %v1198, 0
        %v1284 = vsel %vm525, %v1207, 0
        %v1287 = vsel %vm525, %v1216, 0
        %v1290 = vsel %vm525, %v1225, 0
        %v1293 = vsel %vm525, %v1234, 0
        %v1296 = vsel %vm525, %v1243, 0
        %v1299 = vsel %vm525, %v1252, 0
        %v1302 = vsel %vm525, %v1261, 0
        %v1305 = vsel %vm525, %v1270, 0
        %v1308 = vsel %vm525, %v1269, 0
        %v1311 = vsel %vm556, %v1278, 0
        %1313 = vmatprep.subr.bf16.mxu0 0
        %1314 = vmatpush1.bf16.msra.mxu0 0
        %1315 = vmatprep.subr.bf16.mxu0 0
        %1316 = vmatpush1.bf16.msra.mxu0 0
        %1317 = vmatprep.subr.bf16.mxu0 0
        %1318 = vmatpush1.bf16.msra.mxu0 0
        %1319 = vmatprep.subr.bf16.mxu0 0
        %1320 = vmatpush1.bf16.msra.mxu0 0
        %1321 = vmatprep.subr.bf16.mxu0 0
        %1322 = vmatpush1.bf16.msra.mxu0 0
        %1323 = vmatprep.subr.bf16.mxu0 0
        %1324 = vmatpush1.bf16.msra.mxu0 0
        %1325 = vmatprep.subr.bf16.mxu0 0
        %1326 = vmatpush1.bf16.msra.mxu0 %v1311
        %1327 = vmatprep.subr.bf16.mxu0 0
        %1328 = vmatpush1.bf16.msra.mxu0 %v1277
        %1329 = vmatprep.subr.bf16.mxu0 0
        %1330 = vmatpush2.bf16.msra.mxu0 0
        %1331 = vmatprep.subr.bf16.mxu0 0
        %1332 = vmatpush2.bf16.msra.mxu0 0
        %1333 = vmatprep.subr.bf16.mxu0 0
        %1334 = vmatpush2.bf16.msra.mxu0 0
        %1335 = vmatprep.subr.bf16.mxu0 0
        %1336 = vmatpush2.bf16.msra.mxu0 0
        %1337 = vmatprep.subr.bf16.mxu0 0
        %1338 = vmatpush2.bf16.msra.mxu0 0
        %1339 = vmatprep.subr.bf16.mxu0 0
        %1340 = vmatpush2.bf16.msra.mxu0 0
        %1341 = vmatprep.subr.bf16.mxu0 0
        %1342 = vmatpush2.bf16.msra.mxu0 0
        %1343 = vmatprep.subr.bf16.mxu0 0
        %1344 = vmatpush2.bf16.msra.mxu0 0
        %1345 = vmatprep.mubr.bf16.mxu0 0
        %1346 = vmatmul.mubr.bf16.gmra.mxu0 %v1281
        %v1347 = vpop.f32.mrf.mxu0
        %v1348 = vadd.f32 0.0, %v1347
        %v1349 = vpop.f32.mrf.mxu0
        %v1350 = vpop.f32.mrf.mxu0
        %v1351 = vadd.f32 0.0, %v1350
        %v1352 = vpop.f32.mrf.mxu0
        %1353 = vmatprep.mubr.bf16.mxu0 0
        %1354 = vmatmul.mubr.bf16.gmra.mxu0 %v1284
        %v1355 = vpop.f32.mrf.mxu0
        %v1356 = vadd.f32 0.0, %v1355
        %v1357 = vpop.f32.mrf.mxu0
        %v1358 = vpop.f32.mrf.mxu0
        %v1359 = vadd.f32 0.0, %v1358
        %v1360 = vpop.f32.mrf.mxu0
        %1361 = vmatprep.mubr.bf16.mxu0 0
        %1362 = vmatmul.mubr.bf16.gmra.mxu0 %v1287
        %v1363 = vpop.f32.mrf.mxu0
        %v1364 = vadd.f32 0.0, %v1363
        %v1365 = vpop.f32.mrf.mxu0
        %v1366 = vpop.f32.mrf.mxu0
        %v1367 = vadd.f32 0.0, %v1366
        %v1368 = vpop.f32.mrf.mxu0
        %1369 = vmatprep.mubr.bf16.mxu0 0
        %1370 = vmatmul.mubr.bf16.gmra.mxu0 %v1290
        %v1371 = vpop.f32.mrf.mxu0
        %v1372 = vadd.f32 0.0, %v1371
        %v1373 = vpop.f32.mrf.mxu0
        %v1374 = vpop.f32.mrf.mxu0
        %v1375 = vadd.f32 0.0, %v1374
        %v1376 = vpop.f32.mrf.mxu0
        %1377 = vmatprep.mubr.bf16.mxu0 0
        %1378 = vmatmul.mubr.bf16.gmra.mxu0 %v1293
        %v1379 = vpop.f32.mrf.mxu0
        %v1380 = vadd.f32 0.0, %v1379
        %v1381 = vpop.f32.mrf.mxu0
        %v1382 = vpop.f32.mrf.mxu0
        %v1383 = vadd.f32 0.0, %v1382
        %v1384 = vpop.f32.mrf.mxu0
        %1385 = vmatprep.mubr.bf16.mxu0 0
        %1386 = vmatmul.mubr.bf16.gmra.mxu0 %v1296
        %v1387 = vpop.f32.mrf.mxu0
        %v1388 = vadd.f32 0.0, %v1387
        %v1389 = vpop.f32.mrf.mxu0
        %v1390 = vpop.f32.mrf.mxu0
        %v1391 = vadd.f32 0.0, %v1390
        %v1392 = vpop.f32.mrf.mxu0
        %1393 = vmatprep.mubr.bf16.mxu0 0
        %1394 = vmatmul.mubr.bf16.gmra.mxu0 %v1299
        %v1395 = vpop.f32.mrf.mxu0
        %v1396 = vadd.f32 0.0, %v1395
        %v1397 = vpop.f32.mrf.mxu0
        %v1398 = vpop.f32.mrf.mxu0
        %v1399 = vadd.f32 0.0, %v1398
        %v1400 = vpop.f32.mrf.mxu0
        %1401 = vmatprep.mubr.bf16.mxu0 0
        %1402 = vmatmul.mubr.bf16.gmra.mxu0 %v1302
        %v1403 = vpop.f32.mrf.mxu0
        %v1404 = vadd.f32 0.0, %v1403
        %v1405 = vpop.f32.mrf.mxu0
        %v1406 = vpop.f32.mrf.mxu0
        %v1407 = vadd.f32 0.0, %v1406
        %v1408 = vpop.f32.mrf.mxu0
        %1409 = vmatprep.mubr.bf16.mxu0 0
        %1410 = vmatmul.mubr.bf16.gmra.mxu0 %v1305
        %v1411 = vpop.f32.mrf.mxu0
        %v1412 = vadd.f32 0.0, %v1411
        %v1413 = vpop.f32.mrf.mxu0
        %v1414 = vpop.f32.mrf.mxu0
        %v1415 = vadd.f32 0.0, %v1414
        %v1416 = vpop.f32.mrf.mxu0
        %1417 = vmatprep.mubr.bf16.mxu0 0
        %1418 = vmatmul.mubr.bf16.gmra.mxu0 %v1308
        %v1419 = vpop.f32.mrf.mxu0
        %v1420 = vadd.f32 0.0, %v1419
        %v1421 = vpop.f32.mrf.mxu0
        %v1422 = vpop.f32.mrf.mxu0
        %v1423 = vpop.f32.mrf.mxu0
        %1424 = vdwg.mxu0
        %v1425 = vadd.f32 %v1088, %v1348
        %v1426 = vadd.f32 %v1089, %v1351
        %v1427 = vadd.f32 %v1090, %v1356
        %v1428 = vadd.f32 %v1091, %v1359
        %v1429 = vadd.f32 %v1092, %v1364
        %v1430 = vadd.f32 %v1093, %v1367
        %v1431 = vadd.f32 %v1094, %v1372
        %v1432 = vadd.f32 %v1095, %v1375
        %v1433 = vadd.f32 %v1096, %v1380
        %v1434 = vadd.f32 %v1097, %v1383
        %v1435 = vadd.f32 %v1098, %v1388
        %v1436 = vadd.f32 %v1099, %v1391
        %v1437 = vadd.f32 %v1100, %v1396
        %v1438 = vadd.f32 %v1101, %v1399
        %v1439 = vadd.f32 %v1102, %v1404
        %v1440 = vadd.f32 %v1103, %v1407
        %v1441 = vadd.f32 %v1104, %v1412
        %v1442 = vadd.f32 %v1105, %v1415
        %v1443 = vadd.f32 %v1106, %v1420
        %v1444 = vld [vmem:[%s340 + $0x1c] sm:$0xc]
        %v1445 = vld [vmem:[%s340 + $0x20] sm:$0xf]
        %v1446 = vld [vmem:[%s340 + $0x24] sm:$0xf]
        %v1447 = vld [vmem:[%s340 + $0x28] sm:$0xf]
        %v1448 = vld [vmem:[%s340 + $0x2c] sm:$0xf]
        %v1449 = vld [vmem:[%s340 + $0x30] sm:$0xf]
        %v1450 = vld [vmem:[%s340 + $0x34] sm:$0xf]
        %v1451 = vld [vmem:[%s340 + $0x38] sm:$0xf]
        %v1452 = vld [vmem:[%s340 + $0x3c] sm:$0xf]
        %v1453 = vld [vmem:[%s340 + $0x40] sm:$0xf]
        %v1454 = vld [vmem:[%s340 + $0x44] sm:$0xf]
        %v1455 = vld [vmem:[%s340 + $0x48] sm:$0xf]
        %v1456 = vld [vmem:[%s340 + $0x4c] sm:$0xf]
        %v1457 = vld [vmem:[%s340 + $0x50] sm:$0xf]
        %v1458 = vld [vmem:[%s340 + $0x54] sm:$0xf]
        %v1459 = vld [vmem:[%s340 + $0x58] sm:$0xf]
        %v1460 = vld [vmem:[%s340 + $0x5c] sm:$0xf]
        %v1461 = vld [vmem:[%s340 + $0x60] sm:$0xf]
        %v1462 = vld [vmem:[%s340 + $0x64] sm:$0xf]
        %v1463 = vld [vmem:[%s340 + $0x68] sm:$0x3]
        %s1464 = scalar_lea.vmem [#allocation4], 48
        %v1465 = vld [vmem:[%s1464] sm:$0xf]
        %v1466 = vld [vmem:[%s1464 + $0x4] sm:$0xf]
        %v1467 = vld [vmem:[%s1464 + $0x8] sm:$0xf]
        %v1488 = vunpack.c.l.b16 %v1444
        %v1489 = vunpack.c.l.b16 %v1445
        %v1490 = vunpack.c.l.b16 %v1446
        %v1491 = vunpack.c.l.b16 %v1447
        %v1492 = vunpack.c.l.b16 %v1448
        %v1493 = vunpack.c.l.b16 %v1449
        %v1494 = vunpack.c.l.b16 %v1450
        %v1495 = vunpack.c.l.b16 %v1451
        %v1496 = vunpack.c.l.b16 %v1452
        %v1497 = vunpack.c.l.b16 %v1453
        %v1498 = vunpack.c.l.b16 %v1454
        %v1499 = vunpack.c.l.b16 %v1455
        %v1500 = vunpack.c.l.b16 %v1456
        %v1501 = vunpack.c.l.b16 %v1457
        %v1502 = vunpack.c.l.b16 %v1458
        %v1503 = vunpack.c.l.b16 %v1459
        %v1504 = vunpack.c.l.b16 %v1460
        %v1505 = vunpack.c.l.b16 %v1461
        %v1506 = vunpack.c.l.b16 %v1462
        %v1507 = vunpack.c.l.b16 %v1463
        %v1508 = vpack.c.b16 %v1489, %v1488
        %v1509 = vpack.c.b16 %v1491, %v1490
        %v1510 = vpack.c.b16 %v1493, %v1492
        %v1511 = vpack.c.b16 %v1495, %v1494
        %v1512 = vpack.c.b16 %v1497, %v1496
        %v1513 = vpack.c.b16 %v1499, %v1498
        %v1514 = vpack.c.b16 %v1501, %v1500
        %v1515 = vpack.c.b16 %v1503, %v1502
        %v1516 = vpack.c.b16 %v1505, %v1504
        %v1517 = vpack.c.b16 %v1507, %v1506
        %vm1518 = vcmask 1045504
        %v1519 = vrot.slane %v1508, 2
        %v1520 = vrot.slane %v1509, 2
        %v1521 = vsel %vm1518, %v1519, %v1520
        %v1522 = vrot.slane %v1510, 2
        %v1523 = vsel %vm1518, %v1520, %v1522
        %v1524 = vrot.slane %v1511, 2
        %v1525 = vsel %vm1518, %v1522, %v1524
        %v1526 = vrot.slane %v1512, 2
        %v1527 = vsel %vm1518, %v1524, %v1526
        %v1528 = vrot.slane %v1513, 2
        %v1529 = vsel %vm1518, %v1526, %v1528
        %v1530 = vrot.slane %v1514, 2
        %v1531 = vsel %vm1518, %v1528, %v1530
        %v1532 = vrot.slane %v1515, 2
        %v1533 = vsel %vm1518, %v1530, %v1532
        %v1534 = vrot.slane %v1516, 2
        %v1535 = vsel %vm1518, %v1532, %v1534
        %v1536 = vrot.slane %v1517, 2
        %v1537 = vsel %vm1518, %v1534, %v1536
        %v1541 = vunpack.c.l.b16 %v1465
        %v1542 = vunpack.c.l.b16 %v1466
        %v1543 = vunpack.c.l.b16 %v1467
        %v1544 = vpack.c.b16 %v1542, %v1541
        %v1545 = vpack.c.b16 %v1543, %v1543
        %v1548 = vsel %vm525, %v1521, 0
        %v1551 = vsel %vm525, %v1523, 0
        %v1554 = vsel %vm525, %v1525, 0
        %v1557 = vsel %vm525, %v1527, 0
        %v1560 = vsel %vm525, %v1529, 0
        %v1563 = vsel %vm525, %v1531, 0
        %v1566 = vsel %vm525, %v1533, 0
        %v1569 = vsel %vm525, %v1535, 0
        %v1572 = vsel %vm525, %v1537, 0
        %v1575 = vsel %vm525, %v1536, 0
        %v1578 = vsel %vm556, %v1545, 0
        %1580 = vmatprep.subr.bf16.mxu0 0
        %1581 = vmatpush1.bf16.msra.mxu0 0
        %1582 = vmatprep.subr.bf16.mxu0 0
        %1583 = vmatpush1.bf16.msra.mxu0 0
        %1584 = vmatprep.subr.bf16.mxu0 0
        %1585 = vmatpush1.bf16.msra.mxu0 0
        %1586 = vmatprep.subr.bf16.mxu0 0
        %1587 = vmatpush1.bf16.msra.mxu0 0
        %1588 = vmatprep.subr.bf16.mxu0 0
        %1589 = vmatpush1.bf16.msra.mxu0 0
        %1590 = vmatprep.subr.bf16.mxu0 0
        %1591 = vmatpush1.bf16.msra.mxu0 0
        %1592 = vmatprep.subr.bf16.mxu0 0
        %1593 = vmatpush1.bf16.msra.mxu0 %v1578
        %1594 = vmatprep.subr.bf16.mxu0 0
        %1595 = vmatpush1.bf16.msra.mxu0 %v1544
        %1596 = vmatprep.subr.bf16.mxu0 0
        %1597 = vmatpush2.bf16.msra.mxu0 0
        %1598 = vmatprep.subr.bf16.mxu0 0
        %1599 = vmatpush2.bf16.msra.mxu0 0
        %1600 = vmatprep.subr.bf16.mxu0 0
        %1601 = vmatpush2.bf16.msra.mxu0 0
        %1602 = vmatprep.subr.bf16.mxu0 0
        %1603 = vmatpush2.bf16.msra.mxu0 0
        %1604 = vmatprep.subr.bf16.mxu0 0
        %1605 = vmatpush2.bf16.msra.mxu0 0
        %1606 = vmatprep.subr.bf16.mxu0 0
        %1607 = vmatpush2.bf16.msra.mxu0 0
        %1608 = vmatprep.subr.bf16.mxu0 0
        %1609 = vmatpush2.bf16.msra.mxu0 0
        %1610 = vmatprep.subr.bf16.mxu0 0
        %1611 = vmatpush2.bf16.msra.mxu0 0
        %1612 = vmatprep.mubr.bf16.mxu0 0
        %1613 = vmatmul.mubr.bf16.gmra.mxu0 %v1548
        %v1614 = vpop.f32.mrf.mxu0
        %v1615 = vadd.f32 0.0, %v1614
        %v1616 = vpop.f32.mrf.mxu0
        %v1617 = vpop.f32.mrf.mxu0
        %v1618 = vadd.f32 0.0, %v1617
        %v1619 = vpop.f32.mrf.mxu0
        %1620 = vmatprep.mubr.bf16.mxu0 0
        %1621 = vmatmul.mubr.bf16.gmra.mxu0 %v1551
        %v1622 = vpop.f32.mrf.mxu0
        %v1623 = vadd.f32 0.0, %v1622
        %v1624 = vpop.f32.mrf.mxu0
        %v1625 = vpop.f32.mrf.mxu0
        %v1626 = vadd.f32 0.0, %v1625
        %v1627 = vpop.f32.mrf.mxu0
        %1628 = vmatprep.mubr.bf16.mxu0 0
        %1629 = vmatmul.mubr.bf16.gmra.mxu0 %v1554
        %v1630 = vpop.f32.mrf.mxu0
        %v1631 = vadd.f32 0.0, %v1630
        %v1632 = vpop.f32.mrf.mxu0
        %v1633 = vpop.f32.mrf.mxu0
        %v1634 = vadd.f32 0.0, %v1633
        %v1635 = vpop.f32.mrf.mxu0
        %1636 = vmatprep.mubr.bf16.mxu0 0
        %1637 = vmatmul.mubr.bf16.gmra.mxu0 %v1557
        %v1638 = vpop.f32.mrf.mxu0
        %v1639 = vadd.f32 0.0, %v1638
        %v1640 = vpop.f32.mrf.mxu0
        %v1641 = vpop.f32.mrf.mxu0
        %v1642 = vadd.f32 0.0, %v1641
        %v1643 = vpop.f32.mrf.mxu0
        %1644 = vmatprep.mubr.bf16.mxu0 0
        %1645 = vmatmul.mubr.bf16.gmra.mxu0 %v1560
        %v1646 = vpop.f32.mrf.mxu0
        %v1647 = vadd.f32 0.0, %v1646
        %v1648 = vpop.f32.mrf.mxu0
        %v1649 = vpop.f32.mrf.mxu0
        %v1650 = vadd.f32 0.0, %v1649
        %v1651 = vpop.f32.mrf.mxu0
        %1652 = vmatprep.mubr.bf16.mxu0 0
        %1653 = vmatmul.mubr.bf16.gmra.mxu0 %v1563
        %v1654 = vpop.f32.mrf.mxu0
        %v1655 = vadd.f32 0.0, %v1654
        %v1656 = vpop.f32.mrf.mxu0
        %v1657 = vpop.f32.mrf.mxu0
        %v1658 = vadd.f32 0.0, %v1657
        %v1659 = vpop.f32.mrf.mxu0
        %1660 = vmatprep.mubr.bf16.mxu0 0
        %1661 = vmatmul.mubr.bf16.gmra.mxu0 %v1566
        %v1662 = vpop.f32.mrf.mxu0
        %v1663 = vadd.f32 0.0, %v1662
        %v1664 = vpop.f32.mrf.mxu0
        %v1665 = vpop.f32.mrf.mxu0
        %v1666 = vadd.f32 0.0, %v1665
        %v1667 = vpop.f32.mrf.mxu0
        %1668 = vmatprep.mubr.bf16.mxu0 0
        %1669 = vmatmul.mubr.bf16.gmra.mxu0 %v1569
        %v1670 = vpop.f32.mrf.mxu0
        %v1671 = vadd.f32 0.0, %v1670
        %v1672 = vpop.f32.mrf.mxu0
        %v1673 = vpop.f32.mrf.mxu0
        %v1674 = vadd.f32 0.0, %v1673
        %v1675 = vpop.f32.mrf.mxu0
        %1676 = vmatprep.mubr.bf16.mxu0 0
        %1677 = vmatmul.mubr.bf16.gmra.mxu0 %v1572
        %v1678 = vpop.f32.mrf.mxu0
        %v1679 = vadd.f32 0.0, %v1678
        %v1680 = vpop.f32.mrf.mxu0
        %v1681 = vpop.f32.mrf.mxu0
        %v1682 = vadd.f32 0.0, %v1681
        %v1683 = vpop.f32.mrf.mxu0
        %1684 = vmatprep.mubr.bf16.mxu0 0
        %1685 = vmatmul.mubr.bf16.gmra.mxu0 %v1575
        %v1686 = vpop.f32.mrf.mxu0
        %v1687 = vadd.f32 0.0, %v1686
        %v1688 = vpop.f32.mrf.mxu0
        %v1689 = vpop.f32.mrf.mxu0
        %v1690 = vpop.f32.mrf.mxu0
        %1691 = vdwg.mxu0
        %v1692 = vadd.f32 %v1425, %v1615
        %v1693 = vadd.f32 %v1426, %v1618
        %v1694 = vadd.f32 %v1427, %v1623
        %v1695 = vadd.f32 %v1428, %v1626
        %v1696 = vadd.f32 %v1429, %v1631
        %v1697 = vadd.f32 %v1430, %v1634
        %v1698 = vadd.f32 %v1431, %v1639
        %v1699 = vadd.f32 %v1432, %v1642
        %v1700 = vadd.f32 %v1433, %v1647
        %v1701 = vadd.f32 %v1434, %v1650
        %v1702 = vadd.f32 %v1435, %v1655
        %v1703 = vadd.f32 %v1436, %v1658
        %v1704 = vadd.f32 %v1437, %v1663
        %v1705 = vadd.f32 %v1438, %v1666
        %v1706 = vadd.f32 %v1439, %v1671
        %v1707 = vadd.f32 %v1440, %v1674
        %v1708 = vadd.f32 %v1441, %v1679
        %v1709 = vadd.f32 %v1442, %v1682
        %v1710 = vadd.f32 %v1443, %v1687
        %v1711 = vld [vmem:[%s340 + $0x24] sm:$0xe]
        %v1712 = vld [vmem:[%s340 + $0x28] sm:$0xf]
        %v1713 = vld [vmem:[%s340 + $0x2c] sm:$0xf]
        %v1714 = vld [vmem:[%s340 + $0x30] sm:$0xf]
        %v1715 = vld [vmem:[%s340 + $0x34] sm:$0xf]
        %v1716 = vld [vmem:[%s340 + $0x38] sm:$0xf]
        %v1717 = vld [vmem:[%s340 + $0x3c] sm:$0xf]
        %v1718 = vld [vmem:[%s340 + $0x40] sm:$0xf]
        %v1719 = vld [vmem:[%s340 + $0x44] sm:$0xf]
        %v1720 = vld [vmem:[%s340 + $0x48] sm:$0xf]
        %v1721 = vld [vmem:[%s340 + $0x4c] sm:$0xf]
        %v1722 = vld [vmem:[%s340 + $0x50] sm:$0xf]
        %v1723 = vld [vmem:[%s340 + $0x54] sm:$0xf]
        %v1724 = vld [vmem:[%s340 + $0x58] sm:$0xf]
        %v1725 = vld [vmem:[%s340 + $0x5c] sm:$0xf]
        %v1726 = vld [vmem:[%s340 + $0x60] sm:$0xf]
        %v1727 = vld [vmem:[%s340 + $0x64] sm:$0xf]
        %v1728 = vld [vmem:[%s340 + $0x68] sm:$0xf]
        %v1729 = vld [vmem:[%s340 + $0x6c] sm:$0xf]
        %v1730 = vld [vmem:[%s340 + $0x70] sm:$0x3]
        %s1731 = scalar_lea.vmem [#allocation4], 60
        %v1732 = vld [vmem:[%s1731] sm:$0xf]
        %v1733 = vld [vmem:[%s1731 + $0x4] sm:$0xf]
        %v1734 = vld [vmem:[%s1731 + $0x8] sm:$0xf]
        %v1755 = vunpack.c.l.b16 %v1711
        %v1756 = vunpack.c.l.b16 %v1712
        %v1757 = vunpack.c.l.b16 %v1713
        %v1758 = vunpack.c.l.b16 %v1714
        %v1759 = vunpack.c.l.b16 %v1715
        %v1760 = vunpack.c.l.b16 %v1716
        %v1761 = vunpack.c.l.b16 %v1717
        %v1762 = vunpack.c.l.b16 %v1718
        %v1763 = vunpack.c.l.b16 %v1719
        %v1764 = vunpack.c.l.b16 %v1720
        %v1765 = vunpack.c.l.b16 %v1721
        %v1766 = vunpack.c.l.b16 %v1722
        %v1767 = vunpack.c.l.b16 %v1723
        %v1768 = vunpack.c.l.b16 %v1724
        %v1769 = vunpack.c.l.b16 %v1725
        %v1770 = vunpack.c.l.b16 %v1726
        %v1771 = vunpack.c.l.b16 %v1727
        %v1772 = vunpack.c.l.b16 %v1728
        %v1773 = vunpack.c.l.b16 %v1729
        %v1774 = vunpack.c.l.b16 %v1730
        %v1775 = vpack.c.b16 %v1756, %v1755
        %v1776 = vpack.c.b16 %v1758, %v1757
        %v1777 = vpack.c.b16 %v1760, %v1759
        %v1778 = vpack.c.b16 %v1762, %v1761
        %v1779 = vpack.c.b16 %v1764, %v1763
        %v1780 = vpack.c.b16 %v1766, %v1765
        %v1781 = vpack.c.b16 %v1768, %v1767
        %v1782 = vpack.c.b16 %v1770, %v1769
        %v1783 = vpack.c.b16 %v1772, %v1771
        %v1784 = vpack.c.b16 %v1774, %v1773
        %vm1785 = vsmask.f32 6400
        %v1787 = vshrl.u32 %v1775, 16
        %v1789 = vrot.slane %v1787, 1
        %v1790 = vshll.u32 %v1775, 16
        %v1792 = vrot.slane %v1790, 2
        %v1793 = vor.u32 %v1789, %v1792
        %v1795 = vshrl.u32 %v1776, 16
        %v1797 = vrot.slane %v1795, 1
        %v1798 = vshll.u32 %v1776, 16
        %v1800 = vrot.slane %v1798, 2
        %v1801 = vor.u32 %v1797, %v1800
        %v1802 = vsel %vm1785, %v1793, %v1801
        %v1804 = vshrl.u32 %v1777, 16
        %v1806 = vrot.slane %v1804, 1
        %v1807 = vshll.u32 %v1777, 16
        %v1809 = vrot.slane %v1807, 2
        %v1810 = vor.u32 %v1806, %v1809
        %v1811 = vsel %vm1785, %v1801, %v1810
        %v1813 = vshrl.u32 %v1778, 16
        %v1815 = vrot.slane %v1813, 1
        %v1816 = vshll.u32 %v1778, 16
        %v1818 = vrot.slane %v1816, 2
        %v1819 = vor.u32 %v1815, %v1818
        %v1820 = vsel %vm1785, %v1810, %v1819
        %v1822 = vshrl.u32 %v1779, 16
        %v1824 = vrot.slane %v1822, 1
        %v1825 = vshll.u32 %v1779, 16
        %v1827 = vrot.slane %v1825, 2
        %v1828 = vor.u32 %v1824, %v1827
        %v1829 = vsel %vm1785, %v1819, %v1828
        %v1831 = vshrl.u32 %v1780, 16
        %v1833 = vrot.slane %v1831, 1
        %v1834 = vshll.u32 %v1780, 16
        %v1836 = vrot.slane %v1834, 2
        %v1837 = vor.u32 %v1833, %v1836
        %v1838 = vsel %vm1785, %v1828, %v1837
        %v1840 = vshrl.u32 %v1781, 16
        %v1842 = vrot.slane %v1840, 1
        %v1843 = vshll.u32 %v1781, 16
        %v1845 = vrot.slane %v1843, 2
        %v1846 = vor.u32 %v1842, %v1845
        %v1847 = vsel %vm1785, %v1837, %v1846
        %v1849 = vshrl.u32 %v1782, 16
        %v1851 = vrot.slane %v1849, 1
        %v1852 = vshll.u32 %v1782, 16
        %v1854 = vrot.slane %v1852, 2
        %v1855 = vor.u32 %v1851, %v1854
        %v1856 = vsel %vm1785, %v1846, %v1855
        %v1858 = vshrl.u32 %v1783, 16
        %v1860 = vrot.slane %v1858, 1
        %v1861 = vshll.u32 %v1783, 16
        %v1863 = vrot.slane %v1861, 2
        %v1864 = vor.u32 %v1860, %v1863
        %v1865 = vsel %vm1785, %v1855, %v1864
        %v1867 = vshrl.u32 %v1784, 16
        %v1869 = vrot.slane %v1867, 1
        %v1870 = vshll.u32 %v1784, 16
        %v1872 = vrot.slane %v1870, 2
        %v1873 = vor.u32 %v1869, %v1872
        %v1874 = vsel %vm1785, %v1864, %v1873
        %v1878 = vunpack.c.l.b16 %v1732
        %v1879 = vunpack.c.l.b16 %v1733
        %v1880 = vunpack.c.l.b16 %v1734
        %v1881 = vpack.c.b16 %v1879, %v1878
        %v1882 = vpack.c.b16 %v1880, %v1880
        %v1885 = vsel %vm525, %v1802, 0
        %v1888 = vsel %vm525, %v1811, 0
        %v1891 = vsel %vm525, %v1820, 0
        %v1894 = vsel %vm525, %v1829, 0
        %v1897 = vsel %vm525, %v1838, 0
        %v1900 = vsel %vm525, %v1847, 0
        %v1903 = vsel %vm525, %v1856, 0
        %v1906 = vsel %vm525, %v1865, 0
        %v1909 = vsel %vm525, %v1874, 0
        %v1912 = vsel %vm525, %v1873, 0
        %v1915 = vsel %vm556, %v1882, 0
        %1917 = vmatprep.subr.bf16.mxu0 0
        %1918 = vmatpush1.bf16.msra.mxu0 0
        %1919 = vmatprep.subr.bf16.mxu0 0
        %1920 = vmatpush1.bf16.msra.mxu0 0
        %1921 = vmatprep.subr.bf16.mxu0 0
        %1922 = vmatpush1.bf16.msra.mxu0 0
        %1923 = vmatprep.subr.bf16.mxu0 0
        %1924 = vmatpush1.bf16.msra.mxu0 0
        %1925 = vmatprep.subr.bf16.mxu0 0
        %1926 = vmatpush1.bf16.msra.mxu0 0
        %1927 = vmatprep.subr.bf16.mxu0 0
        %1928 = vmatpush1.bf16.msra.mxu0 0
        %1929 = vmatprep.subr.bf16.mxu0 0
        %1930 = vmatpush1.bf16.msra.mxu0 %v1915
        %1931 = vmatprep.subr.bf16.mxu0 0
        %1932 = vmatpush1.bf16.msra.mxu0 %v1881
        %1933 = vmatprep.subr.bf16.mxu0 0
        %1934 = vmatpush2.bf16.msra.mxu0 0
        %1935 = vmatprep.subr.bf16.mxu0 0
        %1936 = vmatpush2.bf16.msra.mxu0 0
        %1937 = vmatprep.subr.bf16.mxu0 0
        %1938 = vmatpush2.bf16.msra.mxu0 0
        %1939 = vmatprep.subr.bf16.mxu0 0
        %1940 = vmatpush2.bf16.msra.mxu0 0
        %1941 = vmatprep.subr.bf16.mxu0 0
        %1942 = vmatpush2.bf16.msra.mxu0 0
        %1943 = vmatprep.subr.bf16.mxu0 0
        %1944 = vmatpush2.bf16.msra.mxu0 0
        %1945 = vmatprep.subr.bf16.mxu0 0
        %1946 = vmatpush2.bf16.msra.mxu0 0
        %1947 = vmatprep.subr.bf16.mxu0 0
        %1948 = vmatpush2.bf16.msra.mxu0 0
        %1949 = vmatprep.mubr.bf16.mxu0 0
        %1950 = vmatmul.mubr.bf16.gmra.mxu0 %v1885
        %v1951 = vpop.f32.mrf.mxu0
        %v1952 = vadd.f32 0.0, %v1951
        %v1953 = vpop.f32.mrf.mxu0
        %v1954 = vpop.f32.mrf.mxu0
        %v1955 = vadd.f32 0.0, %v1954
        %v1956 = vpop.f32.mrf.mxu0
        %1957 = vmatprep.mubr.bf16.mxu0 0
        %1958 = vmatmul.mubr.bf16.gmra.mxu0 %v1888
        %v1959 = vpop.f32.mrf.mxu0
        %v1960 = vadd.f32 0.0, %v1959
        %v1961 = vpop.f32.mrf.mxu0
        %v1962 = vpop.f32.mrf.mxu0
        %v1963 = vadd.f32 0.0, %v1962
        %v1964 = vpop.f32.mrf.mxu0
        %1965 = vmatprep.mubr.bf16.mxu0 0
        %1966 = vmatmul.mubr.bf16.gmra.mxu0 %v1891
        %v1967 = vpop.f32.mrf.mxu0
        %v1968 = vadd.f32 0.0, %v1967
        %v1969 = vpop.f32.mrf.mxu0
        %v1970 = vpop.f32.mrf.mxu0
        %v1971 = vadd.f32 0.0, %v1970
        %v1972 = vpop.f32.mrf.mxu0
        %1973 = vmatprep.mubr.bf16.mxu0 0
        %1974 = vmatmul.mubr.bf16.gmra.mxu0 %v1894
        %v1975 = vpop.f32.mrf.mxu0
        %v1976 = vadd.f32 0.0, %v1975
        %v1977 = vpop.f32.mrf.mxu0
        %v1978 = vpop.f32.mrf.mxu0
        %v1979 = vadd.f32 0.0, %v1978
        %v1980 = vpop.f32.mrf.mxu0
        %1981 = vmatprep.mubr.bf16.mxu0 0
        %1982 = vmatmul.mubr.bf16.gmra.mxu0 %v1897
        %v1983 = vpop.f32.mrf.mxu0
        %v1984 = vadd.f32 0.0, %v1983
        %v1985 = vpop.f32.mrf.mxu0
        %v1986 = vpop.f32.mrf.mxu0
        %v1987 = vadd.f32 0.0, %v1986
        %v1988 = vpop.f32.mrf.mxu0
        %1989 = vmatprep.mubr.bf16.mxu0 0
        %1990 = vmatmul.mubr.bf16.gmra.mxu0 %v1900
        %v1991 = vpop.f32.mrf.mxu0
        %v1992 = vadd.f32 0.0, %v1991
        %v1993 = vpop.f32.mrf.mxu0
        %v1994 = vpop.f32.mrf.mxu0
        %v1995 = vadd.f32 0.0, %v1994
        %v1996 = vpop.f32.mrf.mxu0
        %1997 = vmatprep.mubr.bf16.mxu0 0
        %1998 = vmatmul.mubr.bf16.gmra.mxu0 %v1903
        %v1999 = vpop.f32.mrf.mxu0
        %v2000 = vadd.f32 0.0, %v1999
        %v2001 = vpop.f32.mrf.mxu0
        %v2002 = vpop.f32.mrf.mxu0
        %v2003 = vadd.f32 0.0, %v2002
        %v2004 = vpop.f32.mrf.mxu0
        %2005 = vmatprep.mubr.bf16.mxu0 0
        %2006 = vmatmul.mubr.bf16.gmra.mxu0 %v1906
        %v2007 = vpop.f32.mrf.mxu0
        %v2008 = vadd.f32 0.0, %v2007
        %v2009 = vpop.f32.mrf.mxu0
        %v2010 = vpop.f32.mrf.mxu0
        %v2011 = vadd.f32 0.0, %v2010
        %v2012 = vpop.f32.mrf.mxu0
        %2013 = vmatprep.mubr.bf16.mxu0 0
        %2014 = vmatmul.mubr.bf16.gmra.mxu0 %v1909
        %v2015 = vpop.f32.mrf.mxu0
        %v2016 = vadd.f32 0.0, %v2015
        %v2017 = vpop.f32.mrf.mxu0
        %v2018 = vpop.f32.mrf.mxu0
        %v2019 = vadd.f32 0.0, %v2018
        %v2020 = vpop.f32.mrf.mxu0
        %2021 = vmatprep.mubr.bf16.mxu0 0
        %2022 = vmatmul.mubr.bf16.gmra.mxu0 %v1912
        %v2023 = vpop.f32.mrf.mxu0
        %v2024 = vadd.f32 0.0, %v2023
        %v2025 = vpop.f32.mrf.mxu0
        %v2026 = vpop.f32.mrf.mxu0
        %v2027 = vpop.f32.mrf.mxu0
        %2028 = vdwg.mxu0
        %v2029 = vadd.f32 %v1692, %v1952
        %v2030 = vadd.f32 %v1693, %v1955
        %v2031 = vadd.f32 %v1694, %v1960
        %v2032 = vadd.f32 %v1695, %v1963
        %v2033 = vadd.f32 %v1696, %v1968
        %v2034 = vadd.f32 %v1697, %v1971
        %v2035 = vadd.f32 %v1698, %v1976
        %v2036 = vadd.f32 %v1699, %v1979
        %v2037 = vadd.f32 %v1700, %v1984
        %v2038 = vadd.f32 %v1701, %v1987
        %v2039 = vadd.f32 %v1702, %v1992
        %v2040 = vadd.f32 %v1703, %v1995
        %v2041 = vadd.f32 %v1704, %v2000
        %v2042 = vadd.f32 %v1705, %v2003
        %v2043 = vadd.f32 %v1706, %v2008
        %v2044 = vadd.f32 %v1707, %v2011
        %v2045 = vadd.f32 %v1708, %v2016
        %v2046 = vadd.f32 %v1709, %v2019
        %v2047 = vadd.f32 %v1710, %v2024
        %v2048 = vld [vmem:[#allocation6] sm:$0x1]
        %v2050 = vlaneseq
        %v2051 = vshrl.u32 %v2050, 7
        %v2052 = vsub.s32 0, %v2051
        %v2053 = vrot.slane %v2048, %v2052
        %v2055 = vadd.f32 %v2029, %v2053
        %v2056 = vadd.f32 %v2030, %v2053
        %v2057 = vadd.f32 %v2031, %v2053
        %v2058 = vadd.f32 %v2032, %v2053
        %v2059 = vadd.f32 %v2033, %v2053
        %v2060 = vadd.f32 %v2034, %v2053
        %v2061 = vadd.f32 %v2035, %v2053
        %v2062 = vadd.f32 %v2036, %v2053
        %v2063 = vadd.f32 %v2037, %v2053
        %v2064 = vadd.f32 %v2038, %v2053
        %v2065 = vadd.f32 %v2039, %v2053
        %v2066 = vadd.f32 %v2040, %v2053
        %v2067 = vadd.f32 %v2041, %v2053
        %v2068 = vadd.f32 %v2042, %v2053
        %v2069 = vadd.f32 %v2043, %v2053
        %v2070 = vadd.f32 %v2044, %v2053
        %v2071 = vadd.f32 %v2045, %v2053
        %v2072 = vadd.f32 %v2046, %v2053
        %v2073 = vadd.f32 %v2047, %v2053
        %v2074 = vmax.f32 %v2055, 0.0
        %v2075 = vmax.f32 %v2056, 0.0
        %v2076 = vmax.f32 %v2057, 0.0
        %v2077 = vmax.f32 %v2058, 0.0
        %v2078 = vmax.f32 %v2059, 0.0
        %v2079 = vmax.f32 %v2060, 0.0
        %v2080 = vmax.f32 %v2061, 0.0
        %v2081 = vmax.f32 %v2062, 0.0
        %v2082 = vmax.f32 %v2063, 0.0
        %v2083 = vmax.f32 %v2064, 0.0
        %v2084 = vmax.f32 %v2065, 0.0
        %v2085 = vmax.f32 %v2066, 0.0
        %v2086 = vmax.f32 %v2067, 0.0
        %v2087 = vmax.f32 %v2068, 0.0
        %v2088 = vmax.f32 %v2069, 0.0
        %v2089 = vmax.f32 %v2070, 0.0
        %v2090 = vmax.f32 %v2071, 0.0
        %v2091 = vmax.f32 %v2072, 0.0
        %v2092 = vmax.f32 %v2073, 0.0
        %v2093 = vpack.c.bf16 %v2075, %v2074
        %v2094 = vpack.c.bf16 %v2077, %v2076
        %v2095 = vpack.c.bf16 %v2079, %v2078
        %v2096 = vpack.c.bf16 %v2081, %v2080
        %v2097 = vpack.c.bf16 %v2083, %v2082
        %v2098 = vpack.c.bf16 %v2085, %v2084
        %v2099 = vpack.c.bf16 %v2087, %v2086
        %v2100 = vpack.c.bf16 %v2089, %v2088
        %v2101 = vpack.c.bf16 %v2091, %v2090
        %v2102 = vpack.c.bf16 %v2092, %v2092
        %v2113 = vunpack.c.l.b16 %v2093
        %v2114 = vunpack.c.h.b16 %v2093
        %v2115 = vunpack.c.l.b16 %v2094
        %v2116 = vunpack.c.h.b16 %v2094
        %v2117 = vunpack.c.l.b16 %v2095
        %v2118 = vunpack.c.h.b16 %v2095
        %v2119 = vunpack.c.l.b16 %v2096
        %v2120 = vunpack.c.h.b16 %v2096
        %v2121 = vunpack.c.l.b16 %v2097
        %v2122 = vunpack.c.h.b16 %v2097
        %v2123 = vunpack.c.l.b16 %v2098
        %v2124 = vunpack.c.h.b16 %v2098
        %v2125 = vunpack.c.l.b16 %v2099
        %v2126 = vunpack.c.h.b16 %v2099
        %v2127 = vunpack.c.l.b16 %v2100
        %v2128 = vunpack.c.h.b16 %v2100
        %v2129 = vunpack.c.l.b16 %v2101
        %v2130 = vunpack.c.h.b16 %v2101
        %v2131 = vunpack.c.l.b16 %v2102
        %v2132 = vpack.c.b16 %v2113, %v2113
        %v2133 = vpack.c.b16 %v2114, %v2114
        %v2134 = vpack.c.b16 %v2115, %v2115
        %v2135 = vpack.c.b16 %v2116, %v2116
        %v2136 = vpack.c.b16 %v2117, %v2117
        %v2137 = vpack.c.b16 %v2118, %v2118
        %v2138 = vpack.c.b16 %v2119, %v2119
        %v2139 = vpack.c.b16 %v2120, %v2120
        %v2140 = vpack.c.b16 %v2121, %v2121
        %v2141 = vpack.c.b16 %v2122, %v2122
        %v2142 = vpack.c.b16 %v2123, %v2123
        %v2143 = vpack.c.b16 %v2124, %v2124
        %v2144 = vpack.c.b16 %v2125, %v2125
        %v2145 = vpack.c.b16 %v2126, %v2126
        %v2146 = vpack.c.b16 %v2127, %v2127
        %v2147 = vpack.c.b16 %v2128, %v2128
        %v2148 = vpack.c.b16 %v2129, %v2129
        %v2149 = vpack.c.b16 %v2130, %v2130
        %v2150 = vpack.c.b16 %v2131, %v2131
        %vm2170 = vcmask 257024
        %2171 = vst.msk [vmem:[#allocation2] sm:$0xf] %vm2170, %v2132
        %2172 = vst.msk [vmem:[#allocation2 + $0x4] sm:$0xf] %vm2170, %v2133
        %2173 = vst.msk [vmem:[#allocation2 + $0x8] sm:$0xf] %vm2170, %v2134
        %2174 = vst.msk [vmem:[#allocation2 + $0xc] sm:$0xf] %vm2170, %v2135
        %2175 = vst.msk [vmem:[#allocation2 + $0x10] sm:$0xf] %vm2170, %v2136
        %2176 = vst.msk [vmem:[#allocation2 + $0x14] sm:$0xf] %vm2170, %v2137
        %2177 = vst.msk [vmem:[#allocation2 + $0x18] sm:$0xf] %vm2170, %v2138
        %2178 = vst.msk [vmem:[#allocation2 + $0x1c] sm:$0xf] %vm2170, %v2139
        %2179 = vst.msk [vmem:[#allocation2 + $0x20] sm:$0xf] %vm2170, %v2140
        %2180 = vst.msk [vmem:[#allocation2 + $0x24] sm:$0xf] %vm2170, %v2141
        %2181 = vst.msk [vmem:[#allocation2 + $0x28] sm:$0xf] %vm2170, %v2142
        %2182 = vst.msk [vmem:[#allocation2 + $0x2c] sm:$0xf] %vm2170, %v2143
        %2183 = vst.msk [vmem:[#allocation2 + $0x30] sm:$0xf] %vm2170, %v2144
        %2184 = vst.msk [vmem:[#allocation2 + $0x34] sm:$0xf] %vm2170, %v2145
        %2185 = vst.msk [vmem:[#allocation2 + $0x38] sm:$0xf] %vm2170, %v2146
        %2186 = vst.msk [vmem:[#allocation2 + $0x3c] sm:$0xf] %vm2170, %v2147
        %2187 = vst.msk [vmem:[#allocation2 + $0x40] sm:$0xf] %vm2170, %v2148
        %2188 = vst.msk [vmem:[#allocation2 + $0x44] sm:$0xf] %vm2170, %v2149
        %2189 = vst.msk [vmem:[#allocation2 + $0x48] sm:$0xf] %vm2170, %v2150
        %v2190 = vld [vmem:[#allocation2] sm:$0xf]
        %v2191 = vld [vmem:[#allocation2 + $0x4] sm:$0xf]
        %v2192 = vld [vmem:[#allocation2 + $0x8] sm:$0xf]
        %v2193 = vld [vmem:[#allocation2 + $0xc] sm:$0xf]
        %v2194 = vld [vmem:[#allocation2 + $0x10] sm:$0xf]
        %v2195 = vld [vmem:[#allocation2 + $0x14] sm:$0xf]
        %v2196 = vld [vmem:[#allocation2 + $0x18] sm:$0xf]
        %v2197 = vld [vmem:[#allocation2 + $0x1c] sm:$0xf]
        %v2198 = vld [vmem:[#allocation2 + $0x20] sm:$0xf]
        %v2199 = vld [vmem:[#allocation2 + $0x24] sm:$0xf]
        %v2200 = vld [vmem:[#allocation2 + $0x28] sm:$0xf]
        %v2201 = vld [vmem:[#allocation8] sm:$0xf]
        %v2202 = vld [vmem:[#allocation8 + $0x4] sm:$0xf]
        %v2203 = vld [vmem:[#allocation8 + $0x8] sm:$0xf]
        %v2204 = vld [vmem:[#allocation8 + $0xc] sm:$0xf]
        %v2205 = vld [vmem:[#allocation2 + $0x2c] sm:$0x1]
        %s2206 = scalar_lea.vmem [#allocation8], 16
        %v2207 = vld [vmem:[%s2206] sm:$0xf]
        %v2208 = vld [vmem:[%s2206 + $0x4] sm:$0xf]
        %v2209 = vld [vmem:[%s2206 + $0x8] sm:$0xf]
        %v2210 = vld [vmem:[%s2206 + $0xc] sm:$0xf]
        %v2223 = vunpack.c.l.b16 %v2190
        %v2224 = vunpack.c.l.b16 %v2191
        %v2225 = vunpack.c.l.b16 %v2192
        %v2226 = vunpack.c.l.b16 %v2193
        %v2227 = vunpack.c.l.b16 %v2194
        %v2228 = vunpack.c.l.b16 %v2195
        %v2229 = vunpack.c.l.b16 %v2196
        %v2230 = vunpack.c.l.b16 %v2197
        %v2231 = vunpack.c.l.b16 %v2198
        %v2232 = vunpack.c.l.b16 %v2199
        %v2233 = vunpack.c.l.b16 %v2200
        %v2234 = vunpack.c.l.b16 %v2205
        %v2235 = vpack.c.b16 %v2224, %v2223
        %v2236 = vpack.c.b16 %v2226, %v2225
        %v2237 = vpack.c.b16 %v2228, %v2227
        %v2238 = vpack.c.b16 %v2230, %v2229
        %v2239 = vpack.c.b16 %v2232, %v2231
        %v2240 = vpack.c.b16 %v2234, %v2233
        %vm2241 = vsmask.f32 7424
        %v2243 = vshrl.u32 %v2235, 16
        %v2245 = vshll.u32 %v2235, 16
        %v2247 = vrot.slane %v2245, 1
        %v2248 = vor.u32 %v2243, %v2247
        %v2250 = vshll.u32 %v2236, 16
        %v2252 = vrot.slane %v2250, 1
        %v2253 = vsel %vm2241, %v2248, %v2252
        %v2254 = vshrl.u32 %v2236, 16
        %v2256 = vor.u32 %v2254, %v2252
        %v2258 = vshll.u32 %v2237, 16
        %v2260 = vrot.slane %v2258, 1
        %v2261 = vsel %vm2241, %v2256, %v2260
        %v2262 = vshrl.u32 %v2237, 16
        %v2264 = vor.u32 %v2262, %v2260
        %v2266 = vshll.u32 %v2238, 16
        %v2268 = vrot.slane %v2266, 1
        %v2269 = vsel %vm2241, %v2264, %v2268
        %v2270 = vshrl.u32 %v2238, 16
        %v2272 = vor.u32 %v2270, %v2268
        %v2274 = vshll.u32 %v2239, 16
        %v2276 = vrot.slane %v2274, 1
        %v2277 = vsel %vm2241, %v2272, %v2276
        %v2278 = vshrl.u32 %v2239, 16
        %v2280 = vor.u32 %v2278, %v2276
        %v2282 = vshll.u32 %v2240, 16
        %v2284 = vrot.slane %v2282, 1
        %v2285 = vsel %vm2241, %v2280, %v2284
        %v2286 = vshrl.u32 %v2240, 16
        %v2288 = vor.u32 %v2286, %v2284
        %v2293 = vunpack.c.l.b16 %v2207
        %v2294 = vunpack.c.l.b16 %v2208
        %v2295 = vunpack.c.l.b16 %v2209
        %v2296 = vunpack.c.l.b16 %v2210
        %v2297 = vpack.c.b16 %v2294, %v2293
        %v2298 = vpack.c.b16 %v2296, %v2295
        %vm2301 = vcmask 261120
        %v2303 = vsel %vm2301, %v2253, 0
        %v2306 = vsel %vm2301, %v2261, 0
        %v2309 = vsel %vm2301, %v2269, 0
        %v2312 = vsel %vm2301, %v2277, 0
        %v2315 = vsel %vm2301, %v2285, 0
        %v2318 = vsel %vm2301, %v2288, 0
        %2320 = vmatprep.subr.bf16.mxu0 0
        %2321 = vmatpush1.bf16.msra.mxu0 0
        %2322 = vmatprep.subr.bf16.mxu0 0
        %2323 = vmatpush1.bf16.msra.mxu0 0
        %2324 = vmatprep.subr.bf16.mxu0 0
        %2325 = vmatpush1.bf16.msra.mxu0 0
        %2326 = vmatprep.subr.bf16.mxu0 0
        %2327 = vmatpush1.bf16.msra.mxu0 0
        %2328 = vmatprep.subr.bf16.mxu0 0
        %2329 = vmatpush1.bf16.msra.mxu0 0
        %2330 = vmatprep.subr.bf16.mxu0 0
        %2331 = vmatpush1.bf16.msra.mxu0 0
        %2332 = vmatprep.subr.bf16.mxu0 0
        %2333 = vmatpush1.bf16.msra.mxu0 %v2298
        %2334 = vmatprep.subr.bf16.mxu0 0
        %2335 = vmatpush1.bf16.msra.mxu0 %v2297
        %2336 = vmatprep.subr.bf16.mxu0 0
        %2337 = vmatpush2.bf16.msra.mxu0 0
        %2338 = vmatprep.subr.bf16.mxu0 0
        %2339 = vmatpush2.bf16.msra.mxu0 0
        %2340 = vmatprep.subr.bf16.mxu0 0
        %2341 = vmatpush2.bf16.msra.mxu0 0
        %2342 = vmatprep.subr.bf16.mxu0 0
        %2343 = vmatpush2.bf16.msra.mxu0 0
        %2344 = vmatprep.subr.bf16.mxu0 0
        %2345 = vmatpush2.bf16.msra.mxu0 0
        %2346 = vmatprep.subr.bf16.mxu0 0
        %2347 = vmatpush2.bf16.msra.mxu0 0
        %2348 = vmatprep.subr.bf16.mxu0 0
        %2349 = vmatpush2.bf16.msra.mxu0 0
        %2350 = vmatprep.subr.bf16.mxu0 0
        %2351 = vmatpush2.bf16.msra.mxu0 0
        %2352 = vmatprep.mubr.bf16.mxu0 0
        %2353 = vmatmul.mubr.bf16.gmra.mxu0 %v2303
        %v2354 = vpop.f32.mrf.mxu0
        %v2355 = vadd.f32 0.0, %v2354
        %v2356 = vpop.f32.mrf.mxu0
        %v2357 = vpop.f32.mrf.mxu0
        %v2358 = vadd.f32 0.0, %v2357
        %v2359 = vpop.f32.mrf.mxu0
        %2360 = vmatprep.mubr.bf16.mxu0 0
        %2361 = vmatmul.mubr.bf16.gmra.mxu0 %v2306
        %v2362 = vpop.f32.mrf.mxu0
        %v2363 = vadd.f32 0.0, %v2362
        %v2364 = vpop.f32.mrf.mxu0
        %v2365 = vpop.f32.mrf.mxu0
        %v2366 = vadd.f32 0.0, %v2365
        %v2367 = vpop.f32.mrf.mxu0
        %2368 = vmatprep.mubr.bf16.mxu0 0
        %2369 = vmatmul.mubr.bf16.gmra.mxu0 %v2309
        %v2370 = vpop.f32.mrf.mxu0
        %v2371 = vadd.f32 0.0, %v2370
        %v2372 = vpop.f32.mrf.mxu0
        %v2373 = vpop.f32.mrf.mxu0
        %v2374 = vadd.f32 0.0, %v2373
        %v2375 = vpop.f32.mrf.mxu0
        %2376 = vmatprep.mubr.bf16.mxu0 0
        %2377 = vmatmul.mubr.bf16.gmra.mxu0 %v2312
        %v2378 = vpop.f32.mrf.mxu0
        %v2379 = vadd.f32 0.0, %v2378
        %v2380 = vpop.f32.mrf.mxu0
        %v2381 = vpop.f32.mrf.mxu0
        %v2382 = vadd.f32 0.0, %v2381
        %v2383 = vpop.f32.mrf.mxu0
        %2384 = vmatprep.mubr.bf16.mxu0 0
        %2385 = vmatmul.mubr.bf16.gmra.mxu0 %v2315
        %v2386 = vpop.f32.mrf.mxu0
        %v2387 = vadd.f32 0.0, %v2386
        %v2388 = vpop.f32.mrf.mxu0
        %v2389 = vpop.f32.mrf.mxu0
        %v2390 = vadd.f32 0.0, %v2389
        %v2391 = vpop.f32.mrf.mxu0
        %2392 = vmatprep.mubr.bf16.mxu0 0
        %2393 = vmatmul.mubr.bf16.gmra.mxu0 %v2318
        %v2394 = vpop.f32.mrf.mxu0
        %v2395 = vadd.f32 0.0, %v2394
        %v2396 = vpop.f32.mrf.mxu0
        %v2397 = vpop.f32.mrf.mxu0
        %v2398 = vpop.f32.mrf.mxu0
        %2399 = vdwg.mxu0
        %v2400 = vpack.c.b16 %v2233, %v2233
        %v2405 = vunpack.c.l.b16 %v2201
        %v2406 = vunpack.c.l.b16 %v2202
        %v2407 = vunpack.c.l.b16 %v2203
        %v2408 = vunpack.c.l.b16 %v2204
        %v2409 = vpack.c.b16 %v2406, %v2405
        %v2410 = vpack.c.b16 %v2408, %v2407
        %v2413 = vsel %vm2301, %v2235, 0
        %v2415 = vsel %vm2301, %v2236, 0
        %v2417 = vsel %vm2301, %v2237, 0
        %v2419 = vsel %vm2301, %v2238, 0
        %v2421 = vsel %vm2301, %v2239, 0
        %v2424 = vsel %vm2301, %v2400, 0
        %2426 = vmatprep.subr.bf16.mxu0 0
        %2427 = vmatpush1.bf16.msra.mxu0 0
        %2428 = vmatprep.subr.bf16.mxu0 0
        %2429 = vmatpush1.bf16.msra.mxu0 0
        %2430 = vmatprep.subr.bf16.mxu0 0
        %2431 = vmatpush1.bf16.msra.mxu0 0
        %2432 = vmatprep.subr.bf16.mxu0 0
        %2433 = vmatpush1.bf16.msra.mxu0 0
        %2434 = vmatprep.subr.bf16.mxu0 0
        %2435 = vmatpush1.bf16.msra.mxu0 0
        %2436 = vmatprep.subr.bf16.mxu0 0
        %2437 = vmatpush1.bf16.msra.mxu0 0
        %2438 = vmatprep.subr.bf16.mxu0 0
        %2439 = vmatpush1.bf16.msra.mxu0 %v2410
        %2440 = vmatprep.subr.bf16.mxu0 0
        %2441 = vmatpush1.bf16.msra.mxu0 %v2409
        %2442 = vmatprep.subr.bf16.mxu0 0
        %2443 = vmatpush2.bf16.msra.mxu0 0
        %2444 = vmatprep.subr.bf16.mxu0 0
        %2445 = vmatpush2.bf16.msra.mxu0 0
        %2446 = vmatprep.subr.bf16.mxu0 0
        %2447 = vmatpush2.bf16.msra.mxu0 0
        %2448 = vmatprep.subr.bf16.mxu0 0
        %2449 = vmatpush2.bf16.msra.mxu0 0
        %2450 = vmatprep.subr.bf16.mxu0 0
        %2451 = vmatpush2.bf16.msra.mxu0 0
        %2452 = vmatprep.subr.bf16.mxu0 0
        %2453 = vmatpush2.bf16.msra.mxu0 0
        %2454 = vmatprep.subr.bf16.mxu0 0
        %2455 = vmatpush2.bf16.msra.mxu0 0
        %2456 = vmatprep.subr.bf16.mxu0 0
        %2457 = vmatpush2.bf16.msra.mxu0 0
        %2458 = vmatprep.mubr.bf16.mxu0 0
        %2459 = vmatmul.mubr.bf16.gmra.mxu0 %v2413
        %v2460 = vpop.f32.mrf.mxu0
        %v2461 = vadd.f32 %v2355, %v2460
        %v2462 = vpop.f32.mrf.mxu0
        %v2463 = vpop.f32.mrf.mxu0
        %v2464 = vadd.f32 %v2358, %v2463
        %v2465 = vpop.f32.mrf.mxu0
        %2466 = vmatprep.mubr.bf16.mxu0 0
        %2467 = vmatmul.mubr.bf16.gmra.mxu0 %v2415
        %v2468 = vpop.f32.mrf.mxu0
        %v2469 = vadd.f32 %v2363, %v2468
        %v2470 = vpop.f32.mrf.mxu0
        %v2471 = vpop.f32.mrf.mxu0
        %v2472 = vadd.f32 %v2366, %v2471
        %v2473 = vpop.f32.mrf.mxu0
        %2474 = vmatprep.mubr.bf16.mxu0 0
        %2475 = vmatmul.mubr.bf16.gmra.mxu0 %v2417
        %v2476 = vpop.f32.mrf.mxu0
        %v2477 = vadd.f32 %v2371, %v2476
        %v2478 = vpop.f32.mrf.mxu0
        %v2479 = vpop.f32.mrf.mxu0
        %v2480 = vadd.f32 %v2374, %v2479
        %v2481 = vpop.f32.mrf.mxu0
        %2482 = vmatprep.mubr.bf16.mxu0 0
        %2483 = vmatmul.mubr.bf16.gmra.mxu0 %v2419
        %v2484 = vpop.f32.mrf.mxu0
        %v2485 = vadd.f32 %v2379, %v2484
        %v2486 = vpop.f32.mrf.mxu0
        %v2487 = vpop.f32.mrf.mxu0
        %v2488 = vadd.f32 %v2382, %v2487
        %v2489 = vpop.f32.mrf.mxu0
        %2490 = vmatprep.mubr.bf16.mxu0 0
        %2491 = vmatmul.mubr.bf16.gmra.mxu0 %v2421
        %v2492 = vpop.f32.mrf.mxu0
        %v2493 = vadd.f32 %v2387, %v2492
        %v2494 = vpop.f32.mrf.mxu0
        %v2495 = vpop.f32.mrf.mxu0
        %v2496 = vadd.f32 %v2390, %v2495
        %v2497 = vpop.f32.mrf.mxu0
        %2498 = vmatprep.mubr.bf16.mxu0 0
        %2499 = vmatmul.mubr.bf16.gmra.mxu0 %v2424
        %v2500 = vpop.f32.mrf.mxu0
        %v2501 = vadd.f32 %v2395, %v2500
        %v2502 = vpop.f32.mrf.mxu0
        %v2503 = vpop.f32.mrf.mxu0
        %v2504 = vpop.f32.mrf.mxu0
        %2505 = vdwg.mxu0
        %v2506 = vld [vmem:[#allocation2] sm:$0xe]
        %s2507 = scalar_lea.vmem [#allocation8], 32
        %v2508 = vld [vmem:[%s2507] sm:$0xf]
        %v2509 = vld [vmem:[%s2507 + $0x4] sm:$0xf]
        %v2510 = vld [vmem:[%s2507 + $0x8] sm:$0xf]
        %v2511 = vld [vmem:[%s2507 + $0xc] sm:$0xf]
        %v2513 = vunpack.c.l.b16 %v2506
        %v2514 = vpack.c.b16 %v2224, %v2513
        %vm2515 = vcmask 1046528
        %v2516 = vrot.slane %v2514, 1
        %v2517 = vrot.slane %v2236, 1
        %v2518 = vsel %vm2515, %v2516, %v2517
        %v2519 = vrot.slane %v2237, 1
        %v2520 = vsel %vm2515, %v2517, %v2519
        %v2521 = vrot.slane %v2238, 1
        %v2522 = vsel %vm2515, %v2519, %v2521
        %v2523 = vrot.slane %v2239, 1
        %v2524 = vsel %vm2515, %v2521, %v2523
        %v2525 = vrot.slane %v2240, 1
        %v2526 = vsel %vm2515, %v2523, %v2525
        %v2531 = vunpack.c.l.b16 %v2508
        %v2532 = vunpack.c.l.b16 %v2509
        %v2533 = vunpack.c.l.b16 %v2510
        %v2534 = vunpack.c.l.b16 %v2511
        %v2535 = vpack.c.b16 %v2532, %v2531
        %v2536 = vpack.c.b16 %v2534, %v2533
        %v2540 = vsel %vm2301, %v2518, 0
        %v2543 = vsel %vm2301, %v2520, 0
        %v2546 = vsel %vm2301, %v2522, 0
        %v2549 = vsel %vm2301, %v2524, 0
        %v2552 = vsel %vm2301, %v2526, 0
        %v2555 = vsel %vm2301, %v2525, 0
        %2557 = vmatprep.subr.bf16.mxu0 0
        %2558 = vmatpush1.bf16.msra.mxu0 0
        %2559 = vmatprep.subr.bf16.mxu0 0
        %2560 = vmatpush1.bf16.msra.mxu0 0
        %2561 = vmatprep.subr.bf16.mxu0 0
        %2562 = vmatpush1.bf16.msra.mxu0 0
        %2563 = vmatprep.subr.bf16.mxu0 0
        %2564 = vmatpush1.bf16.msra.mxu0 0
        %2565 = vmatprep.subr.bf16.mxu0 0
        %2566 = vmatpush1.bf16.msra.mxu0 0
        %2567 = vmatprep.subr.bf16.mxu0 0
        %2568 = vmatpush1.bf16.msra.mxu0 0
        %2569 = vmatprep.subr.bf16.mxu0 0
        %2570 = vmatpush1.bf16.msra.mxu0 %v2536
        %2571 = vmatprep.subr.bf16.mxu0 0
        %2572 = vmatpush1.bf16.msra.mxu0 %v2535
        %2573 = vmatprep.subr.bf16.mxu0 0
        %2574 = vmatpush2.bf16.msra.mxu0 0
        %2575 = vmatprep.subr.bf16.mxu0 0
        %2576 = vmatpush2.bf16.msra.mxu0 0
        %2577 = vmatprep.subr.bf16.mxu0 0
        %2578 = vmatpush2.bf16.msra.mxu0 0
        %2579 = vmatprep.subr.bf16.mxu0 0
        %2580 = vmatpush2.bf16.msra.mxu0 0
        %2581 = vmatprep.subr.bf16.mxu0 0
        %2582 = vmatpush2.bf16.msra.mxu0 0
        %2583 = vmatprep.subr.bf16.mxu0 0
        %2584 = vmatpush2.bf16.msra.mxu0 0
        %2585 = vmatprep.subr.bf16.mxu0 0
        %2586 = vmatpush2.bf16.msra.mxu0 0
        %2587 = vmatprep.subr.bf16.mxu0 0
        %2588 = vmatpush2.bf16.msra.mxu0 0
        %2589 = vmatprep.mubr.bf16.mxu0 0
        %2590 = vmatmul.mubr.bf16.gmra.mxu0 %v2540
        %v2591 = vpop.f32.mrf.mxu0
        %v2592 = vadd.f32 0.0, %v2591
        %v2593 = vpop.f32.mrf.mxu0
        %v2594 = vpop.f32.mrf.mxu0
        %v2595 = vadd.f32 0.0, %v2594
        %v2596 = vpop.f32.mrf.mxu0
        %2597 = vmatprep.mubr.bf16.mxu0 0
        %2598 = vmatmul.mubr.bf16.gmra.mxu0 %v2543
        %v2599 = vpop.f32.mrf.mxu0
        %v2600 = vadd.f32 0.0, %v2599
        %v2601 = vpop.f32.mrf.mxu0
        %v2602 = vpop.f32.mrf.mxu0
        %v2603 = vadd.f32 0.0, %v2602
        %v2604 = vpop.f32.mrf.mxu0
        %2605 = vmatprep.mubr.bf16.mxu0 0
        %2606 = vmatmul.mubr.bf16.gmra.mxu0 %v2546
        %v2607 = vpop.f32.mrf.mxu0
        %v2608 = vadd.f32 0.0, %v2607
        %v2609 = vpop.f32.mrf.mxu0
        %v2610 = vpop.f32.mrf.mxu0
        %v2611 = vadd.f32 0.0, %v2610
        %v2612 = vpop.f32.mrf.mxu0
        %2613 = vmatprep.mubr.bf16.mxu0 0
        %2614 = vmatmul.mubr.bf16.gmra.mxu0 %v2549
        %v2615 = vpop.f32.mrf.mxu0
        %v2616 = vadd.f32 0.0, %v2615
        %v2617 = vpop.f32.mrf.mxu0
        %v2618 = vpop.f32.mrf.mxu0
        %v2619 = vadd.f32 0.0, %v2618
        %v2620 = vpop.f32.mrf.mxu0
        %2621 = vmatprep.mubr.bf16.mxu0 0
        %2622 = vmatmul.mubr.bf16.gmra.mxu0 %v2552
        %v2623 = vpop.f32.mrf.mxu0
        %v2624 = vadd.f32 0.0, %v2623
        %v2625 = vpop.f32.mrf.mxu0
        %v2626 = vpop.f32.mrf.mxu0
        %v2627 = vadd.f32 0.0, %v2626
        %v2628 = vpop.f32.mrf.mxu0
        %2629 = vmatprep.mubr.bf16.mxu0 0
        %2630 = vmatmul.mubr.bf16.gmra.mxu0 %v2555
        %v2631 = vpop.f32.mrf.mxu0
        %v2632 = vadd.f32 0.0, %v2631
        %v2633 = vpop.f32.mrf.mxu0
        %v2634 = vpop.f32.mrf.mxu0
        %v2635 = vpop.f32.mrf.mxu0
        %2636 = vdwg.mxu0
        %v2637 = vadd.f32 %v2461, %v2592
        %v2638 = vadd.f32 %v2464, %v2595
        %v2639 = vadd.f32 %v2469, %v2600
        %v2640 = vadd.f32 %v2472, %v2603
        %v2641 = vadd.f32 %v2477, %v2608
        %v2642 = vadd.f32 %v2480, %v2611
        %v2643 = vadd.f32 %v2485, %v2616
        %v2644 = vadd.f32 %v2488, %v2619
        %v2645 = vadd.f32 %v2493, %v2624
        %v2646 = vadd.f32 %v2496, %v2627
        %v2647 = vadd.f32 %v2501, %v2632
        %v2648 = vld [vmem:[#allocation2 + $0x2c] sm:$0x3]
        %s2649 = scalar_lea.vmem [#allocation8], 48
        %v2650 = vld [vmem:[%s2649] sm:$0xf]
        %v2651 = vld [vmem:[%s2649 + $0x4] sm:$0xf]
        %v2652 = vld [vmem:[%s2649 + $0x8] sm:$0xf]
        %v2653 = vld [vmem:[%s2649 + $0xc] sm:$0xf]
        %v2655 = vunpack.c.l.b16 %v2648
        %v2656 = vpack.c.b16 %v2655, %v2233
        %v2658 = vshrl.u32 %v2514, 16
        %v2660 = vrot.slane %v2658, 1
        %v2661 = vshll.u32 %v2514, 16
        %v2663 = vrot.slane %v2661, 2
        %v2664 = vor.u32 %v2660, %v2663
        %v2665 = vrot.slane %v2254, 1
        %v2666 = vrot.slane %v2250, 2
        %v2667 = vor.u32 %v2665, %v2666
        %v2668 = vsel %vm1785, %v2664, %v2667
        %v2669 = vrot.slane %v2262, 1
        %v2670 = vrot.slane %v2258, 2
        %v2671 = vor.u32 %v2669, %v2670
        %v2672 = vsel %vm1785, %v2667, %v2671
        %v2673 = vrot.slane %v2270, 1
        %v2674 = vrot.slane %v2266, 2
        %v2675 = vor.u32 %v2673, %v2674
        %v2676 = vsel %vm1785, %v2671, %v2675
        %v2677 = vrot.slane %v2278, 1
        %v2678 = vrot.slane %v2274, 2
        %v2679 = vor.u32 %v2677, %v2678
        %v2680 = vsel %vm1785, %v2675, %v2679
        %v2682 = vshrl.u32 %v2656, 16
        %v2684 = vrot.slane %v2682, 1
        %v2685 = vshll.u32 %v2656, 16
        %v2687 = vrot.slane %v2685, 2
        %v2688 = vor.u32 %v2684, %v2687
        %v2689 = vsel %vm1785, %v2679, %v2688
        %v2694 = vunpack.c.l.b16 %v2650
        %v2695 = vunpack.c.l.b16 %v2651
        %v2696 = vunpack.c.l.b16 %v2652
        %v2697 = vunpack.c.l.b16 %v2653
        %v2698 = vpack.c.b16 %v2695, %v2694
        %v2699 = vpack.c.b16 %v2697, %v2696
        %v2703 = vsel %vm2301, %v2668, 0
        %v2706 = vsel %vm2301, %v2672, 0
        %v2709 = vsel %vm2301, %v2676, 0
        %v2712 = vsel %vm2301, %v2680, 0
        %v2715 = vsel %vm2301, %v2689, 0
        %v2718 = vsel %vm2301, %v2688, 0
        %2720 = vmatprep.subr.bf16.mxu0 0
        %2721 = vmatpush1.bf16.msra.mxu0 0
        %2722 = vmatprep.subr.bf16.mxu0 0
        %2723 = vmatpush1.bf16.msra.mxu0 0
        %2724 = vmatprep.subr.bf16.mxu0 0
        %2725 = vmatpush1.bf16.msra.mxu0 0
        %2726 = vmatprep.subr.bf16.mxu0 0
        %2727 = vmatpush1.bf16.msra.mxu0 0
        %2728 = vmatprep.subr.bf16.mxu0 0
        %2729 = vmatpush1.bf16.msra.mxu0 0
        %2730 = vmatprep.subr.bf16.mxu0 0
        %2731 = vmatpush1.bf16.msra.mxu0 0
        %2732 = vmatprep.subr.bf16.mxu0 0
        %2733 = vmatpush1.bf16.msra.mxu0 %v2699
        %2734 = vmatprep.subr.bf16.mxu0 0
        %2735 = vmatpush1.bf16.msra.mxu0 %v2698
        %2736 = vmatprep.subr.bf16.mxu0 0
        %2737 = vmatpush2.bf16.msra.mxu0 0
        %2738 = vmatprep.subr.bf16.mxu0 0
        %2739 = vmatpush2.bf16.msra.mxu0 0
        %2740 = vmatprep.subr.bf16.mxu0 0
        %2741 = vmatpush2.bf16.msra.mxu0 0
        %2742 = vmatprep.subr.bf16.mxu0 0
        %2743 = vmatpush2.bf16.msra.mxu0 0
        %2744 = vmatprep.subr.bf16.mxu0 0
        %2745 = vmatpush2.bf16.msra.mxu0 0
        %2746 = vmatprep.subr.bf16.mxu0 0
        %2747 = vmatpush2.bf16.msra.mxu0 0
        %2748 = vmatprep.subr.bf16.mxu0 0
        %2749 = vmatpush2.bf16.msra.mxu0 0
        %2750 = vmatprep.subr.bf16.mxu0 0
        %2751 = vmatpush2.bf16.msra.mxu0 0
        %2752 = vmatprep.mubr.bf16.mxu0 0
        %2753 = vmatmul.mubr.bf16.gmra.mxu0 %v2703
        %v2754 = vpop.f32.mrf.mxu0
        %v2755 = vadd.f32 0.0, %v2754
        %v2756 = vpop.f32.mrf.mxu0
        %v2757 = vpop.f32.mrf.mxu0
        %v2758 = vadd.f32 0.0, %v2757
        %v2759 = vpop.f32.mrf.mxu0
        %2760 = vmatprep.mubr.bf16.mxu0 0
        %2761 = vmatmul.mubr.bf16.gmra.mxu0 %v2706
        %v2762 = vpop.f32.mrf.mxu0
        %v2763 = vadd.f32 0.0, %v2762
        %v2764 = vpop.f32.mrf.mxu0
        %v2765 = vpop.f32.mrf.mxu0
        %v2766 = vadd.f32 0.0, %v2765
        %v2767 = vpop.f32.mrf.mxu0
        %2768 = vmatprep.mubr.bf16.mxu0 0
        %2769 = vmatmul.mubr.bf16.gmra.mxu0 %v2709
        %v2770 = vpop.f32.mrf.mxu0
        %v2771 = vadd.f32 0.0, %v2770
        %v2772 = vpop.f32.mrf.mxu0
        %v2773 = vpop.f32.mrf.mxu0
        %v2774 = vadd.f32 0.0, %v2773
        %v2775 = vpop.f32.mrf.mxu0
        %2776 = vmatprep.mubr.bf16.mxu0 0
        %2777 = vmatmul.mubr.bf16.gmra.mxu0 %v2712
        %v2778 = vpop.f32.mrf.mxu0
        %v2779 = vadd.f32 0.0, %v2778
        %v2780 = vpop.f32.mrf.mxu0
        %v2781 = vpop.f32.mrf.mxu0
        %v2782 = vadd.f32 0.0, %v2781
        %v2783 = vpop.f32.mrf.mxu0
        %2784 = vmatprep.mubr.bf16.mxu0 0
        %2785 = vmatmul.mubr.bf16.gmra.mxu0 %v2715
        %v2786 = vpop.f32.mrf.mxu0
        %v2787 = vadd.f32 0.0, %v2786
        %v2788 = vpop.f32.mrf.mxu0
        %v2789 = vpop.f32.mrf.mxu0
        %v2790 = vadd.f32 0.0, %v2789
        %v2791 = vpop.f32.mrf.mxu0
        %2792 = vmatprep.mubr.bf16.mxu0 0
        %2793 = vmatmul.mubr.bf16.gmra.mxu0 %v2718
        %v2794 = vpop.f32.mrf.mxu0
        %v2795 = vadd.f32 0.0, %v2794
        %v2796 = vpop.f32.mrf.mxu0
        %v2797 = vpop.f32.mrf.mxu0
        %v2798 = vpop.f32.mrf.mxu0
        %2799 = vdwg.mxu0
        %v2800 = vadd.f32 %v2637, %v2755
        %v2801 = vadd.f32 %v2638, %v2758
        %v2802 = vadd.f32 %v2639, %v2763
        %v2803 = vadd.f32 %v2640, %v2766
        %v2804 = vadd.f32 %v2641, %v2771
        %v2805 = vadd.f32 %v2642, %v2774
        %v2806 = vadd.f32 %v2643, %v2779
        %v2807 = vadd.f32 %v2644, %v2782
        %v2808 = vadd.f32 %v2645, %v2787
        %v2809 = vadd.f32 %v2646, %v2790
        %v2810 = vadd.f32 %v2647, %v2795
        %v2811 = vld [vmem:[#allocation2] sm:$0xc]
        %s2812 = scalar_lea.vmem [#allocation8], 64
        %v2813 = vld [vmem:[%s2812] sm:$0xf]
        %v2814 = vld [vmem:[%s2812 + $0x4] sm:$0xf]
        %v2815 = vld [vmem:[%s2812 + $0x8] sm:$0xf]
        %v2816 = vld [vmem:[%s2812 + $0xc] sm:$0xf]
        %v2818 = vunpack.c.l.b16 %v2811
        %v2819 = vpack.c.b16 %v2224, %v2818
        %v2820 = vrot.slane %v2819, 2
        %v2821 = vrot.slane %v2236, 2
        %v2822 = vsel %vm1518, %v2820, %v2821
        %v2823 = vrot.slane %v2237, 2
        %v2824 = vsel %vm1518, %v2821, %v2823
        %v2825 = vrot.slane %v2238, 2
        %v2826 = vsel %vm1518, %v2823, %v2825
        %v2827 = vrot.slane %v2239, 2
        %v2828 = vsel %vm1518, %v2825, %v2827
        %v2829 = vrot.slane %v2656, 2
        %v2830 = vsel %vm1518, %v2827, %v2829
        %v2835 = vunpack.c.l.b16 %v2813
        %v2836 = vunpack.c.l.b16 %v2814
        %v2837 = vunpack.c.l.b16 %v2815
        %v2838 = vunpack.c.l.b16 %v2816
        %v2839 = vpack.c.b16 %v2836, %v2835
        %v2840 = vpack.c.b16 %v2838, %v2837
        %v2844 = vsel %vm2301, %v2822, 0
        %v2847 = vsel %vm2301, %v2824, 0
        %v2850 = vsel %vm2301, %v2826, 0
        %v2853 = vsel %vm2301, %v2828, 0
        %v2856 = vsel %vm2301, %v2830, 0
        %v2859 = vsel %vm2301, %v2829, 0
        %2861 = vmatprep.subr.bf16.mxu0 0
        %2862 = vmatpush1.bf16.msra.mxu0 0
        %2863 = vmatprep.subr.bf16.mxu0 0
        %2864 = vmatpush1.bf16.msra.mxu0 0
        %2865 = vmatprep.subr.bf16.mxu0 0
        %2866 = vmatpush1.bf16.msra.mxu0 0
        %2867 = vmatprep.subr.bf16.mxu0 0
        %2868 = vmatpush1.bf16.msra.mxu0 0
        %2869 = vmatprep.subr.bf16.mxu0 0
        %2870 = vmatpush1.bf16.msra.mxu0 0
        %2871 = vmatprep.subr.bf16.mxu0 0
        %2872 = vmatpush1.bf16.msra.mxu0 0
        %2873 = vmatprep.subr.bf16.mxu0 0
        %2874 = vmatpush1.bf16.msra.mxu0 %v2840
        %2875 = vmatprep.subr.bf16.mxu0 0
        %2876 = vmatpush1.bf16.msra.mxu0 %v2839
        %2877 = vmatprep.subr.bf16.mxu0 0
        %2878 = vmatpush2.bf16.msra.mxu0 0
        %2879 = vmatprep.subr.bf16.mxu0 0
        %2880 = vmatpush2.bf16.msra.mxu0 0
        %2881 = vmatprep.subr.bf16.mxu0 0
        %2882 = vmatpush2.bf16.msra.mxu0 0
        %2883 = vmatprep.subr.bf16.mxu0 0
        %2884 = vmatpush2.bf16.msra.mxu0 0
        %2885 = vmatprep.subr.bf16.mxu0 0
        %2886 = vmatpush2.bf16.msra.mxu0 0
        %2887 = vmatprep.subr.bf16.mxu0 0
        %2888 = vmatpush2.bf16.msra.mxu0 0
        %2889 = vmatprep.subr.bf16.mxu0 0
        %2890 = vmatpush2.bf16.msra.mxu0 0
        %2891 = vmatprep.subr.bf16.mxu0 0
        %2892 = vmatpush2.bf16.msra.mxu0 0
        %2893 = vmatprep.mubr.bf16.mxu0 0
        %2894 = vmatmul.mubr.bf16.gmra.mxu0 %v2844
        %v2895 = vpop.f32.mrf.mxu0
        %v2896 = vadd.f32 0.0, %v2895
        %v2897 = vpop.f32.mrf.mxu0
        %v2898 = vpop.f32.mrf.mxu0
        %v2899 = vadd.f32 0.0, %v2898
        %v2900 = vpop.f32.mrf.mxu0
        %2901 = vmatprep.mubr.bf16.mxu0 0
        %2902 = vmatmul.mubr.bf16.gmra.mxu0 %v2847
        %v2903 = vpop.f32.mrf.mxu0
        %v2904 = vadd.f32 0.0, %v2903
        %v2905 = vpop.f32.mrf.mxu0
        %v2906 = vpop.f32.mrf.mxu0
        %v2907 = vadd.f32 0.0, %v2906
        %v2908 = vpop.f32.mrf.mxu0
        %2909 = vmatprep.mubr.bf16.mxu0 0
        %2910 = vmatmul.mubr.bf16.gmra.mxu0 %v2850
        %v2911 = vpop.f32.mrf.mxu0
        %v2912 = vadd.f32 0.0, %v2911
        %v2913 = vpop.f32.mrf.mxu0
        %v2914 = vpop.f32.mrf.mxu0
        %v2915 = vadd.f32 0.0, %v2914
        %v2916 = vpop.f32.mrf.mxu0
        %2917 = vmatprep.mubr.bf16.mxu0 0
        %2918 = vmatmul.mubr.bf16.gmra.mxu0 %v2853
        %v2919 = vpop.f32.mrf.mxu0
        %v2920 = vadd.f32 0.0, %v2919
        %v2921 = vpop.f32.mrf.mxu0
        %v2922 = vpop.f32.mrf.mxu0
        %v2923 = vadd.f32 0.0, %v2922
        %v2924 = vpop.f32.mrf.mxu0
        %2925 = vmatprep.mubr.bf16.mxu0 0
        %2926 = vmatmul.mubr.bf16.gmra.mxu0 %v2856
        %v2927 = vpop.f32.mrf.mxu0
        %v2928 = vadd.f32 0.0, %v2927
        %v2929 = vpop.f32.mrf.mxu0
        %v2930 = vpop.f32.mrf.mxu0
        %v2931 = vadd.f32 0.0, %v2930
        %v2932 = vpop.f32.mrf.mxu0
        %2933 = vmatprep.mubr.bf16.mxu0 0
        %2934 = vmatmul.mubr.bf16.gmra.mxu0 %v2859
        %v2935 = vpop.f32.mrf.mxu0
        %v2936 = vadd.f32 0.0, %v2935
        %v2937 = vpop.f32.mrf.mxu0
        %v2938 = vpop.f32.mrf.mxu0
        %v2939 = vpop.f32.mrf.mxu0
        %2940 = vdwg.mxu0
        %v2941 = vadd.f32 %v2800, %v2896
        %v2942 = vadd.f32 %v2801, %v2899
        %v2943 = vadd.f32 %v2802, %v2904
        %v2944 = vadd.f32 %v2803, %v2907
        %v2945 = vadd.f32 %v2804, %v2912
        %v2946 = vadd.f32 %v2805, %v2915
        %v2947 = vadd.f32 %v2806, %v2920
        %v2948 = vadd.f32 %v2807, %v2923
        %v2949 = vadd.f32 %v2808, %v2928
        %v2950 = vadd.f32 %v2809, %v2931
        %v2951 = vadd.f32 %v2810, %v2936
        %v2952 = vld [vmem:[#allocation2 + $0x4] sm:$0x8]
        %v2953 = vld [vmem:[#allocation2 + $0x8] sm:$0xf]
        %v2954 = vld [vmem:[#allocation2 + $0xc] sm:$0xf]
        %v2955 = vld [vmem:[#allocation2 + $0x10] sm:$0xf]
        %v2956 = vld [vmem:[#allocation2 + $0x14] sm:$0xf]
        %v2957 = vld [vmem:[#allocation2 + $0x18] sm:$0xf]
        %v2958 = vld [vmem:[#allocation2 + $0x1c] sm:$0xf]
        %v2959 = vld [vmem:[#allocation2 + $0x20] sm:$0xf]
        %v2960 = vld [vmem:[#allocation2 + $0x24] sm:$0xf]
        %v2961 = vld [vmem:[#allocation2 + $0x28] sm:$0xf]
        %v2962 = vld [vmem:[#allocation2 + $0x2c] sm:$0xf]
        %v2963 = vld [vmem:[#allocation2 + $0x30] sm:$0xf]
        %s2964 = scalar_lea.vmem [#allocation8], 80
        %v2965 = vld [vmem:[%s2964] sm:$0xf]
        %v2966 = vld [vmem:[%s2964 + $0x4] sm:$0xf]
        %v2967 = vld [vmem:[%s2964 + $0x8] sm:$0xf]
        %v2968 = vld [vmem:[%s2964 + $0xc] sm:$0xf]
        %v2981 = vunpack.c.l.b16 %v2952
        %v2982 = vunpack.c.l.b16 %v2953
        %v2983 = vunpack.c.l.b16 %v2954
        %v2984 = vunpack.c.l.b16 %v2955
        %v2985 = vunpack.c.l.b16 %v2956
        %v2986 = vunpack.c.l.b16 %v2957
        %v2987 = vunpack.c.l.b16 %v2958
        %v2988 = vunpack.c.l.b16 %v2959
        %v2989 = vunpack.c.l.b16 %v2960
        %v2990 = vunpack.c.l.b16 %v2961
        %v2991 = vunpack.c.l.b16 %v2962
        %v2992 = vunpack.c.l.b16 %v2963
        %v2993 = vpack.c.b16 %v2982, %v2981
        %v2994 = vpack.c.b16 %v2984, %v2983
        %v2995 = vpack.c.b16 %v2986, %v2985
        %v2996 = vpack.c.b16 %v2988, %v2987
        %v2997 = vpack.c.b16 %v2990, %v2989
        %v2998 = vpack.c.b16 %v2992, %v2991
        %v3000 = vshrl.u32 %v2993, 16
        %v3002 = vrot.slane %v3000, 3
        %v3003 = vshll.u32 %v2993, 16
        %v3005 = vrot.slane %v3003, 4
        %v3006 = vor.u32 %v3002, %v3005
        %v3008 = vshrl.u32 %v2994, 16
        %v3010 = vrot.slane %v3008, 3
        %v3011 = vshll.u32 %v2994, 16
        %v3013 = vrot.slane %v3011, 4
        %v3014 = vor.u32 %v3010, %v3013
        %v3015 = vsel %vm426, %v3006, %v3014
        %v3017 = vshrl.u32 %v2995, 16
        %v3019 = vrot.slane %v3017, 3
        %v3020 = vshll.u32 %v2995, 16
        %v3022 = vrot.slane %v3020, 4
        %v3023 = vor.u32 %v3019, %v3022
        %v3024 = vsel %vm426, %v3014, %v3023
        %v3026 = vshrl.u32 %v2996, 16
        %v3028 = vrot.slane %v3026, 3
        %v3029 = vshll.u32 %v2996, 16
        %v3031 = vrot.slane %v3029, 4
        %v3032 = vor.u32 %v3028, %v3031
        %v3033 = vsel %vm426, %v3023, %v3032
        %v3035 = vshrl.u32 %v2997, 16
        %v3037 = vrot.slane %v3035, 3
        %v3038 = vshll.u32 %v2997, 16
        %v3040 = vrot.slane %v3038, 4
        %v3041 = vor.u32 %v3037, %v3040
        %v3042 = vsel %vm426, %v3032, %v3041
        %v3044 = vshrl.u32 %v2998, 16
        %v3046 = vrot.slane %v3044, 3
        %v3047 = vshll.u32 %v2998, 16
        %v3049 = vrot.slane %v3047, 4
        %v3050 = vor.u32 %v3046, %v3049
        %v3051 = vsel %vm426, %v3041, %v3050
        %v3056 = vunpack.c.l.b16 %v2965
        %v3057 = vunpack.c.l.b16 %v2966
        %v3058 = vunpack.c.l.b16 %v2967
        %v3059 = vunpack.c.l.b16 %v2968
        %v3060 = vpack.c.b16 %v3057, %v3056
        %v3061 = vpack.c.b16 %v3059, %v3058
        %v3065 = vsel %vm2301, %v3015, 0
        %v3068 = vsel %vm2301, %v3024, 0
        %v3071 = vsel %vm2301, %v3033, 0
        %v3074 = vsel %vm2301, %v3042, 0
        %v3077 = vsel %vm2301, %v3051, 0
        %v3080 = vsel %vm2301, %v3050, 0
        %3082 = vmatprep.subr.bf16.mxu0 0
        %3083 = vmatpush1.bf16.msra.mxu0 0
        %3084 = vmatprep.subr.bf16.mxu0 0
        %3085 = vmatpush1.bf16.msra.mxu0 0
        %3086 = vmatprep.subr.bf16.mxu0 0
        %3087 = vmatpush1.bf16.msra.mxu0 0
        %3088 = vmatprep.subr.bf16.mxu0 0
        %3089 = vmatpush1.bf16.msra.mxu0 0
        %3090 = vmatprep.subr.bf16.mxu0 0
        %3091 = vmatpush1.bf16.msra.mxu0 0
        %3092 = vmatprep.subr.bf16.mxu0 0
        %3093 = vmatpush1.bf16.msra.mxu0 0
        %3094 = vmatprep.subr.bf16.mxu0 0
        %3095 = vmatpush1.bf16.msra.mxu0 %v3061
        %3096 = vmatprep.subr.bf16.mxu0 0
        %3097 = vmatpush1.bf16.msra.mxu0 %v3060
        %3098 = vmatprep.subr.bf16.mxu0 0
        %3099 = vmatpush2.bf16.msra.mxu0 0
        %3100 = vmatprep.subr.bf16.mxu0 0
        %3101 = vmatpush2.bf16.msra.mxu0 0
        %3102 = vmatprep.subr.bf16.mxu0 0
        %3103 = vmatpush2.bf16.msra.mxu0 0
        %3104 = vmatprep.subr.bf16.mxu0 0
        %3105 = vmatpush2.bf16.msra.mxu0 0
        %3106 = vmatprep.subr.bf16.mxu0 0
        %3107 = vmatpush2.bf16.msra.mxu0 0
        %3108 = vmatprep.subr.bf16.mxu0 0
        %3109 = vmatpush2.bf16.msra.mxu0 0
        %3110 = vmatprep.subr.bf16.mxu0 0
        %3111 = vmatpush2.bf16.msra.mxu0 0
        %3112 = vmatprep.subr.bf16.mxu0 0
        %3113 = vmatpush2.bf16.msra.mxu0 0
        %3114 = vmatprep.mubr.bf16.mxu0 0
        %3115 = vmatmul.mubr.bf16.gmra.mxu0 %v3065
        %v3116 = vpop.f32.mrf.mxu0
        %v3117 = vadd.f32 0.0, %v3116
        %v3118 = vpop.f32.mrf.mxu0
        %v3119 = vpop.f32.mrf.mxu0
        %v3120 = vadd.f32 0.0, %v3119
        %v3121 = vpop.f32.mrf.mxu0
        %3122 = vmatprep.mubr.bf16.mxu0 0
        %3123 = vmatmul.mubr.bf16.gmra.mxu0 %v3068
        %v3124 = vpop.f32.mrf.mxu0
        %v3125 = vadd.f32 0.0, %v3124
        %v3126 = vpop.f32.mrf.mxu0
        %v3127 = vpop.f32.mrf.mxu0
        %v3128 = vadd.f32 0.0, %v3127
        %v3129 = vpop.f32.mrf.mxu0
        %3130 = vmatprep.mubr.bf16.mxu0 0
        %3131 = vmatmul.mubr.bf16.gmra.mxu0 %v3071
        %v3132 = vpop.f32.mrf.mxu0
        %v3133 = vadd.f32 0.0, %v3132
        %v3134 = vpop.f32.mrf.mxu0
        %v3135 = vpop.f32.mrf.mxu0
        %v3136 = vadd.f32 0.0, %v3135
        %v3137 = vpop.f32.mrf.mxu0
        %3138 = vmatprep.mubr.bf16.mxu0 0
        %3139 = vmatmul.mubr.bf16.gmra.mxu0 %v3074
        %v3140 = vpop.f32.mrf.mxu0
        %v3141 = vadd.f32 0.0, %v3140
        %v3142 = vpop.f32.mrf.mxu0
        %v3143 = vpop.f32.mrf.mxu0
        %v3144 = vadd.f32 0.0, %v3143
        %v3145 = vpop.f32.mrf.mxu0
        %3146 = vmatprep.mubr.bf16.mxu0 0
        %3147 = vmatmul.mubr.bf16.gmra.mxu0 %v3077
        %v3148 = vpop.f32.mrf.mxu0
        %v3149 = vadd.f32 0.0, %v3148
        %v3150 = vpop.f32.mrf.mxu0
        %v3151 = vpop.f32.mrf.mxu0
        %v3152 = vadd.f32 0.0, %v3151
        %v3153 = vpop.f32.mrf.mxu0
        %3154 = vmatprep.mubr.bf16.mxu0 0
        %3155 = vmatmul.mubr.bf16.gmra.mxu0 %v3080
        %v3156 = vpop.f32.mrf.mxu0
        %v3157 = vadd.f32 0.0, %v3156
        %v3158 = vpop.f32.mrf.mxu0
        %v3159 = vpop.f32.mrf.mxu0
        %v3160 = vpop.f32.mrf.mxu0
        %3161 = vdwg.mxu0
        %v3162 = vadd.f32 %v2941, %v3117
        %v3163 = vadd.f32 %v2942, %v3120
        %v3164 = vadd.f32 %v2943, %v3125
        %v3165 = vadd.f32 %v2944, %v3128
        %v3166 = vadd.f32 %v2945, %v3133
        %v3167 = vadd.f32 %v2946, %v3136
        %v3168 = vadd.f32 %v2947, %v3141
        %v3169 = vadd.f32 %v2948, %v3144
        %v3170 = vadd.f32 %v2949, %v3149
        %v3171 = vadd.f32 %v2950, %v3152
        %v3172 = vadd.f32 %v2951, %v3157
        %s3173 = scalar_lea.vmem [#allocation8], 96
        %v3174 = vld [vmem:[%s3173] sm:$0xf]
        %v3175 = vld [vmem:[%s3173 + $0x4] sm:$0xf]
        %v3176 = vld [vmem:[%s3173 + $0x8] sm:$0xf]
        %v3177 = vld [vmem:[%s3173 + $0xc] sm:$0xf]
        %v3178 = vpack.c.b16 %v2983, %v2982
        %v3179 = vpack.c.b16 %v2985, %v2984
        %v3180 = vpack.c.b16 %v2987, %v2986
        %v3181 = vpack.c.b16 %v2989, %v2988
        %v3182 = vpack.c.b16 %v2991, %v2990
        %v3183 = vpack.c.b16 %v2992, %v2992
        %v3188 = vunpack.c.l.b16 %v3174
        %v3189 = vunpack.c.l.b16 %v3175
        %v3190 = vunpack.c.l.b16 %v3176
        %v3191 = vunpack.c.l.b16 %v3177
        %v3192 = vpack.c.b16 %v3189, %v3188
        %v3193 = vpack.c.b16 %v3191, %v3190
        %v3197 = vsel %vm2301, %v3178, 0
        %v3200 = vsel %vm2301, %v3179, 0
        %v3203 = vsel %vm2301, %v3180, 0
        %v3206 = vsel %vm2301, %v3181, 0
        %v3209 = vsel %vm2301, %v3182, 0
        %v3212 = vsel %vm2301, %v3183, 0
        %3214 = vmatprep.subr.bf16.mxu0 0
        %3215 = vmatpush1.bf16.msra.mxu0 0
        %3216 = vmatprep.subr.bf16.mxu0 0
        %3217 = vmatpush1.bf16.msra.mxu0 0
        %3218 = vmatprep.subr.bf16.mxu0 0
        %3219 = vmatpush1.bf16.msra.mxu0 0
        %3220 = vmatprep.subr.bf16.mxu0 0
        %3221 = vmatpush1.bf16.msra.mxu0 0
        %3222 = vmatprep.subr.bf16.mxu0 0
        %3223 = vmatpush1.bf16.msra.mxu0 0
        %3224 = vmatprep.subr.bf16.mxu0 0
        %3225 = vmatpush1.bf16.msra.mxu0 0
        %3226 = vmatprep.subr.bf16.mxu0 0
        %3227 = vmatpush1.bf16.msra.mxu0 %v3193
        %3228 = vmatprep.subr.bf16.mxu0 0
        %3229 = vmatpush1.bf16.msra.mxu0 %v3192
        %3230 = vmatprep.subr.bf16.mxu0 0
        %3231 = vmatpush2.bf16.msra.mxu0 0
        %3232 = vmatprep.subr.bf16.mxu0 0
        %3233 = vmatpush2.bf16.msra.mxu0 0
        %3234 = vmatprep.subr.bf16.mxu0 0
        %3235 = vmatpush2.bf16.msra.mxu0 0
        %3236 = vmatprep.subr.bf16.mxu0 0
        %3237 = vmatpush2.bf16.msra.mxu0 0
        %3238 = vmatprep.subr.bf16.mxu0 0
        %3239 = vmatpush2.bf16.msra.mxu0 0
        %3240 = vmatprep.subr.bf16.mxu0 0
        %3241 = vmatpush2.bf16.msra.mxu0 0
        %3242 = vmatprep.subr.bf16.mxu0 0
        %3243 = vmatpush2.bf16.msra.mxu0 0
        %3244 = vmatprep.subr.bf16.mxu0 0
        %3245 = vmatpush2.bf16.msra.mxu0 0
        %3246 = vmatprep.mubr.bf16.mxu0 0
        %3247 = vmatmul.mubr.bf16.gmra.mxu0 %v3197
        %v3248 = vpop.f32.mrf.mxu0
        %v3249 = vadd.f32 0.0, %v3248
        %v3250 = vpop.f32.mrf.mxu0
        %v3251 = vpop.f32.mrf.mxu0
        %v3252 = vadd.f32 0.0, %v3251
        %v3253 = vpop.f32.mrf.mxu0
        %3254 = vmatprep.mubr.bf16.mxu0 0
        %3255 = vmatmul.mubr.bf16.gmra.mxu0 %v3200
        %v3256 = vpop.f32.mrf.mxu0
        %v3257 = vadd.f32 0.0, %v3256
        %v3258 = vpop.f32.mrf.mxu0
        %v3259 = vpop.f32.mrf.mxu0
        %v3260 = vadd.f32 0.0, %v3259
        %v3261 = vpop.f32.mrf.mxu0
        %3262 = vmatprep.mubr.bf16.mxu0 0
        %3263 = vmatmul.mubr.bf16.gmra.mxu0 %v3203
        %v3264 = vpop.f32.mrf.mxu0
        %v3265 = vadd.f32 0.0, %v3264
        %v3266 = vpop.f32.mrf.mxu0
        %v3267 = vpop.f32.mrf.mxu0
        %v3268 = vadd.f32 0.0, %v3267
        %v3269 = vpop.f32.mrf.mxu0
        %3270 = vmatprep.mubr.bf16.mxu0 0
        %3271 = vmatmul.mubr.bf16.gmra.mxu0 %v3206
        %v3272 = vpop.f32.mrf.mxu0
        %v3273 = vadd.f32 0.0, %v3272
        %v3274 = vpop.f32.mrf.mxu0
        %v3275 = vpop.f32.mrf.mxu0
        %v3276 = vadd.f32 0.0, %v3275
        %v3277 = vpop.f32.mrf.mxu0
        %3278 = vmatprep.mubr.bf16.mxu0 0
        %3279 = vmatmul.mubr.bf16.gmra.mxu0 %v3209
        %v3280 = vpop.f32.mrf.mxu0
        %v3281 = vadd.f32 0.0, %v3280
        %v3282 = vpop.f32.mrf.mxu0
        %v3283 = vpop.f32.mrf.mxu0
        %v3284 = vadd.f32 0.0, %v3283
        %v3285 = vpop.f32.mrf.mxu0
        %3286 = vmatprep.mubr.bf16.mxu0 0
        %3287 = vmatmul.mubr.bf16.gmra.mxu0 %v3212
        %v3288 = vpop.f32.mrf.mxu0
        %v3289 = vadd.f32 0.0, %v3288
        %v3290 = vpop.f32.mrf.mxu0
        %v3291 = vpop.f32.mrf.mxu0
        %v3292 = vpop.f32.mrf.mxu0
        %3293 = vdwg.mxu0
        %v3294 = vadd.f32 %v3162, %v3249
        %v3295 = vadd.f32 %v3163, %v3252
        %v3296 = vadd.f32 %v3164, %v3257
        %v3297 = vadd.f32 %v3165, %v3260
        %v3298 = vadd.f32 %v3166, %v3265
        %v3299 = vadd.f32 %v3167, %v3268
        %v3300 = vadd.f32 %v3168, %v3273
        %v3301 = vadd.f32 %v3169, %v3276
        %v3302 = vadd.f32 %v3170, %v3281
        %v3303 = vadd.f32 %v3171, %v3284
        %v3304 = vadd.f32 %v3172, %v3289
        %v3305 = vld [vmem:[#allocation2 + $0x8] sm:$0xf]
        %v3306 = vld [vmem:[#allocation2 + $0xc] sm:$0xf]
        %v3307 = vld [vmem:[#allocation2 + $0x10] sm:$0xf]
        %v3308 = vld [vmem:[#allocation2 + $0x14] sm:$0xf]
        %v3309 = vld [vmem:[#allocation2 + $0x18] sm:$0xf]
        %v3310 = vld [vmem:[#allocation2 + $0x1c] sm:$0xf]
        %v3311 = vld [vmem:[#allocation2 + $0x20] sm:$0xf]
        %v3312 = vld [vmem:[#allocation2 + $0x24] sm:$0xf]
        %v3313 = vld [vmem:[#allocation2 + $0x28] sm:$0xf]
        %v3314 = vld [vmem:[#allocation2 + $0x2c] sm:$0xf]
        %v3315 = vld [vmem:[#allocation2 + $0x30] sm:$0xf]
        %v3316 = vld [vmem:[#allocation2 + $0x34] sm:$0x1]
        %s3317 = scalar_lea.vmem [#allocation8], 112
        %v3318 = vld [vmem:[%s3317] sm:$0xf]
        %v3319 = vld [vmem:[%s3317 + $0x4] sm:$0xf]
        %v3320 = vld [vmem:[%s3317 + $0x8] sm:$0xf]
        %v3321 = vld [vmem:[%s3317 + $0xc] sm:$0xf]
        %v3334 = vunpack.c.l.b16 %v3305
        %v3335 = vunpack.c.l.b16 %v3306
        %v3336 = vunpack.c.l.b16 %v3307
        %v3337 = vunpack.c.l.b16 %v3308
        %v3338 = vunpack.c.l.b16 %v3309
        %v3339 = vunpack.c.l.b16 %v3310
        %v3340 = vunpack.c.l.b16 %v3311
        %v3341 = vunpack.c.l.b16 %v3312
        %v3342 = vunpack.c.l.b16 %v3313
        %v3343 = vunpack.c.l.b16 %v3314
        %v3344 = vunpack.c.l.b16 %v3315
        %v3345 = vunpack.c.l.b16 %v3316
        %v3346 = vpack.c.b16 %v3335, %v3334
        %v3347 = vpack.c.b16 %v3337, %v3336
        %v3348 = vpack.c.b16 %v3339, %v3338
        %v3349 = vpack.c.b16 %v3341, %v3340
        %v3350 = vpack.c.b16 %v3343, %v3342
        %v3351 = vpack.c.b16 %v3345, %v3344
        %v3353 = vshrl.u32 %v3346, 16
        %v3355 = vshll.u32 %v3346, 16
        %v3357 = vrot.slane %v3355, 1
        %v3358 = vor.u32 %v3353, %v3357
        %v3360 = vshll.u32 %v3347, 16
        %v3362 = vrot.slane %v3360, 1
        %v3363 = vsel %vm2241, %v3358, %v3362
        %v3364 = vshrl.u32 %v3347, 16
        %v3366 = vor.u32 %v3364, %v3362
        %v3368 = vshll.u32 %v3348, 16
        %v3370 = vrot.slane %v3368, 1
        %v3371 = vsel %vm2241, %v3366, %v3370
        %v3372 = vshrl.u32 %v3348, 16
        %v3374 = vor.u32 %v3372, %v3370
        %v3376 = vshll.u32 %v3349, 16
        %v3378 = vrot.slane %v3376, 1
        %v3379 = vsel %vm2241, %v3374, %v3378
        %v3380 = vshrl.u32 %v3349, 16
        %v3382 = vor.u32 %v3380, %v3378
        %v3384 = vshll.u32 %v3350, 16
        %v3386 = vrot.slane %v3384, 1
        %v3387 = vsel %vm2241, %v3382, %v3386
        %v3388 = vshrl.u32 %v3350, 16
        %v3390 = vor.u32 %v3388, %v3386
        %v3392 = vshll.u32 %v3351, 16
        %v3394 = vrot.slane %v3392, 1
        %v3395 = vsel %vm2241, %v3390, %v3394
        %v3396 = vshrl.u32 %v3351, 16
        %v3398 = vor.u32 %v3396, %v3394
        %v3403 = vunpack.c.l.b16 %v3318
        %v3404 = vunpack.c.l.b16 %v3319
        %v3405 = vunpack.c.l.b16 %v3320
        %v3406 = vunpack.c.l.b16 %v3321
        %v3407 = vpack.c.b16 %v3404, %v3403
        %v3408 = vpack.c.b16 %v3406, %v3405
        %v3412 = vsel %vm2301, %v3363, 0
        %v3415 = vsel %vm2301, %v3371, 0
        %v3418 = vsel %vm2301, %v3379, 0
        %v3421 = vsel %vm2301, %v3387, 0
        %v3424 = vsel %vm2301, %v3395, 0
        %v3427 = vsel %vm2301, %v3398, 0
        %3429 = vmatprep.subr.bf16.mxu0 0
        %3430 = vmatpush1.bf16.msra.mxu0 0
        %3431 = vmatprep.subr.bf16.mxu0 0
        %3432 = vmatpush1.bf16.msra.mxu0 0
        %3433 = vmatprep.subr.bf16.mxu0 0
        %3434 = vmatpush1.bf16.msra.mxu0 0
        %3435 = vmatprep.subr.bf16.mxu0 0
        %3436 = vmatpush1.bf16.msra.mxu0 0
        %3437 = vmatprep.subr.bf16.mxu0 0
        %3438 = vmatpush1.bf16.msra.mxu0 0
        %3439 = vmatprep.subr.bf16.mxu0 0
        %3440 = vmatpush1.bf16.msra.mxu0 0
        %3441 = vmatprep.subr.bf16.mxu0 0
        %3442 = vmatpush1.bf16.msra.mxu0 %v3408
        %3443 = vmatprep.subr.bf16.mxu0 0
        %3444 = vmatpush1.bf16.msra.mxu0 %v3407
        %3445 = vmatprep.subr.bf16.mxu0 0
        %3446 = vmatpush2.bf16.msra.mxu0 0
        %3447 = vmatprep.subr.bf16.mxu0 0
        %3448 = vmatpush2.bf16.msra.mxu0 0
        %3449 = vmatprep.subr.bf16.mxu0 0
        %3450 = vmatpush2.bf16.msra.mxu0 0
        %3451 = vmatprep.subr.bf16.mxu0 0
        %3452 = vmatpush2.bf16.msra.mxu0 0
        %3453 = vmatprep.subr.bf16.mxu0 0
        %3454 = vmatpush2.bf16.msra.mxu0 0
        %3455 = vmatprep.subr.bf16.mxu0 0
        %3456 = vmatpush2.bf16.msra.mxu0 0
        %3457 = vmatprep.subr.bf16.mxu0 0
        %3458 = vmatpush2.bf16.msra.mxu0 0
        %3459 = vmatprep.subr.bf16.mxu0 0
        %3460 = vmatpush2.bf16.msra.mxu0 0
        %3461 = vmatprep.mubr.bf16.mxu0 0
        %3462 = vmatmul.mubr.bf16.gmra.mxu0 %v3412
        %v3463 = vpop.f32.mrf.mxu0
        %v3464 = vadd.f32 0.0, %v3463
        %v3465 = vpop.f32.mrf.mxu0
        %v3466 = vpop.f32.mrf.mxu0
        %v3467 = vadd.f32 0.0, %v3466
        %v3468 = vpop.f32.mrf.mxu0
        %3469 = vmatprep.mubr.bf16.mxu0 0
        %3470 = vmatmul.mubr.bf16.gmra.mxu0 %v3415
        %v3471 = vpop.f32.mrf.mxu0
        %v3472 = vadd.f32 0.0, %v3471
        %v3473 = vpop.f32.mrf.mxu0
        %v3474 = vpop.f32.mrf.mxu0
        %v3475 = vadd.f32 0.0, %v3474
        %v3476 = vpop.f32.mrf.mxu0
        %3477 = vmatprep.mubr.bf16.mxu0 0
        %3478 = vmatmul.mubr.bf16.gmra.mxu0 %v3418
        %v3479 = vpop.f32.mrf.mxu0
        %v3480 = vadd.f32 0.0, %v3479
        %v3481 = vpop.f32.mrf.mxu0
        %v3482 = vpop.f32.mrf.mxu0
        %v3483 = vadd.f32 0.0, %v3482
        %v3484 = vpop.f32.mrf.mxu0
        %3485 = vmatprep.mubr.bf16.mxu0 0
        %3486 = vmatmul.mubr.bf16.gmra.mxu0 %v3421
        %v3487 = vpop.f32.mrf.mxu0
        %v3488 = vadd.f32 0.0, %v3487
        %v3489 = vpop.f32.mrf.mxu0
        %v3490 = vpop.f32.mrf.mxu0
        %v3491 = vadd.f32 0.0, %v3490
        %v3492 = vpop.f32.mrf.mxu0
        %3493 = vmatprep.mubr.bf16.mxu0 0
        %3494 = vmatmul.mubr.bf16.gmra.mxu0 %v3424
        %v3495 = vpop.f32.mrf.mxu0
        %v3496 = vadd.f32 0.0, %v3495
        %v3497 = vpop.f32.mrf.mxu0
        %v3498 = vpop.f32.mrf.mxu0
        %v3499 = vadd.f32 0.0, %v3498
        %v3500 = vpop.f32.mrf.mxu0
        %3501 = vmatprep.mubr.bf16.mxu0 0
        %3502 = vmatmul.mubr.bf16.gmra.mxu0 %v3427
        %v3503 = vpop.f32.mrf.mxu0
        %v3504 = vadd.f32 0.0, %v3503
        %v3505 = vpop.f32.mrf.mxu0
        %v3506 = vpop.f32.mrf.mxu0
        %v3507 = vpop.f32.mrf.mxu0
        %3508 = vdwg.mxu0
        %v3509 = vadd.f32 %v3294, %v3464
        %v3510 = vadd.f32 %v3295, %v3467
        %v3511 = vadd.f32 %v3296, %v3472
        %v3512 = vadd.f32 %v3297, %v3475
        %v3513 = vadd.f32 %v3298, %v3480
        %v3514 = vadd.f32 %v3299, %v3483
        %v3515 = vadd.f32 %v3300, %v3488
        %v3516 = vadd.f32 %v3301, %v3491
        %v3517 = vadd.f32 %v3302, %v3496
        %v3518 = vadd.f32 %v3303, %v3499
        %v3519 = vadd.f32 %v3304, %v3504
        %v3520 = vld [vmem:[#allocation2 + $0x8] sm:$0xe]
        %s3521 = scalar_lea.vmem [#allocation8], 128
        %v3522 = vld [vmem:[%s3521] sm:$0xf]
        %v3523 = vld [vmem:[%s3521 + $0x4] sm:$0xf]
        %v3524 = vld [vmem:[%s3521 + $0x8] sm:$0xf]
        %v3525 = vld [vmem:[%s3521 + $0xc] sm:$0xf]
        %v3527 = vunpack.c.l.b16 %v3520
        %v3528 = vpack.c.b16 %v3335, %v3527
        %v3529 = vrot.slane %v3528, 1
        %v3530 = vrot.slane %v3347, 1
        %v3531 = vsel %vm2515, %v3529, %v3530
        %v3532 = vrot.slane %v3348, 1
        %v3533 = vsel %vm2515, %v3530, %v3532
        %v3534 = vrot.slane %v3349, 1
        %v3535 = vsel %vm2515, %v3532, %v3534
        %v3536 = vrot.slane %v3350, 1
        %v3537 = vsel %vm2515, %v3534, %v3536
        %v3538 = vrot.slane %v3351, 1
        %v3539 = vsel %vm2515, %v3536, %v3538
        %v3544 = vunpack.c.l.b16 %v3522
        %v3545 = vunpack.c.l.b16 %v3523
        %v3546 = vunpack.c.l.b16 %v3524
        %v3547 = vunpack.c.l.b16 %v3525
        %v3548 = vpack.c.b16 %v3545, %v3544
        %v3549 = vpack.c.b16 %v3547, %v3546
        %v3553 = vsel %vm2301, %v3531, 0
        %v3556 = vsel %vm2301, %v3533, 0
        %v3559 = vsel %vm2301, %v3535, 0
        %v3562 = vsel %vm2301, %v3537, 0
        %v3565 = vsel %vm2301, %v3539, 0
        %v3568 = vsel %vm2301, %v3538, 0
        %3570 = vmatprep.subr.bf16.mxu0 0
        %3571 = vmatpush1.bf16.msra.mxu0 0
        %3572 = vmatprep.subr.bf16.mxu0 0
        %3573 = vmatpush1.bf16.msra.mxu0 0
        %3574 = vmatprep.subr.bf16.mxu0 0
        %3575 = vmatpush1.bf16.msra.mxu0 0
        %3576 = vmatprep.subr.bf16.mxu0 0
        %3577 = vmatpush1.bf16.msra.mxu0 0
        %3578 = vmatprep.subr.bf16.mxu0 0
        %3579 = vmatpush1.bf16.msra.mxu0 0
        %3580 = vmatprep.subr.bf16.mxu0 0
        %3581 = vmatpush1.bf16.msra.mxu0 0
        %3582 = vmatprep.subr.bf16.mxu0 0
        %3583 = vmatpush1.bf16.msra.mxu0 %v3549
        %3584 = vmatprep.subr.bf16.mxu0 0
        %3585 = vmatpush1.bf16.msra.mxu0 %v3548
        %3586 = vmatprep.subr.bf16.mxu0 0
        %3587 = vmatpush2.bf16.msra.mxu0 0
        %3588 = vmatprep.subr.bf16.mxu0 0
        %3589 = vmatpush2.bf16.msra.mxu0 0
        %3590 = vmatprep.subr.bf16.mxu0 0
        %3591 = vmatpush2.bf16.msra.mxu0 0
        %3592 = vmatprep.subr.bf16.mxu0 0
        %3593 = vmatpush2.bf16.msra.mxu0 0
        %3594 = vmatprep.subr.bf16.mxu0 0
        %3595 = vmatpush2.bf16.msra.mxu0 0
        %3596 = vmatprep.subr.bf16.mxu0 0
        %3597 = vmatpush2.bf16.msra.mxu0 0
        %3598 = vmatprep.subr.bf16.mxu0 0
        %3599 = vmatpush2.bf16.msra.mxu0 0
        %3600 = vmatprep.subr.bf16.mxu0 0
        %3601 = vmatpush2.bf16.msra.mxu0 0
        %3602 = vmatprep.mubr.bf16.mxu0 0
        %3603 = vmatmul.mubr.bf16.gmra.mxu0 %v3553
        %v3604 = vpop.f32.mrf.mxu0
        %v3605 = vadd.f32 0.0, %v3604
        %v3606 = vpop.f32.mrf.mxu0
        %v3607 = vpop.f32.mrf.mxu0
        %v3608 = vadd.f32 0.0, %v3607
        %v3609 = vpop.f32.mrf.mxu0
        %3610 = vmatprep.mubr.bf16.mxu0 0
        %3611 = vmatmul.mubr.bf16.gmra.mxu0 %v3556
        %v3612 = vpop.f32.mrf.mxu0
        %v3613 = vadd.f32 0.0, %v3612
        %v3614 = vpop.f32.mrf.mxu0
        %v3615 = vpop.f32.mrf.mxu0
        %v3616 = vadd.f32 0.0, %v3615
        %v3617 = vpop.f32.mrf.mxu0
        %3618 = vmatprep.mubr.bf16.mxu0 0
        %3619 = vmatmul.mubr.bf16.gmra.mxu0 %v3559
        %v3620 = vpop.f32.mrf.mxu0
        %v3621 = vadd.f32 0.0, %v3620
        %v3622 = vpop.f32.mrf.mxu0
        %v3623 = vpop.f32.mrf.mxu0
        %v3624 = vadd.f32 0.0, %v3623
        %v3625 = vpop.f32.mrf.mxu0
        %3626 = vmatprep.mubr.bf16.mxu0 0
        %3627 = vmatmul.mubr.bf16.gmra.mxu0 %v3562
        %v3628 = vpop.f32.mrf.mxu0
        %v3629 = vadd.f32 0.0, %v3628
        %v3630 = vpop.f32.mrf.mxu0
        %v3631 = vpop.f32.mrf.mxu0
        %v3632 = vadd.f32 0.0, %v3631
        %v3633 = vpop.f32.mrf.mxu0
        %3634 = vmatprep.mubr.bf16.mxu0 0
        %3635 = vmatmul.mubr.bf16.gmra.mxu0 %v3565
        %v3636 = vpop.f32.mrf.mxu0
        %v3637 = vadd.f32 0.0, %v3636
        %v3638 = vpop.f32.mrf.mxu0
        %v3639 = vpop.f32.mrf.mxu0
        %v3640 = vadd.f32 0.0, %v3639
        %v3641 = vpop.f32.mrf.mxu0
        %3642 = vmatprep.mubr.bf16.mxu0 0
        %3643 = vmatmul.mubr.bf16.gmra.mxu0 %v3568
        %v3644 = vpop.f32.mrf.mxu0
        %v3645 = vadd.f32 0.0, %v3644
        %v3646 = vpop.f32.mrf.mxu0
        %v3647 = vpop.f32.mrf.mxu0
        %v3648 = vpop.f32.mrf.mxu0
        %3649 = vdwg.mxu0
        %v3650 = vadd.f32 %v3509, %v3605
        %v3651 = vadd.f32 %v3510, %v3608
        %v3652 = vadd.f32 %v3511, %v3613
        %v3653 = vadd.f32 %v3512, %v3616
        %v3654 = vadd.f32 %v3513, %v3621
        %v3655 = vadd.f32 %v3514, %v3624
        %v3656 = vadd.f32 %v3515, %v3629
        %v3657 = vadd.f32 %v3516, %v3632
        %v3658 = vadd.f32 %v3517, %v3637
        %v3659 = vadd.f32 %v3518, %v3640
        %v3660 = vadd.f32 %v3519, %v3645
        %v3661 = vld [vmem:[#allocation2 + $0x34] sm:$0x3]
        %s3662 = scalar_lea.vmem [#allocation8], 144
        %v3663 = vld [vmem:[%s3662] sm:$0xf]
        %v3664 = vld [vmem:[%s3662 + $0x4] sm:$0xf]
        %v3665 = vld [vmem:[%s3662 + $0x8] sm:$0xf]
        %v3666 = vld [vmem:[%s3662 + $0xc] sm:$0xf]
        %v3668 = vunpack.c.l.b16 %v3661
        %v3669 = vpack.c.b16 %v3668, %v3344
        %v3671 = vshrl.u32 %v3528, 16
        %v3673 = vrot.slane %v3671, 1
        %v3674 = vshll.u32 %v3528, 16
        %v3676 = vrot.slane %v3674, 2
        %v3677 = vor.u32 %v3673, %v3676
        %v3678 = vrot.slane %v3364, 1
        %v3679 = vrot.slane %v3360, 2
        %v3680 = vor.u32 %v3678, %v3679
        %v3681 = vsel %vm1785, %v3677, %v3680
        %v3682 = vrot.slane %v3372, 1
        %v3683 = vrot.slane %v3368, 2
        %v3684 = vor.u32 %v3682, %v3683
        %v3685 = vsel %vm1785, %v3680, %v3684
        %v3686 = vrot.slane %v3380, 1
        %v3687 = vrot.slane %v3376, 2
        %v3688 = vor.u32 %v3686, %v3687
        %v3689 = vsel %vm1785, %v3684, %v3688
        %v3690 = vrot.slane %v3388, 1
        %v3691 = vrot.slane %v3384, 2
        %v3692 = vor.u32 %v3690, %v3691
        %v3693 = vsel %vm1785, %v3688, %v3692
        %v3695 = vshrl.u32 %v3669, 16
        %v3697 = vrot.slane %v3695, 1
        %v3698 = vshll.u32 %v3669, 16
        %v3700 = vrot.slane %v3698, 2
        %v3701 = vor.u32 %v3697, %v3700
        %v3702 = vsel %vm1785, %v3692, %v3701
        %v3707 = vunpack.c.l.b16 %v3663
        %v3708 = vunpack.c.l.b16 %v3664
        %v3709 = vunpack.c.l.b16 %v3665
        %v3710 = vunpack.c.l.b16 %v3666
        %v3711 = vpack.c.b16 %v3708, %v3707
        %v3712 = vpack.c.b16 %v3710, %v3709
        %v3716 = vsel %vm2301, %v3681, 0
        %v3719 = vsel %vm2301, %v3685, 0
        %v3722 = vsel %vm2301, %v3689, 0
        %v3725 = vsel %vm2301, %v3693, 0
        %v3728 = vsel %vm2301, %v3702, 0
        %v3731 = vsel %vm2301, %v3701, 0
        %3733 = vmatprep.subr.bf16.mxu0 0
        %3734 = vmatpush1.bf16.msra.mxu0 0
        %3735 = vmatprep.subr.bf16.mxu0 0
        %3736 = vmatpush1.bf16.msra.mxu0 0
        %3737 = vmatprep.subr.bf16.mxu0 0
        %3738 = vmatpush1.bf16.msra.mxu0 0
        %3739 = vmatprep.subr.bf16.mxu0 0
        %3740 = vmatpush1.bf16.msra.mxu0 0
        %3741 = vmatprep.subr.bf16.mxu0 0
        %3742 = vmatpush1.bf16.msra.mxu0 0
        %3743 = vmatprep.subr.bf16.mxu0 0
        %3744 = vmatpush1.bf16.msra.mxu0 0
        %3745 = vmatprep.subr.bf16.mxu0 0
        %3746 = vmatpush1.bf16.msra.mxu0 %v3712
        %3747 = vmatprep.subr.bf16.mxu0 0
        %3748 = vmatpush1.bf16.msra.mxu0 %v3711
        %3749 = vmatprep.subr.bf16.mxu0 0
        %3750 = vmatpush2.bf16.msra.mxu0 0
        %3751 = vmatprep.subr.bf16.mxu0 0
        %3752 = vmatpush2.bf16.msra.mxu0 0
        %3753 = vmatprep.subr.bf16.mxu0 0
        %3754 = vmatpush2.bf16.msra.mxu0 0
        %3755 = vmatprep.subr.bf16.mxu0 0
        %3756 = vmatpush2.bf16.msra.mxu0 0
        %3757 = vmatprep.subr.bf16.mxu0 0
        %3758 = vmatpush2.bf16.msra.mxu0 0
        %3759 = vmatprep.subr.bf16.mxu0 0
        %3760 = vmatpush2.bf16.msra.mxu0 0
        %3761 = vmatprep.subr.bf16.mxu0 0
        %3762 = vmatpush2.bf16.msra.mxu0 0
        %3763 = vmatprep.subr.bf16.mxu0 0
        %3764 = vmatpush2.bf16.msra.mxu0 0
        %3765 = vmatprep.mubr.bf16.mxu0 0
        %3766 = vmatmul.mubr.bf16.gmra.mxu0 %v3716
        %v3767 = vpop.f32.mrf.mxu0
        %v3768 = vadd.f32 0.0, %v3767
        %v3769 = vpop.f32.mrf.mxu0
        %v3770 = vpop.f32.mrf.mxu0
        %v3771 = vadd.f32 0.0, %v3770
        %v3772 = vpop.f32.mrf.mxu0
        %3773 = vmatprep.mubr.bf16.mxu0 0
        %3774 = vmatmul.mubr.bf16.gmra.mxu0 %v3719
        %v3775 = vpop.f32.mrf.mxu0
        %v3776 = vadd.f32 0.0, %v3775
        %v3777 = vpop.f32.mrf.mxu0
        %v3778 = vpop.f32.mrf.mxu0
        %v3779 = vadd.f32 0.0, %v3778
        %v3780 = vpop.f32.mrf.mxu0
        %3781 = vmatprep.mubr.bf16.mxu0 0
        %3782 = vmatmul.mubr.bf16.gmra.mxu0 %v3722
        %v3783 = vpop.f32.mrf.mxu0
        %v3784 = vadd.f32 0.0, %v3783
        %v3785 = vpop.f32.mrf.mxu0
        %v3786 = vpop.f32.mrf.mxu0
        %v3787 = vadd.f32 0.0, %v3786
        %v3788 = vpop.f32.mrf.mxu0
        %3789 = vmatprep.mubr.bf16.mxu0 0
        %3790 = vmatmul.mubr.bf16.gmra.mxu0 %v3725
        %v3791 = vpop.f32.mrf.mxu0
        %v3792 = vadd.f32 0.0, %v3791
        %v3793 = vpop.f32.mrf.mxu0
        %v3794 = vpop.f32.mrf.mxu0
        %v3795 = vadd.f32 0.0, %v3794
        %v3796 = vpop.f32.mrf.mxu0
        %3797 = vmatprep.mubr.bf16.mxu0 0
        %3798 = vmatmul.mubr.bf16.gmra.mxu0 %v3728
        %v3799 = vpop.f32.mrf.mxu0
        %v3800 = vadd.f32 0.0, %v3799
        %v3801 = vpop.f32.mrf.mxu0
        %v3802 = vpop.f32.mrf.mxu0
        %v3803 = vadd.f32 0.0, %v3802
        %v3804 = vpop.f32.mrf.mxu0
        %3805 = vmatprep.mubr.bf16.mxu0 0
        %3806 = vmatmul.mubr.bf16.gmra.mxu0 %v3731
        %v3807 = vpop.f32.mrf.mxu0
        %v3808 = vadd.f32 0.0, %v3807
        %v3809 = vpop.f32.mrf.mxu0
        %v3810 = vpop.f32.mrf.mxu0
        %v3811 = vpop.f32.mrf.mxu0
        %3812 = vdwg.mxu0
        %v3813 = vadd.f32 %v3650, %v3768
        %v3814 = vadd.f32 %v3651, %v3771
        %v3815 = vadd.f32 %v3652, %v3776
        %v3816 = vadd.f32 %v3653, %v3779
        %v3817 = vadd.f32 %v3654, %v3784
        %v3818 = vadd.f32 %v3655, %v3787
        %v3819 = vadd.f32 %v3656, %v3792
        %v3820 = vadd.f32 %v3657, %v3795
        %v3821 = vadd.f32 %v3658, %v3800
        %v3822 = vadd.f32 %v3659, %v3803
        %v3823 = vadd.f32 %v3660, %v3808
        %v3824 = vld [vmem:[#allocation2 + $0xc] sm:$0x8]
        %v3825 = vld [vmem:[#allocation2 + $0x10] sm:$0xf]
        %v3826 = vld [vmem:[#allocation2 + $0x14] sm:$0xf]
        %v3827 = vld [vmem:[#allocation2 + $0x18] sm:$0xf]
        %v3828 = vld [vmem:[#allocation2 + $0x1c] sm:$0xf]
        %v3829 = vld [vmem:[#allocation2 + $0x20] sm:$0xf]
        %v3830 = vld [vmem:[#allocation2 + $0x24] sm:$0xf]
        %v3831 = vld [vmem:[#allocation2 + $0x28] sm:$0xf]
        %v3832 = vld [vmem:[#allocation2 + $0x2c] sm:$0xf]
        %v3833 = vld [vmem:[#allocation2 + $0x30] sm:$0xf]
        %v3834 = vld [vmem:[#allocation2 + $0x34] sm:$0xf]
        %v3835 = vld [vmem:[#allocation2 + $0x38] sm:$0x7]
        %s3836 = scalar_lea.vmem [#allocation8], 160
        %v3837 = vld [vmem:[%s3836] sm:$0xf]
        %v3838 = vld [vmem:[%s3836 + $0x4] sm:$0xf]
        %v3839 = vld [vmem:[%s3836 + $0x8] sm:$0xf]
        %v3840 = vld [vmem:[%s3836 + $0xc] sm:$0xf]
        %v3853 = vunpack.c.l.b16 %v3824
        %v3854 = vunpack.c.l.b16 %v3825
        %v3855 = vunpack.c.l.b16 %v3826
        %v3856 = vunpack.c.l.b16 %v3827
        %v3857 = vunpack.c.l.b16 %v3828
        %v3858 = vunpack.c.l.b16 %v3829
        %v3859 = vunpack.c.l.b16 %v3830
        %v3860 = vunpack.c.l.b16 %v3831
        %v3861 = vunpack.c.l.b16 %v3832
        %v3862 = vunpack.c.l.b16 %v3833
        %v3863 = vunpack.c.l.b16 %v3834
        %v3864 = vunpack.c.l.b16 %v3835
        %v3865 = vpack.c.b16 %v3854, %v3853
        %v3866 = vpack.c.b16 %v3856, %v3855
        %v3867 = vpack.c.b16 %v3858, %v3857
        %v3868 = vpack.c.b16 %v3860, %v3859
        %v3869 = vpack.c.b16 %v3862, %v3861
        %v3870 = vpack.c.b16 %v3864, %v3863
        %v3871 = vrot.slane %v3865, 3
        %v3872 = vrot.slane %v3866, 3
        %v3873 = vsel %vm914, %v3871, %v3872
        %v3874 = vrot.slane %v3867, 3
        %v3875 = vsel %vm914, %v3872, %v3874
        %v3876 = vrot.slane %v3868, 3
        %v3877 = vsel %vm914, %v3874, %v3876
        %v3878 = vrot.slane %v3869, 3
        %v3879 = vsel %vm914, %v3876, %v3878
        %v3880 = vrot.slane %v3870, 3
        %v3881 = vsel %vm914, %v3878, %v3880
        %v3886 = vunpack.c.l.b16 %v3837
        %v3887 = vunpack.c.l.b16 %v3838
        %v3888 = vunpack.c.l.b16 %v3839
        %v3889 = vunpack.c.l.b16 %v3840
        %v3890 = vpack.c.b16 %v3887, %v3886
        %v3891 = vpack.c.b16 %v3889, %v3888
        %v3895 = vsel %vm2301, %v3873, 0
        %v3898 = vsel %vm2301, %v3875, 0
        %v3901 = vsel %vm2301, %v3877, 0
        %v3904 = vsel %vm2301, %v3879, 0
        %v3907 = vsel %vm2301, %v3881, 0
        %v3910 = vsel %vm2301, %v3880, 0
        %3912 = vmatprep.subr.bf16.mxu0 0
        %3913 = vmatpush1.bf16.msra.mxu0 0
        %3914 = vmatprep.subr.bf16.mxu0 0
        %3915 = vmatpush1.bf16.msra.mxu0 0
        %3916 = vmatprep.subr.bf16.mxu0 0
        %3917 = vmatpush1.bf16.msra.mxu0 0
        %3918 = vmatprep.subr.bf16.mxu0 0
        %3919 = vmatpush1.bf16.msra.mxu0 0
        %3920 = vmatprep.subr.bf16.mxu0 0
        %3921 = vmatpush1.bf16.msra.mxu0 0
        %3922 = vmatprep.subr.bf16.mxu0 0
        %3923 = vmatpush1.bf16.msra.mxu0 0
        %3924 = vmatprep.subr.bf16.mxu0 0
        %3925 = vmatpush1.bf16.msra.mxu0 %v3891
        %3926 = vmatprep.subr.bf16.mxu0 0
        %3927 = vmatpush1.bf16.msra.mxu0 %v3890
        %3928 = vmatprep.subr.bf16.mxu0 0
        %3929 = vmatpush2.bf16.msra.mxu0 0
        %3930 = vmatprep.subr.bf16.mxu0 0
        %3931 = vmatpush2.bf16.msra.mxu0 0
        %3932 = vmatprep.subr.bf16.mxu0 0
        %3933 = vmatpush2.bf16.msra.mxu0 0
        %3934 = vmatprep.subr.bf16.mxu0 0
        %3935 = vmatpush2.bf16.msra.mxu0 0
        %3936 = vmatprep.subr.bf16.mxu0 0
        %3937 = vmatpush2.bf16.msra.mxu0 0
        %3938 = vmatprep.subr.bf16.mxu0 0
        %3939 = vmatpush2.bf16.msra.mxu0 0
        %3940 = vmatprep.subr.bf16.mxu0 0
        %3941 = vmatpush2.bf16.msra.mxu0 0
        %3942 = vmatprep.subr.bf16.mxu0 0
        %3943 = vmatpush2.bf16.msra.mxu0 0
        %3944 = vmatprep.mubr.bf16.mxu0 0
        %3945 = vmatmul.mubr.bf16.gmra.mxu0 %v3895
        %v3946 = vpop.f32.mrf.mxu0
        %v3947 = vadd.f32 0.0, %v3946
        %v3948 = vpop.f32.mrf.mxu0
        %v3949 = vpop.f32.mrf.mxu0
        %v3950 = vadd.f32 0.0, %v3949
        %v3951 = vpop.f32.mrf.mxu0
        %3952 = vmatprep.mubr.bf16.mxu0 0
        %3953 = vmatmul.mubr.bf16.gmra.mxu0 %v3898
        %v3954 = vpop.f32.mrf.mxu0
        %v3955 = vadd.f32 0.0, %v3954
        %v3956 = vpop.f32.mrf.mxu0
        %v3957 = vpop.f32.mrf.mxu0
        %v3958 = vadd.f32 0.0, %v3957
        %v3959 = vpop.f32.mrf.mxu0
        %3960 = vmatprep.mubr.bf16.mxu0 0
        %3961 = vmatmul.mubr.bf16.gmra.mxu0 %v3901
        %v3962 = vpop.f32.mrf.mxu0
        %v3963 = vadd.f32 0.0, %v3962
        %v3964 = vpop.f32.mrf.mxu0
        %v3965 = vpop.f32.mrf.mxu0
        %v3966 = vadd.f32 0.0, %v3965
        %v3967 = vpop.f32.mrf.mxu0
        %3968 = vmatprep.mubr.bf16.mxu0 0
        %3969 = vmatmul.mubr.bf16.gmra.mxu0 %v3904
        %v3970 = vpop.f32.mrf.mxu0
        %v3971 = vadd.f32 0.0, %v3970
        %v3972 = vpop.f32.mrf.mxu0
        %v3973 = vpop.f32.mrf.mxu0
        %v3974 = vadd.f32 0.0, %v3973
        %v3975 = vpop.f32.mrf.mxu0
        %3976 = vmatprep.mubr.bf16.mxu0 0
        %3977 = vmatmul.mubr.bf16.gmra.mxu0 %v3907
        %v3978 = vpop.f32.mrf.mxu0
        %v3979 = vadd.f32 0.0, %v3978
        %v3980 = vpop.f32.mrf.mxu0
        %v3981 = vpop.f32.mrf.mxu0
        %v3982 = vadd.f32 0.0, %v3981
        %v3983 = vpop.f32.mrf.mxu0
        %3984 = vmatprep.mubr.bf16.mxu0 0
        %3985 = vmatmul.mubr.bf16.gmra.mxu0 %v3910
        %v3986 = vpop.f32.mrf.mxu0
        %v3987 = vadd.f32 0.0, %v3986
        %v3988 = vpop.f32.mrf.mxu0
        %v3989 = vpop.f32.mrf.mxu0
        %v3990 = vpop.f32.mrf.mxu0
        %3991 = vdwg.mxu0
        %v3992 = vadd.f32 %v3813, %v3947
        %v3993 = vadd.f32 %v3814, %v3950
        %v3994 = vadd.f32 %v3815, %v3955
        %v3995 = vadd.f32 %v3816, %v3958
        %v3996 = vadd.f32 %v3817, %v3963
        %v3997 = vadd.f32 %v3818, %v3966
        %v3998 = vadd.f32 %v3819, %v3971
        %v3999 = vadd.f32 %v3820, %v3974
        %v4000 = vadd.f32 %v3821, %v3979
        %v4001 = vadd.f32 %v3822, %v3982
        %v4002 = vadd.f32 %v3823, %v3987
        %v4003 = vld [vmem:[#allocation2 + $0x38] sm:$0xf]
        %s4004 = scalar_lea.vmem [#allocation8], 176
        %v4005 = vld [vmem:[%s4004] sm:$0xf]
        %v4006 = vld [vmem:[%s4004 + $0x4] sm:$0xf]
        %v4007 = vld [vmem:[%s4004 + $0x8] sm:$0xf]
        %v4008 = vld [vmem:[%s4004 + $0xc] sm:$0xf]
        %v4010 = vunpack.c.l.b16 %v4003
        %v4011 = vpack.c.b16 %v4010, %v3863
        %v4013 = vshrl.u32 %v3865, 16
        %v4015 = vrot.slane %v4013, 3
        %v4016 = vshll.u32 %v3865, 16
        %v4018 = vrot.slane %v4016, 4
        %v4019 = vor.u32 %v4015, %v4018
        %v4021 = vshrl.u32 %v3866, 16
        %v4023 = vrot.slane %v4021, 3
        %v4024 = vshll.u32 %v3866, 16
        %v4026 = vrot.slane %v4024, 4
        %v4027 = vor.u32 %v4023, %v4026
        %v4028 = vsel %vm426, %v4019, %v4027
        %v4030 = vshrl.u32 %v3867, 16
        %v4032 = vrot.slane %v4030, 3
        %v4033 = vshll.u32 %v3867, 16
        %v4035 = vrot.slane %v4033, 4
        %v4036 = vor.u32 %v4032, %v4035
        %v4037 = vsel %vm426, %v4027, %v4036
        %v4039 = vshrl.u32 %v3868, 16
        %v4041 = vrot.slane %v4039, 3
        %v4042 = vshll.u32 %v3868, 16
        %v4044 = vrot.slane %v4042, 4
        %v4045 = vor.u32 %v4041, %v4044
        %v4046 = vsel %vm426, %v4036, %v4045
        %v4048 = vshrl.u32 %v3869, 16
        %v4050 = vrot.slane %v4048, 3
        %v4051 = vshll.u32 %v3869, 16
        %v4053 = vrot.slane %v4051, 4
        %v4054 = vor.u32 %v4050, %v4053
        %v4055 = vsel %vm426, %v4045, %v4054
        %v4057 = vshrl.u32 %v4011, 16
        %v4059 = vrot.slane %v4057, 3
        %v4060 = vshll.u32 %v4011, 16
        %v4062 = vrot.slane %v4060, 4
        %v4063 = vor.u32 %v4059, %v4062
        %v4064 = vsel %vm426, %v4054, %v4063
        %v4069 = vunpack.c.l.b16 %v4005
        %v4070 = vunpack.c.l.b16 %v4006
        %v4071 = vunpack.c.l.b16 %v4007
        %v4072 = vunpack.c.l.b16 %v4008
        %v4073 = vpack.c.b16 %v4070, %v4069
        %v4074 = vpack.c.b16 %v4072, %v4071
        %v4078 = vsel %vm2301, %v4028, 0
        %v4081 = vsel %vm2301, %v4037, 0
        %v4084 = vsel %vm2301, %v4046, 0
        %v4087 = vsel %vm2301, %v4055, 0
        %v4090 = vsel %vm2301, %v4064, 0
        %v4093 = vsel %vm2301, %v4063, 0
        %4095 = vmatprep.subr.bf16.mxu0 0
        %4096 = vmatpush1.bf16.msra.mxu0 0
        %4097 = vmatprep.subr.bf16.mxu0 0
        %4098 = vmatpush1.bf16.msra.mxu0 0
        %4099 = vmatprep.subr.bf16.mxu0 0
        %4100 = vmatpush1.bf16.msra.mxu0 0
        %4101 = vmatprep.subr.bf16.mxu0 0
        %4102 = vmatpush1.bf16.msra.mxu0 0
        %4103 = vmatprep.subr.bf16.mxu0 0
        %4104 = vmatpush1.bf16.msra.mxu0 0
        %4105 = vmatprep.subr.bf16.mxu0 0
        %4106 = vmatpush1.bf16.msra.mxu0 0
        %4107 = vmatprep.subr.bf16.mxu0 0
        %4108 = vmatpush1.bf16.msra.mxu0 %v4074
        %4109 = vmatprep.subr.bf16.mxu0 0
        %4110 = vmatpush1.bf16.msra.mxu0 %v4073
        %4111 = vmatprep.subr.bf16.mxu0 0
        %4112 = vmatpush2.bf16.msra.mxu0 0
        %4113 = vmatprep.subr.bf16.mxu0 0
        %4114 = vmatpush2.bf16.msra.mxu0 0
        %4115 = vmatprep.subr.bf16.mxu0 0
        %4116 = vmatpush2.bf16.msra.mxu0 0
        %4117 = vmatprep.subr.bf16.mxu0 0
        %4118 = vmatpush2.bf16.msra.mxu0 0
        %4119 = vmatprep.subr.bf16.mxu0 0
        %4120 = vmatpush2.bf16.msra.mxu0 0
        %4121 = vmatprep.subr.bf16.mxu0 0
        %4122 = vmatpush2.bf16.msra.mxu0 0
        %4123 = vmatprep.subr.bf16.mxu0 0
        %4124 = vmatpush2.bf16.msra.mxu0 0
        %4125 = vmatprep.subr.bf16.mxu0 0
        %4126 = vmatpush2.bf16.msra.mxu0 0
        %4127 = vmatprep.mubr.bf16.mxu0 0
        %4128 = vmatmul.mubr.bf16.gmra.mxu0 %v4078
        %v4129 = vpop.f32.mrf.mxu0
        %v4130 = vadd.f32 0.0, %v4129
        %v4131 = vpop.f32.mrf.mxu0
        %v4132 = vpop.f32.mrf.mxu0
        %v4133 = vadd.f32 0.0, %v4132
        %v4134 = vpop.f32.mrf.mxu0
        %4135 = vmatprep.mubr.bf16.mxu0 0
        %4136 = vmatmul.mubr.bf16.gmra.mxu0 %v4081
        %v4137 = vpop.f32.mrf.mxu0
        %v4138 = vadd.f32 0.0, %v4137
        %v4139 = vpop.f32.mrf.mxu0
        %v4140 = vpop.f32.mrf.mxu0
        %v4141 = vadd.f32 0.0, %v4140
        %v4142 = vpop.f32.mrf.mxu0
        %4143 = vmatprep.mubr.bf16.mxu0 0
        %4144 = vmatmul.mubr.bf16.gmra.mxu0 %v4084
        %v4145 = vpop.f32.mrf.mxu0
        %v4146 = vadd.f32 0.0, %v4145
        %v4147 = vpop.f32.mrf.mxu0
        %v4148 = vpop.f32.mrf.mxu0
        %v4149 = vadd.f32 0.0, %v4148
        %v4150 = vpop.f32.mrf.mxu0
        %4151 = vmatprep.mubr.bf16.mxu0 0
        %4152 = vmatmul.mubr.bf16.gmra.mxu0 %v4087
        %v4153 = vpop.f32.mrf.mxu0
        %v4154 = vadd.f32 0.0, %v4153
        %v4155 = vpop.f32.mrf.mxu0
        %v4156 = vpop.f32.mrf.mxu0
        %v4157 = vadd.f32 0.0, %v4156
        %v4158 = vpop.f32.mrf.mxu0
        %4159 = vmatprep.mubr.bf16.mxu0 0
        %4160 = vmatmul.mubr.bf16.gmra.mxu0 %v4090
        %v4161 = vpop.f32.mrf.mxu0
        %v4162 = vadd.f32 0.0, %v4161
        %v4163 = vpop.f32.mrf.mxu0
        %v4164 = vpop.f32.mrf.mxu0
        %v4165 = vadd.f32 0.0, %v4164
        %v4166 = vpop.f32.mrf.mxu0
        %4167 = vmatprep.mubr.bf16.mxu0 0
        %4168 = vmatmul.mubr.bf16.gmra.mxu0 %v4093
        %v4169 = vpop.f32.mrf.mxu0
        %v4170 = vadd.f32 0.0, %v4169
        %v4171 = vpop.f32.mrf.mxu0
        %v4172 = vpop.f32.mrf.mxu0
        %v4173 = vpop.f32.mrf.mxu0
        %4174 = vdwg.mxu0
        %v4175 = vadd.f32 %v3992, %v4130
        %v4176 = vadd.f32 %v3993, %v4133
        %v4177 = vadd.f32 %v3994, %v4138
        %v4178 = vadd.f32 %v3995, %v4141
        %v4179 = vadd.f32 %v3996, %v4146
        %v4180 = vadd.f32 %v3997, %v4149
        %v4181 = vadd.f32 %v3998, %v4154
        %v4182 = vadd.f32 %v3999, %v4157
        %v4183 = vadd.f32 %v4000, %v4162
        %v4184 = vadd.f32 %v4001, %v4165
        %v4185 = vadd.f32 %v4002, %v4170
        %s4186 = scalar_lea.vmem [#allocation8], 192
        %v4187 = vld [vmem:[%s4186] sm:$0xf]
        %v4188 = vld [vmem:[%s4186 + $0x4] sm:$0xf]
        %v4189 = vld [vmem:[%s4186 + $0x8] sm:$0xf]
        %v4190 = vld [vmem:[%s4186 + $0xc] sm:$0xf]
        %v4191 = vpack.c.b16 %v3855, %v3854
        %v4192 = vpack.c.b16 %v3857, %v3856
        %v4193 = vpack.c.b16 %v3859, %v3858
        %v4194 = vpack.c.b16 %v3861, %v3860
        %v4195 = vpack.c.b16 %v3863, %v3862
        %v4196 = vpack.c.b16 %v4010, %v4010
        %v4201 = vunpack.c.l.b16 %v4187
        %v4202 = vunpack.c.l.b16 %v4188
        %v4203 = vunpack.c.l.b16 %v4189
        %v4204 = vunpack.c.l.b16 %v4190
        %v4205 = vpack.c.b16 %v4202, %v4201
        %v4206 = vpack.c.b16 %v4204, %v4203
        %v4210 = vsel %vm2301, %v4191, 0
        %v4213 = vsel %vm2301, %v4192, 0
        %v4216 = vsel %vm2301, %v4193, 0
        %v4219 = vsel %vm2301, %v4194, 0
        %v4222 = vsel %vm2301, %v4195, 0
        %v4225 = vsel %vm2301, %v4196, 0
        %4227 = vmatprep.subr.bf16.mxu0 0
        %4228 = vmatpush1.bf16.msra.mxu0 0
        %4229 = vmatprep.subr.bf16.mxu0 0
        %4230 = vmatpush1.bf16.msra.mxu0 0
        %4231 = vmatprep.subr.bf16.mxu0 0
        %4232 = vmatpush1.bf16.msra.mxu0 0
        %4233 = vmatprep.subr.bf16.mxu0 0
        %4234 = vmatpush1.bf16.msra.mxu0 0
        %4235 = vmatprep.subr.bf16.mxu0 0
        %4236 = vmatpush1.bf16.msra.mxu0 0
        %4237 = vmatprep.subr.bf16.mxu0 0
        %4238 = vmatpush1.bf16.msra.mxu0 0
        %4239 = vmatprep.subr.bf16.mxu0 0
        %4240 = vmatpush1.bf16.msra.mxu0 %v4206
        %4241 = vmatprep.subr.bf16.mxu0 0
        %4242 = vmatpush1.bf16.msra.mxu0 %v4205
        %4243 = vmatprep.subr.bf16.mxu0 0
        %4244 = vmatpush2.bf16.msra.mxu0 0
        %4245 = vmatprep.subr.bf16.mxu0 0
        %4246 = vmatpush2.bf16.msra.mxu0 0
        %4247 = vmatprep.subr.bf16.mxu0 0
        %4248 = vmatpush2.bf16.msra.mxu0 0
        %4249 = vmatprep.subr.bf16.mxu0 0
        %4250 = vmatpush2.bf16.msra.mxu0 0
        %4251 = vmatprep.subr.bf16.mxu0 0
        %4252 = vmatpush2.bf16.msra.mxu0 0
        %4253 = vmatprep.subr.bf16.mxu0 0
        %4254 = vmatpush2.bf16.msra.mxu0 0
        %4255 = vmatprep.subr.bf16.mxu0 0
        %4256 = vmatpush2.bf16.msra.mxu0 0
        %4257 = vmatprep.subr.bf16.mxu0 0
        %4258 = vmatpush2.bf16.msra.mxu0 0
        %4259 = vmatprep.mubr.bf16.mxu0 0
        %4260 = vmatmul.mubr.bf16.gmra.mxu0 %v4210
        %v4261 = vpop.f32.mrf.mxu0
        %v4262 = vadd.f32 0.0, %v4261
        %v4263 = vpop.f32.mrf.mxu0
        %v4264 = vpop.f32.mrf.mxu0
        %v4265 = vadd.f32 0.0, %v4264
        %v4266 = vpop.f32.mrf.mxu0
        %4267 = vmatprep.mubr.bf16.mxu0 0
        %4268 = vmatmul.mubr.bf16.gmra.mxu0 %v4213
        %v4269 = vpop.f32.mrf.mxu0
        %v4270 = vadd.f32 0.0, %v4269
        %v4271 = vpop.f32.mrf.mxu0
        %v4272 = vpop.f32.mrf.mxu0
        %v4273 = vadd.f32 0.0, %v4272
        %v4274 = vpop.f32.mrf.mxu0
        %4275 = vmatprep.mubr.bf16.mxu0 0
        %4276 = vmatmul.mubr.bf16.gmra.mxu0 %v4216
        %v4277 = vpop.f32.mrf.mxu0
        %v4278 = vadd.f32 0.0, %v4277
        %v4279 = vpop.f32.mrf.mxu0
        %v4280 = vpop.f32.mrf.mxu0
        %v4281 = vadd.f32 0.0, %v4280
        %v4282 = vpop.f32.mrf.mxu0
        %4283 = vmatprep.mubr.bf16.mxu0 0
        %4284 = vmatmul.mubr.bf16.gmra.mxu0 %v4219
        %v4285 = vpop.f32.mrf.mxu0
        %v4286 = vadd.f32 0.0, %v4285
        %v4287 = vpop.f32.mrf.mxu0
        %v4288 = vpop.f32.mrf.mxu0
        %v4289 = vadd.f32 0.0, %v4288
        %v4290 = vpop.f32.mrf.mxu0
        %4291 = vmatprep.mubr.bf16.mxu0 0
        %4292 = vmatmul.mubr.bf16.gmra.mxu0 %v4222
        %v4293 = vpop.f32.mrf.mxu0
        %v4294 = vadd.f32 0.0, %v4293
        %v4295 = vpop.f32.mrf.mxu0
        %v4296 = vpop.f32.mrf.mxu0
        %v4297 = vadd.f32 0.0, %v4296
        %v4298 = vpop.f32.mrf.mxu0
        %4299 = vmatprep.mubr.bf16.mxu0 0
        %4300 = vmatmul.mubr.bf16.gmra.mxu0 %v4225
        %v4301 = vpop.f32.mrf.mxu0
        %v4302 = vadd.f32 0.0, %v4301
        %v4303 = vpop.f32.mrf.mxu0
        %v4304 = vpop.f32.mrf.mxu0
        %v4305 = vpop.f32.mrf.mxu0
        %4306 = vdwg.mxu0
        %v4307 = vadd.f32 %v4175, %v4262
        %v4308 = vadd.f32 %v4176, %v4265
        %v4309 = vadd.f32 %v4177, %v4270
        %v4310 = vadd.f32 %v4178, %v4273
        %v4311 = vadd.f32 %v4179, %v4278
        %v4312 = vadd.f32 %v4180, %v4281
        %v4313 = vadd.f32 %v4181, %v4286
        %v4314 = vadd.f32 %v4182, %v4289
        %v4315 = vadd.f32 %v4183, %v4294
        %v4316 = vadd.f32 %v4184, %v4297
        %v4317 = vadd.f32 %v4185, %v4302
        %v4318 = vld [vmem:[#allocation2 + $0x10] sm:$0xf]
        %v4319 = vld [vmem:[#allocation2 + $0x14] sm:$0xf]
        %v4320 = vld [vmem:[#allocation2 + $0x18] sm:$0xf]
        %v4321 = vld [vmem:[#allocation2 + $0x1c] sm:$0xf]
        %v4322 = vld [vmem:[#allocation2 + $0x20] sm:$0xf]
        %v4323 = vld [vmem:[#allocation2 + $0x24] sm:$0xf]
        %v4324 = vld [vmem:[#allocation2 + $0x28] sm:$0xf]
        %v4325 = vld [vmem:[#allocation2 + $0x2c] sm:$0xf]
        %v4326 = vld [vmem:[#allocation2 + $0x30] sm:$0xf]
        %v4327 = vld [vmem:[#allocation2 + $0x34] sm:$0xf]
        %v4328 = vld [vmem:[#allocation2 + $0x38] sm:$0xf]
        %v4329 = vld [vmem:[#allocation2 + $0x3c] sm:$0x1]
        %s4330 = scalar_lea.vmem [#allocation8], 208
        %v4331 = vld [vmem:[%s4330] sm:$0xf]
        %v4332 = vld [vmem:[%s4330 + $0x4] sm:$0xf]
        %v4333 = vld [vmem:[%s4330 + $0x8] sm:$0xf]
        %v4334 = vld [vmem:[%s4330 + $0xc] sm:$0xf]
        %v4347 = vunpack.c.l.b16 %v4318
        %v4348 = vunpack.c.l.b16 %v4319
        %v4349 = vunpack.c.l.b16 %v4320
        %v4350 = vunpack.c.l.b16 %v4321
        %v4351 = vunpack.c.l.b16 %v4322
        %v4352 = vunpack.c.l.b16 %v4323
        %v4353 = vunpack.c.l.b16 %v4324
        %v4354 = vunpack.c.l.b16 %v4325
        %v4355 = vunpack.c.l.b16 %v4326
        %v4356 = vunpack.c.l.b16 %v4327
        %v4357 = vunpack.c.l.b16 %v4328
        %v4358 = vunpack.c.l.b16 %v4329
        %v4359 = vpack.c.b16 %v4348, %v4347
        %v4360 = vpack.c.b16 %v4350, %v4349
        %v4361 = vpack.c.b16 %v4352, %v4351
        %v4362 = vpack.c.b16 %v4354, %v4353
        %v4363 = vpack.c.b16 %v4356, %v4355
        %v4364 = vpack.c.b16 %v4358, %v4357
        %v4366 = vshrl.u32 %v4359, 16
        %v4368 = vshll.u32 %v4359, 16
        %v4370 = vrot.slane %v4368, 1
        %v4371 = vor.u32 %v4366, %v4370
        %v4373 = vshll.u32 %v4360, 16
        %v4375 = vrot.slane %v4373, 1
        %v4376 = vsel %vm2241, %v4371, %v4375
        %v4377 = vshrl.u32 %v4360, 16
        %v4379 = vor.u32 %v4377, %v4375
        %v4381 = vshll.u32 %v4361, 16
        %v4383 = vrot.slane %v4381, 1
        %v4384 = vsel %vm2241, %v4379, %v4383
        %v4385 = vshrl.u32 %v4361, 16
        %v4387 = vor.u32 %v4385, %v4383
        %v4389 = vshll.u32 %v4362, 16
        %v4391 = vrot.slane %v4389, 1
        %v4392 = vsel %vm2241, %v4387, %v4391
        %v4393 = vshrl.u32 %v4362, 16
        %v4395 = vor.u32 %v4393, %v4391
        %v4397 = vshll.u32 %v4363, 16
        %v4399 = vrot.slane %v4397, 1
        %v4400 = vsel %vm2241, %v4395, %v4399
        %v4401 = vshrl.u32 %v4363, 16
        %v4403 = vor.u32 %v4401, %v4399
        %v4405 = vshll.u32 %v4364, 16
        %v4407 = vrot.slane %v4405, 1
        %v4408 = vsel %vm2241, %v4403, %v4407
        %v4409 = vshrl.u32 %v4364, 16
        %v4411 = vor.u32 %v4409, %v4407
        %v4416 = vunpack.c.l.b16 %v4331
        %v4417 = vunpack.c.l.b16 %v4332
        %v4418 = vunpack.c.l.b16 %v4333
        %v4419 = vunpack.c.l.b16 %v4334
        %v4420 = vpack.c.b16 %v4417, %v4416
        %v4421 = vpack.c.b16 %v4419, %v4418
        %v4425 = vsel %vm2301, %v4376, 0
        %v4428 = vsel %vm2301, %v4384, 0
        %v4431 = vsel %vm2301, %v4392, 0
        %v4434 = vsel %vm2301, %v4400, 0
        %v4437 = vsel %vm2301, %v4408, 0
        %v4440 = vsel %vm2301, %v4411, 0
        %4442 = vmatprep.subr.bf16.mxu0 0
        %4443 = vmatpush1.bf16.msra.mxu0 0
        %4444 = vmatprep.subr.bf16.mxu0 0
        %4445 = vmatpush1.bf16.msra.mxu0 0
        %4446 = vmatprep.subr.bf16.mxu0 0
        %4447 = vmatpush1.bf16.msra.mxu0 0
        %4448 = vmatprep.subr.bf16.mxu0 0
        %4449 = vmatpush1.bf16.msra.mxu0 0
        %4450 = vmatprep.subr.bf16.mxu0 0
        %4451 = vmatpush1.bf16.msra.mxu0 0
        %4452 = vmatprep.subr.bf16.mxu0 0
        %4453 = vmatpush1.bf16.msra.mxu0 0
        %4454 = vmatprep.subr.bf16.mxu0 0
        %4455 = vmatpush1.bf16.msra.mxu0 %v4421
        %4456 = vmatprep.subr.bf16.mxu0 0
        %4457 = vmatpush1.bf16.msra.mxu0 %v4420
        %4458 = vmatprep.subr.bf16.mxu0 0
        %4459 = vmatpush2.bf16.msra.mxu0 0
        %4460 = vmatprep.subr.bf16.mxu0 0
        %4461 = vmatpush2.bf16.msra.mxu0 0
        %4462 = vmatprep.subr.bf16.mxu0 0
        %4463 = vmatpush2.bf16.msra.mxu0 0
        %4464 = vmatprep.subr.bf16.mxu0 0
        %4465 = vmatpush2.bf16.msra.mxu0 0
        %4466 = vmatprep.subr.bf16.mxu0 0
        %4467 = vmatpush2.bf16.msra.mxu0 0
        %4468 = vmatprep.subr.bf16.mxu0 0
        %4469 = vmatpush2.bf16.msra.mxu0 0
        %4470 = vmatprep.subr.bf16.mxu0 0
        %4471 = vmatpush2.bf16.msra.mxu0 0
        %4472 = vmatprep.subr.bf16.mxu0 0
        %4473 = vmatpush2.bf16.msra.mxu0 0
        %4474 = vmatprep.mubr.bf16.mxu0 0
        %4475 = vmatmul.mubr.bf16.gmra.mxu0 %v4425
        %v4476 = vpop.f32.mrf.mxu0
        %v4477 = vadd.f32 0.0, %v4476
        %v4478 = vpop.f32.mrf.mxu0
        %v4479 = vpop.f32.mrf.mxu0
        %v4480 = vadd.f32 0.0, %v4479
        %v4481 = vpop.f32.mrf.mxu0
        %4482 = vmatprep.mubr.bf16.mxu0 0
        %4483 = vmatmul.mubr.bf16.gmra.mxu0 %v4428
        %v4484 = vpop.f32.mrf.mxu0
        %v4485 = vadd.f32 0.0, %v4484
        %v4486 = vpop.f32.mrf.mxu0
        %v4487 = vpop.f32.mrf.mxu0
        %v4488 = vadd.f32 0.0, %v4487
        %v4489 = vpop.f32.mrf.mxu0
        %4490 = vmatprep.mubr.bf16.mxu0 0
        %4491 = vmatmul.mubr.bf16.gmra.mxu0 %v4431
        %v4492 = vpop.f32.mrf.mxu0
        %v4493 = vadd.f32 0.0, %v4492
        %v4494 = vpop.f32.mrf.mxu0
        %v4495 = vpop.f32.mrf.mxu0
        %v4496 = vadd.f32 0.0, %v4495
        %v4497 = vpop.f32.mrf.mxu0
        %4498 = vmatprep.mubr.bf16.mxu0 0
        %4499 = vmatmul.mubr.bf16.gmra.mxu0 %v4434
        %v4500 = vpop.f32.mrf.mxu0
        %v4501 = vadd.f32 0.0, %v4500
        %v4502 = vpop.f32.mrf.mxu0
        %v4503 = vpop.f32.mrf.mxu0
        %v4504 = vadd.f32 0.0, %v4503
        %v4505 = vpop.f32.mrf.mxu0
        %4506 = vmatprep.mubr.bf16.mxu0 0
        %4507 = vmatmul.mubr.bf16.gmra.mxu0 %v4437
        %v4508 = vpop.f32.mrf.mxu0
        %v4509 = vadd.f32 0.0, %v4508
        %v4510 = vpop.f32.mrf.mxu0
        %v4511 = vpop.f32.mrf.mxu0
        %v4512 = vadd.f32 0.0, %v4511
        %v4513 = vpop.f32.mrf.mxu0
        %4514 = vmatprep.mubr.bf16.mxu0 0
        %4515 = vmatmul.mubr.bf16.gmra.mxu0 %v4440
        %v4516 = vpop.f32.mrf.mxu0
        %v4517 = vadd.f32 0.0, %v4516
        %v4518 = vpop.f32.mrf.mxu0
        %v4519 = vpop.f32.mrf.mxu0
        %v4520 = vpop.f32.mrf.mxu0
        %4521 = vdwg.mxu0
        %v4522 = vadd.f32 %v4307, %v4477
        %v4523 = vadd.f32 %v4308, %v4480
        %v4524 = vadd.f32 %v4309, %v4485
        %v4525 = vadd.f32 %v4310, %v4488
        %v4526 = vadd.f32 %v4311, %v4493
        %v4527 = vadd.f32 %v4312, %v4496
        %v4528 = vadd.f32 %v4313, %v4501
        %v4529 = vadd.f32 %v4314, %v4504
        %v4530 = vadd.f32 %v4315, %v4509
        %v4531 = vadd.f32 %v4316, %v4512
        %v4532 = vadd.f32 %v4317, %v4517
        %v4533 = vld [vmem:[#allocation2 + $0x10] sm:$0xe]
        %s4534 = scalar_lea.vmem [#allocation8], 224
        %v4535 = vld [vmem:[%s4534] sm:$0xf]
        %v4536 = vld [vmem:[%s4534 + $0x4] sm:$0xf]
        %v4537 = vld [vmem:[%s4534 + $0x8] sm:$0xf]
        %v4538 = vld [vmem:[%s4534 + $0xc] sm:$0xf]
        %v4540 = vunpack.c.l.b16 %v4533
        %v4541 = vpack.c.b16 %v4348, %v4540
        %v4542 = vrot.slane %v4541, 1
        %v4543 = vrot.slane %v4360, 1
        %v4544 = vsel %vm2515, %v4542, %v4543
        %v4545 = vrot.slane %v4361, 1
        %v4546 = vsel %vm2515, %v4543, %v4545
        %v4547 = vrot.slane %v4362, 1
        %v4548 = vsel %vm2515, %v4545, %v4547
        %v4549 = vrot.slane %v4363, 1
        %v4550 = vsel %vm2515, %v4547, %v4549
        %v4551 = vrot.slane %v4364, 1
        %v4552 = vsel %vm2515, %v4549, %v4551
        %v4557 = vunpack.c.l.b16 %v4535
        %v4558 = vunpack.c.l.b16 %v4536
        %v4559 = vunpack.c.l.b16 %v4537
        %v4560 = vunpack.c.l.b16 %v4538
        %v4561 = vpack.c.b16 %v4558, %v4557
        %v4562 = vpack.c.b16 %v4560, %v4559
        %v4566 = vsel %vm2301, %v4544, 0
        %v4569 = vsel %vm2301, %v4546, 0
        %v4572 = vsel %vm2301, %v4548, 0
        %v4575 = vsel %vm2301, %v4550, 0
        %v4578 = vsel %vm2301, %v4552, 0
        %v4581 = vsel %vm2301, %v4551, 0
        %4583 = vmatprep.subr.bf16.mxu0 0
        %4584 = vmatpush1.bf16.msra.mxu0 0
        %4585 = vmatprep.subr.bf16.mxu0 0
        %4586 = vmatpush1.bf16.msra.mxu0 0
        %4587 = vmatprep.subr.bf16.mxu0 0
        %4588 = vmatpush1.bf16.msra.mxu0 0
        %4589 = vmatprep.subr.bf16.mxu0 0
        %4590 = vmatpush1.bf16.msra.mxu0 0
        %4591 = vmatprep.subr.bf16.mxu0 0
        %4592 = vmatpush1.bf16.msra.mxu0 0
        %4593 = vmatprep.subr.bf16.mxu0 0
        %4594 = vmatpush1.bf16.msra.mxu0 0
        %4595 = vmatprep.subr.bf16.mxu0 0
        %4596 = vmatpush1.bf16.msra.mxu0 %v4562
        %4597 = vmatprep.subr.bf16.mxu0 0
        %4598 = vmatpush1.bf16.msra.mxu0 %v4561
        %4599 = vmatprep.subr.bf16.mxu0 0
        %4600 = vmatpush2.bf16.msra.mxu0 0
        %4601 = vmatprep.subr.bf16.mxu0 0
        %4602 = vmatpush2.bf16.msra.mxu0 0
        %4603 = vmatprep.subr.bf16.mxu0 0
        %4604 = vmatpush2.bf16.msra.mxu0 0
        %4605 = vmatprep.subr.bf16.mxu0 0
        %4606 = vmatpush2.bf16.msra.mxu0 0
        %4607 = vmatprep.subr.bf16.mxu0 0
        %4608 = vmatpush2.bf16.msra.mxu0 0
        %4609 = vmatprep.subr.bf16.mxu0 0
        %4610 = vmatpush2.bf16.msra.mxu0 0
        %4611 = vmatprep.subr.bf16.mxu0 0
        %4612 = vmatpush2.bf16.msra.mxu0 0
        %4613 = vmatprep.subr.bf16.mxu0 0
        %4614 = vmatpush2.bf16.msra.mxu0 0
        %4615 = vmatprep.mubr.bf16.mxu0 0
        %4616 = vmatmul.mubr.bf16.gmra.mxu0 %v4566
        %v4617 = vpop.f32.mrf.mxu0
        %v4618 = vadd.f32 0.0, %v4617
        %v4619 = vpop.f32.mrf.mxu0
        %v4620 = vpop.f32.mrf.mxu0
        %v4621 = vadd.f32 0.0, %v4620
        %v4622 = vpop.f32.mrf.mxu0
        %4623 = vmatprep.mubr.bf16.mxu0 0
        %4624 = vmatmul.mubr.bf16.gmra.mxu0 %v4569
        %v4625 = vpop.f32.mrf.mxu0
        %v4626 = vadd.f32 0.0, %v4625
        %v4627 = vpop.f32.mrf.mxu0
        %v4628 = vpop.f32.mrf.mxu0
        %v4629 = vadd.f32 0.0, %v4628
        %v4630 = vpop.f32.mrf.mxu0
        %4631 = vmatprep.mubr.bf16.mxu0 0
        %4632 = vmatmul.mubr.bf16.gmra.mxu0 %v4572
        %v4633 = vpop.f32.mrf.mxu0
        %v4634 = vadd.f32 0.0, %v4633
        %v4635 = vpop.f32.mrf.mxu0
        %v4636 = vpop.f32.mrf.mxu0
        %v4637 = vadd.f32 0.0, %v4636
        %v4638 = vpop.f32.mrf.mxu0
        %4639 = vmatprep.mubr.bf16.mxu0 0
        %4640 = vmatmul.mubr.bf16.gmra.mxu0 %v4575
        %v4641 = vpop.f32.mrf.mxu0
        %v4642 = vadd.f32 0.0, %v4641
        %v4643 = vpop.f32.mrf.mxu0
        %v4644 = vpop.f32.mrf.mxu0
        %v4645 = vadd.f32 0.0, %v4644
        %v4646 = vpop.f32.mrf.mxu0
        %4647 = vmatprep.mubr.bf16.mxu0 0
        %4648 = vmatmul.mubr.bf16.gmra.mxu0 %v4578
        %v4649 = vpop.f32.mrf.mxu0
        %v4650 = vadd.f32 0.0, %v4649
        %v4651 = vpop.f32.mrf.mxu0
        %v4652 = vpop.f32.mrf.mxu0
        %v4653 = vadd.f32 0.0, %v4652
        %v4654 = vpop.f32.mrf.mxu0
        %4655 = vmatprep.mubr.bf16.mxu0 0
        %4656 = vmatmul.mubr.bf16.gmra.mxu0 %v4581
        %v4657 = vpop.f32.mrf.mxu0
        %v4658 = vadd.f32 0.0, %v4657
        %v4659 = vpop.f32.mrf.mxu0
        %v4660 = vpop.f32.mrf.mxu0
        %v4661 = vpop.f32.mrf.mxu0
        %4662 = vdwg.mxu0
        %v4663 = vadd.f32 %v4522, %v4618
        %v4664 = vadd.f32 %v4523, %v4621
        %v4665 = vadd.f32 %v4524, %v4626
        %v4666 = vadd.f32 %v4525, %v4629
        %v4667 = vadd.f32 %v4526, %v4634
        %v4668 = vadd.f32 %v4527, %v4637
        %v4669 = vadd.f32 %v4528, %v4642
        %v4670 = vadd.f32 %v4529, %v4645
        %v4671 = vadd.f32 %v4530, %v4650
        %v4672 = vadd.f32 %v4531, %v4653
        %v4673 = vadd.f32 %v4532, %v4658
        %v4674 = vld [vmem:[#allocation2 + $0x14] sm:$0xc]
        %v4675 = vld [vmem:[#allocation2 + $0x18] sm:$0xf]
        %v4676 = vld [vmem:[#allocation2 + $0x1c] sm:$0xf]
        %v4677 = vld [vmem:[#allocation2 + $0x20] sm:$0xf]
        %v4678 = vld [vmem:[#allocation2 + $0x24] sm:$0xf]
        %v4679 = vld [vmem:[#allocation2 + $0x28] sm:$0xf]
        %v4680 = vld [vmem:[#allocation2 + $0x2c] sm:$0xf]
        %v4681 = vld [vmem:[#allocation2 + $0x30] sm:$0xf]
        %v4682 = vld [vmem:[#allocation2 + $0x34] sm:$0xf]
        %v4683 = vld [vmem:[#allocation2 + $0x38] sm:$0xf]
        %v4684 = vld [vmem:[#allocation2 + $0x3c] sm:$0xf]
        %v4685 = vld [vmem:[#allocation2 + $0x40] sm:$0x7]
        %s4686 = scalar_lea.vmem [#allocation8], 240
        %v4687 = vld [vmem:[%s4686] sm:$0xf]
        %v4688 = vld [vmem:[%s4686 + $0x4] sm:$0xf]
        %v4689 = vld [vmem:[%s4686 + $0x8] sm:$0xf]
        %v4690 = vld [vmem:[%s4686 + $0xc] sm:$0xf]
        %v4703 = vunpack.c.l.b16 %v4674
        %v4704 = vunpack.c.l.b16 %v4675
        %v4705 = vunpack.c.l.b16 %v4676
        %v4706 = vunpack.c.l.b16 %v4677
        %v4707 = vunpack.c.l.b16 %v4678
        %v4708 = vunpack.c.l.b16 %v4679
        %v4709 = vunpack.c.l.b16 %v4680
        %v4710 = vunpack.c.l.b16 %v4681
        %v4711 = vunpack.c.l.b16 %v4682
        %v4712 = vunpack.c.l.b16 %v4683
        %v4713 = vunpack.c.l.b16 %v4684
        %v4714 = vunpack.c.l.b16 %v4685
        %v4715 = vpack.c.b16 %v4704, %v4703
        %v4716 = vpack.c.b16 %v4706, %v4705
        %v4717 = vpack.c.b16 %v4708, %v4707
        %v4718 = vpack.c.b16 %v4710, %v4709
        %v4719 = vpack.c.b16 %v4712, %v4711
        %v4720 = vpack.c.b16 %v4714, %v4713
        %v4722 = vshrl.u32 %v4715, 16
        %v4724 = vrot.slane %v4722, 2
        %v4725 = vshll.u32 %v4715, 16
        %v4727 = vrot.slane %v4725, 3
        %v4728 = vor.u32 %v4724, %v4727
        %v4730 = vshrl.u32 %v4716, 16
        %v4732 = vrot.slane %v4730, 2
        %v4733 = vshll.u32 %v4716, 16
        %v4735 = vrot.slane %v4733, 3
        %v4736 = vor.u32 %v4732, %v4735
        %v4737 = vsel %vm1181, %v4728, %v4736
        %v4739 = vshrl.u32 %v4717, 16
        %v4741 = vrot.slane %v4739, 2
        %v4742 = vshll.u32 %v4717, 16
        %v4744 = vrot.slane %v4742, 3
        %v4745 = vor.u32 %v4741, %v4744
        %v4746 = vsel %vm1181, %v4736, %v4745
        %v4748 = vshrl.u32 %v4718, 16
        %v4750 = vrot.slane %v4748, 2
        %v4751 = vshll.u32 %v4718, 16
        %v4753 = vrot.slane %v4751, 3
        %v4754 = vor.u32 %v4750, %v4753
        %v4755 = vsel %vm1181, %v4745, %v4754
        %v4757 = vshrl.u32 %v4719, 16
        %v4759 = vrot.slane %v4757, 2
        %v4760 = vshll.u32 %v4719, 16
        %v4762 = vrot.slane %v4760, 3
        %v4763 = vor.u32 %v4759, %v4762
        %v4764 = vsel %vm1181, %v4754, %v4763
        %v4766 = vshrl.u32 %v4720, 16
        %v4768 = vrot.slane %v4766, 2
        %v4769 = vshll.u32 %v4720, 16
        %v4771 = vrot.slane %v4769, 3
        %v4772 = vor.u32 %v4768, %v4771
        %v4773 = vsel %vm1181, %v4763, %v4772
        %v4778 = vunpack.c.l.b16 %v4687
        %v4779 = vunpack.c.l.b16 %v4688
        %v4780 = vunpack.c.l.b16 %v4689
        %v4781 = vunpack.c.l.b16 %v4690
        %v4782 = vpack.c.b16 %v4779, %v4778
        %v4783 = vpack.c.b16 %v4781, %v4780
        %v4787 = vsel %vm2301, %v4737, 0
        %v4790 = vsel %vm2301, %v4746, 0
        %v4793 = vsel %vm2301, %v4755, 0
        %v4796 = vsel %vm2301, %v4764, 0
        %v4799 = vsel %vm2301, %v4773, 0
        %v4802 = vsel %vm2301, %v4772, 0
        %4804 = vmatprep.subr.bf16.mxu0 0
        %4805 = vmatpush1.bf16.msra.mxu0 0
        %4806 = vmatprep.subr.bf16.mxu0 0
        %4807 = vmatpush1.bf16.msra.mxu0 0
        %4808 = vmatprep.subr.bf16.mxu0 0
        %4809 = vmatpush1.bf16.msra.mxu0 0
        %4810 = vmatprep.subr.bf16.mxu0 0
        %4811 = vmatpush1.bf16.msra.mxu0 0
        %4812 = vmatprep.subr.bf16.mxu0 0
        %4813 = vmatpush1.bf16.msra.mxu0 0
        %4814 = vmatprep.subr.bf16.mxu0 0
        %4815 = vmatpush1.bf16.msra.mxu0 0
        %4816 = vmatprep.subr.bf16.mxu0 0
        %4817 = vmatpush1.bf16.msra.mxu0 %v4783
        %4818 = vmatprep.subr.bf16.mxu0 0
        %4819 = vmatpush1.bf16.msra.mxu0 %v4782
        %4820 = vmatprep.subr.bf16.mxu0 0
        %4821 = vmatpush2.bf16.msra.mxu0 0
        %4822 = vmatprep.subr.bf16.mxu0 0
        %4823 = vmatpush2.bf16.msra.mxu0 0
        %4824 = vmatprep.subr.bf16.mxu0 0
        %4825 = vmatpush2.bf16.msra.mxu0 0
        %4826 = vmatprep.subr.bf16.mxu0 0
        %4827 = vmatpush2.bf16.msra.mxu0 0
        %4828 = vmatprep.subr.bf16.mxu0 0
        %4829 = vmatpush2.bf16.msra.mxu0 0
        %4830 = vmatprep.subr.bf16.mxu0 0
        %4831 = vmatpush2.bf16.msra.mxu0 0
        %4832 = vmatprep.subr.bf16.mxu0 0
        %4833 = vmatpush2.bf16.msra.mxu0 0
        %4834 = vmatprep.subr.bf16.mxu0 0
        %4835 = vmatpush2.bf16.msra.mxu0 0
        %4836 = vmatprep.mubr.bf16.mxu0 0
        %4837 = vmatmul.mubr.bf16.gmra.mxu0 %v4787
        %v4838 = vpop.f32.mrf.mxu0
        %v4839 = vadd.f32 0.0, %v4838
        %v4840 = vpop.f32.mrf.mxu0
        %v4841 = vpop.f32.mrf.mxu0
        %v4842 = vadd.f32 0.0, %v4841
        %v4843 = vpop.f32.mrf.mxu0
        %4844 = vmatprep.mubr.bf16.mxu0 0
        %4845 = vmatmul.mubr.bf16.gmra.mxu0 %v4790
        %v4846 = vpop.f32.mrf.mxu0
        %v4847 = vadd.f32 0.0, %v4846
        %v4848 = vpop.f32.mrf.mxu0
        %v4849 = vpop.f32.mrf.mxu0
        %v4850 = vadd.f32 0.0, %v4849
        %v4851 = vpop.f32.mrf.mxu0
        %4852 = vmatprep.mubr.bf16.mxu0 0
        %4853 = vmatmul.mubr.bf16.gmra.mxu0 %v4793
        %v4854 = vpop.f32.mrf.mxu0
        %v4855 = vadd.f32 0.0, %v4854
        %v4856 = vpop.f32.mrf.mxu0
        %v4857 = vpop.f32.mrf.mxu0
        %v4858 = vadd.f32 0.0, %v4857
        %v4859 = vpop.f32.mrf.mxu0
        %4860 = vmatprep.mubr.bf16.mxu0 0
        %4861 = vmatmul.mubr.bf16.gmra.mxu0 %v4796
        %v4862 = vpop.f32.mrf.mxu0
        %v4863 = vadd.f32 0.0, %v4862
        %v4864 = vpop.f32.mrf.mxu0
        %v4865 = vpop.f32.mrf.mxu0
        %v4866 = vadd.f32 0.0, %v4865
        %v4867 = vpop.f32.mrf.mxu0
        %4868 = vmatprep.mubr.bf16.mxu0 0
        %4869 = vmatmul.mubr.bf16.gmra.mxu0 %v4799
        %v4870 = vpop.f32.mrf.mxu0
        %v4871 = vadd.f32 0.0, %v4870
        %v4872 = vpop.f32.mrf.mxu0
        %v4873 = vpop.f32.mrf.mxu0
        %v4874 = vadd.f32 0.0, %v4873
        %v4875 = vpop.f32.mrf.mxu0
        %4876 = vmatprep.mubr.bf16.mxu0 0
        %4877 = vmatmul.mubr.bf16.gmra.mxu0 %v4802
        %v4878 = vpop.f32.mrf.mxu0
        %v4879 = vadd.f32 0.0, %v4878
        %v4880 = vpop.f32.mrf.mxu0
        %v4881 = vpop.f32.mrf.mxu0
        %v4882 = vpop.f32.mrf.mxu0
        %4883 = vdwg.mxu0
        %v4884 = vadd.f32 %v4663, %v4839
        %v4885 = vadd.f32 %v4664, %v4842
        %v4886 = vadd.f32 %v4665, %v4847
        %v4887 = vadd.f32 %v4666, %v4850
        %v4888 = vadd.f32 %v4667, %v4855
        %v4889 = vadd.f32 %v4668, %v4858
        %v4890 = vadd.f32 %v4669, %v4863
        %v4891 = vadd.f32 %v4670, %v4866
        %v4892 = vadd.f32 %v4671, %v4871
        %v4893 = vadd.f32 %v4672, %v4874
        %v4894 = vadd.f32 %v4673, %v4879
        %v4895 = vld [vmem:[#allocation2 + $0x14] sm:$0x8]
        %s4896 = scalar_lea.vmem [#allocation8], 256
        %v4897 = vld [vmem:[%s4896] sm:$0xf]
        %v4898 = vld [vmem:[%s4896 + $0x4] sm:$0xf]
        %v4899 = vld [vmem:[%s4896 + $0x8] sm:$0xf]
        %v4900 = vld [vmem:[%s4896 + $0xc] sm:$0xf]
        %v4902 = vunpack.c.l.b16 %v4895
        %v4903 = vpack.c.b16 %v4704, %v4902
        %v4904 = vrot.slane %v4903, 3
        %v4905 = vrot.slane %v4716, 3
        %v4906 = vsel %vm914, %v4904, %v4905
        %v4907 = vrot.slane %v4717, 3
        %v4908 = vsel %vm914, %v4905, %v4907
        %v4909 = vrot.slane %v4718, 3
        %v4910 = vsel %vm914, %v4907, %v4909
        %v4911 = vrot.slane %v4719, 3
        %v4912 = vsel %vm914, %v4909, %v4911
        %v4913 = vrot.slane %v4720, 3
        %v4914 = vsel %vm914, %v4911, %v4913
        %v4919 = vunpack.c.l.b16 %v4897
        %v4920 = vunpack.c.l.b16 %v4898
        %v4921 = vunpack.c.l.b16 %v4899
        %v4922 = vunpack.c.l.b16 %v4900
        %v4923 = vpack.c.b16 %v4920, %v4919
        %v4924 = vpack.c.b16 %v4922, %v4921
        %v4928 = vsel %vm2301, %v4906, 0
        %v4931 = vsel %vm2301, %v4908, 0
        %v4934 = vsel %vm2301, %v4910, 0
        %v4937 = vsel %vm2301, %v4912, 0
        %v4940 = vsel %vm2301, %v4914, 0
        %v4943 = vsel %vm2301, %v4913, 0
        %4945 = vmatprep.subr.bf16.mxu0 0
        %4946 = vmatpush1.bf16.msra.mxu0 0
        %4947 = vmatprep.subr.bf16.mxu0 0
        %4948 = vmatpush1.bf16.msra.mxu0 0
        %4949 = vmatprep.subr.bf16.mxu0 0
        %4950 = vmatpush1.bf16.msra.mxu0 0
        %4951 = vmatprep.subr.bf16.mxu0 0
        %4952 = vmatpush1.bf16.msra.mxu0 0
        %4953 = vmatprep.subr.bf16.mxu0 0
        %4954 = vmatpush1.bf16.msra.mxu0 0
        %4955 = vmatprep.subr.bf16.mxu0 0
        %4956 = vmatpush1.bf16.msra.mxu0 0
        %4957 = vmatprep.subr.bf16.mxu0 0
        %4958 = vmatpush1.bf16.msra.mxu0 %v4924
        %4959 = vmatprep.subr.bf16.mxu0 0
        %4960 = vmatpush1.bf16.msra.mxu0 %v4923
        %4961 = vmatprep.subr.bf16.mxu0 0
        %4962 = vmatpush2.bf16.msra.mxu0 0
        %4963 = vmatprep.subr.bf16.mxu0 0
        %4964 = vmatpush2.bf16.msra.mxu0 0
        %4965 = vmatprep.subr.bf16.mxu0 0
        %4966 = vmatpush2.bf16.msra.mxu0 0
        %4967 = vmatprep.subr.bf16.mxu0 0
        %4968 = vmatpush2.bf16.msra.mxu0 0
        %4969 = vmatprep.subr.bf16.mxu0 0
        %4970 = vmatpush2.bf16.msra.mxu0 0
        %4971 = vmatprep.subr.bf16.mxu0 0
        %4972 = vmatpush2.bf16.msra.mxu0 0
        %4973 = vmatprep.subr.bf16.mxu0 0
        %4974 = vmatpush2.bf16.msra.mxu0 0
        %4975 = vmatprep.subr.bf16.mxu0 0
        %4976 = vmatpush2.bf16.msra.mxu0 0
        %4977 = vmatprep.mubr.bf16.mxu0 0
        %4978 = vmatmul.mubr.bf16.gmra.mxu0 %v4928
        %v4979 = vpop.f32.mrf.mxu0
        %v4980 = vadd.f32 0.0, %v4979
        %v4981 = vpop.f32.mrf.mxu0
        %v4982 = vpop.f32.mrf.mxu0
        %v4983 = vadd.f32 0.0, %v4982
        %v4984 = vpop.f32.mrf.mxu0
        %4985 = vmatprep.mubr.bf16.mxu0 0
        %4986 = vmatmul.mubr.bf16.gmra.mxu0 %v4931
        %v4987 = vpop.f32.mrf.mxu0
        %v4988 = vadd.f32 0.0, %v4987
        %v4989 = vpop.f32.mrf.mxu0
        %v4990 = vpop.f32.mrf.mxu0
        %v4991 = vadd.f32 0.0, %v4990
        %v4992 = vpop.f32.mrf.mxu0
        %4993 = vmatprep.mubr.bf16.mxu0 0
        %4994 = vmatmul.mubr.bf16.gmra.mxu0 %v4934
        %v4995 = vpop.f32.mrf.mxu0
        %v4996 = vadd.f32 0.0, %v4995
        %v4997 = vpop.f32.mrf.mxu0
        %v4998 = vpop.f32.mrf.mxu0
        %v4999 = vadd.f32 0.0, %v4998
        %v5000 = vpop.f32.mrf.mxu0
        %5001 = vmatprep.mubr.bf16.mxu0 0
        %5002 = vmatmul.mubr.bf16.gmra.mxu0 %v4937
        %v5003 = vpop.f32.mrf.mxu0
        %v5004 = vadd.f32 0.0, %v5003
        %v5005 = vpop.f32.mrf.mxu0
        %v5006 = vpop.f32.mrf.mxu0
        %v5007 = vadd.f32 0.0, %v5006
        %v5008 = vpop.f32.mrf.mxu0
        %5009 = vmatprep.mubr.bf16.mxu0 0
        %5010 = vmatmul.mubr.bf16.gmra.mxu0 %v4940
        %v5011 = vpop.f32.mrf.mxu0
        %v5012 = vadd.f32 0.0, %v5011
        %v5013 = vpop.f32.mrf.mxu0
        %v5014 = vpop.f32.mrf.mxu0
        %v5015 = vadd.f32 0.0, %v5014
        %v5016 = vpop.f32.mrf.mxu0
        %5017 = vmatprep.mubr.bf16.mxu0 0
        %5018 = vmatmul.mubr.bf16.gmra.mxu0 %v4943
        %v5019 = vpop.f32.mrf.mxu0
        %v5020 = vadd.f32 0.0, %v5019
        %v5021 = vpop.f32.mrf.mxu0
        %v5022 = vpop.f32.mrf.mxu0
        %v5023 = vpop.f32.mrf.mxu0
        %5024 = vdwg.mxu0
        %v5025 = vadd.f32 %v4884, %v4980
        %v5026 = vadd.f32 %v4885, %v4983
        %v5027 = vadd.f32 %v4886, %v4988
        %v5028 = vadd.f32 %v4887, %v4991
        %v5029 = vadd.f32 %v4888, %v4996
        %v5030 = vadd.f32 %v4889, %v4999
        %v5031 = vadd.f32 %v4890, %v5004
        %v5032 = vadd.f32 %v4891, %v5007
        %v5033 = vadd.f32 %v4892, %v5012
        %v5034 = vadd.f32 %v4893, %v5015
        %v5035 = vadd.f32 %v4894, %v5020
        %v5036 = vld [vmem:[#allocation2 + $0x40] sm:$0xf]
        %s5037 = scalar_lea.vmem [#allocation8], 272
        %v5038 = vld [vmem:[%s5037] sm:$0xf]
        %v5039 = vld [vmem:[%s5037 + $0x4] sm:$0xf]
        %v5040 = vld [vmem:[%s5037 + $0x8] sm:$0xf]
        %v5041 = vld [vmem:[%s5037 + $0xc] sm:$0xf]
        %v5043 = vunpack.c.l.b16 %v5036
        %v5044 = vpack.c.b16 %v5043, %v4713
        %v5046 = vshrl.u32 %v4903, 16
        %v5048 = vrot.slane %v5046, 3
        %v5049 = vshll.u32 %v4903, 16
        %v5051 = vrot.slane %v5049, 4
        %v5052 = vor.u32 %v5048, %v5051
        %v5053 = vrot.slane %v4730, 3
        %v5054 = vrot.slane %v4733, 4
        %v5055 = vor.u32 %v5053, %v5054
        %v5056 = vsel %vm426, %v5052, %v5055
        %v5057 = vrot.slane %v4739, 3
        %v5058 = vrot.slane %v4742, 4
        %v5059 = vor.u32 %v5057, %v5058
        %v5060 = vsel %vm426, %v5055, %v5059
        %v5061 = vrot.slane %v4748, 3
        %v5062 = vrot.slane %v4751, 4
        %v5063 = vor.u32 %v5061, %v5062
        %v5064 = vsel %vm426, %v5059, %v5063
        %v5065 = vrot.slane %v4757, 3
        %v5066 = vrot.slane %v4760, 4
        %v5067 = vor.u32 %v5065, %v5066
        %v5068 = vsel %vm426, %v5063, %v5067
        %v5070 = vshrl.u32 %v5044, 16
        %v5072 = vrot.slane %v5070, 3
        %v5073 = vshll.u32 %v5044, 16
        %v5075 = vrot.slane %v5073, 4
        %v5076 = vor.u32 %v5072, %v5075
        %v5077 = vsel %vm426, %v5067, %v5076
        %v5082 = vunpack.c.l.b16 %v5038
        %v5083 = vunpack.c.l.b16 %v5039
        %v5084 = vunpack.c.l.b16 %v5040
        %v5085 = vunpack.c.l.b16 %v5041
        %v5086 = vpack.c.b16 %v5083, %v5082
        %v5087 = vpack.c.b16 %v5085, %v5084
        %v5091 = vsel %vm2301, %v5056, 0
        %v5094 = vsel %vm2301, %v5060, 0
        %v5097 = vsel %vm2301, %v5064, 0
        %v5100 = vsel %vm2301, %v5068, 0
        %v5103 = vsel %vm2301, %v5077, 0
        %v5106 = vsel %vm2301, %v5076, 0
        %5108 = vmatprep.subr.bf16.mxu0 0
        %5109 = vmatpush1.bf16.msra.mxu0 0
        %5110 = vmatprep.subr.bf16.mxu0 0
        %5111 = vmatpush1.bf16.msra.mxu0 0
        %5112 = vmatprep.subr.bf16.mxu0 0
        %5113 = vmatpush1.bf16.msra.mxu0 0
        %5114 = vmatprep.subr.bf16.mxu0 0
        %5115 = vmatpush1.bf16.msra.mxu0 0
        %5116 = vmatprep.subr.bf16.mxu0 0
        %5117 = vmatpush1.bf16.msra.mxu0 0
        %5118 = vmatprep.subr.bf16.mxu0 0
        %5119 = vmatpush1.bf16.msra.mxu0 0
        %5120 = vmatprep.subr.bf16.mxu0 0
        %5121 = vmatpush1.bf16.msra.mxu0 %v5087
        %5122 = vmatprep.subr.bf16.mxu0 0
        %5123 = vmatpush1.bf16.msra.mxu0 %v5086
        %5124 = vmatprep.subr.bf16.mxu0 0
        %5125 = vmatpush2.bf16.msra.mxu0 0
        %5126 = vmatprep.subr.bf16.mxu0 0
        %5127 = vmatpush2.bf16.msra.mxu0 0
        %5128 = vmatprep.subr.bf16.mxu0 0
        %5129 = vmatpush2.bf16.msra.mxu0 0
        %5130 = vmatprep.subr.bf16.mxu0 0
        %5131 = vmatpush2.bf16.msra.mxu0 0
        %5132 = vmatprep.subr.bf16.mxu0 0
        %5133 = vmatpush2.bf16.msra.mxu0 0
        %5134 = vmatprep.subr.bf16.mxu0 0
        %5135 = vmatpush2.bf16.msra.mxu0 0
        %5136 = vmatprep.subr.bf16.mxu0 0
        %5137 = vmatpush2.bf16.msra.mxu0 0
        %5138 = vmatprep.subr.bf16.mxu0 0
        %5139 = vmatpush2.bf16.msra.mxu0 0
        %5140 = vmatprep.mubr.bf16.mxu0 0
        %5141 = vmatmul.mubr.bf16.gmra.mxu0 %v5091
        %v5142 = vpop.f32.mrf.mxu0
        %v5143 = vadd.f32 0.0, %v5142
        %v5144 = vpop.f32.mrf.mxu0
        %v5145 = vpop.f32.mrf.mxu0
        %v5146 = vadd.f32 0.0, %v5145
        %v5147 = vpop.f32.mrf.mxu0
        %5148 = vmatprep.mubr.bf16.mxu0 0
        %5149 = vmatmul.mubr.bf16.gmra.mxu0 %v5094
        %v5150 = vpop.f32.mrf.mxu0
        %v5151 = vadd.f32 0.0, %v5150
        %v5152 = vpop.f32.mrf.mxu0
        %v5153 = vpop.f32.mrf.mxu0
        %v5154 = vadd.f32 0.0, %v5153
        %v5155 = vpop.f32.mrf.mxu0
        %5156 = vmatprep.mubr.bf16.mxu0 0
        %5157 = vmatmul.mubr.bf16.gmra.mxu0 %v5097
        %v5158 = vpop.f32.mrf.mxu0
        %v5159 = vadd.f32 0.0, %v5158
        %v5160 = vpop.f32.mrf.mxu0
        %v5161 = vpop.f32.mrf.mxu0
        %v5162 = vadd.f32 0.0, %v5161
        %v5163 = vpop.f32.mrf.mxu0
        %5164 = vmatprep.mubr.bf16.mxu0 0
        %5165 = vmatmul.mubr.bf16.gmra.mxu0 %v5100
        %v5166 = vpop.f32.mrf.mxu0
        %v5167 = vadd.f32 0.0, %v5166
        %v5168 = vpop.f32.mrf.mxu0
        %v5169 = vpop.f32.mrf.mxu0
        %v5170 = vadd.f32 0.0, %v5169
        %v5171 = vpop.f32.mrf.mxu0
        %5172 = vmatprep.mubr.bf16.mxu0 0
        %5173 = vmatmul.mubr.bf16.gmra.mxu0 %v5103
        %v5174 = vpop.f32.mrf.mxu0
        %v5175 = vadd.f32 0.0, %v5174
        %v5176 = vpop.f32.mrf.mxu0
        %v5177 = vpop.f32.mrf.mxu0
        %v5178 = vadd.f32 0.0, %v5177
        %v5179 = vpop.f32.mrf.mxu0
        %5180 = vmatprep.mubr.bf16.mxu0 0
        %5181 = vmatmul.mubr.bf16.gmra.mxu0 %v5106
        %v5182 = vpop.f32.mrf.mxu0
        %v5183 = vadd.f32 0.0, %v5182
        %v5184 = vpop.f32.mrf.mxu0
        %v5185 = vpop.f32.mrf.mxu0
        %v5186 = vpop.f32.mrf.mxu0
        %5187 = vdwg.mxu0
        %v5188 = vadd.f32 %v5025, %v5143
        %v5189 = vadd.f32 %v5026, %v5146
        %v5190 = vadd.f32 %v5027, %v5151
        %v5191 = vadd.f32 %v5028, %v5154
        %v5192 = vadd.f32 %v5029, %v5159
        %v5193 = vadd.f32 %v5030, %v5162
        %v5194 = vadd.f32 %v5031, %v5167
        %v5195 = vadd.f32 %v5032, %v5170
        %v5196 = vadd.f32 %v5033, %v5175
        %v5197 = vadd.f32 %v5034, %v5178
        %v5198 = vadd.f32 %v5035, %v5183
        %s5199 = scalar_lea.vmem [#allocation8], 288
        %v5200 = vld [vmem:[%s5199] sm:$0xf]
        %v5201 = vld [vmem:[%s5199 + $0x4] sm:$0xf]
        %v5202 = vld [vmem:[%s5199 + $0x8] sm:$0xf]
        %v5203 = vld [vmem:[%s5199 + $0xc] sm:$0xf]
        %v5204 = vpack.c.b16 %v4705, %v4704
        %v5205 = vpack.c.b16 %v4707, %v4706
        %v5206 = vpack.c.b16 %v4709, %v4708
        %v5207 = vpack.c.b16 %v4711, %v4710
        %v5208 = vpack.c.b16 %v4713, %v4712
        %v5209 = vpack.c.b16 %v5043, %v5043
        %v5214 = vunpack.c.l.b16 %v5200
        %v5215 = vunpack.c.l.b16 %v5201
        %v5216 = vunpack.c.l.b16 %v5202
        %v5217 = vunpack.c.l.b16 %v5203
        %v5218 = vpack.c.b16 %v5215, %v5214
        %v5219 = vpack.c.b16 %v5217, %v5216
        %v5223 = vsel %vm2301, %v5204, 0
        %v5226 = vsel %vm2301, %v5205, 0
        %v5229 = vsel %vm2301, %v5206, 0
        %v5232 = vsel %vm2301, %v5207, 0
        %v5235 = vsel %vm2301, %v5208, 0
        %v5238 = vsel %vm2301, %v5209, 0
        %5240 = vmatprep.subr.bf16.mxu0 0
        %5241 = vmatpush1.bf16.msra.mxu0 0
        %5242 = vmatprep.subr.bf16.mxu0 0
        %5243 = vmatpush1.bf16.msra.mxu0 0
        %5244 = vmatprep.subr.bf16.mxu0 0
        %5245 = vmatpush1.bf16.msra.mxu0 0
        %5246 = vmatprep.subr.bf16.mxu0 0
        %5247 = vmatpush1.bf16.msra.mxu0 0
        %5248 = vmatprep.subr.bf16.mxu0 0
        %5249 = vmatpush1.bf16.msra.mxu0 0
        %5250 = vmatprep.subr.bf16.mxu0 0
        %5251 = vmatpush1.bf16.msra.mxu0 0
        %5252 = vmatprep.subr.bf16.mxu0 0
        %5253 = vmatpush1.bf16.msra.mxu0 %v5219
        %5254 = vmatprep.subr.bf16.mxu0 0
        %5255 = vmatpush1.bf16.msra.mxu0 %v5218
        %5256 = vmatprep.subr.bf16.mxu0 0
        %5257 = vmatpush2.bf16.msra.mxu0 0
        %5258 = vmatprep.subr.bf16.mxu0 0
        %5259 = vmatpush2.bf16.msra.mxu0 0
        %5260 = vmatprep.subr.bf16.mxu0 0
        %5261 = vmatpush2.bf16.msra.mxu0 0
        %5262 = vmatprep.subr.bf16.mxu0 0
        %5263 = vmatpush2.bf16.msra.mxu0 0
        %5264 = vmatprep.subr.bf16.mxu0 0
        %5265 = vmatpush2.bf16.msra.mxu0 0
        %5266 = vmatprep.subr.bf16.mxu0 0
        %5267 = vmatpush2.bf16.msra.mxu0 0
        %5268 = vmatprep.subr.bf16.mxu0 0
        %5269 = vmatpush2.bf16.msra.mxu0 0
        %5270 = vmatprep.subr.bf16.mxu0 0
        %5271 = vmatpush2.bf16.msra.mxu0 0
        %5272 = vmatprep.mubr.bf16.mxu0 0
        %5273 = vmatmul.mubr.bf16.gmra.mxu0 %v5223
        %v5274 = vpop.f32.mrf.mxu0
        %v5275 = vadd.f32 0.0, %v5274
        %v5276 = vpop.f32.mrf.mxu0
        %v5277 = vpop.f32.mrf.mxu0
        %v5278 = vadd.f32 0.0, %v5277
        %v5279 = vpop.f32.mrf.mxu0
        %5280 = vmatprep.mubr.bf16.mxu0 0
        %5281 = vmatmul.mubr.bf16.gmra.mxu0 %v5226
        %v5282 = vpop.f32.mrf.mxu0
        %v5283 = vadd.f32 0.0, %v5282
        %v5284 = vpop.f32.mrf.mxu0
        %v5285 = vpop.f32.mrf.mxu0
        %v5286 = vadd.f32 0.0, %v5285
        %v5287 = vpop.f32.mrf.mxu0
        %5288 = vmatprep.mubr.bf16.mxu0 0
        %5289 = vmatmul.mubr.bf16.gmra.mxu0 %v5229
        %v5290 = vpop.f32.mrf.mxu0
        %v5291 = vadd.f32 0.0, %v5290
        %v5292 = vpop.f32.mrf.mxu0
        %v5293 = vpop.f32.mrf.mxu0
        %v5294 = vadd.f32 0.0, %v5293
        %v5295 = vpop.f32.mrf.mxu0
        %5296 = vmatprep.mubr.bf16.mxu0 0
        %5297 = vmatmul.mubr.bf16.gmra.mxu0 %v5232
        %v5298 = vpop.f32.mrf.mxu0
        %v5299 = vadd.f32 0.0, %v5298
        %v5300 = vpop.f32.mrf.mxu0
        %v5301 = vpop.f32.mrf.mxu0
        %v5302 = vadd.f32 0.0, %v5301
        %v5303 = vpop.f32.mrf.mxu0
        %5304 = vmatprep.mubr.bf16.mxu0 0
        %5305 = vmatmul.mubr.bf16.gmra.mxu0 %v5235
        %v5306 = vpop.f32.mrf.mxu0
        %v5307 = vadd.f32 0.0, %v5306
        %v5308 = vpop.f32.mrf.mxu0
        %v5309 = vpop.f32.mrf.mxu0
        %v5310 = vadd.f32 0.0, %v5309
        %v5311 = vpop.f32.mrf.mxu0
        %5312 = vmatprep.mubr.bf16.mxu0 0
        %5313 = vmatmul.mubr.bf16.gmra.mxu0 %v5238
        %v5314 = vpop.f32.mrf.mxu0
        %v5315 = vadd.f32 0.0, %v5314
        %v5316 = vpop.f32.mrf.mxu0
        %v5317 = vpop.f32.mrf.mxu0
        %v5318 = vpop.f32.mrf.mxu0
        %5319 = vdwg.mxu0
        %v5320 = vadd.f32 %v5188, %v5275
        %v5321 = vadd.f32 %v5189, %v5278
        %v5322 = vadd.f32 %v5190, %v5283
        %v5323 = vadd.f32 %v5191, %v5286
        %v5324 = vadd.f32 %v5192, %v5291
        %v5325 = vadd.f32 %v5193, %v5294
        %v5326 = vadd.f32 %v5194, %v5299
        %v5327 = vadd.f32 %v5195, %v5302
        %v5328 = vadd.f32 %v5196, %v5307
        %v5329 = vadd.f32 %v5197, %v5310
        %v5330 = vadd.f32 %v5198, %v5315
        %v5331 = vld [vmem:[#allocation2 + $0x18] sm:$0xf]
        %v5332 = vld [vmem:[#allocation2 + $0x1c] sm:$0xf]
        %v5333 = vld [vmem:[#allocation2 + $0x20] sm:$0xf]
        %v5334 = vld [vmem:[#allocation2 + $0x24] sm:$0xf]
        %v5335 = vld [vmem:[#allocation2 + $0x28] sm:$0xf]
        %v5336 = vld [vmem:[#allocation2 + $0x2c] sm:$0xf]
        %v5337 = vld [vmem:[#allocation2 + $0x30] sm:$0xf]
        %v5338 = vld [vmem:[#allocation2 + $0x34] sm:$0xf]
        %v5339 = vld [vmem:[#allocation2 + $0x38] sm:$0xf]
        %v5340 = vld [vmem:[#allocation2 + $0x3c] sm:$0xf]
        %v5341 = vld [vmem:[#allocation2 + $0x40] sm:$0xf]
        %v5342 = vld [vmem:[#allocation2 + $0x44] sm:$0x1]
        %s5343 = scalar_lea.vmem [#allocation8], 304
        %v5344 = vld [vmem:[%s5343] sm:$0xf]
        %v5345 = vld [vmem:[%s5343 + $0x4] sm:$0xf]
        %v5346 = vld [vmem:[%s5343 + $0x8] sm:$0xf]
        %v5347 = vld [vmem:[%s5343 + $0xc] sm:$0xf]
        %v5360 = vunpack.c.l.b16 %v5331
        %v5361 = vunpack.c.l.b16 %v5332
        %v5362 = vunpack.c.l.b16 %v5333
        %v5363 = vunpack.c.l.b16 %v5334
        %v5364 = vunpack.c.l.b16 %v5335
        %v5365 = vunpack.c.l.b16 %v5336
        %v5366 = vunpack.c.l.b16 %v5337
        %v5367 = vunpack.c.l.b16 %v5338
        %v5368 = vunpack.c.l.b16 %v5339
        %v5369 = vunpack.c.l.b16 %v5340
        %v5370 = vunpack.c.l.b16 %v5341
        %v5371 = vunpack.c.l.b16 %v5342
        %v5372 = vpack.c.b16 %v5361, %v5360
        %v5373 = vpack.c.b16 %v5363, %v5362
        %v5374 = vpack.c.b16 %v5365, %v5364
        %v5375 = vpack.c.b16 %v5367, %v5366
        %v5376 = vpack.c.b16 %v5369, %v5368
        %v5377 = vpack.c.b16 %v5371, %v5370
        %v5379 = vshrl.u32 %v5372, 16
        %v5381 = vshll.u32 %v5372, 16
        %v5383 = vrot.slane %v5381, 1
        %v5384 = vor.u32 %v5379, %v5383
        %v5386 = vshll.u32 %v5373, 16
        %v5388 = vrot.slane %v5386, 1
        %v5389 = vsel %vm2241, %v5384, %v5388
        %v5390 = vshrl.u32 %v5373, 16
        %v5392 = vor.u32 %v5390, %v5388
        %v5394 = vshll.u32 %v5374, 16
        %v5396 = vrot.slane %v5394, 1
        %v5397 = vsel %vm2241, %v5392, %v5396
        %v5398 = vshrl.u32 %v5374, 16
        %v5400 = vor.u32 %v5398, %v5396
        %v5402 = vshll.u32 %v5375, 16
        %v5404 = vrot.slane %v5402, 1
        %v5405 = vsel %vm2241, %v5400, %v5404
        %v5406 = vshrl.u32 %v5375, 16
        %v5408 = vor.u32 %v5406, %v5404
        %v5410 = vshll.u32 %v5376, 16
        %v5412 = vrot.slane %v5410, 1
        %v5413 = vsel %vm2241, %v5408, %v5412
        %v5414 = vshrl.u32 %v5376, 16
        %v5416 = vor.u32 %v5414, %v5412
        %v5418 = vshll.u32 %v5377, 16
        %v5420 = vrot.slane %v5418, 1
        %v5421 = vsel %vm2241, %v5416, %v5420
        %v5422 = vshrl.u32 %v5377, 16
        %v5424 = vor.u32 %v5422, %v5420
        %v5429 = vunpack.c.l.b16 %v5344
        %v5430 = vunpack.c.l.b16 %v5345
        %v5431 = vunpack.c.l.b16 %v5346
        %v5432 = vunpack.c.l.b16 %v5347
        %v5433 = vpack.c.b16 %v5430, %v5429
        %v5434 = vpack.c.b16 %v5432, %v5431
        %v5438 = vsel %vm2301, %v5389, 0
        %v5441 = vsel %vm2301, %v5397, 0
        %v5444 = vsel %vm2301, %v5405, 0
        %v5447 = vsel %vm2301, %v5413, 0
        %v5450 = vsel %vm2301, %v5421, 0
        %v5453 = vsel %vm2301, %v5424, 0
        %5455 = vmatprep.subr.bf16.mxu0 0
        %5456 = vmatpush1.bf16.msra.mxu0 0
        %5457 = vmatprep.subr.bf16.mxu0 0
        %5458 = vmatpush1.bf16.msra.mxu0 0
        %5459 = vmatprep.subr.bf16.mxu0 0
        %5460 = vmatpush1.bf16.msra.mxu0 0
        %5461 = vmatprep.subr.bf16.mxu0 0
        %5462 = vmatpush1.bf16.msra.mxu0 0
        %5463 = vmatprep.subr.bf16.mxu0 0
        %5464 = vmatpush1.bf16.msra.mxu0 0
        %5465 = vmatprep.subr.bf16.mxu0 0
        %5466 = vmatpush1.bf16.msra.mxu0 0
        %5467 = vmatprep.subr.bf16.mxu0 0
        %5468 = vmatpush1.bf16.msra.mxu0 %v5434
        %5469 = vmatprep.subr.bf16.mxu0 0
        %5470 = vmatpush1.bf16.msra.mxu0 %v5433
        %5471 = vmatprep.subr.bf16.mxu0 0
        %5472 = vmatpush2.bf16.msra.mxu0 0
        %5473 = vmatprep.subr.bf16.mxu0 0
        %5474 = vmatpush2.bf16.msra.mxu0 0
        %5475 = vmatprep.subr.bf16.mxu0 0
        %5476 = vmatpush2.bf16.msra.mxu0 0
        %5477 = vmatprep.subr.bf16.mxu0 0
        %5478 = vmatpush2.bf16.msra.mxu0 0
        %5479 = vmatprep.subr.bf16.mxu0 0
        %5480 = vmatpush2.bf16.msra.mxu0 0
        %5481 = vmatprep.subr.bf16.mxu0 0
        %5482 = vmatpush2.bf16.msra.mxu0 0
        %5483 = vmatprep.subr.bf16.mxu0 0
        %5484 = vmatpush2.bf16.msra.mxu0 0
        %5485 = vmatprep.subr.bf16.mxu0 0
        %5486 = vmatpush2.bf16.msra.mxu0 0
        %5487 = vmatprep.mubr.bf16.mxu0 0
        %5488 = vmatmul.mubr.bf16.gmra.mxu0 %v5438
        %v5489 = vpop.f32.mrf.mxu0
        %v5490 = vadd.f32 0.0, %v5489
        %v5491 = vpop.f32.mrf.mxu0
        %v5492 = vpop.f32.mrf.mxu0
        %v5493 = vadd.f32 0.0, %v5492
        %v5494 = vpop.f32.mrf.mxu0
        %5495 = vmatprep.mubr.bf16.mxu0 0
        %5496 = vmatmul.mubr.bf16.gmra.mxu0 %v5441
        %v5497 = vpop.f32.mrf.mxu0
        %v5498 = vadd.f32 0.0, %v5497
        %v5499 = vpop.f32.mrf.mxu0
        %v5500 = vpop.f32.mrf.mxu0
        %v5501 = vadd.f32 0.0, %v5500
        %v5502 = vpop.f32.mrf.mxu0
        %5503 = vmatprep.mubr.bf16.mxu0 0
        %5504 = vmatmul.mubr.bf16.gmra.mxu0 %v5444
        %v5505 = vpop.f32.mrf.mxu0
        %v5506 = vadd.f32 0.0, %v5505
        %v5507 = vpop.f32.mrf.mxu0
        %v5508 = vpop.f32.mrf.mxu0
        %v5509 = vadd.f32 0.0, %v5508
        %v5510 = vpop.f32.mrf.mxu0
        %5511 = vmatprep.mubr.bf16.mxu0 0
        %5512 = vmatmul.mubr.bf16.gmra.mxu0 %v5447
        %v5513 = vpop.f32.mrf.mxu0
        %v5514 = vadd.f32 0.0, %v5513
        %v5515 = vpop.f32.mrf.mxu0
        %v5516 = vpop.f32.mrf.mxu0
        %v5517 = vadd.f32 0.0, %v5516
        %v5518 = vpop.f32.mrf.mxu0
        %5519 = vmatprep.mubr.bf16.mxu0 0
        %5520 = vmatmul.mubr.bf16.gmra.mxu0 %v5450
        %v5521 = vpop.f32.mrf.mxu0
        %v5522 = vadd.f32 0.0, %v5521
        %v5523 = vpop.f32.mrf.mxu0
        %v5524 = vpop.f32.mrf.mxu0
        %v5525 = vadd.f32 0.0, %v5524
        %v5526 = vpop.f32.mrf.mxu0
        %5527 = vmatprep.mubr.bf16.mxu0 0
        %5528 = vmatmul.mubr.bf16.gmra.mxu0 %v5453
        %v5529 = vpop.f32.mrf.mxu0
        %v5530 = vadd.f32 0.0, %v5529
        %v5531 = vpop.f32.mrf.mxu0
        %v5532 = vpop.f32.mrf.mxu0
        %v5533 = vpop.f32.mrf.mxu0
        %5534 = vdwg.mxu0
        %v5535 = vadd.f32 %v5320, %v5490
        %v5536 = vadd.f32 %v5321, %v5493
        %v5537 = vadd.f32 %v5322, %v5498
        %v5538 = vadd.f32 %v5323, %v5501
        %v5539 = vadd.f32 %v5324, %v5506
        %v5540 = vadd.f32 %v5325, %v5509
        %v5541 = vadd.f32 %v5326, %v5514
        %v5542 = vadd.f32 %v5327, %v5517
        %v5543 = vadd.f32 %v5328, %v5522
        %v5544 = vadd.f32 %v5329, %v5525
        %v5545 = vadd.f32 %v5330, %v5530
        %v5546 = vld [vmem:[#allocation2 + $0x1c] sm:$0xc]
        %v5547 = vld [vmem:[#allocation2 + $0x20] sm:$0xf]
        %v5548 = vld [vmem:[#allocation2 + $0x24] sm:$0xf]
        %v5549 = vld [vmem:[#allocation2 + $0x28] sm:$0xf]
        %v5550 = vld [vmem:[#allocation2 + $0x2c] sm:$0xf]
        %v5551 = vld [vmem:[#allocation2 + $0x30] sm:$0xf]
        %v5552 = vld [vmem:[#allocation2 + $0x34] sm:$0xf]
        %v5553 = vld [vmem:[#allocation2 + $0x38] sm:$0xf]
        %v5554 = vld [vmem:[#allocation2 + $0x3c] sm:$0xf]
        %v5555 = vld [vmem:[#allocation2 + $0x40] sm:$0xf]
        %v5556 = vld [vmem:[#allocation2 + $0x44] sm:$0xf]
        %v5557 = vld [vmem:[#allocation2 + $0x48] sm:$0x3]
        %s5558 = scalar_lea.vmem [#allocation8], 320
        %v5559 = vld [vmem:[%s5558] sm:$0xf]
        %v5560 = vld [vmem:[%s5558 + $0x4] sm:$0xf]
        %v5561 = vld [vmem:[%s5558 + $0x8] sm:$0xf]
        %v5562 = vld [vmem:[%s5558 + $0xc] sm:$0xf]
        %v5575 = vunpack.c.l.b16 %v5546
        %v5576 = vunpack.c.l.b16 %v5547
        %v5577 = vunpack.c.l.b16 %v5548
        %v5578 = vunpack.c.l.b16 %v5549
        %v5579 = vunpack.c.l.b16 %v5550
        %v5580 = vunpack.c.l.b16 %v5551
        %v5581 = vunpack.c.l.b16 %v5552
        %v5582 = vunpack.c.l.b16 %v5553
        %v5583 = vunpack.c.l.b16 %v5554
        %v5584 = vunpack.c.l.b16 %v5555
        %v5585 = vunpack.c.l.b16 %v5556
        %v5586 = vunpack.c.l.b16 %v5557
        %v5587 = vpack.c.b16 %v5576, %v5575
        %v5588 = vpack.c.b16 %v5578, %v5577
        %v5589 = vpack.c.b16 %v5580, %v5579
        %v5590 = vpack.c.b16 %v5582, %v5581
        %v5591 = vpack.c.b16 %v5584, %v5583
        %v5592 = vpack.c.b16 %v5586, %v5585
        %v5593 = vrot.slane %v5587, 2
        %v5594 = vrot.slane %v5588, 2
        %v5595 = vsel %vm1518, %v5593, %v5594
        %v5596 = vrot.slane %v5589, 2
        %v5597 = vsel %vm1518, %v5594, %v5596
        %v5598 = vrot.slane %v5590, 2
        %v5599 = vsel %vm1518, %v5596, %v5598
        %v5600 = vrot.slane %v5591, 2
        %v5601 = vsel %vm1518, %v5598, %v5600
        %v5602 = vrot.slane %v5592, 2
        %v5603 = vsel %vm1518, %v5600, %v5602
        %v5608 = vunpack.c.l.b16 %v5559
        %v5609 = vunpack.c.l.b16 %v5560
        %v5610 = vunpack.c.l.b16 %v5561
        %v5611 = vunpack.c.l.b16 %v5562
        %v5612 = vpack.c.b16 %v5609, %v5608
        %v5613 = vpack.c.b16 %v5611, %v5610
        %v5617 = vsel %vm2301, %v5595, 0
        %v5620 = vsel %vm2301, %v5597, 0
        %v5623 = vsel %vm2301, %v5599, 0
        %v5626 = vsel %vm2301, %v5601, 0
        %v5629 = vsel %vm2301, %v5603, 0
        %v5632 = vsel %vm2301, %v5602, 0
        %5634 = vmatprep.subr.bf16.mxu0 0
        %5635 = vmatpush1.bf16.msra.mxu0 0
        %5636 = vmatprep.subr.bf16.mxu0 0
        %5637 = vmatpush1.bf16.msra.mxu0 0
        %5638 = vmatprep.subr.bf16.mxu0 0
        %5639 = vmatpush1.bf16.msra.mxu0 0
        %5640 = vmatprep.subr.bf16.mxu0 0
        %5641 = vmatpush1.bf16.msra.mxu0 0
        %5642 = vmatprep.subr.bf16.mxu0 0
        %5643 = vmatpush1.bf16.msra.mxu0 0
        %5644 = vmatprep.subr.bf16.mxu0 0
        %5645 = vmatpush1.bf16.msra.mxu0 0
        %5646 = vmatprep.subr.bf16.mxu0 0
        %5647 = vmatpush1.bf16.msra.mxu0 %v5613
        %5648 = vmatprep.subr.bf16.mxu0 0
        %5649 = vmatpush1.bf16.msra.mxu0 %v5612
        %5650 = vmatprep.subr.bf16.mxu0 0
        %5651 = vmatpush2.bf16.msra.mxu0 0
        %5652 = vmatprep.subr.bf16.mxu0 0
        %5653 = vmatpush2.bf16.msra.mxu0 0
        %5654 = vmatprep.subr.bf16.mxu0 0
        %5655 = vmatpush2.bf16.msra.mxu0 0
        %5656 = vmatprep.subr.bf16.mxu0 0
        %5657 = vmatpush2.bf16.msra.mxu0 0
        %5658 = vmatprep.subr.bf16.mxu0 0
        %5659 = vmatpush2.bf16.msra.mxu0 0
        %5660 = vmatprep.subr.bf16.mxu0 0
        %5661 = vmatpush2.bf16.msra.mxu0 0
        %5662 = vmatprep.subr.bf16.mxu0 0
        %5663 = vmatpush2.bf16.msra.mxu0 0
        %5664 = vmatprep.subr.bf16.mxu0 0
        %5665 = vmatpush2.bf16.msra.mxu0 0
        %5666 = vmatprep.mubr.bf16.mxu0 0
        %5667 = vmatmul.mubr.bf16.gmra.mxu0 %v5617
        %v5668 = vpop.f32.mrf.mxu0
        %v5669 = vadd.f32 0.0, %v5668
        %v5670 = vpop.f32.mrf.mxu0
        %v5671 = vpop.f32.mrf.mxu0
        %v5672 = vadd.f32 0.0, %v5671
        %v5673 = vpop.f32.mrf.mxu0
        %5674 = vmatprep.mubr.bf16.mxu0 0
        %5675 = vmatmul.mubr.bf16.gmra.mxu0 %v5620
        %v5676 = vpop.f32.mrf.mxu0
        %v5677 = vadd.f32 0.0, %v5676
        %v5678 = vpop.f32.mrf.mxu0
        %v5679 = vpop.f32.mrf.mxu0
        %v5680 = vadd.f32 0.0, %v5679
        %v5681 = vpop.f32.mrf.mxu0
        %5682 = vmatprep.mubr.bf16.mxu0 0
        %5683 = vmatmul.mubr.bf16.gmra.mxu0 %v5623
        %v5684 = vpop.f32.mrf.mxu0
        %v5685 = vadd.f32 0.0, %v5684
        %v5686 = vpop.f32.mrf.mxu0
        %v5687 = vpop.f32.mrf.mxu0
        %v5688 = vadd.f32 0.0, %v5687
        %v5689 = vpop.f32.mrf.mxu0
        %5690 = vmatprep.mubr.bf16.mxu0 0
        %5691 = vmatmul.mubr.bf16.gmra.mxu0 %v5626
        %v5692 = vpop.f32.mrf.mxu0
        %v5693 = vadd.f32 0.0, %v5692
        %v5694 = vpop.f32.mrf.mxu0
        %v5695 = vpop.f32.mrf.mxu0
        %v5696 = vadd.f32 0.0, %v5695
        %v5697 = vpop.f32.mrf.mxu0
        %5698 = vmatprep.mubr.bf16.mxu0 0
        %5699 = vmatmul.mubr.bf16.gmra.mxu0 %v5629
        %v5700 = vpop.f32.mrf.mxu0
        %v5701 = vadd.f32 0.0, %v5700
        %v5702 = vpop.f32.mrf.mxu0
        %v5703 = vpop.f32.mrf.mxu0
        %v5704 = vadd.f32 0.0, %v5703
        %v5705 = vpop.f32.mrf.mxu0
        %5706 = vmatprep.mubr.bf16.mxu0 0
        %5707 = vmatmul.mubr.bf16.gmra.mxu0 %v5632
        %v5708 = vpop.f32.mrf.mxu0
        %v5709 = vadd.f32 0.0, %v5708
        %v5710 = vpop.f32.mrf.mxu0
        %v5711 = vpop.f32.mrf.mxu0
        %v5712 = vpop.f32.mrf.mxu0
        %5713 = vdwg.mxu0
        %v5714 = vadd.f32 %v5535, %v5669
        %v5715 = vadd.f32 %v5536, %v5672
        %v5716 = vadd.f32 %v5537, %v5677
        %v5717 = vadd.f32 %v5538, %v5680
        %v5718 = vadd.f32 %v5539, %v5685
        %v5719 = vadd.f32 %v5540, %v5688
        %v5720 = vadd.f32 %v5541, %v5693
        %v5721 = vadd.f32 %v5542, %v5696
        %v5722 = vadd.f32 %v5543, %v5701
        %v5723 = vadd.f32 %v5544, %v5704
        %v5724 = vadd.f32 %v5545, %v5709
        %v5725 = vld [vmem:[#allocation2 + $0x48] sm:$0x7]
        %s5726 = scalar_lea.vmem [#allocation8], 336
        %v5727 = vld [vmem:[%s5726] sm:$0xf]
        %v5728 = vld [vmem:[%s5726 + $0x4] sm:$0xf]
        %v5729 = vld [vmem:[%s5726 + $0x8] sm:$0xf]
        %v5730 = vld [vmem:[%s5726 + $0xc] sm:$0xf]
        %v5732 = vunpack.c.l.b16 %v5725
        %v5733 = vpack.c.b16 %v5732, %v5585
        %v5735 = vshrl.u32 %v5587, 16
        %v5737 = vrot.slane %v5735, 2
        %v5738 = vshll.u32 %v5587, 16
        %v5740 = vrot.slane %v5738, 3
        %v5741 = vor.u32 %v5737, %v5740
        %v5743 = vshrl.u32 %v5588, 16
        %v5745 = vrot.slane %v5743, 2
        %v5746 = vshll.u32 %v5588, 16
        %v5748 = vrot.slane %v5746, 3
        %v5749 = vor.u32 %v5745, %v5748
        %v5750 = vsel %vm1181, %v5741, %v5749
        %v5752 = vshrl.u32 %v5589, 16
        %v5754 = vrot.slane %v5752, 2
        %v5755 = vshll.u32 %v5589, 16
        %v5757 = vrot.slane %v5755, 3
        %v5758 = vor.u32 %v5754, %v5757
        %v5759 = vsel %vm1181, %v5749, %v5758
        %v5761 = vshrl.u32 %v5590, 16
        %v5763 = vrot.slane %v5761, 2
        %v5764 = vshll.u32 %v5590, 16
        %v5766 = vrot.slane %v5764, 3
        %v5767 = vor.u32 %v5763, %v5766
        %v5768 = vsel %vm1181, %v5758, %v5767
        %v5770 = vshrl.u32 %v5591, 16
        %v5772 = vrot.slane %v5770, 2
        %v5773 = vshll.u32 %v5591, 16
        %v5775 = vrot.slane %v5773, 3
        %v5776 = vor.u32 %v5772, %v5775
        %v5777 = vsel %vm1181, %v5767, %v5776
        %v5779 = vshrl.u32 %v5733, 16
        %v5781 = vrot.slane %v5779, 2
        %v5782 = vshll.u32 %v5733, 16
        %v5784 = vrot.slane %v5782, 3
        %v5785 = vor.u32 %v5781, %v5784
        %v5786 = vsel %vm1181, %v5776, %v5785
        %v5791 = vunpack.c.l.b16 %v5727
        %v5792 = vunpack.c.l.b16 %v5728
        %v5793 = vunpack.c.l.b16 %v5729
        %v5794 = vunpack.c.l.b16 %v5730
        %v5795 = vpack.c.b16 %v5792, %v5791
        %v5796 = vpack.c.b16 %v5794, %v5793
        %v5800 = vsel %vm2301, %v5750, 0
        %v5803 = vsel %vm2301, %v5759, 0
        %v5806 = vsel %vm2301, %v5768, 0
        %v5809 = vsel %vm2301, %v5777, 0
        %v5812 = vsel %vm2301, %v5786, 0
        %v5815 = vsel %vm2301, %v5785, 0
        %5817 = vmatprep.subr.bf16.mxu0 0
        %5818 = vmatpush1.bf16.msra.mxu0 0
        %5819 = vmatprep.subr.bf16.mxu0 0
        %5820 = vmatpush1.bf16.msra.mxu0 0
        %5821 = vmatprep.subr.bf16.mxu0 0
        %5822 = vmatpush1.bf16.msra.mxu0 0
        %5823 = vmatprep.subr.bf16.mxu0 0
        %5824 = vmatpush1.bf16.msra.mxu0 0
        %5825 = vmatprep.subr.bf16.mxu0 0
        %5826 = vmatpush1.bf16.msra.mxu0 0
        %5827 = vmatprep.subr.bf16.mxu0 0
        %5828 = vmatpush1.bf16.msra.mxu0 0
        %5829 = vmatprep.subr.bf16.mxu0 0
        %5830 = vmatpush1.bf16.msra.mxu0 %v5796
        %5831 = vmatprep.subr.bf16.mxu0 0
        %5832 = vmatpush1.bf16.msra.mxu0 %v5795
        %5833 = vmatprep.subr.bf16.mxu0 0
        %5834 = vmatpush2.bf16.msra.mxu0 0
        %5835 = vmatprep.subr.bf16.mxu0 0
        %5836 = vmatpush2.bf16.msra.mxu0 0
        %5837 = vmatprep.subr.bf16.mxu0 0
        %5838 = vmatpush2.bf16.msra.mxu0 0
        %5839 = vmatprep.subr.bf16.mxu0 0
        %5840 = vmatpush2.bf16.msra.mxu0 0
        %5841 = vmatprep.subr.bf16.mxu0 0
        %5842 = vmatpush2.bf16.msra.mxu0 0
        %5843 = vmatprep.subr.bf16.mxu0 0
        %5844 = vmatpush2.bf16.msra.mxu0 0
        %5845 = vmatprep.subr.bf16.mxu0 0
        %5846 = vmatpush2.bf16.msra.mxu0 0
        %5847 = vmatprep.subr.bf16.mxu0 0
        %5848 = vmatpush2.bf16.msra.mxu0 0
        %5849 = vmatprep.mubr.bf16.mxu0 0
        %5850 = vmatmul.mubr.bf16.gmra.mxu0 %v5800
        %v5851 = vpop.f32.mrf.mxu0
        %v5852 = vadd.f32 0.0, %v5851
        %v5853 = vpop.f32.mrf.mxu0
        %v5854 = vpop.f32.mrf.mxu0
        %v5855 = vadd.f32 0.0, %v5854
        %v5856 = vpop.f32.mrf.mxu0
        %5857 = vmatprep.mubr.bf16.mxu0 0
        %5858 = vmatmul.mubr.bf16.gmra.mxu0 %v5803
        %v5859 = vpop.f32.mrf.mxu0
        %v5860 = vadd.f32 0.0, %v5859
        %v5861 = vpop.f32.mrf.mxu0
        %v5862 = vpop.f32.mrf.mxu0
        %v5863 = vadd.f32 0.0, %v5862
        %v5864 = vpop.f32.mrf.mxu0
        %5865 = vmatprep.mubr.bf16.mxu0 0
        %5866 = vmatmul.mubr.bf16.gmra.mxu0 %v5806
        %v5867 = vpop.f32.mrf.mxu0
        %v5868 = vadd.f32 0.0, %v5867
        %v5869 = vpop.f32.mrf.mxu0
        %v5870 = vpop.f32.mrf.mxu0
        %v5871 = vadd.f32 0.0, %v5870
        %v5872 = vpop.f32.mrf.mxu0
        %5873 = vmatprep.mubr.bf16.mxu0 0
        %5874 = vmatmul.mubr.bf16.gmra.mxu0 %v5809
        %v5875 = vpop.f32.mrf.mxu0
        %v5876 = vadd.f32 0.0, %v5875
        %v5877 = vpop.f32.mrf.mxu0
        %v5878 = vpop.f32.mrf.mxu0
        %v5879 = vadd.f32 0.0, %v5878
        %v5880 = vpop.f32.mrf.mxu0
        %5881 = vmatprep.mubr.bf16.mxu0 0
        %5882 = vmatmul.mubr.bf16.gmra.mxu0 %v5812
        %v5883 = vpop.f32.mrf.mxu0
        %v5884 = vadd.f32 0.0, %v5883
        %v5885 = vpop.f32.mrf.mxu0
        %v5886 = vpop.f32.mrf.mxu0
        %v5887 = vadd.f32 0.0, %v5886
        %v5888 = vpop.f32.mrf.mxu0
        %5889 = vmatprep.mubr.bf16.mxu0 0
        %5890 = vmatmul.mubr.bf16.gmra.mxu0 %v5815
        %v5891 = vpop.f32.mrf.mxu0
        %v5892 = vadd.f32 0.0, %v5891
        %v5893 = vpop.f32.mrf.mxu0
        %v5894 = vpop.f32.mrf.mxu0
        %v5895 = vpop.f32.mrf.mxu0
        %5896 = vdwg.mxu0
        %v5897 = vadd.f32 %v5714, %v5852
        %v5898 = vadd.f32 %v5715, %v5855
        %v5899 = vadd.f32 %v5716, %v5860
        %v5900 = vadd.f32 %v5717, %v5863
        %v5901 = vadd.f32 %v5718, %v5868
        %v5902 = vadd.f32 %v5719, %v5871
        %v5903 = vadd.f32 %v5720, %v5876
        %v5904 = vadd.f32 %v5721, %v5879
        %v5905 = vadd.f32 %v5722, %v5884
        %v5906 = vadd.f32 %v5723, %v5887
        %v5907 = vadd.f32 %v5724, %v5892
        %v5908 = vld [vmem:[#allocation2 + $0x1c] sm:$0x8]
        %s5909 = scalar_lea.vmem [#allocation8], 352
        %v5910 = vld [vmem:[%s5909] sm:$0xf]
        %v5911 = vld [vmem:[%s5909 + $0x4] sm:$0xf]
        %v5912 = vld [vmem:[%s5909 + $0x8] sm:$0xf]
        %v5913 = vld [vmem:[%s5909 + $0xc] sm:$0xf]
        %v5915 = vunpack.c.l.b16 %v5908
        %v5916 = vpack.c.b16 %v5576, %v5915
        %v5917 = vrot.slane %v5916, 3
        %v5918 = vrot.slane %v5588, 3
        %v5919 = vsel %vm914, %v5917, %v5918
        %v5920 = vrot.slane %v5589, 3
        %v5921 = vsel %vm914, %v5918, %v5920
        %v5922 = vrot.slane %v5590, 3
        %v5923 = vsel %vm914, %v5920, %v5922
        %v5924 = vrot.slane %v5591, 3
        %v5925 = vsel %vm914, %v5922, %v5924
        %v5926 = vrot.slane %v5733, 3
        %v5927 = vsel %vm914, %v5924, %v5926
        %v5932 = vunpack.c.l.b16 %v5910
        %v5933 = vunpack.c.l.b16 %v5911
        %v5934 = vunpack.c.l.b16 %v5912
        %v5935 = vunpack.c.l.b16 %v5913
        %v5936 = vpack.c.b16 %v5933, %v5932
        %v5937 = vpack.c.b16 %v5935, %v5934
        %v5941 = vsel %vm2301, %v5919, 0
        %v5944 = vsel %vm2301, %v5921, 0
        %v5947 = vsel %vm2301, %v5923, 0
        %v5950 = vsel %vm2301, %v5925, 0
        %v5953 = vsel %vm2301, %v5927, 0
        %v5956 = vsel %vm2301, %v5926, 0
        %5958 = vmatprep.subr.bf16.mxu0 0
        %5959 = vmatpush1.bf16.msra.mxu0 0
        %5960 = vmatprep.subr.bf16.mxu0 0
        %5961 = vmatpush1.bf16.msra.mxu0 0
        %5962 = vmatprep.subr.bf16.mxu0 0
        %5963 = vmatpush1.bf16.msra.mxu0 0
        %5964 = vmatprep.subr.bf16.mxu0 0
        %5965 = vmatpush1.bf16.msra.mxu0 0
        %5966 = vmatprep.subr.bf16.mxu0 0
        %5967 = vmatpush1.bf16.msra.mxu0 0
        %5968 = vmatprep.subr.bf16.mxu0 0
        %5969 = vmatpush1.bf16.msra.mxu0 0
        %5970 = vmatprep.subr.bf16.mxu0 0
        %5971 = vmatpush1.bf16.msra.mxu0 %v5937
        %5972 = vmatprep.subr.bf16.mxu0 0
        %5973 = vmatpush1.bf16.msra.mxu0 %v5936
        %5974 = vmatprep.subr.bf16.mxu0 0
        %5975 = vmatpush2.bf16.msra.mxu0 0
        %5976 = vmatprep.subr.bf16.mxu0 0
        %5977 = vmatpush2.bf16.msra.mxu0 0
        %5978 = vmatprep.subr.bf16.mxu0 0
        %5979 = vmatpush2.bf16.msra.mxu0 0
        %5980 = vmatprep.subr.bf16.mxu0 0
        %5981 = vmatpush2.bf16.msra.mxu0 0
        %5982 = vmatprep.subr.bf16.mxu0 0
        %5983 = vmatpush2.bf16.msra.mxu0 0
        %5984 = vmatprep.subr.bf16.mxu0 0
        %5985 = vmatpush2.bf16.msra.mxu0 0
        %5986 = vmatprep.subr.bf16.mxu0 0
        %5987 = vmatpush2.bf16.msra.mxu0 0
        %5988 = vmatprep.subr.bf16.mxu0 0
        %5989 = vmatpush2.bf16.msra.mxu0 0
        %5990 = vmatprep.mubr.bf16.mxu0 0
        %5991 = vmatmul.mubr.bf16.gmra.mxu0 %v5941
        %v5992 = vpop.f32.mrf.mxu0
        %v5993 = vadd.f32 0.0, %v5992
        %v5994 = vpop.f32.mrf.mxu0
        %v5995 = vpop.f32.mrf.mxu0
        %v5996 = vadd.f32 0.0, %v5995
        %v5997 = vpop.f32.mrf.mxu0
        %5998 = vmatprep.mubr.bf16.mxu0 0
        %5999 = vmatmul.mubr.bf16.gmra.mxu0 %v5944
        %v6000 = vpop.f32.mrf.mxu0
        %v6001 = vadd.f32 0.0, %v6000
        %v6002 = vpop.f32.mrf.mxu0
        %v6003 = vpop.f32.mrf.mxu0
        %v6004 = vadd.f32 0.0, %v6003
        %v6005 = vpop.f32.mrf.mxu0
        %6006 = vmatprep.mubr.bf16.mxu0 0
        %6007 = vmatmul.mubr.bf16.gmra.mxu0 %v5947
        %v6008 = vpop.f32.mrf.mxu0
        %v6009 = vadd.f32 0.0, %v6008
        %v6010 = vpop.f32.mrf.mxu0
        %v6011 = vpop.f32.mrf.mxu0
        %v6012 = vadd.f32 0.0, %v6011
        %v6013 = vpop.f32.mrf.mxu0
        %6014 = vmatprep.mubr.bf16.mxu0 0
        %6015 = vmatmul.mubr.bf16.gmra.mxu0 %v5950
        %v6016 = vpop.f32.mrf.mxu0
        %v6017 = vadd.f32 0.0, %v6016
        %v6018 = vpop.f32.mrf.mxu0
        %v6019 = vpop.f32.mrf.mxu0
        %v6020 = vadd.f32 0.0, %v6019
        %v6021 = vpop.f32.mrf.mxu0
        %6022 = vmatprep.mubr.bf16.mxu0 0
        %6023 = vmatmul.mubr.bf16.gmra.mxu0 %v5953
        %v6024 = vpop.f32.mrf.mxu0
        %v6025 = vadd.f32 0.0, %v6024
        %v6026 = vpop.f32.mrf.mxu0
        %v6027 = vpop.f32.mrf.mxu0
        %v6028 = vadd.f32 0.0, %v6027
        %v6029 = vpop.f32.mrf.mxu0
        %6030 = vmatprep.mubr.bf16.mxu0 0
        %6031 = vmatmul.mubr.bf16.gmra.mxu0 %v5956
        %v6032 = vpop.f32.mrf.mxu0
        %v6033 = vadd.f32 0.0, %v6032
        %v6034 = vpop.f32.mrf.mxu0
        %v6035 = vpop.f32.mrf.mxu0
        %v6036 = vpop.f32.mrf.mxu0
        %6037 = vdwg.mxu0
        %v6038 = vadd.f32 %v5897, %v5993
        %v6039 = vadd.f32 %v5898, %v5996
        %v6040 = vadd.f32 %v5899, %v6001
        %v6041 = vadd.f32 %v5900, %v6004
        %v6042 = vadd.f32 %v5901, %v6009
        %v6043 = vadd.f32 %v5902, %v6012
        %v6044 = vadd.f32 %v5903, %v6017
        %v6045 = vadd.f32 %v5904, %v6020
        %v6046 = vadd.f32 %v5905, %v6025
        %v6047 = vadd.f32 %v5906, %v6028
        %v6048 = vadd.f32 %v5907, %v6033
        %v6049 = vld [vmem:[#allocation2 + $0x48] sm:$0xf]
        %s6050 = scalar_lea.vmem [#allocation8], 368
        %v6051 = vld [vmem:[%s6050] sm:$0xf]
        %v6052 = vld [vmem:[%s6050 + $0x4] sm:$0xf]
        %v6053 = vld [vmem:[%s6050 + $0x8] sm:$0xf]
        %v6054 = vld [vmem:[%s6050 + $0xc] sm:$0xf]
        %v6056 = vunpack.c.l.b16 %v6049
        %v6057 = vpack.c.b16 %v6056, %v5585
        %v6059 = vshrl.u32 %v5916, 16
        %v6061 = vrot.slane %v6059, 3
        %v6062 = vshll.u32 %v5916, 16
        %v6064 = vrot.slane %v6062, 4
        %v6065 = vor.u32 %v6061, %v6064
        %v6066 = vrot.slane %v5743, 3
        %v6067 = vrot.slane %v5746, 4
        %v6068 = vor.u32 %v6066, %v6067
        %v6069 = vsel %vm426, %v6065, %v6068
        %v6070 = vrot.slane %v5752, 3
        %v6071 = vrot.slane %v5755, 4
        %v6072 = vor.u32 %v6070, %v6071
        %v6073 = vsel %vm426, %v6068, %v6072
        %v6074 = vrot.slane %v5761, 3
        %v6075 = vrot.slane %v5764, 4
        %v6076 = vor.u32 %v6074, %v6075
        %v6077 = vsel %vm426, %v6072, %v6076
        %v6078 = vrot.slane %v5770, 3
        %v6079 = vrot.slane %v5773, 4
        %v6080 = vor.u32 %v6078, %v6079
        %v6081 = vsel %vm426, %v6076, %v6080
        %v6083 = vshrl.u32 %v6057, 16
        %v6085 = vrot.slane %v6083, 3
        %v6086 = vshll.u32 %v6057, 16
        %v6088 = vrot.slane %v6086, 4
        %v6089 = vor.u32 %v6085, %v6088
        %v6090 = vsel %vm426, %v6080, %v6089
        %v6095 = vunpack.c.l.b16 %v6051
        %v6096 = vunpack.c.l.b16 %v6052
        %v6097 = vunpack.c.l.b16 %v6053
        %v6098 = vunpack.c.l.b16 %v6054
        %v6099 = vpack.c.b16 %v6096, %v6095
        %v6100 = vpack.c.b16 %v6098, %v6097
        %v6104 = vsel %vm2301, %v6069, 0
        %v6107 = vsel %vm2301, %v6073, 0
        %v6110 = vsel %vm2301, %v6077, 0
        %v6113 = vsel %vm2301, %v6081, 0
        %v6116 = vsel %vm2301, %v6090, 0
        %v6119 = vsel %vm2301, %v6089, 0
        %6121 = vmatprep.subr.bf16.mxu0 0
        %6122 = vmatpush1.bf16.msra.mxu0 0
        %6123 = vmatprep.subr.bf16.mxu0 0
        %6124 = vmatpush1.bf16.msra.mxu0 0
        %6125 = vmatprep.subr.bf16.mxu0 0
        %6126 = vmatpush1.bf16.msra.mxu0 0
        %6127 = vmatprep.subr.bf16.mxu0 0
        %6128 = vmatpush1.bf16.msra.mxu0 0
        %6129 = vmatprep.subr.bf16.mxu0 0
        %6130 = vmatpush1.bf16.msra.mxu0 0
        %6131 = vmatprep.subr.bf16.mxu0 0
        %6132 = vmatpush1.bf16.msra.mxu0 0
        %6133 = vmatprep.subr.bf16.mxu0 0
        %6134 = vmatpush1.bf16.msra.mxu0 %v6100
        %6135 = vmatprep.subr.bf16.mxu0 0
        %6136 = vmatpush1.bf16.msra.mxu0 %v6099
        %6137 = vmatprep.subr.bf16.mxu0 0
        %6138 = vmatpush2.bf16.msra.mxu0 0
        %6139 = vmatprep.subr.bf16.mxu0 0
        %6140 = vmatpush2.bf16.msra.mxu0 0
        %6141 = vmatprep.subr.bf16.mxu0 0
        %6142 = vmatpush2.bf16.msra.mxu0 0
        %6143 = vmatprep.subr.bf16.mxu0 0
        %6144 = vmatpush2.bf16.msra.mxu0 0
        %6145 = vmatprep.subr.bf16.mxu0 0
        %6146 = vmatpush2.bf16.msra.mxu0 0
        %6147 = vmatprep.subr.bf16.mxu0 0
        %6148 = vmatpush2.bf16.msra.mxu0 0
        %6149 = vmatprep.subr.bf16.mxu0 0
        %6150 = vmatpush2.bf16.msra.mxu0 0
        %6151 = vmatprep.subr.bf16.mxu0 0
        %6152 = vmatpush2.bf16.msra.mxu0 0
        %6153 = vmatprep.mubr.bf16.mxu0 0
        %6154 = vmatmul.mubr.bf16.gmra.mxu0 %v6104
        %v6155 = vpop.f32.mrf.mxu0
        %v6156 = vadd.f32 0.0, %v6155
        %v6157 = vpop.f32.mrf.mxu0
        %v6158 = vpop.f32.mrf.mxu0
        %v6159 = vadd.f32 0.0, %v6158
        %v6160 = vpop.f32.mrf.mxu0
        %6161 = vmatprep.mubr.bf16.mxu0 0
        %6162 = vmatmul.mubr.bf16.gmra.mxu0 %v6107
        %v6163 = vpop.f32.mrf.mxu0
        %v6164 = vadd.f32 0.0, %v6163
        %v6165 = vpop.f32.mrf.mxu0
        %v6166 = vpop.f32.mrf.mxu0
        %v6167 = vadd.f32 0.0, %v6166
        %v6168 = vpop.f32.mrf.mxu0
        %6169 = vmatprep.mubr.bf16.mxu0 0
        %6170 = vmatmul.mubr.bf16.gmra.mxu0 %v6110
        %v6171 = vpop.f32.mrf.mxu0
        %v6172 = vadd.f32 0.0, %v6171
        %v6173 = vpop.f32.mrf.mxu0
        %v6174 = vpop.f32.mrf.mxu0
        %v6175 = vadd.f32 0.0, %v6174
        %v6176 = vpop.f32.mrf.mxu0
        %6177 = vmatprep.mubr.bf16.mxu0 0
        %6178 = vmatmul.mubr.bf16.gmra.mxu0 %v6113
        %v6179 = vpop.f32.mrf.mxu0
        %v6180 = vadd.f32 0.0, %v6179
        %v6181 = vpop.f32.mrf.mxu0
        %v6182 = vpop.f32.mrf.mxu0
        %v6183 = vadd.f32 0.0, %v6182
        %v6184 = vpop.f32.mrf.mxu0
        %6185 = vmatprep.mubr.bf16.mxu0 0
        %6186 = vmatmul.mubr.bf16.gmra.mxu0 %v6116
        %v6187 = vpop.f32.mrf.mxu0
        %v6188 = vadd.f32 0.0, %v6187
        %v6189 = vpop.f32.mrf.mxu0
        %v6190 = vpop.f32.mrf.mxu0
        %v6191 = vadd.f32 0.0, %v6190
        %v6192 = vpop.f32.mrf.mxu0
        %6193 = vmatprep.mubr.bf16.mxu0 0
        %6194 = vmatmul.mubr.bf16.gmra.mxu0 %v6119
        %v6195 = vpop.f32.mrf.mxu0
        %v6196 = vadd.f32 0.0, %v6195
        %v6197 = vpop.f32.mrf.mxu0
        %v6198 = vpop.f32.mrf.mxu0
        %v6199 = vpop.f32.mrf.mxu0
        %6200 = vdwg.mxu0
        %v6201 = vadd.f32 %v6038, %v6156
        %v6202 = vadd.f32 %v6039, %v6159
        %v6203 = vadd.f32 %v6040, %v6164
        %v6204 = vadd.f32 %v6041, %v6167
        %v6205 = vadd.f32 %v6042, %v6172
        %v6206 = vadd.f32 %v6043, %v6175
        %v6207 = vadd.f32 %v6044, %v6180
        %v6208 = vadd.f32 %v6045, %v6183
        %v6209 = vadd.f32 %v6046, %v6188
        %v6210 = vadd.f32 %v6047, %v6191
        %v6211 = vadd.f32 %v6048, %v6196
        %s6212 = scalar_lea.vmem [#allocation8], 384
        %v6213 = vld [vmem:[%s6212] sm:$0xf]
        %v6214 = vld [vmem:[%s6212 + $0x4] sm:$0xf]
        %v6215 = vld [vmem:[%s6212 + $0x8] sm:$0xf]
        %v6216 = vld [vmem:[%s6212 + $0xc] sm:$0xf]
        %v6217 = vpack.c.b16 %v5577, %v5576
        %v6218 = vpack.c.b16 %v5579, %v5578
        %v6219 = vpack.c.b16 %v5581, %v5580
        %v6220 = vpack.c.b16 %v5583, %v5582
        %v6221 = vpack.c.b16 %v5585, %v5584
        %v6222 = vpack.c.b16 %v6056, %v6056
        %v6227 = vunpack.c.l.b16 %v6213
        %v6228 = vunpack.c.l.b16 %v6214
        %v6229 = vunpack.c.l.b16 %v6215
        %v6230 = vunpack.c.l.b16 %v6216
        %v6231 = vpack.c.b16 %v6228, %v6227
        %v6232 = vpack.c.b16 %v6230, %v6229
        %v6236 = vsel %vm2301, %v6217, 0
        %v6239 = vsel %vm2301, %v6218, 0
        %v6242 = vsel %vm2301, %v6219, 0
        %v6245 = vsel %vm2301, %v6220, 0
        %v6248 = vsel %vm2301, %v6221, 0
        %v6251 = vsel %vm2301, %v6222, 0
        %6253 = vmatprep.subr.bf16.mxu0 0
        %6254 = vmatpush1.bf16.msra.mxu0 0
        %6255 = vmatprep.subr.bf16.mxu0 0
        %6256 = vmatpush1.bf16.msra.mxu0 0
        %6257 = vmatprep.subr.bf16.mxu0 0
        %6258 = vmatpush1.bf16.msra.mxu0 0
        %6259 = vmatprep.subr.bf16.mxu0 0
        %6260 = vmatpush1.bf16.msra.mxu0 0
        %6261 = vmatprep.subr.bf16.mxu0 0
        %6262 = vmatpush1.bf16.msra.mxu0 0
        %6263 = vmatprep.subr.bf16.mxu0 0
        %6264 = vmatpush1.bf16.msra.mxu0 0
        %6265 = vmatprep.subr.bf16.mxu0 0
        %6266 = vmatpush1.bf16.msra.mxu0 %v6232
        %6267 = vmatprep.subr.bf16.mxu0 0
        %6268 = vmatpush1.bf16.msra.mxu0 %v6231
        %6269 = vmatprep.subr.bf16.mxu0 0
        %6270 = vmatpush2.bf16.msra.mxu0 0
        %6271 = vmatprep.subr.bf16.mxu0 0
        %6272 = vmatpush2.bf16.msra.mxu0 0
        %6273 = vmatprep.subr.bf16.mxu0 0
        %6274 = vmatpush2.bf16.msra.mxu0 0
        %6275 = vmatprep.subr.bf16.mxu0 0
        %6276 = vmatpush2.bf16.msra.mxu0 0
        %6277 = vmatprep.subr.bf16.mxu0 0
        %6278 = vmatpush2.bf16.msra.mxu0 0
        %6279 = vmatprep.subr.bf16.mxu0 0
        %6280 = vmatpush2.bf16.msra.mxu0 0
        %6281 = vmatprep.subr.bf16.mxu0 0
        %6282 = vmatpush2.bf16.msra.mxu0 0
        %6283 = vmatprep.subr.bf16.mxu0 0
        %6284 = vmatpush2.bf16.msra.mxu0 0
        %6285 = vmatprep.mubr.bf16.mxu0 0
        %6286 = vmatmul.mubr.bf16.gmra.mxu0 %v6236
        %v6287 = vpop.f32.mrf.mxu0
        %v6288 = vadd.f32 0.0, %v6287
        %v6289 = vpop.f32.mrf.mxu0
        %v6290 = vpop.f32.mrf.mxu0
        %v6291 = vadd.f32 0.0, %v6290
        %v6292 = vpop.f32.mrf.mxu0
        %6293 = vmatprep.mubr.bf16.mxu0 0
        %6294 = vmatmul.mubr.bf16.gmra.mxu0 %v6239
        %v6295 = vpop.f32.mrf.mxu0
        %v6296 = vadd.f32 0.0, %v6295
        %v6297 = vpop.f32.mrf.mxu0
        %v6298 = vpop.f32.mrf.mxu0
        %v6299 = vadd.f32 0.0, %v6298
        %v6300 = vpop.f32.mrf.mxu0
        %6301 = vmatprep.mubr.bf16.mxu0 0
        %6302 = vmatmul.mubr.bf16.gmra.mxu0 %v6242
        %v6303 = vpop.f32.mrf.mxu0
        %v6304 = vadd.f32 0.0, %v6303
        %v6305 = vpop.f32.mrf.mxu0
        %v6306 = vpop.f32.mrf.mxu0
        %v6307 = vadd.f32 0.0, %v6306
        %v6308 = vpop.f32.mrf.mxu0
        %6309 = vmatprep.mubr.bf16.mxu0 0
        %6310 = vmatmul.mubr.bf16.gmra.mxu0 %v6245
        %v6311 = vpop.f32.mrf.mxu0
        %v6312 = vadd.f32 0.0, %v6311
        %v6313 = vpop.f32.mrf.mxu0
        %v6314 = vpop.f32.mrf.mxu0
        %v6315 = vadd.f32 0.0, %v6314
        %v6316 = vpop.f32.mrf.mxu0
        %6317 = vmatprep.mubr.bf16.mxu0 0
        %6318 = vmatmul.mubr.bf16.gmra.mxu0 %v6248
        %v6319 = vpop.f32.mrf.mxu0
        %v6320 = vadd.f32 0.0, %v6319
        %v6321 = vpop.f32.mrf.mxu0
        %v6322 = vpop.f32.mrf.mxu0
        %v6323 = vadd.f32 0.0, %v6322
        %v6324 = vpop.f32.mrf.mxu0
        %6325 = vmatprep.mubr.bf16.mxu0 0
        %6326 = vmatmul.mubr.bf16.gmra.mxu0 %v6251
        %v6327 = vpop.f32.mrf.mxu0
        %v6328 = vadd.f32 0.0, %v6327
        %v6329 = vpop.f32.mrf.mxu0
        %v6330 = vpop.f32.mrf.mxu0
        %v6331 = vpop.f32.mrf.mxu0
        %6332 = vdwg.mxu0
        %v6333 = vadd.f32 %v6201, %v6288
        %v6334 = vadd.f32 %v6202, %v6291
        %v6335 = vadd.f32 %v6203, %v6296
        %v6336 = vadd.f32 %v6204, %v6299
        %v6337 = vadd.f32 %v6205, %v6304
        %v6338 = vadd.f32 %v6206, %v6307
        %v6339 = vadd.f32 %v6207, %v6312
        %v6340 = vadd.f32 %v6208, %v6315
        %v6341 = vadd.f32 %v6209, %v6320
        %v6342 = vadd.f32 %v6210, %v6323
        %v6343 = vadd.f32 %v6211, %v6328
        %v6344 = vld [vmem:[#allocation9] sm:$0x1]
        %v6346 = vlaneseq
        %v6347 = vshrl.u32 %v6346, 7
        %v6348 = vsub.s32 0, %v6347
        %v6349 = vrot.slane %v6344, %v6348
        %v6351 = vadd.f32 %v6333, %v6349
        %v6352 = vadd.f32 %v6334, %v6349
        %v6353 = vadd.f32 %v6335, %v6349
        %v6354 = vadd.f32 %v6336, %v6349
        %v6355 = vadd.f32 %v6337, %v6349
        %v6356 = vadd.f32 %v6338, %v6349
        %v6357 = vadd.f32 %v6339, %v6349
        %v6358 = vadd.f32 %v6340, %v6349
        %v6359 = vadd.f32 %v6341, %v6349
        %v6360 = vadd.f32 %v6342, %v6349
        %v6361 = vadd.f32 %v6343, %v6349
        %v6362 = vmax.f32 %v6351, 0.0
        %v6363 = vmax.f32 %v6352, 0.0
        %v6364 = vmax.f32 %v6353, 0.0
        %v6365 = vmax.f32 %v6354, 0.0
        %v6366 = vmax.f32 %v6355, 0.0
        %v6367 = vmax.f32 %v6356, 0.0
        %v6368 = vmax.f32 %v6357, 0.0
        %v6369 = vmax.f32 %v6358, 0.0
        %v6370 = vmax.f32 %v6359, 0.0
        %v6371 = vmax.f32 %v6360, 0.0
        %v6372 = vmax.f32 %v6361, 0.0
        %v6373 = vpack.c.bf16 %v6363, %v6362
        %v6374 = vpack.c.bf16 %v6365, %v6364
        %v6375 = vpack.c.bf16 %v6367, %v6366
        %v6376 = vpack.c.bf16 %v6369, %v6368
        %v6377 = vpack.c.bf16 %v6371, %v6370
        %v6378 = vpack.c.bf16 %v6372, %v6372
        %v6385 = vunpack.c.l.b16 %v6373
        %v6386 = vunpack.c.h.b16 %v6373
        %v6387 = vunpack.c.l.b16 %v6374
        %v6388 = vunpack.c.h.b16 %v6374
        %v6389 = vunpack.c.l.b16 %v6375
        %v6390 = vunpack.c.h.b16 %v6375
        %v6391 = vunpack.c.l.b16 %v6376
        %v6392 = vunpack.c.h.b16 %v6376
        %v6393 = vunpack.c.l.b16 %v6377
        %v6394 = vunpack.c.h.b16 %v6377
        %v6395 = vunpack.c.l.b16 %v6378
        %v6396 = vpack.c.b16 %v6385, %v6385
        %v6397 = vpack.c.b16 %v6386, %v6386
        %v6398 = vpack.c.b16 %v6387, %v6387
        %v6399 = vpack.c.b16 %v6388, %v6388
        %v6400 = vpack.c.b16 %v6389, %v6389
        %v6401 = vpack.c.b16 %v6390, %v6390
        %v6402 = vpack.c.b16 %v6391, %v6391
        %v6403 = vpack.c.b16 %v6392, %v6392
        %v6404 = vpack.c.b16 %v6393, %v6393
        %v6405 = vpack.c.b16 %v6394, %v6394
        %v6406 = vpack.c.b16 %v6395, %v6395
        %vm6418 = vcmask 519168
        %6419 = vst.msk [vmem:[#allocation3] sm:$0xf] %vm6418, %v6396
        %6420 = vst.msk [vmem:[#allocation3 + $0x4] sm:$0xf] %vm6418, %v6397
        %6421 = vst.msk [vmem:[#allocation3 + $0x8] sm:$0xf] %vm6418, %v6398
        %6422 = vst.msk [vmem:[#allocation3 + $0xc] sm:$0xf] %vm6418, %v6399
        %6423 = vst.msk [vmem:[#allocation3 + $0x10] sm:$0xf] %vm6418, %v6400
        %6424 = vst.msk [vmem:[#allocation3 + $0x14] sm:$0xf] %vm6418, %v6401
        %6425 = vst.msk [vmem:[#allocation3 + $0x18] sm:$0xf] %vm6418, %v6402
        %6426 = vst.msk [vmem:[#allocation3 + $0x1c] sm:$0xf] %vm6418, %v6403
        %6427 = vst.msk [vmem:[#allocation3 + $0x20] sm:$0xf] %vm6418, %v6404
        %6428 = vst.msk [vmem:[#allocation3 + $0x24] sm:$0xf] %vm6418, %v6405
        %6429 = vst.msk [vmem:[#allocation3 + $0x28] sm:$0xf] %vm6418, %v6406
        %v6430 = vld [vmem:[#allocation3] sm:$0xf]
        %v6431 = vld [vmem:[#allocation3 + $0x4] sm:$0xf]
        %v6432 = vld [vmem:[#allocation3 + $0x8] sm:$0xf]
        %v6433 = vld [vmem:[#allocation3 + $0xc] sm:$0xf]
        %v6434 = vld [vmem:[#allocation3 + $0x10] sm:$0xf]
        %v6435 = vld [vmem:[%s5] sm:$0xf]
        %v6436 = vld [vmem:[%s5 + $0x4] sm:$0xf]
        %v6437 = vld [vmem:[%s5 + $0x8] sm:$0xf]
        %v6438 = vld [vmem:[%s5 + $0xc] sm:$0xf]
        %v6439 = vld [vmem:[%s5 + $0x10] sm:$0xf]
        %v6440 = vld [vmem:[%s5 + $0x14] sm:$0xf]
        %v6441 = vld [vmem:[%s5 + $0x18] sm:$0xf]
        %v6442 = vld [vmem:[%s5 + $0x1c] sm:$0xf]
        %v6443 = vld [vmem:[#allocation3 + $0x14] sm:$0x1]
        %s6444 = scalar_lea.vmem %s5, 32
        %v6445 = vld [vmem:[%s6444] sm:$0xf]
        %v6446 = vld [vmem:[%s6444 + $0x4] sm:$0xf]
        %v6447 = vld [vmem:[%s6444 + $0x8] sm:$0xf]
        %v6448 = vld [vmem:[%s6444 + $0xc] sm:$0xf]
        %v6449 = vld [vmem:[%s6444 + $0x10] sm:$0xf]
        %v6450 = vld [vmem:[%s6444 + $0x14] sm:$0xf]
        %v6451 = vld [vmem:[%s6444 + $0x18] sm:$0xf]
        %v6452 = vld [vmem:[%s6444 + $0x1c] sm:$0xf]
        %v6459 = vunpack.c.l.b16 %v6430
        %v6460 = vunpack.c.l.b16 %v6431
        %v6461 = vunpack.c.l.b16 %v6432
        %v6462 = vunpack.c.l.b16 %v6433
        %v6463 = vunpack.c.l.b16 %v6434
        %v6464 = vunpack.c.l.b16 %v6443
        %v6465 = vpack.c.b16 %v6460, %v6459
        %v6466 = vpack.c.b16 %v6462, %v6461
        %v6467 = vpack.c.b16 %v6464, %v6463
        %v6469 = vshrl.u32 %v6465, 16
        %v6471 = vshll.u32 %v6465, 16
        %v6473 = vrot.slane %v6471, 1
        %v6474 = vor.u32 %v6469, %v6473
        %v6476 = vshll.u32 %v6466, 16
        %v6478 = vrot.slane %v6476, 1
        %v6479 = vsel %vm2241, %v6474, %v6478
        %v6480 = vshrl.u32 %v6466, 16
        %v6482 = vor.u32 %v6480, %v6478
        %v6484 = vshll.u32 %v6467, 16
        %v6486 = vrot.slane %v6484, 1
        %v6487 = vsel %vm2241, %v6482, %v6486
        %v6488 = vshrl.u32 %v6467, 16
        %v6490 = vor.u32 %v6488, %v6486
        %v6499 = vunpack.c.l.b16 %v6445
        %v6500 = vunpack.c.l.b16 %v6446
        %v6501 = vunpack.c.l.b16 %v6447
        %v6502 = vunpack.c.l.b16 %v6448
        %v6503 = vunpack.c.l.b16 %v6449
        %v6504 = vunpack.c.l.b16 %v6450
        %v6505 = vunpack.c.l.b16 %v6451
        %v6506 = vunpack.c.l.b16 %v6452
        %v6507 = vpack.c.b16 %v6500, %v6499
        %v6508 = vpack.c.b16 %v6502, %v6501
        %v6509 = vpack.c.b16 %v6504, %v6503
        %v6510 = vpack.c.b16 %v6506, %v6505
        %vm6515 = vcmask 523264
        %v6517 = vsel %vm6515, %v6479, 0
        %v6520 = vsel %vm6515, %v6487, 0
        %v6523 = vsel %vm6515, %v6490, 0
        %6525 = vmatprep.subr.bf16.mxu0 0
        %6526 = vmatpush1.bf16.msra.mxu0 0
        %6527 = vmatprep.subr.bf16.mxu0 0
        %6528 = vmatpush1.bf16.msra.mxu0 0
        %6529 = vmatprep.subr.bf16.mxu0 0
        %6530 = vmatpush1.bf16.msra.mxu0 0
        %6531 = vmatprep.subr.bf16.mxu0 0
        %6532 = vmatpush1.bf16.msra.mxu0 0
        %6533 = vmatprep.subr.bf16.mxu0 0
        %6534 = vmatpush1.bf16.msra.mxu0 %v6510
        %6535 = vmatprep.subr.bf16.mxu0 0
        %6536 = vmatpush1.bf16.msra.mxu0 %v6509
        %6537 = vmatprep.subr.bf16.mxu0 0
        %6538 = vmatpush1.bf16.msra.mxu0 %v6508
        %6539 = vmatprep.subr.bf16.mxu0 0
        %6540 = vmatpush1.bf16.msra.mxu0 %v6507
        %6541 = vmatprep.subr.bf16.mxu0 0
        %6542 = vmatpush2.bf16.msra.mxu0 0
        %6543 = vmatprep.subr.bf16.mxu0 0
        %6544 = vmatpush2.bf16.msra.mxu0 0
        %6545 = vmatprep.subr.bf16.mxu0 0
        %6546 = vmatpush2.bf16.msra.mxu0 0
        %6547 = vmatprep.subr.bf16.mxu0 0
        %6548 = vmatpush2.bf16.msra.mxu0 0
        %6549 = vmatprep.subr.bf16.mxu0 0
        %6550 = vmatpush2.bf16.msra.mxu0 0
        %6551 = vmatprep.subr.bf16.mxu0 0
        %6552 = vmatpush2.bf16.msra.mxu0 0
        %6553 = vmatprep.subr.bf16.mxu0 0
        %6554 = vmatpush2.bf16.msra.mxu0 0
        %6555 = vmatprep.subr.bf16.mxu0 0
        %6556 = vmatpush2.bf16.msra.mxu0 0
        %6557 = vmatprep.mubr.bf16.mxu0 0
        %6558 = vmatmul.mubr.bf16.gmra.mxu0 %v6517
        %v6559 = vpop.f32.mrf.mxu0
        %v6560 = vadd.f32 0.0, %v6559
        %v6561 = vpop.f32.mrf.mxu0
        %v6562 = vpop.f32.mrf.mxu0
        %v6563 = vadd.f32 0.0, %v6562
        %v6564 = vpop.f32.mrf.mxu0
        %6565 = vmatprep.mubr.bf16.mxu0 0
        %6566 = vmatmul.mubr.bf16.gmra.mxu0 %v6520
        %v6567 = vpop.f32.mrf.mxu0
        %v6568 = vadd.f32 0.0, %v6567
        %v6569 = vpop.f32.mrf.mxu0
        %v6570 = vpop.f32.mrf.mxu0
        %v6571 = vadd.f32 0.0, %v6570
        %v6572 = vpop.f32.mrf.mxu0
        %6573 = vmatprep.mubr.bf16.mxu0 0
        %6574 = vmatmul.mubr.bf16.gmra.mxu0 %v6523
        %v6575 = vpop.f32.mrf.mxu0
        %v6576 = vadd.f32 0.0, %v6575
        %v6577 = vpop.f32.mrf.mxu0
        %v6578 = vpop.f32.mrf.mxu0
        %v6579 = vpop.f32.mrf.mxu0
        %6580 = vdwg.mxu0
        %v6581 = vpack.c.b16 %v6463, %v6463
        %v6590 = vunpack.c.l.b16 %v6435
        %v6591 = vunpack.c.l.b16 %v6436
        %v6592 = vunpack.c.l.b16 %v6437
        %v6593 = vunpack.c.l.b16 %v6438
        %v6594 = vunpack.c.l.b16 %v6439
        %v6595 = vunpack.c.l.b16 %v6440
        %v6596 = vunpack.c.l.b16 %v6441
        %v6597 = vunpack.c.l.b16 %v6442
        %v6598 = vpack.c.b16 %v6591, %v6590
        %v6599 = vpack.c.b16 %v6593, %v6592
        %v6600 = vpack.c.b16 %v6595, %v6594
        %v6601 = vpack.c.b16 %v6597, %v6596
        %v6606 = vsel %vm6515, %v6465, 0
        %v6608 = vsel %vm6515, %v6466, 0
        %v6611 = vsel %vm6515, %v6581, 0
        %6613 = vmatprep.subr.bf16.mxu0 0
        %6614 = vmatpush1.bf16.msra.mxu0 0
        %6615 = vmatprep.subr.bf16.mxu0 0
        %6616 = vmatpush1.bf16.msra.mxu0 0
        %6617 = vmatprep.subr.bf16.mxu0 0
        %6618 = vmatpush1.bf16.msra.mxu0 0
        %6619 = vmatprep.subr.bf16.mxu0 0
        %6620 = vmatpush1.bf16.msra.mxu0 0
        %6621 = vmatprep.subr.bf16.mxu0 0
        %6622 = vmatpush1.bf16.msra.mxu0 %v6601
        %6623 = vmatprep.subr.bf16.mxu0 0
        %6624 = vmatpush1.bf16.msra.mxu0 %v6600
        %6625 = vmatprep.subr.bf16.mxu0 0
        %6626 = vmatpush1.bf16.msra.mxu0 %v6599
        %6627 = vmatprep.subr.bf16.mxu0 0
        %6628 = vmatpush1.bf16.msra.mxu0 %v6598
        %6629 = vmatprep.subr.bf16.mxu0 0
        %6630 = vmatpush2.bf16.msra.mxu0 0
        %6631 = vmatprep.subr.bf16.mxu0 0
        %6632 = vmatpush2.bf16.msra.mxu0 0
        %6633 = vmatprep.subr.bf16.mxu0 0
        %6634 = vmatpush2.bf16.msra.mxu0 0
        %6635 = vmatprep.subr.bf16.mxu0 0
        %6636 = vmatpush2.bf16.msra.mxu0 0
        %6637 = vmatprep.subr.bf16.mxu0 0
        %6638 = vmatpush2.bf16.msra.mxu0 0
        %6639 = vmatprep.subr.bf16.mxu0 0
        %6640 = vmatpush2.bf16.msra.mxu0 0
        %6641 = vmatprep.subr.bf16.mxu0 0
        %6642 = vmatpush2.bf16.msra.mxu0 0
        %6643 = vmatprep.subr.bf16.mxu0 0
        %6644 = vmatpush2.bf16.msra.mxu0 0
        %6645 = vmatprep.mubr.bf16.mxu0 0
        %6646 = vmatmul.mubr.bf16.gmra.mxu0 %v6606
        %v6647 = vpop.f32.mrf.mxu0
        %v6648 = vadd.f32 %v6560, %v6647
        %v6649 = vpop.f32.mrf.mxu0
        %v6650 = vpop.f32.mrf.mxu0
        %v6651 = vadd.f32 %v6563, %v6650
        %v6652 = vpop.f32.mrf.mxu0
        %6653 = vmatprep.mubr.bf16.mxu0 0
        %6654 = vmatmul.mubr.bf16.gmra.mxu0 %v6608
        %v6655 = vpop.f32.mrf.mxu0
        %v6656 = vadd.f32 %v6568, %v6655
        %v6657 = vpop.f32.mrf.mxu0
        %v6658 = vpop.f32.mrf.mxu0
        %v6659 = vadd.f32 %v6571, %v6658
        %v6660 = vpop.f32.mrf.mxu0
        %6661 = vmatprep.mubr.bf16.mxu0 0
        %6662 = vmatmul.mubr.bf16.gmra.mxu0 %v6611
        %v6663 = vpop.f32.mrf.mxu0
        %v6664 = vadd.f32 %v6576, %v6663
        %v6665 = vpop.f32.mrf.mxu0
        %v6666 = vpop.f32.mrf.mxu0
        %v6667 = vpop.f32.mrf.mxu0
        %6668 = vdwg.mxu0
        %v6669 = vld [vmem:[#allocation3] sm:$0xe]
        %s6670 = scalar_lea.vmem %s5, 64
        %v6671 = vld [vmem:[%s6670] sm:$0xf]
        %v6672 = vld [vmem:[%s6670 + $0x4] sm:$0xf]
        %v6673 = vld [vmem:[%s6670 + $0x8] sm:$0xf]
        %v6674 = vld [vmem:[%s6670 + $0xc] sm:$0xf]
        %v6675 = vld [vmem:[%s6670 + $0x10] sm:$0xf]
        %v6676 = vld [vmem:[%s6670 + $0x14] sm:$0xf]
        %v6677 = vld [vmem:[%s6670 + $0x18] sm:$0xf]
        %v6678 = vld [vmem:[%s6670 + $0x1c] sm:$0xf]
        %v6680 = vunpack.c.l.b16 %v6669
        %v6681 = vpack.c.b16 %v6460, %v6680
        %v6682 = vrot.slane %v6681, 1
        %v6683 = vrot.slane %v6466, 1
        %v6684 = vsel %vm2515, %v6682, %v6683
        %v6685 = vrot.slane %v6467, 1
        %v6686 = vsel %vm2515, %v6683, %v6685
        %v6695 = vunpack.c.l.b16 %v6671
        %v6696 = vunpack.c.l.b16 %v6672
        %v6697 = vunpack.c.l.b16 %v6673
        %v6698 = vunpack.c.l.b16 %v6674
        %v6699 = vunpack.c.l.b16 %v6675
        %v6700 = vunpack.c.l.b16 %v6676
        %v6701 = vunpack.c.l.b16 %v6677
        %v6702 = vunpack.c.l.b16 %v6678
        %v6703 = vpack.c.b16 %v6696, %v6695
        %v6704 = vpack.c.b16 %v6698, %v6697
        %v6705 = vpack.c.b16 %v6700, %v6699
        %v6706 = vpack.c.b16 %v6702, %v6701
        %v6712 = vsel %vm6515, %v6684, 0
        %v6715 = vsel %vm6515, %v6686, 0
        %v6718 = vsel %vm6515, %v6685, 0
        %6720 = vmatprep.subr.bf16.mxu0 0
        %6721 = vmatpush1.bf16.msra.mxu0 0
        %6722 = vmatprep.subr.bf16.mxu0 0
        %6723 = vmatpush1.bf16.msra.mxu0 0
        %6724 = vmatprep.subr.bf16.mxu0 0
        %6725 = vmatpush1.bf16.msra.mxu0 0
        %6726 = vmatprep.subr.bf16.mxu0 0
        %6727 = vmatpush1.bf16.msra.mxu0 0
        %6728 = vmatprep.subr.bf16.mxu0 0
        %6729 = vmatpush1.bf16.msra.mxu0 %v6706
        %6730 = vmatprep.subr.bf16.mxu0 0
        %6731 = vmatpush1.bf16.msra.mxu0 %v6705
        %6732 = vmatprep.subr.bf16.mxu0 0
        %6733 = vmatpush1.bf16.msra.mxu0 %v6704
        %6734 = vmatprep.subr.bf16.mxu0 0
        %6735 = vmatpush1.bf16.msra.mxu0 %v6703
        %6736 = vmatprep.subr.bf16.mxu0 0
        %6737 = vmatpush2.bf16.msra.mxu0 0
        %6738 = vmatprep.subr.bf16.mxu0 0
        %6739 = vmatpush2.bf16.msra.mxu0 0
        %6740 = vmatprep.subr.bf16.mxu0 0
        %6741 = vmatpush2.bf16.msra.mxu0 0
        %6742 = vmatprep.subr.bf16.mxu0 0
        %6743 = vmatpush2.bf16.msra.mxu0 0
        %6744 = vmatprep.subr.bf16.mxu0 0
        %6745 = vmatpush2.bf16.msra.mxu0 0
        %6746 = vmatprep.subr.bf16.mxu0 0
        %6747 = vmatpush2.bf16.msra.mxu0 0
        %6748 = vmatprep.subr.bf16.mxu0 0
        %6749 = vmatpush2.bf16.msra.mxu0 0
        %6750 = vmatprep.subr.bf16.mxu0 0
        %6751 = vmatpush2.bf16.msra.mxu0 0
        %6752 = vmatprep.mubr.bf16.mxu0 0
        %6753 = vmatmul.mubr.bf16.gmra.mxu0 %v6712
        %v6754 = vpop.f32.mrf.mxu0
        %v6755 = vadd.f32 0.0, %v6754
        %v6756 = vpop.f32.mrf.mxu0
        %v6757 = vpop.f32.mrf.mxu0
        %v6758 = vadd.f32 0.0, %v6757
        %v6759 = vpop.f32.mrf.mxu0
        %6760 = vmatprep.mubr.bf16.mxu0 0
        %6761 = vmatmul.mubr.bf16.gmra.mxu0 %v6715
        %v6762 = vpop.f32.mrf.mxu0
        %v6763 = vadd.f32 0.0, %v6762
        %v6764 = vpop.f32.mrf.mxu0
        %v6765 = vpop.f32.mrf.mxu0
        %v6766 = vadd.f32 0.0, %v6765
        %v6767 = vpop.f32.mrf.mxu0
        %6768 = vmatprep.mubr.bf16.mxu0 0
        %6769 = vmatmul.mubr.bf16.gmra.mxu0 %v6718
        %v6770 = vpop.f32.mrf.mxu0
        %v6771 = vadd.f32 0.0, %v6770
        %v6772 = vpop.f32.mrf.mxu0
        %v6773 = vpop.f32.mrf.mxu0
        %v6774 = vpop.f32.mrf.mxu0
        %6775 = vdwg.mxu0
        %v6776 = vadd.f32 %v6648, %v6755
        %v6777 = vadd.f32 %v6651, %v6758
        %v6778 = vadd.f32 %v6656, %v6763
        %v6779 = vadd.f32 %v6659, %v6766
        %v6780 = vadd.f32 %v6664, %v6771
        %v6781 = vld [vmem:[#allocation3 + $0x14] sm:$0x3]
        %s6782 = scalar_lea.vmem %s5, 96
        %v6783 = vld [vmem:[%s6782] sm:$0xf]
        %v6784 = vld [vmem:[%s6782 + $0x4] sm:$0xf]
        %v6785 = vld [vmem:[%s6782 + $0x8] sm:$0xf]
        %v6786 = vld [vmem:[%s6782 + $0xc] sm:$0xf]
        %v6787 = vld [vmem:[%s6782 + $0x10] sm:$0xf]
        %v6788 = vld [vmem:[%s6782 + $0x14] sm:$0xf]
        %v6789 = vld [vmem:[%s6782 + $0x18] sm:$0xf]
        %v6790 = vld [vmem:[%s6782 + $0x1c] sm:$0xf]
        %v6792 = vunpack.c.l.b16 %v6781
        %v6793 = vpack.c.b16 %v6792, %v6463
        %v6795 = vshrl.u32 %v6681, 16
        %v6797 = vrot.slane %v6795, 1
        %v6798 = vshll.u32 %v6681, 16
        %v6800 = vrot.slane %v6798, 2
        %v6801 = vor.u32 %v6797, %v6800
        %v6802 = vrot.slane %v6480, 1
        %v6803 = vrot.slane %v6476, 2
        %v6804 = vor.u32 %v6802, %v6803
        %v6805 = vsel %vm1785, %v6801, %v6804
        %v6807 = vshrl.u32 %v6793, 16
        %v6809 = vrot.slane %v6807, 1
        %v6810 = vshll.u32 %v6793, 16
        %v6812 = vrot.slane %v6810, 2
        %v6813 = vor.u32 %v6809, %v6812
        %v6814 = vsel %vm1785, %v6804, %v6813
        %v6823 = vunpack.c.l.b16 %v6783
        %v6824 = vunpack.c.l.b16 %v6784
        %v6825 = vunpack.c.l.b16 %v6785
        %v6826 = vunpack.c.l.b16 %v6786
        %v6827 = vunpack.c.l.b16 %v6787
        %v6828 = vunpack.c.l.b16 %v6788
        %v6829 = vunpack.c.l.b16 %v6789
        %v6830 = vunpack.c.l.b16 %v6790
        %v6831 = vpack.c.b16 %v6824, %v6823
        %v6832 = vpack.c.b16 %v6826, %v6825
        %v6833 = vpack.c.b16 %v6828, %v6827
        %v6834 = vpack.c.b16 %v6830, %v6829
        %v6840 = vsel %vm6515, %v6805, 0
        %v6843 = vsel %vm6515, %v6814, 0
        %v6846 = vsel %vm6515, %v6813, 0
        %6848 = vmatprep.subr.bf16.mxu0 0
        %6849 = vmatpush1.bf16.msra.mxu0 0
        %6850 = vmatprep.subr.bf16.mxu0 0
        %6851 = vmatpush1.bf16.msra.mxu0 0
        %6852 = vmatprep.subr.bf16.mxu0 0
        %6853 = vmatpush1.bf16.msra.mxu0 0
        %6854 = vmatprep.subr.bf16.mxu0 0
        %6855 = vmatpush1.bf16.msra.mxu0 0
        %6856 = vmatprep.subr.bf16.mxu0 0
        %6857 = vmatpush1.bf16.msra.mxu0 %v6834
        %6858 = vmatprep.subr.bf16.mxu0 0
        %6859 = vmatpush1.bf16.msra.mxu0 %v6833
        %6860 = vmatprep.subr.bf16.mxu0 0
        %6861 = vmatpush1.bf16.msra.mxu0 %v6832
        %6862 = vmatprep.subr.bf16.mxu0 0
        %6863 = vmatpush1.bf16.msra.mxu0 %v6831
        %6864 = vmatprep.subr.bf16.mxu0 0
        %6865 = vmatpush2.bf16.msra.mxu0 0
        %6866 = vmatprep.subr.bf16.mxu0 0
        %6867 = vmatpush2.bf16.msra.mxu0 0
        %6868 = vmatprep.subr.bf16.mxu0 0
        %6869 = vmatpush2.bf16.msra.mxu0 0
        %6870 = vmatprep.subr.bf16.mxu0 0
        %6871 = vmatpush2.bf16.msra.mxu0 0
        %6872 = vmatprep.subr.bf16.mxu0 0
        %6873 = vmatpush2.bf16.msra.mxu0 0
        %6874 = vmatprep.subr.bf16.mxu0 0
        %6875 = vmatpush2.bf16.msra.mxu0 0
        %6876 = vmatprep.subr.bf16.mxu0 0
        %6877 = vmatpush2.bf16.msra.mxu0 0
        %6878 = vmatprep.subr.bf16.mxu0 0
        %6879 = vmatpush2.bf16.msra.mxu0 0
        %6880 = vmatprep.mubr.bf16.mxu0 0
        %6881 = vmatmul.mubr.bf16.gmra.mxu0 %v6840
        %v6882 = vpop.f32.mrf.mxu0
        %v6883 = vadd.f32 0.0, %v6882
        %v6884 = vpop.f32.mrf.mxu0
        %v6885 = vpop.f32.mrf.mxu0
        %v6886 = vadd.f32 0.0, %v6885
        %v6887 = vpop.f32.mrf.mxu0
        %6888 = vmatprep.mubr.bf16.mxu0 0
        %6889 = vmatmul.mubr.bf16.gmra.mxu0 %v6843
        %v6890 = vpop.f32.mrf.mxu0
        %v6891 = vadd.f32 0.0, %v6890
        %v6892 = vpop.f32.mrf.mxu0
        %v6893 = vpop.f32.mrf.mxu0
        %v6894 = vadd.f32 0.0, %v6893
        %v6895 = vpop.f32.mrf.mxu0
        %6896 = vmatprep.mubr.bf16.mxu0 0
        %6897 = vmatmul.mubr.bf16.gmra.mxu0 %v6846
        %v6898 = vpop.f32.mrf.mxu0
        %v6899 = vadd.f32 0.0, %v6898
        %v6900 = vpop.f32.mrf.mxu0
        %v6901 = vpop.f32.mrf.mxu0
        %v6902 = vpop.f32.mrf.mxu0
        %6903 = vdwg.mxu0
        %v6904 = vadd.f32 %v6776, %v6883
        %v6905 = vadd.f32 %v6777, %v6886
        %v6906 = vadd.f32 %v6778, %v6891
        %v6907 = vadd.f32 %v6779, %v6894
        %v6908 = vadd.f32 %v6780, %v6899
        %v6909 = vld [vmem:[#allocation3 + $0x4] sm:$0x8]
        %v6910 = vld [vmem:[#allocation3 + $0x8] sm:$0xf]
        %v6911 = vld [vmem:[#allocation3 + $0xc] sm:$0xf]
        %v6912 = vld [vmem:[#allocation3 + $0x10] sm:$0xf]
        %v6913 = vld [vmem:[#allocation3 + $0x14] sm:$0xf]
        %v6914 = vld [vmem:[#allocation3 + $0x18] sm:$0xf]
        %s6915 = scalar_lea.vmem %s5, 128
        %v6916 = vld [vmem:[%s6915] sm:$0xf]
        %v6917 = vld [vmem:[%s6915 + $0x4] sm:$0xf]
        %v6918 = vld [vmem:[%s6915 + $0x8] sm:$0xf]
        %v6919 = vld [vmem:[%s6915 + $0xc] sm:$0xf]
        %v6920 = vld [vmem:[%s6915 + $0x10] sm:$0xf]
        %v6921 = vld [vmem:[%s6915 + $0x14] sm:$0xf]
        %v6922 = vld [vmem:[%s6915 + $0x18] sm:$0xf]
        %v6923 = vld [vmem:[%s6915 + $0x1c] sm:$0xf]
        %v6930 = vunpack.c.l.b16 %v6909
        %v6931 = vunpack.c.l.b16 %v6910
        %v6932 = vunpack.c.l.b16 %v6911
        %v6933 = vunpack.c.l.b16 %v6912
        %v6934 = vunpack.c.l.b16 %v6913
        %v6935 = vunpack.c.l.b16 %v6914
        %v6936 = vpack.c.b16 %v6931, %v6930
        %v6937 = vpack.c.b16 %v6933, %v6932
        %v6938 = vpack.c.b16 %v6935, %v6934
        %v6940 = vshrl.u32 %v6936, 16
        %v6942 = vrot.slane %v6940, 3
        %v6943 = vshll.u32 %v6936, 16
        %v6945 = vrot.slane %v6943, 4
        %v6946 = vor.u32 %v6942, %v6945
        %v6948 = vshrl.u32 %v6937, 16
        %v6950 = vrot.slane %v6948, 3
        %v6951 = vshll.u32 %v6937, 16
        %v6953 = vrot.slane %v6951, 4
        %v6954 = vor.u32 %v6950, %v6953
        %v6955 = vsel %vm426, %v6946, %v6954
        %v6957 = vshrl.u32 %v6938, 16
        %v6959 = vrot.slane %v6957, 3
        %v6960 = vshll.u32 %v6938, 16
        %v6962 = vrot.slane %v6960, 4
        %v6963 = vor.u32 %v6959, %v6962
        %v6964 = vsel %vm426, %v6954, %v6963
        %v6973 = vunpack.c.l.b16 %v6916
        %v6974 = vunpack.c.l.b16 %v6917
        %v6975 = vunpack.c.l.b16 %v6918
        %v6976 = vunpack.c.l.b16 %v6919
        %v6977 = vunpack.c.l.b16 %v6920
        %v6978 = vunpack.c.l.b16 %v6921
        %v6979 = vunpack.c.l.b16 %v6922
        %v6980 = vunpack.c.l.b16 %v6923
        %v6981 = vpack.c.b16 %v6974, %v6973
        %v6982 = vpack.c.b16 %v6976, %v6975
        %v6983 = vpack.c.b16 %v6978, %v6977
        %v6984 = vpack.c.b16 %v6980, %v6979
        %v6990 = vsel %vm6515, %v6955, 0
        %v6993 = vsel %vm6515, %v6964, 0
        %v6996 = vsel %vm6515, %v6963, 0
        %6998 = vmatprep.subr.bf16.mxu0 0
        %6999 = vmatpush1.bf16.msra.mxu0 0
        %7000 = vmatprep.subr.bf16.mxu0 0
        %7001 = vmatpush1.bf16.msra.mxu0 0
        %7002 = vmatprep.subr.bf16.mxu0 0
        %7003 = vmatpush1.bf16.msra.mxu0 0
        %7004 = vmatprep.subr.bf16.mxu0 0
        %7005 = vmatpush1.bf16.msra.mxu0 0
        %7006 = vmatprep.subr.bf16.mxu0 0
        %7007 = vmatpush1.bf16.msra.mxu0 %v6984
        %7008 = vmatprep.subr.bf16.mxu0 0
        %7009 = vmatpush1.bf16.msra.mxu0 %v6983
        %7010 = vmatprep.subr.bf16.mxu0 0
        %7011 = vmatpush1.bf16.msra.mxu0 %v6982
        %7012 = vmatprep.subr.bf16.mxu0 0
        %7013 = vmatpush1.bf16.msra.mxu0 %v6981
        %7014 = vmatprep.subr.bf16.mxu0 0
        %7015 = vmatpush2.bf16.msra.mxu0 0
        %7016 = vmatprep.subr.bf16.mxu0 0
        %7017 = vmatpush2.bf16.msra.mxu0 0
        %7018 = vmatprep.subr.bf16.mxu0 0
        %7019 = vmatpush2.bf16.msra.mxu0 0
        %7020 = vmatprep.subr.bf16.mxu0 0
        %7021 = vmatpush2.bf16.msra.mxu0 0
        %7022 = vmatprep.subr.bf16.mxu0 0
        %7023 = vmatpush2.bf16.msra.mxu0 0
        %7024 = vmatprep.subr.bf16.mxu0 0
        %7025 = vmatpush2.bf16.msra.mxu0 0
        %7026 = vmatprep.subr.bf16.mxu0 0
        %7027 = vmatpush2.bf16.msra.mxu0 0
        %7028 = vmatprep.subr.bf16.mxu0 0
        %7029 = vmatpush2.bf16.msra.mxu0 0
        %7030 = vmatprep.mubr.bf16.mxu0 0
        %7031 = vmatmul.mubr.bf16.gmra.mxu0 %v6990
        %v7032 = vpop.f32.mrf.mxu0
        %v7033 = vadd.f32 0.0, %v7032
        %v7034 = vpop.f32.mrf.mxu0
        %v7035 = vpop.f32.mrf.mxu0
        %v7036 = vadd.f32 0.0, %v7035
        %v7037 = vpop.f32.mrf.mxu0
        %7038 = vmatprep.mubr.bf16.mxu0 0
        %7039 = vmatmul.mubr.bf16.gmra.mxu0 %v6993
        %v7040 = vpop.f32.mrf.mxu0
        %v7041 = vadd.f32 0.0, %v7040
        %v7042 = vpop.f32.mrf.mxu0
        %v7043 = vpop.f32.mrf.mxu0
        %v7044 = vadd.f32 0.0, %v7043
        %v7045 = vpop.f32.mrf.mxu0
        %7046 = vmatprep.mubr.bf16.mxu0 0
        %7047 = vmatmul.mubr.bf16.gmra.mxu0 %v6996
        %v7048 = vpop.f32.mrf.mxu0
        %v7049 = vadd.f32 0.0, %v7048
        %v7050 = vpop.f32.mrf.mxu0
        %v7051 = vpop.f32.mrf.mxu0
        %v7052 = vpop.f32.mrf.mxu0
        %7053 = vdwg.mxu0
        %v7054 = vadd.f32 %v6904, %v7033
        %v7055 = vadd.f32 %v6905, %v7036
        %v7056 = vadd.f32 %v6906, %v7041
        %v7057 = vadd.f32 %v6907, %v7044
        %v7058 = vadd.f32 %v6908, %v7049
        %s7059 = scalar_lea.vmem %s5, 160
        %v7060 = vld [vmem:[%s7059] sm:$0xf]
        %v7061 = vld [vmem:[%s7059 + $0x4] sm:$0xf]
        %v7062 = vld [vmem:[%s7059 + $0x8] sm:$0xf]
        %v7063 = vld [vmem:[%s7059 + $0xc] sm:$0xf]
        %v7064 = vld [vmem:[%s7059 + $0x10] sm:$0xf]
        %v7065 = vld [vmem:[%s7059 + $0x14] sm:$0xf]
        %v7066 = vld [vmem:[%s7059 + $0x18] sm:$0xf]
        %v7067 = vld [vmem:[%s7059 + $0x1c] sm:$0xf]
        %v7068 = vpack.c.b16 %v6932, %v6931
        %v7069 = vpack.c.b16 %v6934, %v6933
        %v7070 = vpack.c.b16 %v6935, %v6935
        %v7079 = vunpack.c.l.b16 %v7060
        %v7080 = vunpack.c.l.b16 %v7061
        %v7081 = vunpack.c.l.b16 %v7062
        %v7082 = vunpack.c.l.b16 %v7063
        %v7083 = vunpack.c.l.b16 %v7064
        %v7084 = vunpack.c.l.b16 %v7065
        %v7085 = vunpack.c.l.b16 %v7066
        %v7086 = vunpack.c.l.b16 %v7067
        %v7087 = vpack.c.b16 %v7080, %v7079
        %v7088 = vpack.c.b16 %v7082, %v7081
        %v7089 = vpack.c.b16 %v7084, %v7083
        %v7090 = vpack.c.b16 %v7086, %v7085
        %v7096 = vsel %vm6515, %v7068, 0
        %v7099 = vsel %vm6515, %v7069, 0
        %v7102 = vsel %vm6515, %v7070, 0
        %7104 = vmatprep.subr.bf16.mxu0 0
        %7105 = vmatpush1.bf16.msra.mxu0 0
        %7106 = vmatprep.subr.bf16.mxu0 0
        %7107 = vmatpush1.bf16.msra.mxu0 0
        %7108 = vmatprep.subr.bf16.mxu0 0
        %7109 = vmatpush1.bf16.msra.mxu0 0
        %7110 = vmatprep.subr.bf16.mxu0 0
        %7111 = vmatpush1.bf16.msra.mxu0 0
        %7112 = vmatprep.subr.bf16.mxu0 0
        %7113 = vmatpush1.bf16.msra.mxu0 %v7090
        %7114 = vmatprep.subr.bf16.mxu0 0
        %7115 = vmatpush1.bf16.msra.mxu0 %v7089
        %7116 = vmatprep.subr.bf16.mxu0 0
        %7117 = vmatpush1.bf16.msra.mxu0 %v7088
        %7118 = vmatprep.subr.bf16.mxu0 0
        %7119 = vmatpush1.bf16.msra.mxu0 %v7087
        %7120 = vmatprep.subr.bf16.mxu0 0
        %7121 = vmatpush2.bf16.msra.mxu0 0
        %7122 = vmatprep.subr.bf16.mxu0 0
        %7123 = vmatpush2.bf16.msra.mxu0 0
        %7124 = vmatprep.subr.bf16.mxu0 0
        %7125 = vmatpush2.bf16.msra.mxu0 0
        %7126 = vmatprep.subr.bf16.mxu0 0
        %7127 = vmatpush2.bf16.msra.mxu0 0
        %7128 = vmatprep.subr.bf16.mxu0 0
        %7129 = vmatpush2.bf16.msra.mxu0 0
        %7130 = vmatprep.subr.bf16.mxu0 0
        %7131 = vmatpush2.bf16.msra.mxu0 0
        %7132 = vmatprep.subr.bf16.mxu0 0
        %7133 = vmatpush2.bf16.msra.mxu0 0
        %7134 = vmatprep.subr.bf16.mxu0 0
        %7135 = vmatpush2.bf16.msra.mxu0 0
        %7136 = vmatprep.mubr.bf16.mxu0 0
        %7137 = vmatmul.mubr.bf16.gmra.mxu0 %v7096
        %v7138 = vpop.f32.mrf.mxu0
        %v7139 = vadd.f32 0.0, %v7138
        %v7140 = vpop.f32.mrf.mxu0
        %v7141 = vpop.f32.mrf.mxu0
        %v7142 = vadd.f32 0.0, %v7141
        %v7143 = vpop.f32.mrf.mxu0
        %7144 = vmatprep.mubr.bf16.mxu0 0
        %7145 = vmatmul.mubr.bf16.gmra.mxu0 %v7099
        %v7146 = vpop.f32.mrf.mxu0
        %v7147 = vadd.f32 0.0, %v7146
        %v7148 = vpop.f32.mrf.mxu0
        %v7149 = vpop.f32.mrf.mxu0
        %v7150 = vadd.f32 0.0, %v7149
        %v7151 = vpop.f32.mrf.mxu0
        %7152 = vmatprep.mubr.bf16.mxu0 0
        %7153 = vmatmul.mubr.bf16.gmra.mxu0 %v7102
        %v7154 = vpop.f32.mrf.mxu0
        %v7155 = vadd.f32 0.0, %v7154
        %v7156 = vpop.f32.mrf.mxu0
        %v7157 = vpop.f32.mrf.mxu0
        %v7158 = vpop.f32.mrf.mxu0
        %7159 = vdwg.mxu0
        %v7160 = vadd.f32 %v7054, %v7139
        %v7161 = vadd.f32 %v7055, %v7142
        %v7162 = vadd.f32 %v7056, %v7147
        %v7163 = vadd.f32 %v7057, %v7150
        %v7164 = vadd.f32 %v7058, %v7155
        %v7165 = vld [vmem:[#allocation3 + $0x8] sm:$0xf]
        %v7166 = vld [vmem:[#allocation3 + $0xc] sm:$0xf]
        %v7167 = vld [vmem:[#allocation3 + $0x10] sm:$0xf]
        %v7168 = vld [vmem:[#allocation3 + $0x14] sm:$0xf]
        %v7169 = vld [vmem:[#allocation3 + $0x18] sm:$0xf]
        %v7170 = vld [vmem:[#allocation3 + $0x1c] sm:$0x1]
        %s7171 = scalar_lea.vmem %s5, 192
        %v7172 = vld [vmem:[%s7171] sm:$0xf]
        %v7173 = vld [vmem:[%s7171 + $0x4] sm:$0xf]
        %v7174 = vld [vmem:[%s7171 + $0x8] sm:$0xf]
        %v7175 = vld [vmem:[%s7171 + $0xc] sm:$0xf]
        %v7176 = vld [vmem:[%s7171 + $0x10] sm:$0xf]
        %v7177 = vld [vmem:[%s7171 + $0x14] sm:$0xf]
        %v7178 = vld [vmem:[%s7171 + $0x18] sm:$0xf]
        %v7179 = vld [vmem:[%s7171 + $0x1c] sm:$0xf]
        %v7186 = vunpack.c.l.b16 %v7165
        %v7187 = vunpack.c.l.b16 %v7166
        %v7188 = vunpack.c.l.b16 %v7167
        %v7189 = vunpack.c.l.b16 %v7168
        %v7190 = vunpack.c.l.b16 %v7169
        %v7191 = vunpack.c.l.b16 %v7170
        %v7192 = vpack.c.b16 %v7187, %v7186
        %v7193 = vpack.c.b16 %v7189, %v7188
        %v7194 = vpack.c.b16 %v7191, %v7190
        %v7196 = vshrl.u32 %v7192, 16
        %v7198 = vshll.u32 %v7192, 16
        %v7200 = vrot.slane %v7198, 1
        %v7201 = vor.u32 %v7196, %v7200
        %v7203 = vshll.u32 %v7193, 16
        %v7205 = vrot.slane %v7203, 1
        %v7206 = vsel %vm2241, %v7201, %v7205
        %v7207 = vshrl.u32 %v7193, 16
        %v7209 = vor.u32 %v7207, %v7205
        %v7211 = vshll.u32 %v7194, 16
        %v7213 = vrot.slane %v7211, 1
        %v7214 = vsel %vm2241, %v7209, %v7213
        %v7215 = vshrl.u32 %v7194, 16
        %v7217 = vor.u32 %v7215, %v7213
        %v7226 = vunpack.c.l.b16 %v7172
        %v7227 = vunpack.c.l.b16 %v7173
        %v7228 = vunpack.c.l.b16 %v7174
        %v7229 = vunpack.c.l.b16 %v7175
        %v7230 = vunpack.c.l.b16 %v7176
        %v7231 = vunpack.c.l.b16 %v7177
        %v7232 = vunpack.c.l.b16 %v7178
        %v7233 = vunpack.c.l.b16 %v7179
        %v7234 = vpack.c.b16 %v7227, %v7226
        %v7235 = vpack.c.b16 %v7229, %v7228
        %v7236 = vpack.c.b16 %v7231, %v7230
        %v7237 = vpack.c.b16 %v7233, %v7232
        %v7243 = vsel %vm6515, %v7206, 0
        %v7246 = vsel %vm6515, %v7214, 0
        %v7249 = vsel %vm6515, %v7217, 0
        %7251 = vmatprep.subr.bf16.mxu0 0
        %7252 = vmatpush1.bf16.msra.mxu0 0
        %7253 = vmatprep.subr.bf16.mxu0 0
        %7254 = vmatpush1.bf16.msra.mxu0 0
        %7255 = vmatprep.subr.bf16.mxu0 0
        %7256 = vmatpush1.bf16.msra.mxu0 0
        %7257 = vmatprep.subr.bf16.mxu0 0
        %7258 = vmatpush1.bf16.msra.mxu0 0
        %7259 = vmatprep.subr.bf16.mxu0 0
        %7260 = vmatpush1.bf16.msra.mxu0 %v7237
        %7261 = vmatprep.subr.bf16.mxu0 0
        %7262 = vmatpush1.bf16.msra.mxu0 %v7236
        %7263 = vmatprep.subr.bf16.mxu0 0
        %7264 = vmatpush1.bf16.msra.mxu0 %v7235
        %7265 = vmatprep.subr.bf16.mxu0 0
        %7266 = vmatpush1.bf16.msra.mxu0 %v7234
        %7267 = vmatprep.subr.bf16.mxu0 0
        %7268 = vmatpush2.bf16.msra.mxu0 0
        %7269 = vmatprep.subr.bf16.mxu0 0
        %7270 = vmatpush2.bf16.msra.mxu0 0
        %7271 = vmatprep.subr.bf16.mxu0 0
        %7272 = vmatpush2.bf16.msra.mxu0 0
        %7273 = vmatprep.subr.bf16.mxu0 0
        %7274 = vmatpush2.bf16.msra.mxu0 0
        %7275 = vmatprep.subr.bf16.mxu0 0
        %7276 = vmatpush2.bf16.msra.mxu0 0
        %7277 = vmatprep.subr.bf16.mxu0 0
        %7278 = vmatpush2.bf16.msra.mxu0 0
        %7279 = vmatprep.subr.bf16.mxu0 0
        %7280 = vmatpush2.bf16.msra.mxu0 0
        %7281 = vmatprep.subr.bf16.mxu0 0
        %7282 = vmatpush2.bf16.msra.mxu0 0
        %7283 = vmatprep.mubr.bf16.mxu0 0
        %7284 = vmatmul.mubr.bf16.gmra.mxu0 %v7243
        %v7285 = vpop.f32.mrf.mxu0
        %v7286 = vadd.f32 0.0, %v7285
        %v7287 = vpop.f32.mrf.mxu0
        %v7288 = vpop.f32.mrf.mxu0
        %v7289 = vadd.f32 0.0, %v7288
        %v7290 = vpop.f32.mrf.mxu0
        %7291 = vmatprep.mubr.bf16.mxu0 0
        %7292 = vmatmul.mubr.bf16.gmra.mxu0 %v7246
        %v7293 = vpop.f32.mrf.mxu0
        %v7294 = vadd.f32 0.0, %v7293
        %v7295 = vpop.f32.mrf.mxu0
        %v7296 = vpop.f32.mrf.mxu0
        %v7297 = vadd.f32 0.0, %v7296
        %v7298 = vpop.f32.mrf.mxu0
        %7299 = vmatprep.mubr.bf16.mxu0 0
        %7300 = vmatmul.mubr.bf16.gmra.mxu0 %v7249
        %v7301 = vpop.f32.mrf.mxu0
        %v7302 = vadd.f32 0.0, %v7301
        %v7303 = vpop.f32.mrf.mxu0
        %v7304 = vpop.f32.mrf.mxu0
        %v7305 = vpop.f32.mrf.mxu0
        %7306 = vdwg.mxu0
        %v7307 = vadd.f32 %v7160, %v7286
        %v7308 = vadd.f32 %v7161, %v7289
        %v7309 = vadd.f32 %v7162, %v7294
        %v7310 = vadd.f32 %v7163, %v7297
        %v7311 = vadd.f32 %v7164, %v7302
        %v7312 = vld [vmem:[#allocation3 + $0x8] sm:$0xe]
        %s7313 = scalar_lea.vmem %s5, 224
        %v7314 = vld [vmem:[%s7313] sm:$0xf]
        %v7315 = vld [vmem:[%s7313 + $0x4] sm:$0xf]
        %v7316 = vld [vmem:[%s7313 + $0x8] sm:$0xf]
        %v7317 = vld [vmem:[%s7313 + $0xc] sm:$0xf]
        %v7318 = vld [vmem:[%s7313 + $0x10] sm:$0xf]
        %v7319 = vld [vmem:[%s7313 + $0x14] sm:$0xf]
        %v7320 = vld [vmem:[%s7313 + $0x18] sm:$0xf]
        %v7321 = vld [vmem:[%s7313 + $0x1c] sm:$0xf]
        %v7323 = vunpack.c.l.b16 %v7312
        %v7324 = vpack.c.b16 %v7187, %v7323
        %v7325 = vrot.slane %v7324, 1
        %v7326 = vrot.slane %v7193, 1
        %v7327 = vsel %vm2515, %v7325, %v7326
        %v7328 = vrot.slane %v7194, 1
        %v7329 = vsel %vm2515, %v7326, %v7328
        %v7338 = vunpack.c.l.b16 %v7314
        %v7339 = vunpack.c.l.b16 %v7315
        %v7340 = vunpack.c.l.b16 %v7316
        %v7341 = vunpack.c.l.b16 %v7317
        %v7342 = vunpack.c.l.b16 %v7318
        %v7343 = vunpack.c.l.b16 %v7319
        %v7344 = vunpack.c.l.b16 %v7320
        %v7345 = vunpack.c.l.b16 %v7321
        %v7346 = vpack.c.b16 %v7339, %v7338
        %v7347 = vpack.c.b16 %v7341, %v7340
        %v7348 = vpack.c.b16 %v7343, %v7342
        %v7349 = vpack.c.b16 %v7345, %v7344
        %v7355 = vsel %vm6515, %v7327, 0
        %v7358 = vsel %vm6515, %v7329, 0
        %v7361 = vsel %vm6515, %v7328, 0
        %7363 = vmatprep.subr.bf16.mxu0 0
        %7364 = vmatpush1.bf16.msra.mxu0 0
        %7365 = vmatprep.subr.bf16.mxu0 0
        %7366 = vmatpush1.bf16.msra.mxu0 0
        %7367 = vmatprep.subr.bf16.mxu0 0
        %7368 = vmatpush1.bf16.msra.mxu0 0
        %7369 = vmatprep.subr.bf16.mxu0 0
        %7370 = vmatpush1.bf16.msra.mxu0 0
        %7371 = vmatprep.subr.bf16.mxu0 0
        %7372 = vmatpush1.bf16.msra.mxu0 %v7349
        %7373 = vmatprep.subr.bf16.mxu0 0
        %7374 = vmatpush1.bf16.msra.mxu0 %v7348
        %7375 = vmatprep.subr.bf16.mxu0 0
        %7376 = vmatpush1.bf16.msra.mxu0 %v7347
        %7377 = vmatprep.subr.bf16.mxu0 0
        %7378 = vmatpush1.bf16.msra.mxu0 %v7346
        %7379 = vmatprep.subr.bf16.mxu0 0
        %7380 = vmatpush2.bf16.msra.mxu0 0
        %7381 = vmatprep.subr.bf16.mxu0 0
        %7382 = vmatpush2.bf16.msra.mxu0 0
        %7383 = vmatprep.subr.bf16.mxu0 0
        %7384 = vmatpush2.bf16.msra.mxu0 0
        %7385 = vmatprep.subr.bf16.mxu0 0
        %7386 = vmatpush2.bf16.msra.mxu0 0
        %7387 = vmatprep.subr.bf16.mxu0 0
        %7388 = vmatpush2.bf16.msra.mxu0 0
        %7389 = vmatprep.subr.bf16.mxu0 0
        %7390 = vmatpush2.bf16.msra.mxu0 0
        %7391 = vmatprep.subr.bf16.mxu0 0
        %7392 = vmatpush2.bf16.msra.mxu0 0
        %7393 = vmatprep.subr.bf16.mxu0 0
        %7394 = vmatpush2.bf16.msra.mxu0 0
        %7395 = vmatprep.mubr.bf16.mxu0 0
        %7396 = vmatmul.mubr.bf16.gmra.mxu0 %v7355
        %v7397 = vpop.f32.mrf.mxu0
        %v7398 = vadd.f32 0.0, %v7397
        %v7399 = vpop.f32.mrf.mxu0
        %v7400 = vpop.f32.mrf.mxu0
        %v7401 = vadd.f32 0.0, %v7400
        %v7402 = vpop.f32.mrf.mxu0
        %7403 = vmatprep.mubr.bf16.mxu0 0
        %7404 = vmatmul.mubr.bf16.gmra.mxu0 %v7358
        %v7405 = vpop.f32.mrf.mxu0
        %v7406 = vadd.f32 0.0, %v7405
        %v7407 = vpop.f32.mrf.mxu0
        %v7408 = vpop.f32.mrf.mxu0
        %v7409 = vadd.f32 0.0, %v7408
        %v7410 = vpop.f32.mrf.mxu0
        %7411 = vmatprep.mubr.bf16.mxu0 0
        %7412 = vmatmul.mubr.bf16.gmra.mxu0 %v7361
        %v7413 = vpop.f32.mrf.mxu0
        %v7414 = vadd.f32 0.0, %v7413
        %v7415 = vpop.f32.mrf.mxu0
        %v7416 = vpop.f32.mrf.mxu0
        %v7417 = vpop.f32.mrf.mxu0
        %7418 = vdwg.mxu0
        %v7419 = vadd.f32 %v7307, %v7398
        %v7420 = vadd.f32 %v7308, %v7401
        %v7421 = vadd.f32 %v7309, %v7406
        %v7422 = vadd.f32 %v7310, %v7409
        %v7423 = vadd.f32 %v7311, %v7414
        %v7424 = vld [vmem:[#allocation3 + $0xc] sm:$0x8]
        %v7425 = vld [vmem:[#allocation3 + $0x10] sm:$0xf]
        %v7426 = vld [vmem:[#allocation3 + $0x14] sm:$0xf]
        %v7427 = vld [vmem:[#allocation3 + $0x18] sm:$0xf]
        %v7428 = vld [vmem:[#allocation3 + $0x1c] sm:$0xf]
        %v7429 = vld [vmem:[#allocation3 + $0x20] sm:$0x7]
        %s7430 = scalar_lea.vmem %s5, 256
        %v7431 = vld [vmem:[%s7430] sm:$0xf]
        %v7432 = vld [vmem:[%s7430 + $0x4] sm:$0xf]
        %v7433 = vld [vmem:[%s7430 + $0x8] sm:$0xf]
        %v7434 = vld [vmem:[%s7430 + $0xc] sm:$0xf]
        %v7435 = vld [vmem:[%s7430 + $0x10] sm:$0xf]
        %v7436 = vld [vmem:[%s7430 + $0x14] sm:$0xf]
        %v7437 = vld [vmem:[%s7430 + $0x18] sm:$0xf]
        %v7438 = vld [vmem:[%s7430 + $0x1c] sm:$0xf]
        %v7445 = vunpack.c.l.b16 %v7424
        %v7446 = vunpack.c.l.b16 %v7425
        %v7447 = vunpack.c.l.b16 %v7426
        %v7448 = vunpack.c.l.b16 %v7427
        %v7449 = vunpack.c.l.b16 %v7428
        %v7450 = vunpack.c.l.b16 %v7429
        %v7451 = vpack.c.b16 %v7446, %v7445
        %v7452 = vpack.c.b16 %v7448, %v7447
        %v7453 = vpack.c.b16 %v7450, %v7449
        %v7454 = vrot.slane %v7451, 3
        %v7455 = vrot.slane %v7452, 3
        %v7456 = vsel %vm914, %v7454, %v7455
        %v7457 = vrot.slane %v7453, 3
        %v7458 = vsel %vm914, %v7455, %v7457
        %v7467 = vunpack.c.l.b16 %v7431
        %v7468 = vunpack.c.l.b16 %v7432
        %v7469 = vunpack.c.l.b16 %v7433
        %v7470 = vunpack.c.l.b16 %v7434
        %v7471 = vunpack.c.l.b16 %v7435
        %v7472 = vunpack.c.l.b16 %v7436
        %v7473 = vunpack.c.l.b16 %v7437
        %v7474 = vunpack.c.l.b16 %v7438
        %v7475 = vpack.c.b16 %v7468, %v7467
        %v7476 = vpack.c.b16 %v7470, %v7469
        %v7477 = vpack.c.b16 %v7472, %v7471
        %v7478 = vpack.c.b16 %v7474, %v7473
        %v7484 = vsel %vm6515, %v7456, 0
        %v7487 = vsel %vm6515, %v7458, 0
        %v7490 = vsel %vm6515, %v7457, 0
        %7492 = vmatprep.subr.bf16.mxu0 0
        %7493 = vmatpush1.bf16.msra.mxu0 0
        %7494 = vmatprep.subr.bf16.mxu0 0
        %7495 = vmatpush1.bf16.msra.mxu0 0
        %7496 = vmatprep.subr.bf16.mxu0 0
        %7497 = vmatpush1.bf16.msra.mxu0 0
        %7498 = vmatprep.subr.bf16.mxu0 0
        %7499 = vmatpush1.bf16.msra.mxu0 0
        %7500 = vmatprep.subr.bf16.mxu0 0
        %7501 = vmatpush1.bf16.msra.mxu0 %v7478
        %7502 = vmatprep.subr.bf16.mxu0 0
        %7503 = vmatpush1.bf16.msra.mxu0 %v7477
        %7504 = vmatprep.subr.bf16.mxu0 0
        %7505 = vmatpush1.bf16.msra.mxu0 %v7476
        %7506 = vmatprep.subr.bf16.mxu0 0
        %7507 = vmatpush1.bf16.msra.mxu0 %v7475
        %7508 = vmatprep.subr.bf16.mxu0 0
        %7509 = vmatpush2.bf16.msra.mxu0 0
        %7510 = vmatprep.subr.bf16.mxu0 0
        %7511 = vmatpush2.bf16.msra.mxu0 0
        %7512 = vmatprep.subr.bf16.mxu0 0
        %7513 = vmatpush2.bf16.msra.mxu0 0
        %7514 = vmatprep.subr.bf16.mxu0 0
        %7515 = vmatpush2.bf16.msra.mxu0 0
        %7516 = vmatprep.subr.bf16.mxu0 0
        %7517 = vmatpush2.bf16.msra.mxu0 0
        %7518 = vmatprep.subr.bf16.mxu0 0
        %7519 = vmatpush2.bf16.msra.mxu0 0
        %7520 = vmatprep.subr.bf16.mxu0 0
        %7521 = vmatpush2.bf16.msra.mxu0 0
        %7522 = vmatprep.subr.bf16.mxu0 0
        %7523 = vmatpush2.bf16.msra.mxu0 0
        %7524 = vmatprep.mubr.bf16.mxu0 0
        %7525 = vmatmul.mubr.bf16.gmra.mxu0 %v7484
        %v7526 = vpop.f32.mrf.mxu0
        %v7527 = vadd.f32 0.0, %v7526
        %v7528 = vpop.f32.mrf.mxu0
        %v7529 = vpop.f32.mrf.mxu0
        %v7530 = vadd.f32 0.0, %v7529
        %v7531 = vpop.f32.mrf.mxu0
        %7532 = vmatprep.mubr.bf16.mxu0 0
        %7533 = vmatmul.mubr.bf16.gmra.mxu0 %v7487
        %v7534 = vpop.f32.mrf.mxu0
        %v7535 = vadd.f32 0.0, %v7534
        %v7536 = vpop.f32.mrf.mxu0
        %v7537 = vpop.f32.mrf.mxu0
        %v7538 = vadd.f32 0.0, %v7537
        %v7539 = vpop.f32.mrf.mxu0
        %7540 = vmatprep.mubr.bf16.mxu0 0
        %7541 = vmatmul.mubr.bf16.gmra.mxu0 %v7490
        %v7542 = vpop.f32.mrf.mxu0
        %v7543 = vadd.f32 0.0, %v7542
        %v7544 = vpop.f32.mrf.mxu0
        %v7545 = vpop.f32.mrf.mxu0
        %v7546 = vpop.f32.mrf.mxu0
        %7547 = vdwg.mxu0
        %v7548 = vadd.f32 %v7419, %v7527
        %v7549 = vadd.f32 %v7420, %v7530
        %v7550 = vadd.f32 %v7421, %v7535
        %v7551 = vadd.f32 %v7422, %v7538
        %v7552 = vadd.f32 %v7423, %v7543
        %v7553 = vld [vmem:[#allocation3 + $0x20] sm:$0xf]
        %s7554 = scalar_lea.vmem %s5, 288
        %v7555 = vld [vmem:[%s7554] sm:$0xf]
        %v7556 = vld [vmem:[%s7554 + $0x4] sm:$0xf]
        %v7557 = vld [vmem:[%s7554 + $0x8] sm:$0xf]
        %v7558 = vld [vmem:[%s7554 + $0xc] sm:$0xf]
        %v7559 = vld [vmem:[%s7554 + $0x10] sm:$0xf]
        %v7560 = vld [vmem:[%s7554 + $0x14] sm:$0xf]
        %v7561 = vld [vmem:[%s7554 + $0x18] sm:$0xf]
        %v7562 = vld [vmem:[%s7554 + $0x1c] sm:$0xf]
        %v7564 = vunpack.c.l.b16 %v7553
        %v7565 = vpack.c.b16 %v7564, %v7449
        %v7567 = vshrl.u32 %v7451, 16
        %v7569 = vrot.slane %v7567, 3
        %v7570 = vshll.u32 %v7451, 16
        %v7572 = vrot.slane %v7570, 4
        %v7573 = vor.u32 %v7569, %v7572
        %v7575 = vshrl.u32 %v7452, 16
        %v7577 = vrot.slane %v7575, 3
        %v7578 = vshll.u32 %v7452, 16
        %v7580 = vrot.slane %v7578, 4
        %v7581 = vor.u32 %v7577, %v7580
        %v7582 = vsel %vm426, %v7573, %v7581
        %v7584 = vshrl.u32 %v7565, 16
        %v7586 = vrot.slane %v7584, 3
        %v7587 = vshll.u32 %v7565, 16
        %v7589 = vrot.slane %v7587, 4
        %v7590 = vor.u32 %v7586, %v7589
        %v7591 = vsel %vm426, %v7581, %v7590
        %v7600 = vunpack.c.l.b16 %v7555
        %v7601 = vunpack.c.l.b16 %v7556
        %v7602 = vunpack.c.l.b16 %v7557
        %v7603 = vunpack.c.l.b16 %v7558
        %v7604 = vunpack.c.l.b16 %v7559
        %v7605 = vunpack.c.l.b16 %v7560
        %v7606 = vunpack.c.l.b16 %v7561
        %v7607 = vunpack.c.l.b16 %v7562
        %v7608 = vpack.c.b16 %v7601, %v7600
        %v7609 = vpack.c.b16 %v7603, %v7602
        %v7610 = vpack.c.b16 %v7605, %v7604
        %v7611 = vpack.c.b16 %v7607, %v7606
        %v7617 = vsel %vm6515, %v7582, 0
        %v7620 = vsel %vm6515, %v7591, 0
        %v7623 = vsel %vm6515, %v7590, 0
        %7625 = vmatprep.subr.bf16.mxu0 0
        %7626 = vmatpush1.bf16.msra.mxu0 0
        %7627 = vmatprep.subr.bf16.mxu0 0
        %7628 = vmatpush1.bf16.msra.mxu0 0
        %7629 = vmatprep.subr.bf16.mxu0 0
        %7630 = vmatpush1.bf16.msra.mxu0 0
        %7631 = vmatprep.subr.bf16.mxu0 0
        %7632 = vmatpush1.bf16.msra.mxu0 0
        %7633 = vmatprep.subr.bf16.mxu0 0
        %7634 = vmatpush1.bf16.msra.mxu0 %v7611
        %7635 = vmatprep.subr.bf16.mxu0 0
        %7636 = vmatpush1.bf16.msra.mxu0 %v7610
        %7637 = vmatprep.subr.bf16.mxu0 0
        %7638 = vmatpush1.bf16.msra.mxu0 %v7609
        %7639 = vmatprep.subr.bf16.mxu0 0
        %7640 = vmatpush1.bf16.msra.mxu0 %v7608
        %7641 = vmatprep.subr.bf16.mxu0 0
        %7642 = vmatpush2.bf16.msra.mxu0 0
        %7643 = vmatprep.subr.bf16.mxu0 0
        %7644 = vmatpush2.bf16.msra.mxu0 0
        %7645 = vmatprep.subr.bf16.mxu0 0
        %7646 = vmatpush2.bf16.msra.mxu0 0
        %7647 = vmatprep.subr.bf16.mxu0 0
        %7648 = vmatpush2.bf16.msra.mxu0 0
        %7649 = vmatprep.subr.bf16.mxu0 0
        %7650 = vmatpush2.bf16.msra.mxu0 0
        %7651 = vmatprep.subr.bf16.mxu0 0
        %7652 = vmatpush2.bf16.msra.mxu0 0
        %7653 = vmatprep.subr.bf16.mxu0 0
        %7654 = vmatpush2.bf16.msra.mxu0 0
        %7655 = vmatprep.subr.bf16.mxu0 0
        %7656 = vmatpush2.bf16.msra.mxu0 0
        %7657 = vmatprep.mubr.bf16.mxu0 0
        %7658 = vmatmul.mubr.bf16.gmra.mxu0 %v7617
        %v7659 = vpop.f32.mrf.mxu0
        %v7660 = vadd.f32 0.0, %v7659
        %v7661 = vpop.f32.mrf.mxu0
        %v7662 = vpop.f32.mrf.mxu0
        %v7663 = vadd.f32 0.0, %v7662
        %v7664 = vpop.f32.mrf.mxu0
        %7665 = vmatprep.mubr.bf16.mxu0 0
        %7666 = vmatmul.mubr.bf16.gmra.mxu0 %v7620
        %v7667 = vpop.f32.mrf.mxu0
        %v7668 = vadd.f32 0.0, %v7667
        %v7669 = vpop.f32.mrf.mxu0
        %v7670 = vpop.f32.mrf.mxu0
        %v7671 = vadd.f32 0.0, %v7670
        %v7672 = vpop.f32.mrf.mxu0
        %7673 = vmatprep.mubr.bf16.mxu0 0
        %7674 = vmatmul.mubr.bf16.gmra.mxu0 %v7623
        %v7675 = vpop.f32.mrf.mxu0
        %v7676 = vadd.f32 0.0, %v7675
        %v7677 = vpop.f32.mrf.mxu0
        %v7678 = vpop.f32.mrf.mxu0
        %v7679 = vpop.f32.mrf.mxu0
        %7680 = vdwg.mxu0
        %v7681 = vadd.f32 %v7548, %v7660
        %v7682 = vadd.f32 %v7549, %v7663
        %v7683 = vadd.f32 %v7550, %v7668
        %v7684 = vadd.f32 %v7551, %v7671
        %v7685 = vadd.f32 %v7552, %v7676
        %s7686 = scalar_lea.vmem %s5, 320
        %v7687 = vld [vmem:[%s7686] sm:$0xf]
        %v7688 = vld [vmem:[%s7686 + $0x4] sm:$0xf]
        %v7689 = vld [vmem:[%s7686 + $0x8] sm:$0xf]
        %v7690 = vld [vmem:[%s7686 + $0xc] sm:$0xf]
        %v7691 = vld [vmem:[%s7686 + $0x10] sm:$0xf]
        %v7692 = vld [vmem:[%s7686 + $0x14] sm:$0xf]
        %v7693 = vld [vmem:[%s7686 + $0x18] sm:$0xf]
        %v7694 = vld [vmem:[%s7686 + $0x1c] sm:$0xf]
        %v7695 = vpack.c.b16 %v7447, %v7446
        %v7696 = vpack.c.b16 %v7449, %v7448
        %v7697 = vpack.c.b16 %v7564, %v7564
        %v7706 = vunpack.c.l.b16 %v7687
        %v7707 = vunpack.c.l.b16 %v7688
        %v7708 = vunpack.c.l.b16 %v7689
        %v7709 = vunpack.c.l.b16 %v7690
        %v7710 = vunpack.c.l.b16 %v7691
        %v7711 = vunpack.c.l.b16 %v7692
        %v7712 = vunpack.c.l.b16 %v7693
        %v7713 = vunpack.c.l.b16 %v7694
        %v7714 = vpack.c.b16 %v7707, %v7706
        %v7715 = vpack.c.b16 %v7709, %v7708
        %v7716 = vpack.c.b16 %v7711, %v7710
        %v7717 = vpack.c.b16 %v7713, %v7712
        %v7723 = vsel %vm6515, %v7695, 0
        %v7726 = vsel %vm6515, %v7696, 0
        %v7729 = vsel %vm6515, %v7697, 0
        %7731 = vmatprep.subr.bf16.mxu0 0
        %7732 = vmatpush1.bf16.msra.mxu0 0
        %7733 = vmatprep.subr.bf16.mxu0 0
        %7734 = vmatpush1.bf16.msra.mxu0 0
        %7735 = vmatprep.subr.bf16.mxu0 0
        %7736 = vmatpush1.bf16.msra.mxu0 0
        %7737 = vmatprep.subr.bf16.mxu0 0
        %7738 = vmatpush1.bf16.msra.mxu0 0
        %7739 = vmatprep.subr.bf16.mxu0 0
        %7740 = vmatpush1.bf16.msra.mxu0 %v7717
        %7741 = vmatprep.subr.bf16.mxu0 0
        %7742 = vmatpush1.bf16.msra.mxu0 %v7716
        %7743 = vmatprep.subr.bf16.mxu0 0
        %7744 = vmatpush1.bf16.msra.mxu0 %v7715
        %7745 = vmatprep.subr.bf16.mxu0 0
        %7746 = vmatpush1.bf16.msra.mxu0 %v7714
        %7747 = vmatprep.subr.bf16.mxu0 0
        %7748 = vmatpush2.bf16.msra.mxu0 0
        %7749 = vmatprep.subr.bf16.mxu0 0
        %7750 = vmatpush2.bf16.msra.mxu0 0
        %7751 = vmatprep.subr.bf16.mxu0 0
        %7752 = vmatpush2.bf16.msra.mxu0 0
        %7753 = vmatprep.subr.bf16.mxu0 0
        %7754 = vmatpush2.bf16.msra.mxu0 0
        %7755 = vmatprep.subr.bf16.mxu0 0
        %7756 = vmatpush2.bf16.msra.mxu0 0
        %7757 = vmatprep.subr.bf16.mxu0 0
        %7758 = vmatpush2.bf16.msra.mxu0 0
        %7759 = vmatprep.subr.bf16.mxu0 0
        %7760 = vmatpush2.bf16.msra.mxu0 0
        %7761 = vmatprep.subr.bf16.mxu0 0
        %7762 = vmatpush2.bf16.msra.mxu0 0
        %7763 = vmatprep.mubr.bf16.mxu0 0
        %7764 = vmatmul.mubr.bf16.gmra.mxu0 %v7723
        %v7765 = vpop.f32.mrf.mxu0
        %v7766 = vadd.f32 0.0, %v7765
        %v7767 = vpop.f32.mrf.mxu0
        %v7768 = vpop.f32.mrf.mxu0
        %v7769 = vadd.f32 0.0, %v7768
        %v7770 = vpop.f32.mrf.mxu0
        %7771 = vmatprep.mubr.bf16.mxu0 0
        %7772 = vmatmul.mubr.bf16.gmra.mxu0 %v7726
        %v7773 = vpop.f32.mrf.mxu0
        %v7774 = vadd.f32 0.0, %v7773
        %v7775 = vpop.f32.mrf.mxu0
        %v7776 = vpop.f32.mrf.mxu0
        %v7777 = vadd.f32 0.0, %v7776
        %v7778 = vpop.f32.mrf.mxu0
        %7779 = vmatprep.mubr.bf16.mxu0 0
        %7780 = vmatmul.mubr.bf16.gmra.mxu0 %v7729
        %v7781 = vpop.f32.mrf.mxu0
        %v7782 = vadd.f32 0.0, %v7781
        %v7783 = vpop.f32.mrf.mxu0
        %v7784 = vpop.f32.mrf.mxu0
        %v7785 = vpop.f32.mrf.mxu0
        %7786 = vdwg.mxu0
        %v7787 = vadd.f32 %v7681, %v7766
        %v7788 = vadd.f32 %v7682, %v7769
        %v7789 = vadd.f32 %v7683, %v7774
        %v7790 = vadd.f32 %v7684, %v7777
        %v7791 = vadd.f32 %v7685, %v7782
        %v7792 = vld [vmem:[#allocation3 + $0x10] sm:$0xf]
        %v7793 = vld [vmem:[#allocation3 + $0x14] sm:$0xf]
        %v7794 = vld [vmem:[#allocation3 + $0x18] sm:$0xf]
        %v7795 = vld [vmem:[#allocation3 + $0x1c] sm:$0xf]
        %v7796 = vld [vmem:[#allocation3 + $0x20] sm:$0xf]
        %v7797 = vld [vmem:[#allocation3 + $0x24] sm:$0x1]
        %s7798 = scalar_lea.vmem %s5, 352
        %v7799 = vld [vmem:[%s7798] sm:$0xf]
        %v7800 = vld [vmem:[%s7798 + $0x4] sm:$0xf]
        %v7801 = vld [vmem:[%s7798 + $0x8] sm:$0xf]
        %v7802 = vld [vmem:[%s7798 + $0xc] sm:$0xf]
        %v7803 = vld [vmem:[%s7798 + $0x10] sm:$0xf]
        %v7804 = vld [vmem:[%s7798 + $0x14] sm:$0xf]
        %v7805 = vld [vmem:[%s7798 + $0x18] sm:$0xf]
        %v7806 = vld [vmem:[%s7798 + $0x1c] sm:$0xf]
        %v7813 = vunpack.c.l.b16 %v7792
        %v7814 = vunpack.c.l.b16 %v7793
        %v7815 = vunpack.c.l.b16 %v7794
        %v7816 = vunpack.c.l.b16 %v7795
        %v7817 = vunpack.c.l.b16 %v7796
        %v7818 = vunpack.c.l.b16 %v7797
        %v7819 = vpack.c.b16 %v7814, %v7813
        %v7820 = vpack.c.b16 %v7816, %v7815
        %v7821 = vpack.c.b16 %v7818, %v7817
        %v7823 = vshrl.u32 %v7819, 16
        %v7825 = vshll.u32 %v7819, 16
        %v7827 = vrot.slane %v7825, 1
        %v7828 = vor.u32 %v7823, %v7827
        %v7830 = vshll.u32 %v7820, 16
        %v7832 = vrot.slane %v7830, 1
        %v7833 = vsel %vm2241, %v7828, %v7832
        %v7834 = vshrl.u32 %v7820, 16
        %v7836 = vor.u32 %v7834, %v7832
        %v7838 = vshll.u32 %v7821, 16
        %v7840 = vrot.slane %v7838, 1
        %v7841 = vsel %vm2241, %v7836, %v7840
        %v7842 = vshrl.u32 %v7821, 16
        %v7844 = vor.u32 %v7842, %v7840
        %v7853 = vunpack.c.l.b16 %v7799
        %v7854 = vunpack.c.l.b16 %v7800
        %v7855 = vunpack.c.l.b16 %v7801
        %v7856 = vunpack.c.l.b16 %v7802
        %v7857 = vunpack.c.l.b16 %v7803
        %v7858 = vunpack.c.l.b16 %v7804
        %v7859 = vunpack.c.l.b16 %v7805
        %v7860 = vunpack.c.l.b16 %v7806
        %v7861 = vpack.c.b16 %v7854, %v7853
        %v7862 = vpack.c.b16 %v7856, %v7855
        %v7863 = vpack.c.b16 %v7858, %v7857
        %v7864 = vpack.c.b16 %v7860, %v7859
        %v7870 = vsel %vm6515, %v7833, 0
        %v7873 = vsel %vm6515, %v7841, 0
        %v7876 = vsel %vm6515, %v7844, 0
        %7878 = vmatprep.subr.bf16.mxu0 0
        %7879 = vmatpush1.bf16.msra.mxu0 0
        %7880 = vmatprep.subr.bf16.mxu0 0
        %7881 = vmatpush1.bf16.msra.mxu0 0
        %7882 = vmatprep.subr.bf16.mxu0 0
        %7883 = vmatpush1.bf16.msra.mxu0 0
        %7884 = vmatprep.subr.bf16.mxu0 0
        %7885 = vmatpush1.bf16.msra.mxu0 0
        %7886 = vmatprep.subr.bf16.mxu0 0
        %7887 = vmatpush1.bf16.msra.mxu0 %v7864
        %7888 = vmatprep.subr.bf16.mxu0 0
        %7889 = vmatpush1.bf16.msra.mxu0 %v7863
        %7890 = vmatprep.subr.bf16.mxu0 0
        %7891 = vmatpush1.bf16.msra.mxu0 %v7862
        %7892 = vmatprep.subr.bf16.mxu0 0
        %7893 = vmatpush1.bf16.msra.mxu0 %v7861
        %7894 = vmatprep.subr.bf16.mxu0 0
        %7895 = vmatpush2.bf16.msra.mxu0 0
        %7896 = vmatprep.subr.bf16.mxu0 0
        %7897 = vmatpush2.bf16.msra.mxu0 0
        %7898 = vmatprep.subr.bf16.mxu0 0
        %7899 = vmatpush2.bf16.msra.mxu0 0
        %7900 = vmatprep.subr.bf16.mxu0 0
        %7901 = vmatpush2.bf16.msra.mxu0 0
        %7902 = vmatprep.subr.bf16.mxu0 0
        %7903 = vmatpush2.bf16.msra.mxu0 0
        %7904 = vmatprep.subr.bf16.mxu0 0
        %7905 = vmatpush2.bf16.msra.mxu0 0
        %7906 = vmatprep.subr.bf16.mxu0 0
        %7907 = vmatpush2.bf16.msra.mxu0 0
        %7908 = vmatprep.subr.bf16.mxu0 0
        %7909 = vmatpush2.bf16.msra.mxu0 0
        %7910 = vmatprep.mubr.bf16.mxu0 0
        %7911 = vmatmul.mubr.bf16.gmra.mxu0 %v7870
        %v7912 = vpop.f32.mrf.mxu0
        %v7913 = vadd.f32 0.0, %v7912
        %v7914 = vpop.f32.mrf.mxu0
        %v7915 = vpop.f32.mrf.mxu0
        %v7916 = vadd.f32 0.0, %v7915
        %v7917 = vpop.f32.mrf.mxu0
        %7918 = vmatprep.mubr.bf16.mxu0 0
        %7919 = vmatmul.mubr.bf16.gmra.mxu0 %v7873
        %v7920 = vpop.f32.mrf.mxu0
        %v7921 = vadd.f32 0.0, %v7920
        %v7922 = vpop.f32.mrf.mxu0
        %v7923 = vpop.f32.mrf.mxu0
        %v7924 = vadd.f32 0.0, %v7923
        %v7925 = vpop.f32.mrf.mxu0
        %7926 = vmatprep.mubr.bf16.mxu0 0
        %7927 = vmatmul.mubr.bf16.gmra.mxu0 %v7876
        %v7928 = vpop.f32.mrf.mxu0
        %v7929 = vadd.f32 0.0, %v7928
        %v7930 = vpop.f32.mrf.mxu0
        %v7931 = vpop.f32.mrf.mxu0
        %v7932 = vpop.f32.mrf.mxu0
        %7933 = vdwg.mxu0
        %v7934 = vadd.f32 %v7787, %v7913
        %v7935 = vadd.f32 %v7788, %v7916
        %v7936 = vadd.f32 %v7789, %v7921
        %v7937 = vadd.f32 %v7790, %v7924
        %v7938 = vadd.f32 %v7791, %v7929
        %v7939 = vld [vmem:[#allocation3 + $0x14] sm:$0xc]
        %v7940 = vld [vmem:[#allocation3 + $0x18] sm:$0xf]
        %v7941 = vld [vmem:[#allocation3 + $0x1c] sm:$0xf]
        %v7942 = vld [vmem:[#allocation3 + $0x20] sm:$0xf]
        %v7943 = vld [vmem:[#allocation3 + $0x24] sm:$0xf]
        %v7944 = vld [vmem:[#allocation3 + $0x28] sm:$0x7]
        %s7945 = scalar_lea.vmem %s5, 384
        %v7946 = vld [vmem:[%s7945] sm:$0xf]
        %v7947 = vld [vmem:[%s7945 + $0x4] sm:$0xf]
        %v7948 = vld [vmem:[%s7945 + $0x8] sm:$0xf]
        %v7949 = vld [vmem:[%s7945 + $0xc] sm:$0xf]
        %v7950 = vld [vmem:[%s7945 + $0x10] sm:$0xf]
        %v7951 = vld [vmem:[%s7945 + $0x14] sm:$0xf]
        %v7952 = vld [vmem:[%s7945 + $0x18] sm:$0xf]
        %v7953 = vld [vmem:[%s7945 + $0x1c] sm:$0xf]
        %v7960 = vunpack.c.l.b16 %v7939
        %v7961 = vunpack.c.l.b16 %v7940
        %v7962 = vunpack.c.l.b16 %v7941
        %v7963 = vunpack.c.l.b16 %v7942
        %v7964 = vunpack.c.l.b16 %v7943
        %v7965 = vunpack.c.l.b16 %v7944
        %v7966 = vpack.c.b16 %v7961, %v7960
        %v7967 = vpack.c.b16 %v7963, %v7962
        %v7968 = vpack.c.b16 %v7965, %v7964
        %v7970 = vshrl.u32 %v7966, 16
        %v7972 = vrot.slane %v7970, 2
        %v7973 = vshll.u32 %v7966, 16
        %v7975 = vrot.slane %v7973, 3
        %v7976 = vor.u32 %v7972, %v7975
        %v7978 = vshrl.u32 %v7967, 16
        %v7980 = vrot.slane %v7978, 2
        %v7981 = vshll.u32 %v7967, 16
        %v7983 = vrot.slane %v7981, 3
        %v7984 = vor.u32 %v7980, %v7983
        %v7985 = vsel %vm1181, %v7976, %v7984
        %v7987 = vshrl.u32 %v7968, 16
        %v7989 = vrot.slane %v7987, 2
        %v7990 = vshll.u32 %v7968, 16
        %v7992 = vrot.slane %v7990, 3
        %v7993 = vor.u32 %v7989, %v7992
        %v7994 = vsel %vm1181, %v7984, %v7993
        %v8003 = vunpack.c.l.b16 %v7946
        %v8004 = vunpack.c.l.b16 %v7947
        %v8005 = vunpack.c.l.b16 %v7948
        %v8006 = vunpack.c.l.b16 %v7949
        %v8007 = vunpack.c.l.b16 %v7950
        %v8008 = vunpack.c.l.b16 %v7951
        %v8009 = vunpack.c.l.b16 %v7952
        %v8010 = vunpack.c.l.b16 %v7953
        %v8011 = vpack.c.b16 %v8004, %v8003
        %v8012 = vpack.c.b16 %v8006, %v8005
        %v8013 = vpack.c.b16 %v8008, %v8007
        %v8014 = vpack.c.b16 %v8010, %v8009
        %v8020 = vsel %vm6515, %v7985, 0
        %v8023 = vsel %vm6515, %v7994, 0
        %v8026 = vsel %vm6515, %v7993, 0
        %8028 = vmatprep.subr.bf16.mxu0 0
        %8029 = vmatpush1.bf16.msra.mxu0 0
        %8030 = vmatprep.subr.bf16.mxu0 0
        %8031 = vmatpush1.bf16.msra.mxu0 0
        %8032 = vmatprep.subr.bf16.mxu0 0
        %8033 = vmatpush1.bf16.msra.mxu0 0
        %8034 = vmatprep.subr.bf16.mxu0 0
        %8035 = vmatpush1.bf16.msra.mxu0 0
        %8036 = vmatprep.subr.bf16.mxu0 0
        %8037 = vmatpush1.bf16.msra.mxu0 %v8014
        %8038 = vmatprep.subr.bf16.mxu0 0
        %8039 = vmatpush1.bf16.msra.mxu0 %v8013
        %8040 = vmatprep.subr.bf16.mxu0 0
        %8041 = vmatpush1.bf16.msra.mxu0 %v8012
        %8042 = vmatprep.subr.bf16.mxu0 0
        %8043 = vmatpush1.bf16.msra.mxu0 %v8011
        %8044 = vmatprep.subr.bf16.mxu0 0
        %8045 = vmatpush2.bf16.msra.mxu0 0
        %8046 = vmatprep.subr.bf16.mxu0 0
        %8047 = vmatpush2.bf16.msra.mxu0 0
        %8048 = vmatprep.subr.bf16.mxu0 0
        %8049 = vmatpush2.bf16.msra.mxu0 0
        %8050 = vmatprep.subr.bf16.mxu0 0
        %8051 = vmatpush2.bf16.msra.mxu0 0
        %8052 = vmatprep.subr.bf16.mxu0 0
        %8053 = vmatpush2.bf16.msra.mxu0 0
        %8054 = vmatprep.subr.bf16.mxu0 0
        %8055 = vmatpush2.bf16.msra.mxu0 0
        %8056 = vmatprep.subr.bf16.mxu0 0
        %8057 = vmatpush2.bf16.msra.mxu0 0
        %8058 = vmatprep.subr.bf16.mxu0 0
        %8059 = vmatpush2.bf16.msra.mxu0 0
        %8060 = vmatprep.mubr.bf16.mxu0 0
        %8061 = vmatmul.mubr.bf16.gmra.mxu0 %v8020
        %v8062 = vpop.f32.mrf.mxu0
        %v8063 = vadd.f32 0.0, %v8062
        %v8064 = vpop.f32.mrf.mxu0
        %v8065 = vpop.f32.mrf.mxu0
        %v8066 = vadd.f32 0.0, %v8065
        %v8067 = vpop.f32.mrf.mxu0
        %8068 = vmatprep.mubr.bf16.mxu0 0
        %8069 = vmatmul.mubr.bf16.gmra.mxu0 %v8023
        %v8070 = vpop.f32.mrf.mxu0
        %v8071 = vadd.f32 0.0, %v8070
        %v8072 = vpop.f32.mrf.mxu0
        %v8073 = vpop.f32.mrf.mxu0
        %v8074 = vadd.f32 0.0, %v8073
        %v8075 = vpop.f32.mrf.mxu0
        %8076 = vmatprep.mubr.bf16.mxu0 0
        %8077 = vmatmul.mubr.bf16.gmra.mxu0 %v8026
        %v8078 = vpop.f32.mrf.mxu0
        %v8079 = vadd.f32 0.0, %v8078
        %v8080 = vpop.f32.mrf.mxu0
        %v8081 = vpop.f32.mrf.mxu0
        %v8082 = vpop.f32.mrf.mxu0
        %8083 = vdwg.mxu0
        %v8084 = vadd.f32 %v7934, %v8063
        %v8085 = vadd.f32 %v7935, %v8066
        %v8086 = vadd.f32 %v7936, %v8071
        %v8087 = vadd.f32 %v7937, %v8074
        %v8088 = vadd.f32 %v7938, %v8079
        %v8089 = vld [vmem:[#allocation3 + $0x14] sm:$0x8]
        %s8090 = scalar_lea.vmem %s5, 416
        %v8091 = vld [vmem:[%s8090] sm:$0xf]
        %v8092 = vld [vmem:[%s8090 + $0x4] sm:$0xf]
        %v8093 = vld [vmem:[%s8090 + $0x8] sm:$0xf]
        %v8094 = vld [vmem:[%s8090 + $0xc] sm:$0xf]
        %v8095 = vld [vmem:[%s8090 + $0x10] sm:$0xf]
        %v8096 = vld [vmem:[%s8090 + $0x14] sm:$0xf]
        %v8097 = vld [vmem:[%s8090 + $0x18] sm:$0xf]
        %v8098 = vld [vmem:[%s8090 + $0x1c] sm:$0xf]
        %v8100 = vunpack.c.l.b16 %v8089
        %v8101 = vpack.c.b16 %v7961, %v8100
        %v8102 = vrot.slane %v8101, 3
        %v8103 = vrot.slane %v7967, 3
        %v8104 = vsel %vm914, %v8102, %v8103
        %v8105 = vrot.slane %v7968, 3
        %v8106 = vsel %vm914, %v8103, %v8105
        %v8115 = vunpack.c.l.b16 %v8091
        %v8116 = vunpack.c.l.b16 %v8092
        %v8117 = vunpack.c.l.b16 %v8093
        %v8118 = vunpack.c.l.b16 %v8094
        %v8119 = vunpack.c.l.b16 %v8095
        %v8120 = vunpack.c.l.b16 %v8096
        %v8121 = vunpack.c.l.b16 %v8097
        %v8122 = vunpack.c.l.b16 %v8098
        %v8123 = vpack.c.b16 %v8116, %v8115
        %v8124 = vpack.c.b16 %v8118, %v8117
        %v8125 = vpack.c.b16 %v8120, %v8119
        %v8126 = vpack.c.b16 %v8122, %v8121
        %v8132 = vsel %vm6515, %v8104, 0
        %v8135 = vsel %vm6515, %v8106, 0
        %v8138 = vsel %vm6515, %v8105, 0
        %8140 = vmatprep.subr.bf16.mxu0 0
        %8141 = vmatpush1.bf16.msra.mxu0 0
        %8142 = vmatprep.subr.bf16.mxu0 0
        %8143 = vmatpush1.bf16.msra.mxu0 0
        %8144 = vmatprep.subr.bf16.mxu0 0
        %8145 = vmatpush1.bf16.msra.mxu0 0
        %8146 = vmatprep.subr.bf16.mxu0 0
        %8147 = vmatpush1.bf16.msra.mxu0 0
        %8148 = vmatprep.subr.bf16.mxu0 0
        %8149 = vmatpush1.bf16.msra.mxu0 %v8126
        %8150 = vmatprep.subr.bf16.mxu0 0
        %8151 = vmatpush1.bf16.msra.mxu0 %v8125
        %8152 = vmatprep.subr.bf16.mxu0 0
        %8153 = vmatpush1.bf16.msra.mxu0 %v8124
        %8154 = vmatprep.subr.bf16.mxu0 0
        %8155 = vmatpush1.bf16.msra.mxu0 %v8123
        %8156 = vmatprep.subr.bf16.mxu0 0
        %8157 = vmatpush2.bf16.msra.mxu0 0
        %8158 = vmatprep.subr.bf16.mxu0 0
        %8159 = vmatpush2.bf16.msra.mxu0 0
        %8160 = vmatprep.subr.bf16.mxu0 0
        %8161 = vmatpush2.bf16.msra.mxu0 0
        %8162 = vmatprep.subr.bf16.mxu0 0
        %8163 = vmatpush2.bf16.msra.mxu0 0
        %8164 = vmatprep.subr.bf16.mxu0 0
        %8165 = vmatpush2.bf16.msra.mxu0 0
        %8166 = vmatprep.subr.bf16.mxu0 0
        %8167 = vmatpush2.bf16.msra.mxu0 0
        %8168 = vmatprep.subr.bf16.mxu0 0
        %8169 = vmatpush2.bf16.msra.mxu0 0
        %8170 = vmatprep.subr.bf16.mxu0 0
        %8171 = vmatpush2.bf16.msra.mxu0 0
        %8172 = vmatprep.mubr.bf16.mxu0 0
        %8173 = vmatmul.mubr.bf16.gmra.mxu0 %v8132
        %v8174 = vpop.f32.mrf.mxu0
        %v8175 = vadd.f32 0.0, %v8174
        %v8176 = vpop.f32.mrf.mxu0
        %v8177 = vpop.f32.mrf.mxu0
        %v8178 = vadd.f32 0.0, %v8177
        %v8179 = vpop.f32.mrf.mxu0
        %8180 = vmatprep.mubr.bf16.mxu0 0
        %8181 = vmatmul.mubr.bf16.gmra.mxu0 %v8135
        %v8182 = vpop.f32.mrf.mxu0
        %v8183 = vadd.f32 0.0, %v8182
        %v8184 = vpop.f32.mrf.mxu0
        %v8185 = vpop.f32.mrf.mxu0
        %v8186 = vadd.f32 0.0, %v8185
        %v8187 = vpop.f32.mrf.mxu0
        %8188 = vmatprep.mubr.bf16.mxu0 0
        %8189 = vmatmul.mubr.bf16.gmra.mxu0 %v8138
        %v8190 = vpop.f32.mrf.mxu0
        %v8191 = vadd.f32 0.0, %v8190
        %v8192 = vpop.f32.mrf.mxu0
        %v8193 = vpop.f32.mrf.mxu0
        %v8194 = vpop.f32.mrf.mxu0
        %8195 = vdwg.mxu0
        %v8196 = vadd.f32 %v8084, %v8175
        %v8197 = vadd.f32 %v8085, %v8178
        %v8198 = vadd.f32 %v8086, %v8183
        %v8199 = vadd.f32 %v8087, %v8186
        %v8200 = vadd.f32 %v8088, %v8191
        %v8201 = vld [vmem:[#allocation3 + $0x28] sm:$0xf]
        %s8202 = scalar_lea.vmem %s5, 448
        %v8203 = vld [vmem:[%s8202] sm:$0xf]
        %v8204 = vld [vmem:[%s8202 + $0x4] sm:$0xf]
        %v8205 = vld [vmem:[%s8202 + $0x8] sm:$0xf]
        %v8206 = vld [vmem:[%s8202 + $0xc] sm:$0xf]
        %v8207 = vld [vmem:[%s8202 + $0x10] sm:$0xf]
        %v8208 = vld [vmem:[%s8202 + $0x14] sm:$0xf]
        %v8209 = vld [vmem:[%s8202 + $0x18] sm:$0xf]
        %v8210 = vld [vmem:[%s8202 + $0x1c] sm:$0xf]
        %v8212 = vunpack.c.l.b16 %v8201
        %v8213 = vpack.c.b16 %v8212, %v7964
        %v8215 = vshrl.u32 %v8101, 16
        %v8217 = vrot.slane %v8215, 3
        %v8218 = vshll.u32 %v8101, 16
        %v8220 = vrot.slane %v8218, 4
        %v8221 = vor.u32 %v8217, %v8220
        %v8222 = vrot.slane %v7978, 3
        %v8223 = vrot.slane %v7981, 4
        %v8224 = vor.u32 %v8222, %v8223
        %v8225 = vsel %vm426, %v8221, %v8224
        %v8227 = vshrl.u32 %v8213, 16
        %v8229 = vrot.slane %v8227, 3
        %v8230 = vshll.u32 %v8213, 16
        %v8232 = vrot.slane %v8230, 4
        %v8233 = vor.u32 %v8229, %v8232
        %v8234 = vsel %vm426, %v8224, %v8233
        %v8243 = vunpack.c.l.b16 %v8203
        %v8244 = vunpack.c.l.b16 %v8204
        %v8245 = vunpack.c.l.b16 %v8205
        %v8246 = vunpack.c.l.b16 %v8206
        %v8247 = vunpack.c.l.b16 %v8207
        %v8248 = vunpack.c.l.b16 %v8208
        %v8249 = vunpack.c.l.b16 %v8209
        %v8250 = vunpack.c.l.b16 %v8210
        %v8251 = vpack.c.b16 %v8244, %v8243
        %v8252 = vpack.c.b16 %v8246, %v8245
        %v8253 = vpack.c.b16 %v8248, %v8247
        %v8254 = vpack.c.b16 %v8250, %v8249
        %v8260 = vsel %vm6515, %v8225, 0
        %v8263 = vsel %vm6515, %v8234, 0
        %v8266 = vsel %vm6515, %v8233, 0
        %8268 = vmatprep.subr.bf16.mxu0 0
        %8269 = vmatpush1.bf16.msra.mxu0 0
        %8270 = vmatprep.subr.bf16.mxu0 0
        %8271 = vmatpush1.bf16.msra.mxu0 0
        %8272 = vmatprep.subr.bf16.mxu0 0
        %8273 = vmatpush1.bf16.msra.mxu0 0
        %8274 = vmatprep.subr.bf16.mxu0 0
        %8275 = vmatpush1.bf16.msra.mxu0 0
        %8276 = vmatprep.subr.bf16.mxu0 0
        %8277 = vmatpush1.bf16.msra.mxu0 %v8254
        %8278 = vmatprep.subr.bf16.mxu0 0
        %8279 = vmatpush1.bf16.msra.mxu0 %v8253
        %8280 = vmatprep.subr.bf16.mxu0 0
        %8281 = vmatpush1.bf16.msra.mxu0 %v8252
        %8282 = vmatprep.subr.bf16.mxu0 0
        %8283 = vmatpush1.bf16.msra.mxu0 %v8251
        %8284 = vmatprep.subr.bf16.mxu0 0
        %8285 = vmatpush2.bf16.msra.mxu0 0
        %8286 = vmatprep.subr.bf16.mxu0 0
        %8287 = vmatpush2.bf16.msra.mxu0 0
        %8288 = vmatprep.subr.bf16.mxu0 0
        %8289 = vmatpush2.bf16.msra.mxu0 0
        %8290 = vmatprep.subr.bf16.mxu0 0
        %8291 = vmatpush2.bf16.msra.mxu0 0
        %8292 = vmatprep.subr.bf16.mxu0 0
        %8293 = vmatpush2.bf16.msra.mxu0 0
        %8294 = vmatprep.subr.bf16.mxu0 0
        %8295 = vmatpush2.bf16.msra.mxu0 0
        %8296 = vmatprep.subr.bf16.mxu0 0
        %8297 = vmatpush2.bf16.msra.mxu0 0
        %8298 = vmatprep.subr.bf16.mxu0 0
        %8299 = vmatpush2.bf16.msra.mxu0 0
        %8300 = vmatprep.mubr.bf16.mxu0 0
        %8301 = vmatmul.mubr.bf16.gmra.mxu0 %v8260
        %v8302 = vpop.f32.mrf.mxu0
        %v8303 = vadd.f32 0.0, %v8302
        %v8304 = vpop.f32.mrf.mxu0
        %v8305 = vpop.f32.mrf.mxu0
        %v8306 = vadd.f32 0.0, %v8305
        %v8307 = vpop.f32.mrf.mxu0
        %8308 = vmatprep.mubr.bf16.mxu0 0
        %8309 = vmatmul.mubr.bf16.gmra.mxu0 %v8263
        %v8310 = vpop.f32.mrf.mxu0
        %v8311 = vadd.f32 0.0, %v8310
        %v8312 = vpop.f32.mrf.mxu0
        %v8313 = vpop.f32.mrf.mxu0
        %v8314 = vadd.f32 0.0, %v8313
        %v8315 = vpop.f32.mrf.mxu0
        %8316 = vmatprep.mubr.bf16.mxu0 0
        %8317 = vmatmul.mubr.bf16.gmra.mxu0 %v8266
        %v8318 = vpop.f32.mrf.mxu0
        %v8319 = vadd.f32 0.0, %v8318
        %v8320 = vpop.f32.mrf.mxu0
        %v8321 = vpop.f32.mrf.mxu0
        %v8322 = vpop.f32.mrf.mxu0
        %8323 = vdwg.mxu0
        %v8324 = vadd.f32 %v8196, %v8303
        %v8325 = vadd.f32 %v8197, %v8306
        %v8326 = vadd.f32 %v8198, %v8311
        %v8327 = vadd.f32 %v8199, %v8314
        %v8328 = vadd.f32 %v8200, %v8319
        %s8329 = scalar_lea.vmem %s5, 480
        %v8330 = vld [vmem:[%s8329] sm:$0xf]
        %v8331 = vld [vmem:[%s8329 + $0x4] sm:$0xf]
        %v8332 = vld [vmem:[%s8329 + $0x8] sm:$0xf]
        %v8333 = vld [vmem:[%s8329 + $0xc] sm:$0xf]
        %v8334 = vld [vmem:[%s8329 + $0x10] sm:$0xf]
        %v8335 = vld [vmem:[%s8329 + $0x14] sm:$0xf]
        %v8336 = vld [vmem:[%s8329 + $0x18] sm:$0xf]
        %v8337 = vld [vmem:[%s8329 + $0x1c] sm:$0xf]
        %v8338 = vpack.c.b16 %v7962, %v7961
        %v8339 = vpack.c.b16 %v7964, %v7963
        %v8340 = vpack.c.b16 %v8212, %v8212
        %v8349 = vunpack.c.l.b16 %v8330
        %v8350 = vunpack.c.l.b16 %v8331
        %v8351 = vunpack.c.l.b16 %v8332
        %v8352 = vunpack.c.l.b16 %v8333
        %v8353 = vunpack.c.l.b16 %v8334
        %v8354 = vunpack.c.l.b16 %v8335
        %v8355 = vunpack.c.l.b16 %v8336
        %v8356 = vunpack.c.l.b16 %v8337
        %v8357 = vpack.c.b16 %v8350, %v8349
        %v8358 = vpack.c.b16 %v8352, %v8351
        %v8359 = vpack.c.b16 %v8354, %v8353
        %v8360 = vpack.c.b16 %v8356, %v8355
        %v8366 = vsel %vm6515, %v8338, 0
        %v8369 = vsel %vm6515, %v8339, 0
        %v8372 = vsel %vm6515, %v8340, 0
        %8374 = vmatprep.subr.bf16.mxu0 0
        %8375 = vmatpush1.bf16.msra.mxu0 0
        %8376 = vmatprep.subr.bf16.mxu0 0
        %8377 = vmatpush1.bf16.msra.mxu0 0
        %8378 = vmatprep.subr.bf16.mxu0 0
        %8379 = vmatpush1.bf16.msra.mxu0 0
        %8380 = vmatprep.subr.bf16.mxu0 0
        %8381 = vmatpush1.bf16.msra.mxu0 0
        %8382 = vmatprep.subr.bf16.mxu0 0
        %8383 = vmatpush1.bf16.msra.mxu0 %v8360
        %8384 = vmatprep.subr.bf16.mxu0 0
        %8385 = vmatpush1.bf16.msra.mxu0 %v8359
        %8386 = vmatprep.subr.bf16.mxu0 0
        %8387 = vmatpush1.bf16.msra.mxu0 %v8358
        %8388 = vmatprep.subr.bf16.mxu0 0
        %8389 = vmatpush1.bf16.msra.mxu0 %v8357
        %8390 = vmatprep.subr.bf16.mxu0 0
        %8391 = vmatpush2.bf16.msra.mxu0 0
        %8392 = vmatprep.subr.bf16.mxu0 0
        %8393 = vmatpush2.bf16.msra.mxu0 0
        %8394 = vmatprep.subr.bf16.mxu0 0
        %8395 = vmatpush2.bf16.msra.mxu0 0
        %8396 = vmatprep.subr.bf16.mxu0 0
        %8397 = vmatpush2.bf16.msra.mxu0 0
        %8398 = vmatprep.subr.bf16.mxu0 0
        %8399 = vmatpush2.bf16.msra.mxu0 0
        %8400 = vmatprep.subr.bf16.mxu0 0
        %8401 = vmatpush2.bf16.msra.mxu0 0
        %8402 = vmatprep.subr.bf16.mxu0 0
        %8403 = vmatpush2.bf16.msra.mxu0 0
        %8404 = vmatprep.subr.bf16.mxu0 0
        %8405 = vmatpush2.bf16.msra.mxu0 0
        %8406 = vmatprep.mubr.bf16.mxu0 0
        %8407 = vmatmul.mubr.bf16.gmra.mxu0 %v8366
        %v8408 = vpop.f32.mrf.mxu0
        %v8409 = vadd.f32 0.0, %v8408
        %v8410 = vpop.f32.mrf.mxu0
        %v8411 = vpop.f32.mrf.mxu0
        %v8412 = vadd.f32 0.0, %v8411
        %v8413 = vpop.f32.mrf.mxu0
        %8414 = vmatprep.mubr.bf16.mxu0 0
        %8415 = vmatmul.mubr.bf16.gmra.mxu0 %v8369
        %v8416 = vpop.f32.mrf.mxu0
        %v8417 = vadd.f32 0.0, %v8416
        %v8418 = vpop.f32.mrf.mxu0
        %v8419 = vpop.f32.mrf.mxu0
        %v8420 = vadd.f32 0.0, %v8419
        %v8421 = vpop.f32.mrf.mxu0
        %8422 = vmatprep.mubr.bf16.mxu0 0
        %8423 = vmatmul.mubr.bf16.gmra.mxu0 %v8372
        %v8424 = vpop.f32.mrf.mxu0
        %v8425 = vadd.f32 0.0, %v8424
        %v8426 = vpop.f32.mrf.mxu0
        %v8427 = vpop.f32.mrf.mxu0
        %v8428 = vpop.f32.mrf.mxu0
        %8429 = vdwg.mxu0
        %v8430 = vadd.f32 %v8324, %v8409
        %v8431 = vadd.f32 %v8325, %v8412
        %v8432 = vadd.f32 %v8326, %v8417
        %v8433 = vadd.f32 %v8327, %v8420
        %v8434 = vadd.f32 %v8328, %v8425
        %v8435 = vld [vmem:[#allocation11] sm:$0x1]
        %v8437 = vlaneseq
        %v8438 = vshrl.u32 %v8437, 7
        %v8439 = vsub.s32 0, %v8438
        %v8440 = vrot.slane %v8435, %v8439
        %v8442 = vadd.f32 %v8430, %v8440
        %v8443 = vadd.f32 %v8431, %v8440
        %v8444 = vadd.f32 %v8432, %v8440
        %v8445 = vadd.f32 %v8433, %v8440
        %v8446 = vadd.f32 %v8434, %v8440
        %v8447 = vmax.f32 %v8442, 0.0
        %v8448 = vmax.f32 %v8443, 0.0
        %v8449 = vmax.f32 %v8444, 0.0
        %v8450 = vmax.f32 %v8445, 0.0
        %v8451 = vmax.f32 %v8446, 0.0
        %v8452 = vpack.c.bf16 %v8448, %v8447
        %v8453 = vpack.c.bf16 %v8450, %v8449
        %v8454 = vpack.c.bf16 %v8451, %v8451
        %vm8455 = vcmask 1041408
        %vm8456 = vsmask.f32 1280
        %vm8457 = vmand %vm8455, %vm8456
        %v8458 = vld [vmem:[%s345] sm:$0x3]
        %v8459 = vsel %vm8457, %v8452, %v8458
        %8460 = vst [vmem:[%s345] sm:$0x3] %v8459
        %v8463 = vunpack.c.h.b16 %v8452
        %v8464 = vunpack.c.l.b16 %v8453
        %v8465 = vpack.c.b16 %v8463, %v8463
        %v8466 = vpack.c.b16 %v8464, %v8464
        %vm8467 = vcmask 1045508
        %vm8468 = vmor %vm8455, %vm8467
        %v8469 = vrot.slane %v8465, 6
        %v8470 = vrot.slane %v8469, 4
        %v8471 = vrot.slane %v8466, 6
        %v8472 = vsel %vm8468, %v8470, %v8471
        %vm8474 = vcmask 1042433
        %vm8475 = vsmask.f32 7942
        %vm8476 = vmand %vm8474, %vm8475
        %v8477 = vld [vmem:[%s345] sm:$0x6]
        %v8478 = vsel %vm8476, %v8472, %v8477
        %8479 = vst [vmem:[%s345] sm:$0x6] %v8478
        %v8481 = vunpack.c.h.b16 %v8453
        %v8482 = vunpack.c.l.b16 %v8454
        %v8483 = vpack.c.b16 %v8481, %v8481
        %v8484 = vpack.c.b16 %v8482, %v8482
        %8487 = vst [vmem:[%s345] sm:$0x8] %v8483
        %vm8488 = vcmask 1040384
        %vm8489 = vsmask.f32 256
        %vm8490 = vmand %vm8488, %vm8489
        %v8491 = vld [vmem:[%s345 + $0x4] sm:$0x1]
        %v8492 = vsel %vm8490, %v8484, %v8491
        %8493 = vst [vmem:[%s345 + $0x4] sm:$0x1] %v8492
        %p8494 = scmp.lt.s32.totalorder %s21, 1
        %s8495 = scalar_select %p8494, %s21, 1
        %s8496 = smul.addr %s8495, 2
        %s8497 = smul.addr %s8496, 4
        %s8498 = scalar_lea.vmem %s7, %s8497
        // Predicated region
        $region69: #{net_forward.2} parent=47 // pred_check
          %p8499 = pneg %p191
        $region70: #{net_forward.2} parent=47 // pred_check_branch
          %8501 = sbr.rel (%p8499) target = $region72
        $region71: #{net_forward.2} parent=47 // pred_region
          _
        $region72: #{net_forward.2} parent=47 // pred_fallthru
          _
      $region48: #{net_forward.2} parent=5 // pred_fallthru
        _
      %p8502 = scmp.le.s32.totalorder 2, %s16
      // Predicated region
      $region73: #{net_forward.2} parent=5 // pred_check
        %p8503 = pneg %p8502
      $region74: #{net_forward.2} parent=5 // pred_check_branch
        %8505 = sbr.rel (%p8503) target = $region76
      $region75: #{net_forward.2} parent=5 // pred_region
        %s8506 = ssub.s32 %s16, 2
        // Predicated region
        $region77: #{net_forward.2} parent=75 // pred_check
          %p8507 = pneg %p197
        $region78: #{net_forward.2} parent=75 // pred_check_branch
          %8509 = sbr.rel (%p8507) target = $region80
        $region79: #{net_forward.2} parent=75 // pred_region
          %p8510 = scmp.lt.s32.totalorder %s22, 1
          %s8511 = scalar_select %p8510, %s22, 1
          %s8512 = smul.addr %s8511, 2
          %s8513 = smul.addr %s8512, 4
          %s8514 = scalar_lea.vmem %s7, %s8513
        $region80: #{net_forward.2} parent=75 // pred_fallthru
          _
      $region76: #{net_forward.2} parent=5 // pred_fallthru
        _
    $region6: #{net_forward.2} parent=1 // loop_footer
      %s20 = sadd.s32 1, %s16
    $region7: #{net_forward.2} parent=1 // loop_footer_branch
      %15 = sbr.rel target = $region3
    $region8: #{net_forward.2} parent=1 // loop_exit
      _
    %8515 = vsyncpa [#allocation5], 1
    %s8516 = scalar_lea.sflag [#allocation5], 1
    %8517 = vsyncpa %s8516, 1
    %8518 = vsyncpa [#allocation7], 1
    %8519 = vsyncpa [#allocation10], 1

</llo_original>
